<compile_context>
chip_gen: v7x
topology: tpu7x:2x2x1
jax: 0.10.0
libtpu: 0.0.40
codegen_flags: <defaults>
</compile_context>

<pallas_src>
import functools

import numpy as np
import jax
import jax.numpy as jnp
from jax.experimental import pallas as pl
from jax.experimental.pallas import tpu as pltpu

# PackedLeNet(in_channels=1, num_classes=10, alpha=2, num_estimators=2)
IN_CHANNELS = 1
NUM_CLASSES = 10
ALPHA = 2
NUM_ESTIMATORS = 2
G = NUM_ESTIMATORS

# Derived sizes (28x28 input implied by fc1's 256*alpha in-features).
C1 = 6 * ALPHA                 # 12  conv1 out channels
C2 = 16 * ALPHA                # 32  conv2 out channels
C1G = C1 // G                  # 6   conv2 per-group in channels
C2G = C2 // G                  # 16  conv2 per-group out channels
H0 = 28                        # input spatial
H1 = H0 - 4                    # 24  conv1 out spatial
P1 = H1 // 2                   # 12  pool1 out spatial
H2 = P1 - 4                    # 8   conv2 out spatial
P2 = H2 // 2                   # 4   pool2 out spatial

K1 = 5 * H0                    # 140  conv1 K-stacked contraction
W1H = 256                      # conv1 out half-block (even/odd ow), 128-mult
W1 = 2 * W1H                   # 512  conv1 out width
K2 = 5 * W1H                   # 1280 conv2 K-stacked contraction
W2H = 128                      # conv2 out half-block
W2 = 2 * W2H                   # 256  conv2 out width

F1G, F2G = 120, 84             # per-group fc1/fc2 widths
FPG = 128                      # per-group lane-padded width
F1_PAD = G * FPG               # 256
F2_PAD = G * FPG               # 256
F3_OUT = G * NUM_CLASSES       # 20
F3_PAD = 128                   # lane-dense logits block (sliced to 20 outside)

# Static invariants the pooling / weight-folding tricks rely on.
assert H1 % 2 == 0 and H2 % 2 == 0            # row pairs never cross images
assert P1 * C1 <= W1H and W1H % 128 == 0      # pool1 half-block fits, aligned
assert (H2 // 2) * C2 <= W2H and W2H % 128 == 0
assert F1G <= FPG and F2G <= FPG and F3_OUT <= F3_PAD


# ----------------------------------------------------------------------------
# Fused kernel: conv1+ReLU+pool1 -> conv2+ReLU+pool2 -> fc1 -> fc2 -> fc3.
# One grid step processes a batch tile; weights are VMEM-resident.
# ----------------------------------------------------------------------------
def _packed_lenet_kernel(x_ref, t1_ref, b1_ref, t2_ref, b2_ref,
                         w3_ref, b3_ref, w4_ref, b4_ref, w5_ref, b5_ref,
                         out_ref):
    f32 = jnp.float32
    bf16 = jnp.bfloat16
    Bt = x_ref.shape[0]

    # ---- conv1 (5x5, 1->12) as ONE MXU matmul (K-stacked row slabs) --------
    x = x_ref[...]                                                # (Bt,28,28) bf16
    slab1 = jnp.concatenate(
        [x[:, di:di + H1, :].reshape(Bt * H1, H0) for di in range(5)],
        axis=1)                                                   # (Bt*24, 140)
    y1 = jnp.dot(slab1, t1_ref[...], preferred_element_type=f32)  # (Bt*24, 512)
    y1 = jnp.maximum(y1 + b1_ref[...], 0.0)

    # ---- 2x2 max-pool #1 -----------------------------------------------------
    # Width pairs: even-ow columns live in lanes [0,W1H), odd-ow in [W1H,2*W1H)
    # -> the pool is a max of two 128-aligned halves and is already compacted.
    m1 = jnp.maximum(y1[:, :W1H], y1[:, W1H:])                    # (Bt*24, 256)
    # Height pairs: adjacent rows; 24 rows/image (even) -> never cross images.
    m1 = m1.reshape(Bt * P1, 2, W1H)
    p1 = jnp.maximum(m1[:, 0, :], m1[:, 1, :]).astype(bf16)       # (Bt*12, 256)
    p1 = p1.reshape(Bt, P1, W1H)

    # ---- conv2 (grouped 5x5, 12->32) as ONE MXU matmul -----------------------
    # Group block structure is folded into t2's zero pattern; slab pieces are
    # 256-wide -> the K-stack concat is lane-aligned (pure vreg copies).
    slab2 = jnp.concatenate(
        [p1[:, di:di + H2, :].reshape(Bt * H2, W1H) for di in range(5)],
        axis=1)                                                   # (Bt*8, 1280)
    y2 = jnp.dot(slab2, t2_ref[...], preferred_element_type=f32)  # (Bt*8, 256)
    y2 = jnp.maximum(y2 + b2_ref[...], 0.0)

    # ---- 2x2 max-pool #2 -----------------------------------------------------
    m2 = jnp.maximum(y2[:, :W2H], y2[:, W2H:])                    # (Bt*8, 128)
    m2 = m2.reshape(Bt * P2, 2, W2H)
    p2 = jnp.maximum(m2[:, 0, :], m2[:, 1, :]).astype(bf16)       # (Bt*4, 128)
    p2 = p2.reshape(Bt, P2, W2H)

    # ---- flatten + fc1/fc2/fc3 ------------------------------------------------
    # torch.flatten's channel-major permutation, the pool compaction and the
    # per-estimator block-diagonal structure are all folded into w3/w4/w5
    # (which are lane-padded to 128 multiples on the host).
    xf = jnp.concatenate([p2[:, i, :] for i in range(P2)], axis=1)  # (Bt, 512)
    h = jnp.dot(xf, w3_ref[...], preferred_element_type=f32) + b3_ref[...]
    h = jnp.maximum(h, 0.0).astype(bf16)                          # (Bt, 256)
    h = jnp.dot(h, w4_ref[...], preferred_element_type=f32) + b4_ref[...]
    h = jnp.maximum(h, 0.0).astype(bf16)                          # (Bt, 256)
    out = jnp.dot(h, w5_ref[...], preferred_element_type=f32) + b5_ref[...]
    out_ref[...] = out.astype(out_ref.dtype)                      # (Bt, 128)


def _round_up(n, m):
    return ((n + m - 1) // m) * m


def _resident_spec(a):
    nd = a.ndim
    return pl.BlockSpec(a.shape, lambda i, _nd=nd: (0,) * _nd)


@functools.partial(jax.jit, static_argnames=("batch_tile",))
def packed_lenet_forward(x_nchw, kparams, *, batch_tile=128):
    """Fused PackedLeNet forward.

    batch_tile: images per grid step (multiple of 8).  128 fits comfortably in
    VMEM on v5e/v6e/v7x; on v5e/v6e (128 MiB VMEM) it can be raised to 512+
    together with vmem_limit_bytes.
    """
    B = x_nchw.shape[0]
    assert x_nchw.shape[1] == IN_CHANNELS == 1
    bt = _round_up(min(batch_tile, max(8, _round_up(B, 8))), 8)
    Bp = _round_up(B, bt)

    # in_channels == 1: NCHW -> (B, 28, 28), delivered in bf16 (halves the DMA).
    x = x_nchw.reshape(B, H0, H0).astype(jnp.bfloat16)
    if Bp != B:
        x = jnp.pad(x, ((0, Bp - B), (0, 0), (0, 0)))

    operands = (x,
                kparams["t1"], kparams["b1"],
                kparams["t2"], kparams["b2"],
                kparams["w3"], kparams["b3"],
                kparams["w4"], kparams["b4"],
                kparams["w5"], kparams["b5"])

    flops = 2 * Bp * (H1 * K1 * W1 + H2 * K2 * W2 +
                      (P2 * W2H) * F1_PAD + F1_PAD * F2_PAD + F2_PAD * F3_PAD)
    bytes_accessed = int(sum(int(np.prod(a.shape)) * a.dtype.itemsize
                             for a in operands)) + Bp * F3_PAD * 4

    out = pl.pallas_call(
        _packed_lenet_kernel,
        out_shape=jax.ShapeDtypeStruct((Bp, F3_PAD), jnp.float32),
        grid=(Bp // bt,),
        in_specs=[pl.BlockSpec((bt, H0, H0), lambda i: (i, 0, 0))]
                 + [_resident_spec(a) for a in operands[1:]],
        out_specs=pl.BlockSpec((bt, F3_PAD), lambda i: (i, 0)),
        compiler_params=pltpu.CompilerParams(
            dimension_semantics=("parallel",),            # v7x: 2 TCs split grid
            vmem_limit_bytes=48 * 1024 * 1024),
        cost_estimate=pl.CostEstimate(flops=flops, transcendentals=0,
                                      bytes_accessed=bytes_accessed),
    )(*operands)
    return out[:B, :F3_OUT]


# ----------------------------------------------------------------------------
# Parameters (deterministic synthetic init, PyTorch-like layouts).
# ----------------------------------------------------------------------------
def init_params(key):
    def uni(k, shape, fan_in):
        s = 1.0 / np.sqrt(float(fan_in))
        return jax.random.uniform(k, shape, jnp.float32, -s, s)

    ks = jax.random.split(key, 10)
    p = {}
    p["conv1_w"] = uni(ks[0], (5, 5, IN_CHANNELS, C1), 5 * 5 * IN_CHANNELS)
    p["conv1_b"] = uni(ks[1], (C1,), 5 * 5 * IN_CHANNELS)
    p["conv2_w"] = uni(ks[2], (G, 5, 5, C1G, C2G), 5 * 5 * C1G)
    p["conv2_b"] = uni(ks[3], (G, C2G), 5 * 5 * C1G)
    p["fc1_w"] = uni(ks[4], (G, C2G * P2 * P2, F1G), C2G * P2 * P2)
    p["fc1_b"] = uni(ks[5], (G, F1G), C2G * P2 * P2)
    p["fc2_w"] = uni(ks[6], (G, F1G, F2G), F1G)
    p["fc2_b"] = uni(ks[7], (G, F2G), F1G)
    p["fc3_w"] = uni(ks[8], (G, F2G, NUM_CLASSES), F2G)
    p["fc3_b"] = uni(ks[9], (G, NUM_CLASSES), F2G)
    return p


# ----------------------------------------------------------------------------
# One-time host-side weight folding for the fused kernel.
# ----------------------------------------------------------------------------
def prepare_kernel_params(params, compute_dtype=jnp.bfloat16):
    w1 = np.asarray(params["conv1_w"], np.float32)     # (5, 5, 1, C1)
    b1 = np.asarray(params["conv1_b"], np.float32)
    w2 = np.asarray(params["conv2_w"], np.float32)     # (G, 5, 5, C1G, C2G)
    b2 = np.asarray(params["conv2_b"], np.float32)
    wf1 = np.asarray(params["fc1_w"], np.float32)      # (G, 256, 120)
    bf1 = np.asarray(params["fc1_b"], np.float32)
    wf2 = np.asarray(params["fc2_w"], np.float32)      # (G, 120, 84)
    bf2 = np.asarray(params["fc2_b"], np.float32)
    wf3 = np.asarray(params["fc3_w"], np.float32)      # (G, 84, 10)
    bf3 = np.asarray(params["fc3_b"], np.float32)

    def col1(ow):   # conv1 output column base: even ow -> half 0, odd -> half 1
        return (ow % 2) * W1H + (ow // 2) * C1

    def col2(ow2):  # conv2 output column base
        return (ow2 % 2) * W2H + (ow2 // 2) * C2

    # conv1: K-stacked (over the 5 kernel rows) Toeplitz-along-W matrix.
    t1 = np.zeros((K1, W1), np.float32)
    b1row = np.zeros((1, W1), np.float32)
    for ow in range(H1):
        b1row[0, col1(ow):col1(ow) + C1] = b1
        for di in range(5):
            for dj in range(5):
                t1[di * H0 + ow + dj, col1(ow):col1(ow) + C1] = w1[di, dj, 0, :]

    # conv2: K-stacked grouped Toeplitz; p1 columns are w*C1 + channel.
    t2 = np.zeros((K2, W2), np.float32)
    b2row = np.zeros((1, W2), np.float32)
    for ow2 in range(H2):
        c0 = col2(ow2)
        for g in range(G):
            b2row[0, c0 + g * C2G:c0 + (g + 1) * C2G] = b2[g]
            for di in range(5):
                for dj in range(5):
                    r0 = di * W1H + (ow2 + dj) * C1 + g * C1G
                    t2[r0:r0 + C1G, c0 + g * C2G:c0 + (g + 1) * C2G] = w2[g, di, dj]

    # fc1: fold torch.flatten's channel-major permutation, the pool2 layout and
    # the per-estimator block-diagonal structure; pad each group 120 -> 128.
    w3 = np.zeros((P2 * W2H, F1_PAD), np.float32)
    b3row = np.zeros((1, F1_PAD), np.float32)
    for g in range(G):
        b3row[0, g * FPG:g * FPG + F1G] = bf1[g]
        for ph in range(P2):
            for pw in range(P2):
                for ocg in range(C2G):
                    k = ph * W2H + pw * C2 + g * C2G + ocg
                    fl = ocg * (P2 * P2) + ph * P2 + pw
                    w3[k, g * FPG:g * FPG + F1G] = wf1[g, fl, :]

    # fc2 / fc3: block-diagonal over the two estimators, lane-padded.
    w4 = np.zeros((F1_PAD, F2_PAD), np.float32)
    b4row = np.zeros((1, F2_PAD), np.float32)
    w5 = np.zeros((F2_PAD, F3_PAD), np.float32)
    b5row = np.zeros((1, F3_PAD), np.float32)
    for g in range(G):
        w4[g * FPG:g * FPG + F1G, g * FPG:g * FPG + F2G] = wf2[g]
        b4row[0, g * FPG:g * FPG + F2G] = bf2[g]
        w5[g * FPG:g * FPG + F2G, g * NUM_CLASSES:(g + 1) * NUM_CLASSES] = wf3[g]
        b5row[0, g * NUM_CLASSES:(g + 1) * NUM_CLASSES] = bf3[g]

    return {
        "t1": jnp.asarray(t1, compute_dtype), "b1": jnp.asarray(b1row, jnp.float32),
        "t2": jnp.asarray(t2, compute_dtype), "b2": jnp.asarray(b2row, jnp.float32),
        "w3": jnp.asarray(w3, compute_dtype), "b3": jnp.asarray(b3row, jnp.float32),
        "w4": jnp.asarray(w4, compute_dtype), "b4": jnp.asarray(b4row, jnp.float32),
        "w5": jnp.asarray(w5, compute_dtype), "b5": jnp.asarray(b5row, jnp.float32),
    }


# ----------------------------------------------------------------------------
# Pure-JAX reference (same PackedLeNet semantics) used only to validate.
# ----------------------------------------------------------------------------
@jax.jit
def reference_forward(x_nchw, params):
    f32 = jnp.float32

    def r(w):  # emulate the kernel's bf16 weight rounding
        return jnp.asarray(w, jnp.bfloat16).astype(f32)

    B = x_nchw.shape[0]
    x = x_nchw.astype(f32)
    # conv1 (groups=1)
    w1 = jnp.transpose(r(params["conv1_w"]), (3, 2, 0, 1))          # OIHW
    y = jax.lax.conv_general_dilated(x, w1, (1, 1), "VALID",
                                     dimension_numbers=("NCHW", "OIHW", "NCHW"))
    y = jax.nn.relu(y + params["conv1_b"].reshape(1, -1, 1, 1))
    y = jax.lax.reduce_window(y, -jnp.inf, jax.lax.max,
                              (1, 1, 2, 2), (1, 1, 2, 2), "VALID")
    # conv2 (grouped)
    w2 = jnp.transpose(r(params["conv2_w"]), (0, 4, 3, 1, 2)).reshape(C2, C1G, 5, 5)
    y = jax.lax.conv_general_dilated(y, w2, (1, 1), "VALID",
                                     dimension_numbers=("NCHW", "OIHW", "NCHW"),
                                     feature_group_count=NUM_ESTIMATORS)
    y = jax.nn.relu(y + params["conv2_b"].reshape(1, -1, 1, 1))
    y = jax.lax.reduce_window(y, -jnp.inf, jax.lax.max,
                              (1, 1, 2, 2), (1, 1, 2, 2), "VALID")
    y = y.reshape(B, -1)                                            # torch.flatten

    def packed_linear(v, w, b):
        g, k, n = w.shape
        vg = v.reshape(B, g, k)
        out = jnp.einsum("bgk,gkn->bgn", vg, r(w)) + b[None]
        return out.reshape(B, g * n)

    y = jax.nn.relu(packed_linear(y, params["fc1_w"], params["fc1_b"]))
    y = jax.nn.relu(packed_linear(y, params["fc2_w"], params["fc2_b"]))
    return packed_linear(y, params["fc3_w"], params["fc3_b"])


if __name__ == "__main__":
    key = jax.random.PRNGKey(0)
    pkey, xkey = jax.random.split(key)
    params = init_params(pkey)
    kparams = prepare_kernel_params(params)

    # MNIST-like input implied by fc1's 256*alpha in-features: 28x28, 1 channel.
    x = jax.random.normal(xkey, (2, IN_CHANNELS, H0, H0), jnp.float32)

    logits = packed_lenet_forward(x, kparams)
    jax.block_until_ready(logits)
    assert logits.shape == (2, F3_OUT), logits.shape

    ref = reference_forward(x, params)
    np.testing.assert_allclose(np.asarray(logits), np.asarray(ref),
                               rtol=5e-2, atol=2e-2)
    print("KERNEL_OK")
</pallas_src>

<mosaic_0001>
module attributes {stable_mosaic.version = 11 : i64} {
  func.func @_packed_lenet_kernel(%arg0: i32, %arg1: memref<8x28x28xbf16, #tpu.memory_space<vmem>>, %arg2: memref<140x512xbf16, #tpu.memory_space<vmem>>, %arg3: memref<1x512xf32, #tpu.memory_space<vmem>>, %arg4: memref<1280x256xbf16, #tpu.memory_space<vmem>>, %arg5: memref<1x256xf32, #tpu.memory_space<vmem>>, %arg6: memref<512x256xbf16, #tpu.memory_space<vmem>>, %arg7: memref<1x256xf32, #tpu.memory_space<vmem>>, %arg8: memref<256x256xbf16, #tpu.memory_space<vmem>>, %arg9: memref<1x256xf32, #tpu.memory_space<vmem>>, %arg10: memref<256x128xbf16, #tpu.memory_space<vmem>>, %arg11: memref<1x128xf32, #tpu.memory_space<vmem>>, %arg12: memref<8x128xf32, #tpu.memory_space<vmem>>) attributes {dimension_semantics = [#tpu.dimension_semantics<parallel>], iteration_bounds = array<i64: 1>, scalar_prefetch = 0 : i64, scratch_operands = 0 : i64, tpu.core_type = #tpu.core_type<tc>, window_params = [{transform_indices = @transform_0, window_bounds = array<i64: 8, 28, 28>}, {pipeline_mode = #tpu.pipeline_mode<synchronous>, transform_indices = @transform_1, window_bounds = array<i64: 140, 512>}, {pipeline_mode = #tpu.pipeline_mode<synchronous>, transform_indices = @transform_2, window_bounds = array<i64: 1, 512>}, {pipeline_mode = #tpu.pipeline_mode<synchronous>, transform_indices = @transform_3, window_bounds = array<i64: 1280, 256>}, {pipeline_mode = #tpu.pipeline_mode<synchronous>, transform_indices = @transform_4, window_bounds = array<i64: 1, 256>}, {pipeline_mode = #tpu.pipeline_mode<synchronous>, transform_indices = @transform_5, window_bounds = array<i64: 512, 256>}, {pipeline_mode = #tpu.pipeline_mode<synchronous>, transform_indices = @transform_6, window_bounds = array<i64: 1, 256>}, {pipeline_mode = #tpu.pipeline_mode<synchronous>, transform_indices = @transform_7, window_bounds = array<i64: 256, 256>}, {pipeline_mode = #tpu.pipeline_mode<synchronous>, transform_indices = @transform_8, window_bounds = array<i64: 1, 256>}, {pipeline_mode = #tpu.pipeline_mode<synchronous>, transform_indices = @transform_9, window_bounds = array<i64: 256, 128>}, {pipeline_mode = #tpu.pipeline_mode<synchronous>, transform_indices = @transform_10, window_bounds = array<i64: 1, 128>}, {transform_indices = @transform_11, window_bounds = array<i64: 8, 128>}]} {
    %c0 = arith.constant 0 : index
    %c0_0 = arith.constant 0 : index
    %c0_1 = arith.constant 0 : index
    %0 = vector.load %arg1[%c0, %c0_0, %c0_1] : memref<8x28x28xbf16, #tpu.memory_space<vmem>>, vector<8x28x28xbf16>
    %1 = vector.extract_strided_slice %0 {offsets = [0, 0, 0], sizes = [8, 24, 28], strides = [1, 1, 1]} : vector<8x28x28xbf16> to vector<8x24x28xbf16>
    %2 = vector.shape_cast %1 : vector<8x24x28xbf16> to vector<192x28xbf16>
    %3 = vector.extract_strided_slice %0 {offsets = [0, 1, 0], sizes = [8, 24, 28], strides = [1, 1, 1]} : vector<8x28x28xbf16> to vector<8x24x28xbf16>
    %4 = vector.shape_cast %3 : vector<8x24x28xbf16> to vector<192x28xbf16>
    %5 = vector.extract_strided_slice %0 {offsets = [0, 2, 0], sizes = [8, 24, 28], strides = [1, 1, 1]} : vector<8x28x28xbf16> to vector<8x24x28xbf16>
    %6 = vector.shape_cast %5 : vector<8x24x28xbf16> to vector<192x28xbf16>
    %7 = vector.extract_strided_slice %0 {offsets = [0, 3, 0], sizes = [8, 24, 28], strides = [1, 1, 1]} : vector<8x28x28xbf16> to vector<8x24x28xbf16>
    %8 = vector.shape_cast %7 : vector<8x24x28xbf16> to vector<192x28xbf16>
    %9 = vector.extract_strided_slice %0 {offsets = [0, 4, 0], sizes = [8, 24, 28], strides = [1, 1, 1]} : vector<8x28x28xbf16> to vector<8x24x28xbf16>
    %10 = vector.shape_cast %9 : vector<8x24x28xbf16> to vector<192x28xbf16>
    %11 = tpu.concatenate %2, %4, %6, %8, %10 in 1 : vector<192x28xbf16>, vector<192x28xbf16>, vector<192x28xbf16>, vector<192x28xbf16>, vector<192x28xbf16> -> vector<192x140xbf16>
    %c0_2 = arith.constant 0 : index
    %c0_3 = arith.constant 0 : index
    %12 = vector.load %arg2[%c0_2, %c0_3] : memref<140x512xbf16, #tpu.memory_space<vmem>>, vector<140x512xbf16>
    %cst = arith.constant dense<0.000000e+00> : vector<192x512xf32>
    %13 = tpu.matmul %11, %12, %cst {dimension_numbers = #tpu.dot_dimension_numbers<[1], [0], [0], [1], [0, 0, 1, 1], [], []>} : vector<192x140xbf16>, vector<140x512xbf16>, vector<192x512xf32> -> vector<192x512xf32>
    %c0_4 = arith.constant 0 : index
    %c0_5 = arith.constant 0 : index
    %14 = vector.load %arg3[%c0_4, %c0_5] : memref<1x512xf32, #tpu.memory_space<vmem>>, vector<1x512xf32>
    %15 = vector.broadcast %14 : vector<1x512xf32> to vector<192x512xf32>
    %16 = arith.addf %13, %15 : vector<192x512xf32>
    %cst_6 = arith.constant 0.000000e+00 : f32
    %17 = vector.broadcast %cst_6 : f32 to vector<192x512xf32>
    %18 = arith.maximumf %16, %17 : vector<192x512xf32>
    %19 = vector.extract_strided_slice %18 {offsets = [0, 0], sizes = [192, 256], strides = [1, 1]} : vector<192x512xf32> to vector<192x256xf32>
    %20 = vector.extract_strided_slice %18 {offsets = [0, 256], sizes = [192, 256], strides = [1, 1]} : vector<192x512xf32> to vector<192x256xf32>
    %21 = arith.maximumf %19, %20 : vector<192x256xf32>
    %22 = vector.shape_cast %21 : vector<192x256xf32> to vector<96x2x256xf32>
    %23 = vector.extract_strided_slice %22 {offsets = [0, 0, 0], sizes = [96, 1, 256], strides = [1, 1, 1]} : vector<96x2x256xf32> to vector<96x1x256xf32>
    %24 = vector.shape_cast %23 : vector<96x1x256xf32> to vector<96x256xf32>
    %25 = vector.extract_strided_slice %22 {offsets = [0, 1, 0], sizes = [96, 1, 256], strides = [1, 1, 1]} : vector<96x2x256xf32> to vector<96x1x256xf32>
    %26 = vector.shape_cast %25 : vector<96x1x256xf32> to vector<96x256xf32>
    %27 = arith.maximumf %24, %26 : vector<96x256xf32>
    %28 = arith.truncf %27 : vector<96x256xf32> to vector<96x256xbf16>
    %29 = vector.shape_cast %28 : vector<96x256xbf16> to vector<8x12x256xbf16>
    %30 = vector.extract_strided_slice %29 {offsets = [0, 0, 0], sizes = [8, 8, 256], strides = [1, 1, 1]} : vector<8x12x256xbf16> to vector<8x8x256xbf16>
    %31 = vector.shape_cast %30 : vector<8x8x256xbf16> to vector<64x256xbf16>
    %32 = vector.extract_strided_slice %29 {offsets = [0, 1, 0], sizes = [8, 8, 256], strides = [1, 1, 1]} : vector<8x12x256xbf16> to vector<8x8x256xbf16>
    %33 = vector.shape_cast %32 : vector<8x8x256xbf16> to vector<64x256xbf16>
    %34 = vector.extract_strided_slice %29 {offsets = [0, 2, 0], sizes = [8, 8, 256], strides = [1, 1, 1]} : vector<8x12x256xbf16> to vector<8x8x256xbf16>
    %35 = vector.shape_cast %34 : vector<8x8x256xbf16> to vector<64x256xbf16>
    %36 = vector.extract_strided_slice %29 {offsets = [0, 3, 0], sizes = [8, 8, 256], strides = [1, 1, 1]} : vector<8x12x256xbf16> to vector<8x8x256xbf16>
    %37 = vector.shape_cast %36 : vector<8x8x256xbf16> to vector<64x256xbf16>
    %38 = vector.extract_strided_slice %29 {offsets = [0, 4, 0], sizes = [8, 8, 256], strides = [1, 1, 1]} : vector<8x12x256xbf16> to vector<8x8x256xbf16>
    %39 = vector.shape_cast %38 : vector<8x8x256xbf16> to vector<64x256xbf16>
    %40 = tpu.concatenate %31, %33, %35, %37, %39 in 1 : vector<64x256xbf16>, vector<64x256xbf16>, vector<64x256xbf16>, vector<64x256xbf16>, vector<64x256xbf16> -> vector<64x1280xbf16>
    %c0_7 = arith.constant 0 : index
    %c0_8 = arith.constant 0 : index
    %41 = vector.load %arg4[%c0_7, %c0_8] : memref<1280x256xbf16, #tpu.memory_space<vmem>>, vector<1280x256xbf16>
    %cst_9 = arith.constant dense<0.000000e+00> : vector<64x256xf32>
    %42 = tpu.matmul %40, %41, %cst_9 {dimension_numbers = #tpu.dot_dimension_numbers<[1], [0], [0], [1], [0, 0, 1, 1], [], []>} : vector<64x1280xbf16>, vector<1280x256xbf16>, vector<64x256xf32> -> vector<64x256xf32>
    %c0_10 = arith.constant 0 : index
    %c0_11 = arith.constant 0 : index
    %43 = vector.load %arg5[%c0_10, %c0_11] : memref<1x256xf32, #tpu.memory_space<vmem>>, vector<1x256xf32>
    %44 = vector.broadcast %43 : vector<1x256xf32> to vector<64x256xf32>
    %45 = arith.addf %42, %44 : vector<64x256xf32>
    %cst_12 = arith.constant 0.000000e+00 : f32
    %46 = vector.broadcast %cst_12 : f32 to vector<64x256xf32>
    %47 = arith.maximumf %45, %46 : vector<64x256xf32>
    %48 = vector.extract_strided_slice %47 {offsets = [0, 0], sizes = [64, 128], strides = [1, 1]} : vector<64x256xf32> to vector<64x128xf32>
    %49 = vector.extract_strided_slice %47 {offsets = [0, 128], sizes = [64, 128], strides = [1, 1]} : vector<64x256xf32> to vector<64x128xf32>
    %50 = arith.maximumf %48, %49 : vector<64x128xf32>
    %51 = vector.shape_cast %50 : vector<64x128xf32> to vector<32x2x128xf32>
    %52 = vector.extract_strided_slice %51 {offsets = [0, 0, 0], sizes = [32, 1, 128], strides = [1, 1, 1]} : vector<32x2x128xf32> to vector<32x1x128xf32>
    %53 = vector.shape_cast %52 : vector<32x1x128xf32> to vector<32x128xf32>
    %54 = vector.extract_strided_slice %51 {offsets = [0, 1, 0], sizes = [32, 1, 128], strides = [1, 1, 1]} : vector<32x2x128xf32> to vector<32x1x128xf32>
    %55 = vector.shape_cast %54 : vector<32x1x128xf32> to vector<32x128xf32>
    %56 = arith.maximumf %53, %55 : vector<32x128xf32>
    %57 = arith.truncf %56 : vector<32x128xf32> to vector<32x128xbf16>
    %58 = vector.shape_cast %57 : vector<32x128xbf16> to vector<8x4x128xbf16>
    %59 = vector.extract_strided_slice %58 {offsets = [0, 0, 0], sizes = [8, 1, 128], strides = [1, 1, 1]} : vector<8x4x128xbf16> to vector<8x1x128xbf16>
    %60 = vector.shape_cast %59 : vector<8x1x128xbf16> to vector<8x128xbf16>
    %61 = vector.extract_strided_slice %58 {offsets = [0, 1, 0], sizes = [8, 1, 128], strides = [1, 1, 1]} : vector<8x4x128xbf16> to vector<8x1x128xbf16>
    %62 = vector.shape_cast %61 : vector<8x1x128xbf16> to vector<8x128xbf16>
    %63 = vector.extract_strided_slice %58 {offsets = [0, 2, 0], sizes = [8, 1, 128], strides = [1, 1, 1]} : vector<8x4x128xbf16> to vector<8x1x128xbf16>
    %64 = vector.shape_cast %63 : vector<8x1x128xbf16> to vector<8x128xbf16>
    %65 = vector.extract_strided_slice %58 {offsets = [0, 3, 0], sizes = [8, 1, 128], strides = [1, 1, 1]} : vector<8x4x128xbf16> to vector<8x1x128xbf16>
    %66 = vector.shape_cast %65 : vector<8x1x128xbf16> to vector<8x128xbf16>
    %67 = tpu.concatenate %60, %62, %64, %66 in 1 : vector<8x128xbf16>, vector<8x128xbf16>, vector<8x128xbf16>, vector<8x128xbf16> -> vector<8x512xbf16>
    %c0_13 = arith.constant 0 : index
    %c0_14 = arith.constant 0 : index
    %68 = vector.load %arg6[%c0_13, %c0_14] : memref<512x256xbf16, #tpu.memory_space<vmem>>, vector<512x256xbf16>
    %cst_15 = arith.constant dense<0.000000e+00> : vector<8x256xf32>
    %69 = tpu.matmul %67, %68, %cst_15 {dimension_numbers = #tpu.dot_dimension_numbers<[1], [0], [0], [1], [0, 0, 1, 1], [], []>} : vector<8x512xbf16>, vector<512x256xbf16>, vector<8x256xf32> -> vector<8x256xf32>
    %c0_16 = arith.constant 0 : index
    %c0_17 = arith.constant 0 : index
    %70 = vector.load %arg7[%c0_16, %c0_17] : memref<1x256xf32, #tpu.memory_space<vmem>>, vector<1x256xf32>
    %71 = vector.broadcast %70 : vector<1x256xf32> to vector<8x256xf32>
    %72 = arith.addf %69, %71 : vector<8x256xf32>
    %cst_18 = arith.constant 0.000000e+00 : f32
    %73 = vector.broadcast %cst_18 : f32 to vector<8x256xf32>
    %74 = arith.maximumf %72, %73 : vector<8x256xf32>
    %75 = arith.truncf %74 : vector<8x256xf32> to vector<8x256xbf16>
    %c0_19 = arith.constant 0 : index
    %c0_20 = arith.constant 0 : index
    %76 = vector.load %arg8[%c0_19, %c0_20] : memref<256x256xbf16, #tpu.memory_space<vmem>>, vector<256x256xbf16>
    %cst_21 = arith.constant dense<0.000000e+00> : vector<8x256xf32>
    %77 = tpu.matmul %75, %76, %cst_21 {dimension_numbers = #tpu.dot_dimension_numbers<[1], [0], [0], [1], [0, 0, 1, 1], [], []>} : vector<8x256xbf16>, vector<256x256xbf16>, vector<8x256xf32> -> vector<8x256xf32>
    %c0_22 = arith.constant 0 : index
    %c0_23 = arith.constant 0 : index
    %78 = vector.load %arg9[%c0_22, %c0_23] : memref<1x256xf32, #tpu.memory_space<vmem>>, vector<1x256xf32>
    %79 = vector.broadcast %78 : vector<1x256xf32> to vector<8x256xf32>
    %80 = arith.addf %77, %79 : vector<8x256xf32>
    %cst_24 = arith.constant 0.000000e+00 : f32
    %81 = vector.broadcast %cst_24 : f32 to vector<8x256xf32>
    %82 = arith.maximumf %80, %81 : vector<8x256xf32>
    %83 = arith.truncf %82 : vector<8x256xf32> to vector<8x256xbf16>
    %c0_25 = arith.constant 0 : index
    %c0_26 = arith.constant 0 : index
    %84 = vector.load %arg10[%c0_25, %c0_26] : memref<256x128xbf16, #tpu.memory_space<vmem>>, vector<256x128xbf16>
    %cst_27 = arith.constant dense<0.000000e+00> : vector<8x128xf32>
    %85 = tpu.matmul %83, %84, %cst_27 {dimension_numbers = #tpu.dot_dimension_numbers<[1], [0], [0], [1], [0, 0, 1, 1], [], []>} : vector<8x256xbf16>, vector<256x128xbf16>, vector<8x128xf32> -> vector<8x128xf32>
    %c0_28 = arith.constant 0 : index
    %c0_29 = arith.constant 0 : index
    %86 = vector.load %arg11[%c0_28, %c0_29] : memref<1x128xf32, #tpu.memory_space<vmem>>, vector<1x128xf32>
    %87 = vector.broadcast %86 : vector<1x128xf32> to vector<8x128xf32>
    %88 = arith.addf %85, %87 : vector<8x128xf32>
    %c0_30 = arith.constant 0 : index
    %c0_31 = arith.constant 0 : index
    %89 = vector.load %arg12[%c0_30, %c0_31] : memref<8x128xf32, #tpu.memory_space<vmem>>, vector<8x128xf32>
    tpu.vector_store %arg12[%c0_30, %c0_31], %88 {strides = array<i32>} : memref<8x128xf32, #tpu.memory_space<vmem>>, vector<8x128xf32>,
    return
  }
  func.func @transform_0(%arg0: i32) -> (i32, i32, i32) {
    %c0_i32 = arith.constant 0 : i32
    %c0_i32_0 = arith.constant 0 : i32
    %c0_i32_1 = arith.constant 0 : i32
    return %arg0, %c0_i32, %c0_i32_0 : i32, i32, i32
  }
  func.func @transform_1(%arg0: i32) -> (i32, i32) {
    %c0_i32 = arith.constant 0 : i32
    %c0_i32_0 = arith.constant 0 : i32
    %c0_i32_1 = arith.constant 0 : i32
    return %c0_i32, %c0_i32_0 : i32, i32
  }
  func.func @transform_2(%arg0: i32) -> (i32, i32) {
    %c0_i32 = arith.constant 0 : i32
    %c0_i32_0 = arith.constant 0 : i32
    %c0_i32_1 = arith.constant 0 : i32
    return %c0_i32, %c0_i32_0 : i32, i32
  }
  func.func @transform_3(%arg0: i32) -> (i32, i32) {
    %c0_i32 = arith.constant 0 : i32
    %c0_i32_0 = arith.constant 0 : i32
    %c0_i32_1 = arith.constant 0 : i32
    return %c0_i32, %c0_i32_0 : i32, i32
  }
  func.func @transform_4(%arg0: i32) -> (i32, i32) {
    %c0_i32 = arith.constant 0 : i32
    %c0_i32_0 = arith.constant 0 : i32
    %c0_i32_1 = arith.constant 0 : i32
    return %c0_i32, %c0_i32_0 : i32, i32
  }
  func.func @transform_5(%arg0: i32) -> (i32, i32) {
    %c0_i32 = arith.constant 0 : i32
    %c0_i32_0 = arith.constant 0 : i32
    %c0_i32_1 = arith.constant 0 : i32
    return %c0_i32, %c0_i32_0 : i32, i32
  }
  func.func @transform_6(%arg0: i32) -> (i32, i32) {
    %c0_i32 = arith.constant 0 : i32
    %c0_i32_0 = arith.constant 0 : i32
    %c0_i32_1 = arith.constant 0 : i32
    return %c0_i32, %c0_i32_0 : i32, i32
  }
  func.func @transform_7(%arg0: i32) -> (i32, i32) {
    %c0_i32 = arith.constant 0 : i32
    %c0_i32_0 = arith.constant 0 : i32
    %c0_i32_1 = arith.constant 0 : i32
    return %c0_i32, %c0_i32_0 : i32, i32
  }
  func.func @transform_8(%arg0: i32) -> (i32, i32) {
    %c0_i32 = arith.constant 0 : i32
    %c0_i32_0 = arith.constant 0 : i32
    %c0_i32_1 = arith.constant 0 : i32
    return %c0_i32, %c0_i32_0 : i32, i32
  }
  func.func @transform_9(%arg0: i32) -> (i32, i32) {
    %c0_i32 = arith.constant 0 : i32
    %c0_i32_0 = arith.constant 0 : i32
    %c0_i32_1 = arith.constant 0 : i32
    return %c0_i32, %c0_i32_0 : i32, i32
  }
  func.func @transform_10(%arg0: i32) -> (i32, i32) {
    %c0_i32 = arith.constant 0 : i32
    %c0_i32_0 = arith.constant 0 : i32
    %c0_i32_1 = arith.constant 0 : i32
    return %c0_i32, %c0_i32_0 : i32, i32
  }
  func.func @transform_11(%arg0: i32) -> (i32, i32) {
    %c0_i32 = arith.constant 0 : i32
    %c0_i32_0 = arith.constant 0 : i32
    return %arg0, %c0_i32 : i32, i32
  }
}

</mosaic_0001>

<llo_original>
// kernel: packed_lenet_forward.1
$region0: #{packed_lenet_forward.1}
  #allocation0 [shape = 'u32[]', space=smem, size = 0x4, offset = 0x4, fixed_abs, tag = 'smem constant byte address 0x4 - core index']
  #allocation1 [shape = 'u32[144,128]{1,0:T(1,128)}', space=vmem, size = 0x12000, scoped, tag = 'internal scratch']
  %s0 = inlined_call_operand.vmem [shape: bf16[8,28,28], index: 0, kind: input, shape index: {}]
  %s1 = inlined_call_operand.hbm [shape: bf16[140,512], index: 1, kind: input, shape index: {}]
  %s2 = inlined_call_operand.vmem [shape: f32[1,512], index: 2, kind: input, shape index: {}]
  %s3 = inlined_call_operand.hbm [shape: bf16[1280,256], index: 3, kind: input, shape index: {}]
  %s4 = inlined_call_operand.vmem [shape: f32[1,256], index: 4, kind: input, shape index: {}]
  %s5 = inlined_call_operand.hbm [shape: bf16[512,256], index: 5, kind: input, shape index: {}]
  %s6 = inlined_call_operand.vmem [shape: f32[1,256], index: 6, kind: input, shape index: {}]
  %s7 = inlined_call_operand.vmem [shape: bf16[256,256], index: 7, kind: input, shape index: {}]
  %s8 = inlined_call_operand.vmem [shape: f32[1,256], index: 8, kind: input, shape index: {}]
  %s9 = inlined_call_operand.hbm [shape: bf16[256,128], index: 9, kind: input, shape index: {}]
  %s10 = inlined_call_operand.vmem [shape: f32[1,128], index: 10, kind: input, shape index: {}]
  %s11 = inlined_call_operand.vmem [shape: f32[8,128], index: 11, kind: output, shape index: {}]
  %s12 = sld [smem:[#allocation0]]
  $region70: #{packed_lenet_forward.1} parent=0
    _
  %s14 = ssub.s32 1, %s12
  %s15 = scalar_select 0, %s14, %s12
  $region1: #{packed_lenet_forward.1} parent=0
    #allocation2 [shape = 'u8[147456]{0}', space=vmem, size = 0x24000, scoped, tag = 'input window, operand 1, single buffered']
    #allocation3 [shape = 's32[1]{0}', space=sflag, size = 0x4, scoped, tag = 'scoped memory for packed_lenet_forward.1']
    #allocation4 [shape = 'u8[655360]{0}', space=vmem, size = 0xa0000, scoped, tag = 'input window, operand 3, single buffered']
    #allocation5 [shape = 's32[1]{0}', space=sflag, size = 0x4, scoped, tag = 'scoped memory for packed_lenet_forward.1']
    #allocation6 [shape = 'u8[262144]{0}', space=vmem, size = 0x40000, scoped, tag = 'input window, operand 5, single buffered']
    #allocation7 [shape = 'u8[65536]{0}', space=vmem, size = 0x10000, scoped, tag = 'input window, operand 9, single buffered']
    #allocation8 [shape = 's32[1]{0}', space=sflag, size = 0x4, scoped, tag = 'scoped memory for packed_lenet_forward.1']
    %16 = vsyncpa [#allocation3], 0
    %17 = vsyncpa [#allocation5], 0
    %18 = vsyncpa [#allocation8], 0
    // Predicated region
    $region2: #{packed_lenet_forward.1} parent=1 // pred_check
      _
    $region3: #{packed_lenet_forward.1} parent=1 // pred_check_branch
      %20 = sbr.rel (0) target = $region5
    $region4: #{packed_lenet_forward.1} parent=1 // pred_region
      _
    $region5: #{packed_lenet_forward.1} parent=1 // pred_fallthru
      _
    // Predicated region
    $region6: #{packed_lenet_forward.1} parent=1 // pred_check
      _
    $region7: #{packed_lenet_forward.1} parent=1 // pred_check_branch
      %22 = sbr.rel (0) target = $region9
    $region8: #{packed_lenet_forward.1} parent=1 // pred_region
      %s24 = ssub.s32 4608, 4608
      %25 = vsyncadd [#allocation3], %s24
      %s26 = sshll.u32 [#allocation2], 4
      %s27 = int_to_ptr.vmem [resolvable:$true] %s26
      %32 = dma.hbm_to_vmem [thread:$0]  %s1, 4608, %s27, [#allocation3], 256, 256, 16
    $region9: #{packed_lenet_forward.1} parent=1 // pred_fallthru
      _
    // Predicated region
    $region10: #{packed_lenet_forward.1} parent=1 // pred_check
      _
    $region11: #{packed_lenet_forward.1} parent=1 // pred_check_branch
      %34 = sbr.rel (0) target = $region13
    $region12: #{packed_lenet_forward.1} parent=1 // pred_region
      _
    $region13: #{packed_lenet_forward.1} parent=1 // pred_fallthru
      _
    // Predicated region
    $region14: #{packed_lenet_forward.1} parent=1 // pred_check
      _
    $region15: #{packed_lenet_forward.1} parent=1 // pred_check_branch
      %36 = sbr.rel (0) target = $region17
    $region16: #{packed_lenet_forward.1} parent=1 // pred_region
      %s38 = ssub.s32 20480, 20480
      %39 = vsyncadd [#allocation5], %s38
      %s40 = sshll.u32 [#allocation4], 4
      %s41 = int_to_ptr.vmem [resolvable:$true] %s40
      %46 = dma.hbm_to_vmem [thread:$0]  %s3, 20480, %s41, [#allocation5], 128, 128, 8
    $region17: #{packed_lenet_forward.1} parent=1 // pred_fallthru
      _
    // Predicated region
    $region18: #{packed_lenet_forward.1} parent=1 // pred_check
      _
    $region19: #{packed_lenet_forward.1} parent=1 // pred_check_branch
      %48 = sbr.rel (0) target = $region21
    $region20: #{packed_lenet_forward.1} parent=1 // pred_region
      _
    $region21: #{packed_lenet_forward.1} parent=1 // pred_fallthru
      _
    // Predicated region
    $region22: #{packed_lenet_forward.1} parent=1 // pred_check
      _
    $region23: #{packed_lenet_forward.1} parent=1 // pred_check_branch
      %50 = sbr.rel (0) target = $region25
    $region24: #{packed_lenet_forward.1} parent=1 // pred_region
      %s52 = ssub.s32 8192, 8192
      %53 = vsyncadd [#allocation5], %s52
      %s54 = sshll.u32 [#allocation6], 4
      %s55 = int_to_ptr.vmem [resolvable:$true] %s54
      %60 = dma.hbm_to_vmem [thread:$0]  %s5, 8192, %s55, [#allocation5], 128, 128, 8
    $region25: #{packed_lenet_forward.1} parent=1 // pred_fallthru
      _
    // Predicated region
    $region26: #{packed_lenet_forward.1} parent=1 // pred_check
      _
    $region27: #{packed_lenet_forward.1} parent=1 // pred_check_branch
      %62 = sbr.rel (0) target = $region29
    $region28: #{packed_lenet_forward.1} parent=1 // pred_region
      _
    $region29: #{packed_lenet_forward.1} parent=1 // pred_fallthru
      _
    // Predicated region
    $region30: #{packed_lenet_forward.1} parent=1 // pred_check
      _
    $region31: #{packed_lenet_forward.1} parent=1 // pred_check_branch
      %64 = sbr.rel (0) target = $region33
    $region32: #{packed_lenet_forward.1} parent=1 // pred_region
      _
    $region33: #{packed_lenet_forward.1} parent=1 // pred_fallthru
      _
    // Predicated region
    $region34: #{packed_lenet_forward.1} parent=1 // pred_check
      _
    $region35: #{packed_lenet_forward.1} parent=1 // pred_check_branch
      %66 = sbr.rel (0) target = $region37
    $region36: #{packed_lenet_forward.1} parent=1 // pred_region
      _
    $region37: #{packed_lenet_forward.1} parent=1 // pred_fallthru
      _
    // Predicated region
    $region38: #{packed_lenet_forward.1} parent=1 // pred_check
      _
    $region39: #{packed_lenet_forward.1} parent=1 // pred_check_branch
      %68 = sbr.rel (0) target = $region41
    $region40: #{packed_lenet_forward.1} parent=1 // pred_region
      %s70 = ssub.s32 2048, 2048
      %71 = vsyncadd [#allocation8], %s70
      %s72 = sshll.u32 [#allocation7], 4
      %s73 = int_to_ptr.vmem [resolvable:$true] %s72
      %78 = dma.hbm_to_vmem [thread:$0]  %s9, 2048, %s73, [#allocation8], 64, 64, 4
    $region41: #{packed_lenet_forward.1} parent=1 // pred_fallthru
      _
    // Predicated region
    $region42: #{packed_lenet_forward.1} parent=1 // pred_check
      _
    $region43: #{packed_lenet_forward.1} parent=1 // pred_check_branch
      %80 = sbr.rel (0) target = $region45
    $region44: #{packed_lenet_forward.1} parent=1 // pred_region
      _
    $region45: #{packed_lenet_forward.1} parent=1 // pred_fallthru
      _
    // Predicated region
    $region46: #{packed_lenet_forward.1} parent=1 // pred_check
      _
    $region47: #{packed_lenet_forward.1} parent=1 // pred_check_branch
      %82 = sbr.rel (0) target = $region49
    $region48: #{packed_lenet_forward.1} parent=1 // pred_region
      %83 = dma.done [#allocation3], 4608
    $region49: #{packed_lenet_forward.1} parent=1 // pred_fallthru
      _
    // Predicated region
    $region50: #{packed_lenet_forward.1} parent=1 // pred_check
      _
    $region51: #{packed_lenet_forward.1} parent=1 // pred_check_branch
      %85 = sbr.rel (0) target = $region53
    $region52: #{packed_lenet_forward.1} parent=1 // pred_region
      %86 = dma.done [#allocation5], 20480
    $region53: #{packed_lenet_forward.1} parent=1 // pred_fallthru
      _
    // Predicated region
    $region54: #{packed_lenet_forward.1} parent=1 // pred_check
      _
    $region55: #{packed_lenet_forward.1} parent=1 // pred_check_branch
      %88 = sbr.rel (0) target = $region57
    $region56: #{packed_lenet_forward.1} parent=1 // pred_region
      %89 = dma.done [#allocation5], 8192
    $region57: #{packed_lenet_forward.1} parent=1 // pred_fallthru
      _
    // Predicated region
    $region58: #{packed_lenet_forward.1} parent=1 // pred_check
      _
    $region59: #{packed_lenet_forward.1} parent=1 // pred_check_branch
      %91 = sbr.rel (0) target = $region61
    $region60: #{packed_lenet_forward.1} parent=1 // pred_region
      %92 = dma.done [#allocation8], 2048
    $region61: #{packed_lenet_forward.1} parent=1 // pred_fallthru
      _
    %v94 = vld [vmem:[%s0] sm:$0xf]
    %v95 = vld [vmem:[%s0 + $0x4] sm:$0xf]
    %v96 = vld [vmem:[%s0 + $0x8] sm:$0xf]
    %v97 = vld [vmem:[%s0 + $0xc] sm:$0x3]
    %v98 = vld [vmem:[%s0 + $0x10] sm:$0xf]
    %v99 = vld [vmem:[%s0 + $0x14] sm:$0xf]
    %v100 = vld [vmem:[%s0 + $0x18] sm:$0xf]
    %v101 = vld [vmem:[%s0 + $0x1c] sm:$0x3]
    %v102 = vld [vmem:[%s0 + $0x20] sm:$0xf]
    %v103 = vld [vmem:[%s0 + $0x24] sm:$0xf]
    %v104 = vld [vmem:[%s0 + $0x28] sm:$0xf]
    %v105 = vld [vmem:[%s0 + $0x2c] sm:$0x3]
    %v106 = vld [vmem:[%s0 + $0x30] sm:$0xf]
    %v107 = vld [vmem:[%s0 + $0x34] sm:$0xf]
    %v108 = vld [vmem:[%s0 + $0x38] sm:$0xf]
    %v109 = vld [vmem:[%s0 + $0x3c] sm:$0x3]
    %v110 = vld [vmem:[%s0 + $0x40] sm:$0xf]
    %v111 = vld [vmem:[%s0 + $0x44] sm:$0xf]
    %v112 = vld [vmem:[%s0 + $0x48] sm:$0xf]
    %v113 = vld [vmem:[%s0 + $0x4c] sm:$0x3]
    %v114 = vld [vmem:[%s0 + $0x50] sm:$0xf]
    %v115 = vld [vmem:[%s0 + $0x54] sm:$0xf]
    %v116 = vld [vmem:[%s0 + $0x58] sm:$0xf]
    %v117 = vld [vmem:[%s0 + $0x5c] sm:$0x3]
    %v118 = vld [vmem:[%s0 + $0x60] sm:$0xf]
    %v119 = vld [vmem:[%s0 + $0x64] sm:$0xf]
    %v120 = vld [vmem:[%s0 + $0x68] sm:$0xf]
    %v121 = vld [vmem:[%s0 + $0x6c] sm:$0x3]
    %v122 = vld [vmem:[%s0 + $0x70] sm:$0xf]
    %v123 = vld [vmem:[%s0 + $0x74] sm:$0xf]
    %v124 = vld [vmem:[%s0 + $0x78] sm:$0xf]
    %v125 = vld [vmem:[%s0 + $0x7c] sm:$0x3]
    %vm126 = vsmask.f32 3328
    %vm127 = vsmask.f32 7440
    %vm128 = vmor %vm126, %vm127
    %v130 = vshrl.u32 %v94, 16
    %v132 = vrot.slane %v130, 4
    %v133 = vshll.u32 %v94, 16
    %v135 = vrot.slane %v133, 5
    %v136 = vor.u32 %v132, %v135
    %v137 = vrot.slane %v136, 4
    %v139 = vshll.u32 %v95, 16
    %v141 = vrot.slane %v139, 5
    %v142 = vsel %vm128, %v137, %v141
    %v143 = vshrl.u32 %v95, 16
    %v145 = vrot.slane %v143, 4
    %v146 = vor.u32 %v145, %v141
    %v147 = vrot.slane %v146, 4
    %v149 = vshll.u32 %v96, 16
    %v151 = vrot.slane %v149, 5
    %v152 = vsel %vm128, %v147, %v151
    %v153 = vshrl.u32 %v96, 16
    %v155 = vrot.slane %v153, 4
    %v156 = vor.u32 %v155, %v151
    %v157 = vrot.slane %v156, 4
    %v159 = vshll.u32 %v97, 16
    %v161 = vrot.slane %v159, 5
    %v162 = vsel %vm128, %v157, %v161
    %v164 = vshrl.u32 %v98, 16
    %v166 = vrot.slane %v164, 4
    %v167 = vshll.u32 %v98, 16
    %v169 = vrot.slane %v167, 5
    %v170 = vor.u32 %v166, %v169
    %v171 = vrot.slane %v170, 4
    %v173 = vshll.u32 %v99, 16
    %v175 = vrot.slane %v173, 5
    %v176 = vsel %vm128, %v171, %v175
    %v177 = vshrl.u32 %v99, 16
    %v179 = vrot.slane %v177, 4
    %v180 = vor.u32 %v179, %v175
    %v181 = vrot.slane %v180, 4
    %v183 = vshll.u32 %v100, 16
    %v185 = vrot.slane %v183, 5
    %v186 = vsel %vm128, %v181, %v185
    %v187 = vshrl.u32 %v100, 16
    %v189 = vrot.slane %v187, 4
    %v190 = vor.u32 %v189, %v185
    %v191 = vrot.slane %v190, 4
    %v193 = vshll.u32 %v101, 16
    %v195 = vrot.slane %v193, 5
    %v196 = vsel %vm128, %v191, %v195
    %v198 = vshrl.u32 %v102, 16
    %v200 = vrot.slane %v198, 4
    %v201 = vshll.u32 %v102, 16
    %v203 = vrot.slane %v201, 5
    %v204 = vor.u32 %v200, %v203
    %v205 = vrot.slane %v204, 4
    %v207 = vshll.u32 %v103, 16
    %v209 = vrot.slane %v207, 5
    %v210 = vsel %vm128, %v205, %v209
    %v211 = vshrl.u32 %v103, 16
    %v213 = vrot.slane %v211, 4
    %v214 = vor.u32 %v213, %v209
    %v215 = vrot.slane %v214, 4
    %v217 = vshll.u32 %v104, 16
    %v219 = vrot.slane %v217, 5
    %v220 = vsel %vm128, %v215, %v219
    %v221 = vshrl.u32 %v104, 16
    %v223 = vrot.slane %v221, 4
    %v224 = vor.u32 %v223, %v219
    %v225 = vrot.slane %v224, 4
    %v227 = vshll.u32 %v105, 16
    %v229 = vrot.slane %v227, 5
    %v230 = vsel %vm128, %v225, %v229
    %v232 = vshrl.u32 %v106, 16
    %v234 = vrot.slane %v232, 4
    %v235 = vshll.u32 %v106, 16
    %v237 = vrot.slane %v235, 5
    %v238 = vor.u32 %v234, %v237
    %v239 = vrot.slane %v238, 4
    %v241 = vshll.u32 %v107, 16
    %v243 = vrot.slane %v241, 5
    %v244 = vsel %vm128, %v239, %v243
    %v245 = vshrl.u32 %v107, 16
    %v247 = vrot.slane %v245, 4
    %v248 = vor.u32 %v247, %v243
    %v249 = vrot.slane %v248, 4
    %v251 = vshll.u32 %v108, 16
    %v253 = vrot.slane %v251, 5
    %v254 = vsel %vm128, %v249, %v253
    %v255 = vshrl.u32 %v108, 16
    %v257 = vrot.slane %v255, 4
    %v258 = vor.u32 %v257, %v253
    %v259 = vrot.slane %v258, 4
    %v261 = vshll.u32 %v109, 16
    %v263 = vrot.slane %v261, 5
    %v264 = vsel %vm128, %v259, %v263
    %v266 = vshrl.u32 %v110, 16
    %v268 = vrot.slane %v266, 4
    %v269 = vshll.u32 %v110, 16
    %v271 = vrot.slane %v269, 5
    %v272 = vor.u32 %v268, %v271
    %v273 = vrot.slane %v272, 4
    %v275 = vshll.u32 %v111, 16
    %v277 = vrot.slane %v275, 5
    %v278 = vsel %vm128, %v273, %v277
    %v279 = vshrl.u32 %v111, 16
    %v281 = vrot.slane %v279, 4
    %v282 = vor.u32 %v281, %v277
    %v283 = vrot.slane %v282, 4
    %v285 = vshll.u32 %v112, 16
    %v287 = vrot.slane %v285, 5
    %v288 = vsel %vm128, %v283, %v287
    %v289 = vshrl.u32 %v112, 16
    %v291 = vrot.slane %v289, 4
    %v292 = vor.u32 %v291, %v287
    %v293 = vrot.slane %v292, 4
    %v295 = vshll.u32 %v113, 16
    %v297 = vrot.slane %v295, 5
    %v298 = vsel %vm128, %v293, %v297
    %v300 = vshrl.u32 %v114, 16
    %v302 = vrot.slane %v300, 4
    %v303 = vshll.u32 %v114, 16
    %v305 = vrot.slane %v303, 5
    %v306 = vor.u32 %v302, %v305
    %v307 = vrot.slane %v306, 4
    %v309 = vshll.u32 %v115, 16
    %v311 = vrot.slane %v309, 5
    %v312 = vsel %vm128, %v307, %v311
    %v313 = vshrl.u32 %v115, 16
    %v315 = vrot.slane %v313, 4
    %v316 = vor.u32 %v315, %v311
    %v317 = vrot.slane %v316, 4
    %v319 = vshll.u32 %v116, 16
    %v321 = vrot.slane %v319, 5
    %v322 = vsel %vm128, %v317, %v321
    %v323 = vshrl.u32 %v116, 16
    %v325 = vrot.slane %v323, 4
    %v326 = vor.u32 %v325, %v321
    %v327 = vrot.slane %v326, 4
    %v329 = vshll.u32 %v117, 16
    %v331 = vrot.slane %v329, 5
    %v332 = vsel %vm128, %v327, %v331
    %v334 = vshrl.u32 %v118, 16
    %v336 = vrot.slane %v334, 4
    %v337 = vshll.u32 %v118, 16
    %v339 = vrot.slane %v337, 5
    %v340 = vor.u32 %v336, %v339
    %v341 = vrot.slane %v340, 4
    %v343 = vshll.u32 %v119, 16
    %v345 = vrot.slane %v343, 5
    %v346 = vsel %vm128, %v341, %v345
    %v347 = vshrl.u32 %v119, 16
    %v349 = vrot.slane %v347, 4
    %v350 = vor.u32 %v349, %v345
    %v351 = vrot.slane %v350, 4
    %v353 = vshll.u32 %v120, 16
    %v355 = vrot.slane %v353, 5
    %v356 = vsel %vm128, %v351, %v355
    %v357 = vshrl.u32 %v120, 16
    %v359 = vrot.slane %v357, 4
    %v360 = vor.u32 %v359, %v355
    %v361 = vrot.slane %v360, 4
    %v363 = vshll.u32 %v121, 16
    %v365 = vrot.slane %v363, 5
    %v366 = vsel %vm128, %v361, %v365
    %v368 = vshrl.u32 %v122, 16
    %v370 = vrot.slane %v368, 4
    %v371 = vshll.u32 %v122, 16
    %v373 = vrot.slane %v371, 5
    %v374 = vor.u32 %v370, %v373
    %v375 = vrot.slane %v374, 4
    %v377 = vshll.u32 %v123, 16
    %v379 = vrot.slane %v377, 5
    %v380 = vsel %vm128, %v375, %v379
    %v381 = vshrl.u32 %v123, 16
    %v383 = vrot.slane %v381, 4
    %v384 = vor.u32 %v383, %v379
    %v385 = vrot.slane %v384, 4
    %v387 = vshll.u32 %v124, 16
    %v389 = vrot.slane %v387, 5
    %v390 = vsel %vm128, %v385, %v389
    %v391 = vshrl.u32 %v124, 16
    %v393 = vrot.slane %v391, 4
    %v394 = vor.u32 %v393, %v389
    %v395 = vrot.slane %v394, 4
    %v397 = vshll.u32 %v125, 16
    %v399 = vrot.slane %v397, 5
    %v400 = vsel %vm128, %v395, %v399
    %vm433 = vcmask 1042432
    %vm434 = vcmask 1046532
    %vm435 = vmor %vm433, %vm434
    %v436 = vrot.slane %v94, 5
    %v437 = vrot.slane %v436, 4
    %v438 = vrot.slane %v95, 5
    %v439 = vsel %vm435, %v437, %v438
    %v440 = vrot.slane %v438, 4
    %v441 = vrot.slane %v96, 5
    %v442 = vsel %vm435, %v440, %v441
    %v443 = vrot.slane %v441, 4
    %v444 = vrot.slane %v97, 5
    %v445 = vsel %vm435, %v443, %v444
    %v446 = vrot.slane %v98, 5
    %v447 = vrot.slane %v446, 4
    %v448 = vrot.slane %v99, 5
    %v449 = vsel %vm435, %v447, %v448
    %v450 = vrot.slane %v448, 4
    %v451 = vrot.slane %v100, 5
    %v452 = vsel %vm435, %v450, %v451
    %v453 = vrot.slane %v451, 4
    %v454 = vrot.slane %v101, 5
    %v455 = vsel %vm435, %v453, %v454
    %v456 = vrot.slane %v102, 5
    %v457 = vrot.slane %v456, 4
    %v458 = vrot.slane %v103, 5
    %v459 = vsel %vm435, %v457, %v458
    %v460 = vrot.slane %v458, 4
    %v461 = vrot.slane %v104, 5
    %v462 = vsel %vm435, %v460, %v461
    %v463 = vrot.slane %v461, 4
    %v464 = vrot.slane %v105, 5
    %v465 = vsel %vm435, %v463, %v464
    %v466 = vrot.slane %v106, 5
    %v467 = vrot.slane %v466, 4
    %v468 = vrot.slane %v107, 5
    %v469 = vsel %vm435, %v467, %v468
    %v470 = vrot.slane %v468, 4
    %v471 = vrot.slane %v108, 5
    %v472 = vsel %vm435, %v470, %v471
    %v473 = vrot.slane %v471, 4
    %v474 = vrot.slane %v109, 5
    %v475 = vsel %vm435, %v473, %v474
    %v476 = vrot.slane %v110, 5
    %v477 = vrot.slane %v476, 4
    %v478 = vrot.slane %v111, 5
    %v479 = vsel %vm435, %v477, %v478
    %v480 = vrot.slane %v478, 4
    %v481 = vrot.slane %v112, 5
    %v482 = vsel %vm435, %v480, %v481
    %v483 = vrot.slane %v481, 4
    %v484 = vrot.slane %v113, 5
    %v485 = vsel %vm435, %v483, %v484
    %v486 = vrot.slane %v114, 5
    %v487 = vrot.slane %v486, 4
    %v488 = vrot.slane %v115, 5
    %v489 = vsel %vm435, %v487, %v488
    %v490 = vrot.slane %v488, 4
    %v491 = vrot.slane %v116, 5
    %v492 = vsel %vm435, %v490, %v491
    %v493 = vrot.slane %v491, 4
    %v494 = vrot.slane %v117, 5
    %v495 = vsel %vm435, %v493, %v494
    %v496 = vrot.slane %v118, 5
    %v497 = vrot.slane %v496, 4
    %v498 = vrot.slane %v119, 5
    %v499 = vsel %vm435, %v497, %v498
    %v500 = vrot.slane %v498, 4
    %v501 = vrot.slane %v120, 5
    %v502 = vsel %vm435, %v500, %v501
    %v503 = vrot.slane %v501, 4
    %v504 = vrot.slane %v121, 5
    %v505 = vsel %vm435, %v503, %v504
    %v506 = vrot.slane %v122, 5
    %v507 = vrot.slane %v506, 4
    %v508 = vrot.slane %v123, 5
    %v509 = vsel %vm435, %v507, %v508
    %v510 = vrot.slane %v508, 4
    %v511 = vrot.slane %v124, 5
    %v512 = vsel %vm435, %v510, %v511
    %v513 = vrot.slane %v511, 4
    %v514 = vrot.slane %v125, 5
    %v515 = vsel %vm435, %v513, %v514
    %vm516 = vsmask.f32 2304
    %vm517 = vsmask.f32 6416
    %vm518 = vmor %vm516, %vm517
    %v519 = vrot.slane %v130, 5
    %v520 = vrot.slane %v133, 6
    %v521 = vor.u32 %v519, %v520
    %v522 = vrot.slane %v521, 4
    %v523 = vrot.slane %v143, 5
    %v524 = vrot.slane %v139, 6
    %v525 = vor.u32 %v523, %v524
    %v526 = vsel %vm518, %v522, %v525
    %v527 = vrot.slane %v525, 4
    %v528 = vrot.slane %v153, 5
    %v529 = vrot.slane %v149, 6
    %v530 = vor.u32 %v528, %v529
    %v531 = vsel %vm518, %v527, %v530
    %v532 = vrot.slane %v530, 4
    %v533 = vshrl.u32 %v97, 16
    %v535 = vrot.slane %v533, 5
    %v536 = vrot.slane %v159, 6
    %v537 = vor.u32 %v535, %v536
    %v538 = vsel %vm518, %v532, %v537
    %v539 = vrot.slane %v164, 5
    %v540 = vrot.slane %v167, 6
    %v541 = vor.u32 %v539, %v540
    %v542 = vrot.slane %v541, 4
    %v543 = vrot.slane %v177, 5
    %v544 = vrot.slane %v173, 6
    %v545 = vor.u32 %v543, %v544
    %v546 = vsel %vm518, %v542, %v545
    %v547 = vrot.slane %v545, 4
    %v548 = vrot.slane %v187, 5
    %v549 = vrot.slane %v183, 6
    %v550 = vor.u32 %v548, %v549
    %v551 = vsel %vm518, %v547, %v550
    %v552 = vrot.slane %v550, 4
    %v553 = vshrl.u32 %v101, 16
    %v555 = vrot.slane %v553, 5
    %v556 = vrot.slane %v193, 6
    %v557 = vor.u32 %v555, %v556
    %v558 = vsel %vm518, %v552, %v557
    %v559 = vrot.slane %v198, 5
    %v560 = vrot.slane %v201, 6
    %v561 = vor.u32 %v559, %v560
    %v562 = vrot.slane %v561, 4
    %v563 = vrot.slane %v211, 5
    %v564 = vrot.slane %v207, 6
    %v565 = vor.u32 %v563, %v564
    %v566 = vsel %vm518, %v562, %v565
    %v567 = vrot.slane %v565, 4
    %v568 = vrot.slane %v221, 5
    %v569 = vrot.slane %v217, 6
    %v570 = vor.u32 %v568, %v569
    %v571 = vsel %vm518, %v567, %v570
    %v572 = vrot.slane %v570, 4
    %v573 = vshrl.u32 %v105, 16
    %v575 = vrot.slane %v573, 5
    %v576 = vrot.slane %v227, 6
    %v577 = vor.u32 %v575, %v576
    %v578 = vsel %vm518, %v572, %v577
    %v579 = vrot.slane %v232, 5
    %v580 = vrot.slane %v235, 6
    %v581 = vor.u32 %v579, %v580
    %v582 = vrot.slane %v581, 4
    %v583 = vrot.slane %v245, 5
    %v584 = vrot.slane %v241, 6
    %v585 = vor.u32 %v583, %v584
    %v586 = vsel %vm518, %v582, %v585
    %v587 = vrot.slane %v585, 4
    %v588 = vrot.slane %v255, 5
    %v589 = vrot.slane %v251, 6
    %v590 = vor.u32 %v588, %v589
    %v591 = vsel %vm518, %v587, %v590
    %v592 = vrot.slane %v590, 4
    %v593 = vshrl.u32 %v109, 16
    %v595 = vrot.slane %v593, 5
    %v596 = vrot.slane %v261, 6
    %v597 = vor.u32 %v595, %v596
    %v598 = vsel %vm518, %v592, %v597
    %v599 = vrot.slane %v266, 5
    %v600 = vrot.slane %v269, 6
    %v601 = vor.u32 %v599, %v600
    %v602 = vrot.slane %v601, 4
    %v603 = vrot.slane %v279, 5
    %v604 = vrot.slane %v275, 6
    %v605 = vor.u32 %v603, %v604
    %v606 = vsel %vm518, %v602, %v605
    %v607 = vrot.slane %v605, 4
    %v608 = vrot.slane %v289, 5
    %v609 = vrot.slane %v285, 6
    %v610 = vor.u32 %v608, %v609
    %v611 = vsel %vm518, %v607, %v610
    %v612 = vrot.slane %v610, 4
    %v613 = vshrl.u32 %v113, 16
    %v615 = vrot.slane %v613, 5
    %v616 = vrot.slane %v295, 6
    %v617 = vor.u32 %v615, %v616
    %v618 = vsel %vm518, %v612, %v617
    %v619 = vrot.slane %v300, 5
    %v620 = vrot.slane %v303, 6
    %v621 = vor.u32 %v619, %v620
    %v622 = vrot.slane %v621, 4
    %v623 = vrot.slane %v313, 5
    %v624 = vrot.slane %v309, 6
    %v625 = vor.u32 %v623, %v624
    %v626 = vsel %vm518, %v622, %v625
    %v627 = vrot.slane %v625, 4
    %v628 = vrot.slane %v323, 5
    %v629 = vrot.slane %v319, 6
    %v630 = vor.u32 %v628, %v629
    %v631 = vsel %vm518, %v627, %v630
    %v632 = vrot.slane %v630, 4
    %v633 = vshrl.u32 %v117, 16
    %v635 = vrot.slane %v633, 5
    %v636 = vrot.slane %v329, 6
    %v637 = vor.u32 %v635, %v636
    %v638 = vsel %vm518, %v632, %v637
    %v639 = vrot.slane %v334, 5
    %v640 = vrot.slane %v337, 6
    %v641 = vor.u32 %v639, %v640
    %v642 = vrot.slane %v641, 4
    %v643 = vrot.slane %v347, 5
    %v644 = vrot.slane %v343, 6
    %v645 = vor.u32 %v643, %v644
    %v646 = vsel %vm518, %v642, %v645
    %v647 = vrot.slane %v645, 4
    %v648 = vrot.slane %v357, 5
    %v649 = vrot.slane %v353, 6
    %v650 = vor.u32 %v648, %v649
    %v651 = vsel %vm518, %v647, %v650
    %v652 = vrot.slane %v650, 4
    %v653 = vshrl.u32 %v121, 16
    %v655 = vrot.slane %v653, 5
    %v656 = vrot.slane %v363, 6
    %v657 = vor.u32 %v655, %v656
    %v658 = vsel %vm518, %v652, %v657
    %v659 = vrot.slane %v368, 5
    %v660 = vrot.slane %v371, 6
    %v661 = vor.u32 %v659, %v660
    %v662 = vrot.slane %v661, 4
    %v663 = vrot.slane %v381, 5
    %v664 = vrot.slane %v377, 6
    %v665 = vor.u32 %v663, %v664
    %v666 = vsel %vm518, %v662, %v665
    %v667 = vrot.slane %v665, 4
    %v668 = vrot.slane %v391, 5
    %v669 = vrot.slane %v387, 6
    %v670 = vor.u32 %v668, %v669
    %v671 = vsel %vm518, %v667, %v670
    %v672 = vrot.slane %v670, 4
    %v673 = vshrl.u32 %v125, 16
    %v675 = vrot.slane %v673, 5
    %v676 = vrot.slane %v397, 6
    %v677 = vor.u32 %v675, %v676
    %v678 = vsel %vm518, %v672, %v677
    %vm679 = vcmask 1041408
    %vm680 = vcmask 1045508
    %vm681 = vmor %vm679, %vm680
    %v682 = vrot.slane %v94, 6
    %v683 = vrot.slane %v682, 4
    %v684 = vrot.slane %v95, 6
    %v685 = vsel %vm681, %v683, %v684
    %v686 = vrot.slane %v684, 4
    %v687 = vrot.slane %v96, 6
    %v688 = vsel %vm681, %v686, %v687
    %v689 = vrot.slane %v687, 4
    %v690 = vrot.slane %v97, 6
    %v691 = vsel %vm681, %v689, %v690
    %v692 = vrot.slane %v98, 6
    %v693 = vrot.slane %v692, 4
    %v694 = vrot.slane %v99, 6
    %v695 = vsel %vm681, %v693, %v694
    %v696 = vrot.slane %v694, 4
    %v697 = vrot.slane %v100, 6
    %v698 = vsel %vm681, %v696, %v697
    %v699 = vrot.slane %v697, 4
    %v700 = vrot.slane %v101, 6
    %v701 = vsel %vm681, %v699, %v700
    %v702 = vrot.slane %v102, 6
    %v703 = vrot.slane %v702, 4
    %v704 = vrot.slane %v103, 6
    %v705 = vsel %vm681, %v703, %v704
    %v706 = vrot.slane %v704, 4
    %v707 = vrot.slane %v104, 6
    %v708 = vsel %vm681, %v706, %v707
    %v709 = vrot.slane %v707, 4
    %v710 = vrot.slane %v105, 6
    %v711 = vsel %vm681, %v709, %v710
    %v712 = vrot.slane %v106, 6
    %v713 = vrot.slane %v712, 4
    %v714 = vrot.slane %v107, 6
    %v715 = vsel %vm681, %v713, %v714
    %v716 = vrot.slane %v714, 4
    %v717 = vrot.slane %v108, 6
    %v718 = vsel %vm681, %v716, %v717
    %v719 = vrot.slane %v717, 4
    %v720 = vrot.slane %v109, 6
    %v721 = vsel %vm681, %v719, %v720
    %v722 = vrot.slane %v110, 6
    %v723 = vrot.slane %v722, 4
    %v724 = vrot.slane %v111, 6
    %v725 = vsel %vm681, %v723, %v724
    %v726 = vrot.slane %v724, 4
    %v727 = vrot.slane %v112, 6
    %v728 = vsel %vm681, %v726, %v727
    %v729 = vrot.slane %v727, 4
    %v730 = vrot.slane %v113, 6
    %v731 = vsel %vm681, %v729, %v730
    %v732 = vrot.slane %v114, 6
    %v733 = vrot.slane %v732, 4
    %v734 = vrot.slane %v115, 6
    %v735 = vsel %vm681, %v733, %v734
    %v736 = vrot.slane %v734, 4
    %v737 = vrot.slane %v116, 6
    %v738 = vsel %vm681, %v736, %v737
    %v739 = vrot.slane %v737, 4
    %v740 = vrot.slane %v117, 6
    %v741 = vsel %vm681, %v739, %v740
    %v742 = vrot.slane %v118, 6
    %v743 = vrot.slane %v742, 4
    %v744 = vrot.slane %v119, 6
    %v745 = vsel %vm681, %v743, %v744
    %v746 = vrot.slane %v744, 4
    %v747 = vrot.slane %v120, 6
    %v748 = vsel %vm681, %v746, %v747
    %v749 = vrot.slane %v747, 4
    %v750 = vrot.slane %v121, 6
    %v751 = vsel %vm681, %v749, %v750
    %v752 = vrot.slane %v122, 6
    %v753 = vrot.slane %v752, 4
    %v754 = vrot.slane %v123, 6
    %v755 = vsel %vm681, %v753, %v754
    %v756 = vrot.slane %v754, 4
    %v757 = vrot.slane %v124, 6
    %v758 = vsel %vm681, %v756, %v757
    %v759 = vrot.slane %v757, 4
    %v760 = vrot.slane %v125, 6
    %v761 = vsel %vm681, %v759, %v760
    %v762 = vunpack.c.l.b16 %v94
    %v763 = vunpack.c.l.b16 %v95
    %v764 = vunpack.c.l.b16 %v96
    %v765 = vunpack.c.l.b16 %v98
    %v766 = vunpack.c.l.b16 %v99
    %v767 = vunpack.c.l.b16 %v100
    %v768 = vunpack.c.l.b16 %v102
    %v769 = vunpack.c.l.b16 %v103
    %v770 = vunpack.c.l.b16 %v104
    %v771 = vunpack.c.l.b16 %v106
    %v772 = vunpack.c.l.b16 %v107
    %v773 = vunpack.c.l.b16 %v108
    %v774 = vunpack.c.l.b16 %v110
    %v775 = vunpack.c.l.b16 %v111
    %v776 = vunpack.c.l.b16 %v112
    %v777 = vunpack.c.l.b16 %v114
    %v778 = vunpack.c.l.b16 %v115
    %v779 = vunpack.c.l.b16 %v116
    %v780 = vunpack.c.l.b16 %v118
    %v781 = vunpack.c.l.b16 %v119
    %v782 = vunpack.c.l.b16 %v120
    %v783 = vunpack.c.l.b16 %v122
    %v784 = vunpack.c.l.b16 %v123
    %v785 = vunpack.c.l.b16 %v124
    %v786 = vpack.c.b16 %v763, %v762
    %v787 = vpack.c.b16 %v765, %v764
    %v788 = vpack.c.b16 %v767, %v766
    %v789 = vpack.c.b16 %v769, %v768
    %v790 = vpack.c.b16 %v771, %v770
    %v791 = vpack.c.b16 %v773, %v772
    %v792 = vpack.c.b16 %v775, %v774
    %v793 = vpack.c.b16 %v777, %v776
    %v794 = vpack.c.b16 %v779, %v778
    %v795 = vpack.c.b16 %v781, %v780
    %v796 = vpack.c.b16 %v783, %v782
    %v797 = vpack.c.b16 %v785, %v784
    %v798 = vunpack.c.l.b16 %v142
    %v799 = vunpack.c.l.b16 %v152
    %v800 = vunpack.c.l.b16 %v162
    %v801 = vunpack.c.l.b16 %v176
    %v802 = vunpack.c.l.b16 %v186
    %v803 = vunpack.c.l.b16 %v196
    %v804 = vunpack.c.l.b16 %v210
    %v805 = vunpack.c.l.b16 %v220
    %v806 = vunpack.c.l.b16 %v230
    %v807 = vunpack.c.l.b16 %v244
    %v808 = vunpack.c.l.b16 %v254
    %v809 = vunpack.c.l.b16 %v264
    %v810 = vunpack.c.l.b16 %v278
    %v811 = vunpack.c.l.b16 %v288
    %v812 = vunpack.c.l.b16 %v298
    %v813 = vunpack.c.l.b16 %v312
    %v814 = vunpack.c.l.b16 %v322
    %v815 = vunpack.c.l.b16 %v332
    %v816 = vunpack.c.l.b16 %v346
    %v817 = vunpack.c.l.b16 %v356
    %v818 = vunpack.c.l.b16 %v366
    %v819 = vunpack.c.l.b16 %v380
    %v820 = vunpack.c.l.b16 %v390
    %v821 = vunpack.c.l.b16 %v400
    %v822 = vpack.c.b16 %v799, %v798
    %v823 = vpack.c.b16 %v801, %v800
    %v824 = vpack.c.b16 %v803, %v802
    %v825 = vpack.c.b16 %v805, %v804
    %v826 = vpack.c.b16 %v807, %v806
    %v827 = vpack.c.b16 %v809, %v808
    %v828 = vpack.c.b16 %v811, %v810
    %v829 = vpack.c.b16 %v813, %v812
    %v830 = vpack.c.b16 %v815, %v814
    %v831 = vpack.c.b16 %v817, %v816
    %v832 = vpack.c.b16 %v819, %v818
    %v833 = vpack.c.b16 %v821, %v820
    %834 = vrot.lane.b32.xlu0 %v822, 28
    %v835 = vpop.permute.xlu0 %834
    %836 = vrot.lane.b32.xlu0 %v823, 28
    %v837 = vpop.permute.xlu0 %836
    %838 = vrot.lane.b32.xlu0 %v824, 28
    %v839 = vpop.permute.xlu0 %838
    %840 = vrot.lane.b32.xlu0 %v825, 28
    %v841 = vpop.permute.xlu0 %840
    %842 = vrot.lane.b32.xlu0 %v826, 28
    %v843 = vpop.permute.xlu0 %842
    %844 = vrot.lane.b32.xlu0 %v827, 28
    %v845 = vpop.permute.xlu0 %844
    %846 = vrot.lane.b32.xlu0 %v828, 28
    %v847 = vpop.permute.xlu0 %846
    %848 = vrot.lane.b32.xlu0 %v829, 28
    %v849 = vpop.permute.xlu0 %848
    %850 = vrot.lane.b32.xlu0 %v830, 28
    %v851 = vpop.permute.xlu0 %850
    %852 = vrot.lane.b32.xlu0 %v831, 28
    %v853 = vpop.permute.xlu0 %852
    %854 = vrot.lane.b32.xlu0 %v832, 28
    %v855 = vpop.permute.xlu0 %854
    %856 = vrot.lane.b32.xlu0 %v833, 28
    %v857 = vpop.permute.xlu0 %856
    %v858 = vunpack.c.l.b16 %v439
    %v859 = vunpack.c.l.b16 %v442
    %v860 = vunpack.c.l.b16 %v445
    %v861 = vunpack.c.l.b16 %v449
    %v862 = vunpack.c.l.b16 %v452
    %v863 = vunpack.c.l.b16 %v455
    %v864 = vunpack.c.l.b16 %v459
    %v865 = vunpack.c.l.b16 %v462
    %v866 = vunpack.c.l.b16 %v465
    %v867 = vunpack.c.l.b16 %v469
    %v868 = vunpack.c.l.b16 %v472
    %v869 = vunpack.c.l.b16 %v475
    %v870 = vunpack.c.l.b16 %v479
    %v871 = vunpack.c.l.b16 %v482
    %v872 = vunpack.c.l.b16 %v485
    %v873 = vunpack.c.l.b16 %v489
    %v874 = vunpack.c.l.b16 %v492
    %v875 = vunpack.c.l.b16 %v495
    %v876 = vunpack.c.l.b16 %v499
    %v877 = vunpack.c.l.b16 %v502
    %v878 = vunpack.c.l.b16 %v505
    %v879 = vunpack.c.l.b16 %v509
    %v880 = vunpack.c.l.b16 %v512
    %v881 = vunpack.c.l.b16 %v515
    %v882 = vpack.c.b16 %v859, %v858
    %v883 = vpack.c.b16 %v861, %v860
    %v884 = vpack.c.b16 %v863, %v862
    %v885 = vpack.c.b16 %v865, %v864
    %v886 = vpack.c.b16 %v867, %v866
    %v887 = vpack.c.b16 %v869, %v868
    %v888 = vpack.c.b16 %v871, %v870
    %v889 = vpack.c.b16 %v873, %v872
    %v890 = vpack.c.b16 %v875, %v874
    %v891 = vpack.c.b16 %v877, %v876
    %v892 = vpack.c.b16 %v879, %v878
    %v893 = vpack.c.b16 %v881, %v880
    %894 = vrot.lane.b32.xlu0 %v882, 56
    %v895 = vpop.permute.xlu0 %894
    %896 = vrot.lane.b32.xlu0 %v883, 56
    %v897 = vpop.permute.xlu0 %896
    %898 = vrot.lane.b32.xlu0 %v884, 56
    %v899 = vpop.permute.xlu0 %898
    %900 = vrot.lane.b32.xlu0 %v885, 56
    %v901 = vpop.permute.xlu0 %900
    %902 = vrot.lane.b32.xlu0 %v886, 56
    %v903 = vpop.permute.xlu0 %902
    %904 = vrot.lane.b32.xlu0 %v887, 56
    %v905 = vpop.permute.xlu0 %904
    %906 = vrot.lane.b32.xlu0 %v888, 56
    %v907 = vpop.permute.xlu0 %906
    %908 = vrot.lane.b32.xlu0 %v889, 56
    %v909 = vpop.permute.xlu0 %908
    %910 = vrot.lane.b32.xlu0 %v890, 56
    %v911 = vpop.permute.xlu0 %910
    %912 = vrot.lane.b32.xlu0 %v891, 56
    %v913 = vpop.permute.xlu0 %912
    %914 = vrot.lane.b32.xlu0 %v892, 56
    %v915 = vpop.permute.xlu0 %914
    %916 = vrot.lane.b32.xlu0 %v893, 56
    %v917 = vpop.permute.xlu0 %916
    %v918 = vunpack.c.l.b16 %v526
    %v919 = vunpack.c.l.b16 %v531
    %v920 = vunpack.c.l.b16 %v538
    %v921 = vunpack.c.l.b16 %v546
    %v922 = vunpack.c.l.b16 %v551
    %v923 = vunpack.c.l.b16 %v558
    %v924 = vunpack.c.l.b16 %v566
    %v925 = vunpack.c.l.b16 %v571
    %v926 = vunpack.c.l.b16 %v578
    %v927 = vunpack.c.l.b16 %v586
    %v928 = vunpack.c.l.b16 %v591
    %v929 = vunpack.c.l.b16 %v598
    %v930 = vunpack.c.l.b16 %v606
    %v931 = vunpack.c.l.b16 %v611
    %v932 = vunpack.c.l.b16 %v618
    %v933 = vunpack.c.l.b16 %v626
    %v934 = vunpack.c.l.b16 %v631
    %v935 = vunpack.c.l.b16 %v638
    %v936 = vunpack.c.l.b16 %v646
    %v937 = vunpack.c.l.b16 %v651
    %v938 = vunpack.c.l.b16 %v658
    %v939 = vunpack.c.l.b16 %v666
    %v940 = vunpack.c.l.b16 %v671
    %v941 = vunpack.c.l.b16 %v678
    %v942 = vpack.c.b16 %v919, %v918
    %v943 = vpack.c.b16 %v921, %v920
    %v944 = vpack.c.b16 %v923, %v922
    %v945 = vpack.c.b16 %v925, %v924
    %v946 = vpack.c.b16 %v927, %v926
    %v947 = vpack.c.b16 %v929, %v928
    %v948 = vpack.c.b16 %v931, %v930
    %v949 = vpack.c.b16 %v933, %v932
    %v950 = vpack.c.b16 %v935, %v934
    %v951 = vpack.c.b16 %v937, %v936
    %v952 = vpack.c.b16 %v939, %v938
    %v953 = vpack.c.b16 %v941, %v940
    %954 = vrot.lane.b32.xlu0 %v942, 84
    %v955 = vpop.permute.xlu0 %954
    %956 = vrot.lane.b32.xlu0 %v943, 84
    %v957 = vpop.permute.xlu0 %956
    %958 = vrot.lane.b32.xlu0 %v944, 84
    %v959 = vpop.permute.xlu0 %958
    %960 = vrot.lane.b32.xlu0 %v945, 84
    %v961 = vpop.permute.xlu0 %960
    %962 = vrot.lane.b32.xlu0 %v946, 84
    %v963 = vpop.permute.xlu0 %962
    %964 = vrot.lane.b32.xlu0 %v947, 84
    %v965 = vpop.permute.xlu0 %964
    %966 = vrot.lane.b32.xlu0 %v948, 84
    %v967 = vpop.permute.xlu0 %966
    %968 = vrot.lane.b32.xlu0 %v949, 84
    %v969 = vpop.permute.xlu0 %968
    %970 = vrot.lane.b32.xlu0 %v950, 84
    %v971 = vpop.permute.xlu0 %970
    %972 = vrot.lane.b32.xlu0 %v951, 84
    %v973 = vpop.permute.xlu0 %972
    %974 = vrot.lane.b32.xlu0 %v952, 84
    %v975 = vpop.permute.xlu0 %974
    %976 = vrot.lane.b32.xlu0 %v953, 84
    %v977 = vpop.permute.xlu0 %976
    %v978 = vunpack.c.l.b16 %v685
    %v979 = vunpack.c.l.b16 %v688
    %v980 = vunpack.c.l.b16 %v691
    %v981 = vunpack.c.l.b16 %v695
    %v982 = vunpack.c.l.b16 %v698
    %v983 = vunpack.c.l.b16 %v701
    %v984 = vunpack.c.l.b16 %v705
    %v985 = vunpack.c.l.b16 %v708
    %v986 = vunpack.c.l.b16 %v711
    %v987 = vunpack.c.l.b16 %v715
    %v988 = vunpack.c.l.b16 %v718
    %v989 = vunpack.c.l.b16 %v721
    %v990 = vunpack.c.l.b16 %v725
    %v991 = vunpack.c.l.b16 %v728
    %v992 = vunpack.c.l.b16 %v731
    %v993 = vunpack.c.l.b16 %v735
    %v994 = vunpack.c.l.b16 %v738
    %v995 = vunpack.c.l.b16 %v741
    %v996 = vunpack.c.l.b16 %v745
    %v997 = vunpack.c.l.b16 %v748
    %v998 = vunpack.c.l.b16 %v751
    %v999 = vunpack.c.l.b16 %v755
    %v1000 = vunpack.c.l.b16 %v758
    %v1001 = vunpack.c.l.b16 %v761
    %v1002 = vpack.c.b16 %v979, %v978
    %v1003 = vpack.c.b16 %v981, %v980
    %v1004 = vpack.c.b16 %v983, %v982
    %v1005 = vpack.c.b16 %v985, %v984
    %v1006 = vpack.c.b16 %v987, %v986
    %v1007 = vpack.c.b16 %v989, %v988
    %v1008 = vpack.c.b16 %v991, %v990
    %v1009 = vpack.c.b16 %v993, %v992
    %v1010 = vpack.c.b16 %v995, %v994
    %v1011 = vpack.c.b16 %v997, %v996
    %v1012 = vpack.c.b16 %v999, %v998
    %v1013 = vpack.c.b16 %v1001, %v1000
    %1014 = vrot.lane.b32.xlu0 %v1002, 112
    %v1015 = vpop.permute.xlu0 %1014
    %1016 = vrot.lane.b32.xlu0 %v1003, 112
    %v1017 = vpop.permute.xlu0 %1016
    %1018 = vrot.lane.b32.xlu0 %v1004, 112
    %v1019 = vpop.permute.xlu0 %1018
    %1020 = vrot.lane.b32.xlu0 %v1005, 112
    %v1021 = vpop.permute.xlu0 %1020
    %1022 = vrot.lane.b32.xlu0 %v1006, 112
    %v1023 = vpop.permute.xlu0 %1022
    %1024 = vrot.lane.b32.xlu0 %v1007, 112
    %v1025 = vpop.permute.xlu0 %1024
    %1026 = vrot.lane.b32.xlu0 %v1008, 112
    %v1027 = vpop.permute.xlu0 %1026
    %1028 = vrot.lane.b32.xlu0 %v1009, 112
    %v1029 = vpop.permute.xlu0 %1028
    %1030 = vrot.lane.b32.xlu0 %v1010, 112
    %v1031 = vpop.permute.xlu0 %1030
    %1032 = vrot.lane.b32.xlu0 %v1011, 112
    %v1033 = vpop.permute.xlu0 %1032
    %1034 = vrot.lane.b32.xlu0 %v1012, 112
    %v1035 = vpop.permute.xlu0 %1034
    %1036 = vrot.lane.b32.xlu0 %v1013, 112
    %v1037 = vpop.permute.xlu0 %1036
    %vm1038 = vcmask 228352
    %v1041 = vsel %vm1038, %v786, %v835
    %v1044 = vsel %vm1038, %v787, %v837
    %v1047 = vsel %vm1038, %v788, %v839
    %v1050 = vsel %vm1038, %v789, %v841
    %v1053 = vsel %vm1038, %v790, %v843
    %v1056 = vsel %vm1038, %v791, %v845
    %v1059 = vsel %vm1038, %v792, %v847
    %v1062 = vsel %vm1038, %v793, %v849
    %v1065 = vsel %vm1038, %v794, %v851
    %v1068 = vsel %vm1038, %v795, %v853
    %v1071 = vsel %vm1038, %v796, %v855
    %v1074 = vsel %vm1038, %v797, %v857
    %vm1075 = vcmask 457728
    %v1077 = vsel %vm1075, %v1041, %v895
    %v1079 = vsel %vm1075, %v1044, %v897
    %v1081 = vsel %vm1075, %v1047, %v899
    %v1083 = vsel %vm1075, %v1050, %v901
    %v1085 = vsel %vm1075, %v1053, %v903
    %v1087 = vsel %vm1075, %v1056, %v905
    %v1089 = vsel %vm1075, %v1059, %v907
    %v1091 = vsel %vm1075, %v1062, %v909
    %v1093 = vsel %vm1075, %v1065, %v911
    %v1095 = vsel %vm1075, %v1068, %v913
    %v1097 = vsel %vm1075, %v1071, %v915
    %v1099 = vsel %vm1075, %v1074, %v917
    %vm1100 = vcmask 687104
    %v1102 = vsel %vm1100, %v1077, %v955
    %v1104 = vsel %vm1100, %v1079, %v957
    %v1106 = vsel %vm1100, %v1081, %v959
    %v1108 = vsel %vm1100, %v1083, %v961
    %v1110 = vsel %vm1100, %v1085, %v963
    %v1112 = vsel %vm1100, %v1087, %v965
    %v1114 = vsel %vm1100, %v1089, %v967
    %v1116 = vsel %vm1100, %v1091, %v969
    %v1118 = vsel %vm1100, %v1093, %v971
    %v1120 = vsel %vm1100, %v1095, %v973
    %v1122 = vsel %vm1100, %v1097, %v975
    %v1124 = vsel %vm1100, %v1099, %v977
    %vm1125 = vcmask 916480
    %v1127 = vsel %vm1125, %v1102, %v1015
    %v1130 = vsel %vm1125, %v1104, %v1017
    %v1133 = vsel %vm1125, %v1106, %v1019
    %v1136 = vsel %vm1125, %v1108, %v1021
    %v1139 = vsel %vm1125, %v1110, %v1023
    %v1142 = vsel %vm1125, %v1112, %v1025
    %v1145 = vsel %vm1125, %v1114, %v1027
    %v1148 = vsel %vm1125, %v1116, %v1029
    %v1151 = vsel %vm1125, %v1118, %v1031
    %v1154 = vsel %vm1125, %v1120, %v1033
    %v1157 = vsel %vm1125, %v1122, %v1035
    %v1160 = vsel %vm1125, %v1124, %v1037
    %v1162 = vld [vmem:[#allocation2] sm:$0xff]
    %v1163 = vld [vmem:[#allocation2 + $0x8] sm:$0xff]
    %v1164 = vld [vmem:[#allocation2 + $0x10] sm:$0xff]
    %v1165 = vld [vmem:[#allocation2 + $0x18] sm:$0xff]
    %v1166 = vld [vmem:[#allocation2 + $0x20] sm:$0xff]
    %v1167 = vld [vmem:[#allocation2 + $0x28] sm:$0xff]
    %v1168 = vld [vmem:[#allocation2 + $0x30] sm:$0xff]
    %v1169 = vld [vmem:[#allocation2 + $0x38] sm:$0xff]
    %v1170 = vld [vmem:[#allocation2 + $0x40] sm:$0xff]
    %v1171 = vld [vmem:[#allocation2 + $0x48] sm:$0xff]
    %v1172 = vld [vmem:[#allocation2 + $0x50] sm:$0xff]
    %v1173 = vld [vmem:[#allocation2 + $0x58] sm:$0xff]
    %v1174 = vld [vmem:[#allocation2 + $0x60] sm:$0xff]
    %v1175 = vld [vmem:[#allocation2 + $0x68] sm:$0xff]
    %v1176 = vld [vmem:[#allocation2 + $0x70] sm:$0xff]
    %v1177 = vld [vmem:[#allocation2 + $0x78] sm:$0xff]
    %v1178 = vld [vmem:[#allocation2 + $0x80] sm:$0xff]
    %v1179 = vld [vmem:[#allocation2 + $0x88] sm:$0xff]
    %v1180 = vld [vmem:[#allocation2 + $0x90] sm:$0xff]
    %v1181 = vld [vmem:[#allocation2 + $0x98] sm:$0xff]
    %v1182 = vld [vmem:[#allocation2 + $0xa0] sm:$0xff]
    %v1183 = vld [vmem:[#allocation2 + $0xa8] sm:$0xff]
    %v1184 = vld [vmem:[#allocation2 + $0xb0] sm:$0xff]
    %v1185 = vld [vmem:[#allocation2 + $0xb8] sm:$0xff]
    %v1186 = vld [vmem:[#allocation2 + $0xc0] sm:$0xff]
    %v1187 = vld [vmem:[#allocation2 + $0xc8] sm:$0xff]
    %v1188 = vld [vmem:[#allocation2 + $0xd0] sm:$0xff]
    %v1189 = vld [vmem:[#allocation2 + $0xd8] sm:$0xff]
    %v1190 = vld [vmem:[#allocation2 + $0xe0] sm:$0xff]
    %v1191 = vld [vmem:[#allocation2 + $0xe8] sm:$0xff]
    %v1192 = vld [vmem:[#allocation2 + $0xf0] sm:$0xff]
    %v1193 = vld [vmem:[#allocation2 + $0xf8] sm:$0xff]
    %v1194 = vld [vmem:[#allocation2 + $0x100] sm:$0xff]
    %v1195 = vld [vmem:[#allocation2 + $0x108] sm:$0xff]
    %v1196 = vld [vmem:[#allocation2 + $0x110] sm:$0x33]
    %v1197 = vld [vmem:[#allocation2 + $0x118] sm:$0x33]
    %v1198 = vld [vmem:[%s2] sm:$0xf]
    %v1200 = vlaneseq
    %v1201 = vshrl.u32 %v1200, 7
    %v1202 = vsub.s32 0, %v1201
    %v1203 = vrot.slane %v1198, %v1202
    %v1204 = vlaneseq
    %v1205 = vshrl.u32 %v1204, 7
    %v1206 = vsub.s32 1, %v1205
    %v1207 = vrot.slane %v1198, %v1206
    %v1208 = vlaneseq
    %v1209 = vshrl.u32 %v1208, 7
    %v1210 = vsub.s32 2, %v1209
    %v1211 = vrot.slane %v1198, %v1210
    %v1212 = vlaneseq
    %v1213 = vshrl.u32 %v1212, 7
    %v1214 = vsub.s32 3, %v1213
    %v1215 = vrot.slane %v1198, %v1214
    %v1256 = vunpack.c.l.b16 %v1162
    %v1257 = vunpack.c.h.b16 %v1162
    %v1258 = vunpack.c.l.b16 %v1163
    %v1259 = vunpack.c.h.b16 %v1163
    %v1260 = vunpack.c.l.b16 %v1164
    %v1261 = vunpack.c.h.b16 %v1164
    %v1262 = vunpack.c.l.b16 %v1165
    %v1263 = vunpack.c.h.b16 %v1165
    %v1264 = vunpack.c.l.b16 %v1166
    %v1265 = vunpack.c.h.b16 %v1166
    %v1266 = vunpack.c.l.b16 %v1167
    %v1267 = vunpack.c.h.b16 %v1167
    %v1268 = vunpack.c.l.b16 %v1168
    %v1269 = vunpack.c.h.b16 %v1168
    %v1270 = vunpack.c.l.b16 %v1169
    %v1271 = vunpack.c.h.b16 %v1169
    %v1272 = vunpack.c.l.b16 %v1170
    %v1273 = vunpack.c.h.b16 %v1170
    %v1274 = vunpack.c.l.b16 %v1171
    %v1275 = vunpack.c.h.b16 %v1171
    %v1276 = vunpack.c.l.b16 %v1172
    %v1277 = vunpack.c.h.b16 %v1172
    %v1278 = vunpack.c.l.b16 %v1173
    %v1279 = vunpack.c.h.b16 %v1173
    %v1280 = vunpack.c.l.b16 %v1174
    %v1281 = vunpack.c.h.b16 %v1174
    %v1282 = vunpack.c.l.b16 %v1175
    %v1283 = vunpack.c.h.b16 %v1175
    %v1284 = vunpack.c.l.b16 %v1176
    %v1285 = vunpack.c.h.b16 %v1176
    %v1286 = vunpack.c.l.b16 %v1177
    %v1287 = vunpack.c.h.b16 %v1177
    %v1288 = vunpack.c.l.b16 %v1178
    %v1289 = vunpack.c.h.b16 %v1178
    %v1290 = vunpack.c.l.b16 %v1179
    %v1291 = vunpack.c.h.b16 %v1179
    %v1292 = vunpack.c.l.b16 %v1180
    %v1293 = vunpack.c.h.b16 %v1180
    %v1294 = vunpack.c.l.b16 %v1181
    %v1295 = vunpack.c.h.b16 %v1181
    %v1296 = vunpack.c.l.b16 %v1182
    %v1297 = vunpack.c.h.b16 %v1182
    %v1298 = vunpack.c.l.b16 %v1183
    %v1299 = vunpack.c.h.b16 %v1183
    %v1300 = vunpack.c.l.b16 %v1184
    %v1301 = vunpack.c.h.b16 %v1184
    %v1302 = vunpack.c.l.b16 %v1185
    %v1303 = vunpack.c.h.b16 %v1185
    %v1304 = vunpack.c.l.b16 %v1186
    %v1305 = vunpack.c.h.b16 %v1186
    %v1306 = vunpack.c.l.b16 %v1187
    %v1307 = vunpack.c.h.b16 %v1187
    %v1308 = vunpack.c.l.b16 %v1188
    %v1309 = vunpack.c.h.b16 %v1188
    %v1310 = vunpack.c.l.b16 %v1189
    %v1311 = vunpack.c.h.b16 %v1189
    %v1312 = vunpack.c.l.b16 %v1190
    %v1313 = vunpack.c.h.b16 %v1190
    %v1314 = vunpack.c.l.b16 %v1191
    %v1315 = vunpack.c.h.b16 %v1191
    %v1316 = vunpack.c.l.b16 %v1192
    %v1317 = vunpack.c.h.b16 %v1192
    %v1318 = vunpack.c.l.b16 %v1193
    %v1319 = vunpack.c.h.b16 %v1193
    %v1320 = vunpack.c.l.b16 %v1194
    %v1321 = vunpack.c.h.b16 %v1194
    %v1322 = vunpack.c.l.b16 %v1195
    %v1323 = vunpack.c.h.b16 %v1195
    %v1324 = vunpack.c.l.b16 %v1196
    %v1325 = vunpack.c.h.b16 %v1196
    %v1326 = vunpack.c.l.b16 %v1197
    %v1327 = vunpack.c.h.b16 %v1197
    %v1328 = vpack.c.b16 %v1260, %v1256
    %v1329 = vpack.c.b16 %v1261, %v1257
    %v1330 = vpack.c.b16 %v1262, %v1258
    %v1331 = vpack.c.b16 %v1263, %v1259
    %v1332 = vpack.c.b16 %v1268, %v1264
    %v1333 = vpack.c.b16 %v1269, %v1265
    %v1334 = vpack.c.b16 %v1270, %v1266
    %v1335 = vpack.c.b16 %v1271, %v1267
    %v1336 = vpack.c.b16 %v1276, %v1272
    %v1337 = vpack.c.b16 %v1277, %v1273
    %v1338 = vpack.c.b16 %v1278, %v1274
    %v1339 = vpack.c.b16 %v1279, %v1275
    %v1340 = vpack.c.b16 %v1284, %v1280
    %v1341 = vpack.c.b16 %v1285, %v1281
    %v1342 = vpack.c.b16 %v1286, %v1282
    %v1343 = vpack.c.b16 %v1287, %v1283
    %v1344 = vpack.c.b16 %v1292, %v1288
    %v1345 = vpack.c.b16 %v1293, %v1289
    %v1346 = vpack.c.b16 %v1294, %v1290
    %v1347 = vpack.c.b16 %v1295, %v1291
    %v1348 = vpack.c.b16 %v1300, %v1296
    %v1349 = vpack.c.b16 %v1301, %v1297
    %v1350 = vpack.c.b16 %v1302, %v1298
    %v1351 = vpack.c.b16 %v1303, %v1299
    %v1352 = vpack.c.b16 %v1308, %v1304
    %v1353 = vpack.c.b16 %v1309, %v1305
    %v1354 = vpack.c.b16 %v1310, %v1306
    %v1355 = vpack.c.b16 %v1311, %v1307
    %v1356 = vpack.c.b16 %v1316, %v1312
    %v1357 = vpack.c.b16 %v1317, %v1313
    %v1358 = vpack.c.b16 %v1318, %v1314
    %v1359 = vpack.c.b16 %v1319, %v1315
    %v1360 = vpack.c.b16 %v1324, %v1320
    %v1361 = vpack.c.b16 %v1325, %v1321
    %v1362 = vpack.c.b16 %v1326, %v1322
    %v1363 = vpack.c.b16 %v1327, %v1323
    %vm1396 = vcmask 97280
    %v1397 = vsel %vm1396, %v1015, 0
    %v1399 = vsel %vm1396, %v1017, 0
    %v1401 = vsel %vm1396, %v1019, 0
    %v1403 = vsel %vm1396, %v1021, 0
    %v1405 = vsel %vm1396, %v1023, 0
    %v1407 = vsel %vm1396, %v1025, 0
    %v1409 = vsel %vm1396, %v1027, 0
    %v1411 = vsel %vm1396, %v1029, 0
    %v1413 = vsel %vm1396, %v1031, 0
    %v1415 = vsel %vm1396, %v1033, 0
    %v1417 = vsel %vm1396, %v1035, 0
    %v1419 = vsel %vm1396, %v1037, 0
    %vm1421 = vcmask 1045504
    %v1423 = vsel %vm1421, %v1360, 0
    %v1426 = vsel %vm1421, %v1361, 0
    %v1429 = vsel %vm1421, %v1362, 0
    %v1432 = vsel %vm1421, %v1363, 0
    %1434 = vmatprep.subr.bf16.mxu0 %v1329
    %1435 = vmatpush1.bf16.msra.mxu0 %v1328
    %1436 = vmatprep.subr.bf16.mxu0 %v1333
    %1437 = vmatpush1.bf16.msra.mxu0 %v1332
    %1438 = vmatprep.subr.bf16.mxu0 %v1337
    %1439 = vmatpush1.bf16.msra.mxu0 %v1336
    %1440 = vmatprep.subr.bf16.mxu0 %v1341
    %1441 = vmatpush1.bf16.msra.mxu0 %v1340
    %1442 = vmatprep.subr.bf16.mxu0 %v1345
    %1443 = vmatpush1.bf16.msra.mxu0 %v1344
    %1444 = vmatprep.subr.bf16.mxu0 %v1349
    %1445 = vmatpush1.bf16.msra.mxu0 %v1348
    %1446 = vmatprep.subr.bf16.mxu0 %v1353
    %1447 = vmatpush1.bf16.msra.mxu0 %v1352
    %1448 = vmatprep.subr.bf16.mxu0 %v1357
    %1449 = vmatpush1.bf16.msra.mxu0 %v1356
    %1450 = vmatprep.subr.bf16.mxu0 %v1426
    %1451 = vmatpush1.bf16.msra.mxu0 %v1423
    %1452 = vmatprep.subr.bf16.mxu0 0
    %1453 = vmatpush1.bf16.msra.mxu0 0
    %1454 = vmatprep.subr.bf16.mxu0 0
    %1455 = vmatpush1.bf16.msra.mxu0 0
    %1456 = vmatprep.subr.bf16.mxu0 0
    %1457 = vmatpush1.bf16.msra.mxu0 0
    %1458 = vmatprep.subr.bf16.mxu0 0
    %1459 = vmatpush1.bf16.msra.mxu0 0
    %1460 = vmatprep.subr.bf16.mxu0 0
    %1461 = vmatpush1.bf16.msra.mxu0 0
    %1462 = vmatprep.subr.bf16.mxu0 0
    %1463 = vmatpush1.bf16.msra.mxu0 0
    %1464 = vmatprep.subr.bf16.mxu0 0
    %1465 = vmatpush1.bf16.msra.mxu0 0
    %1466 = vmatprep.mubr.bf16.mxu0 %v1397
    %1467 = vmatmul.mubr.bf16.gmra.mrb[0].mxu0 %v1127
    %v1468 = vpop.f32.mrb[0].mxu0
    %v1469 = vadd.f32 %v1203, %v1468
    %v1470 = vpop.f32.mrb[0].mxu0
    %v1471 = vadd.f32 %v1207, %v1470
    %v1472 = vpop.f32.mrb[0].mxu0
    %v1473 = vadd.f32 %v1203, %v1472
    %v1474 = vpop.f32.mrb[0].mxu0
    %v1475 = vadd.f32 %v1207, %v1474
    %1476 = vmatprep.mubr.bf16.mxu0 %v1399
    %1477 = vmatmul.mubr.bf16.gmra.mrb[0].mxu0 %v1130
    %v1478 = vpop.f32.mrb[0].mxu0
    %v1479 = vadd.f32 %v1203, %v1478
    %v1480 = vpop.f32.mrb[0].mxu0
    %v1481 = vadd.f32 %v1207, %v1480
    %v1482 = vpop.f32.mrb[0].mxu0
    %v1483 = vadd.f32 %v1203, %v1482
    %v1484 = vpop.f32.mrb[0].mxu0
    %v1485 = vadd.f32 %v1207, %v1484
    %1486 = vmatprep.mubr.bf16.mxu0 %v1401
    %1487 = vmatmul.mubr.bf16.gmra.mrb[0].mxu0 %v1133
    %v1488 = vpop.f32.mrb[0].mxu0
    %v1489 = vadd.f32 %v1203, %v1488
    %v1490 = vpop.f32.mrb[0].mxu0
    %v1491 = vadd.f32 %v1207, %v1490
    %v1492 = vpop.f32.mrb[0].mxu0
    %v1493 = vadd.f32 %v1203, %v1492
    %v1494 = vpop.f32.mrb[0].mxu0
    %v1495 = vadd.f32 %v1207, %v1494
    %1496 = vmatprep.mubr.bf16.mxu0 %v1403
    %1497 = vmatmul.mubr.bf16.gmra.mrb[0].mxu0 %v1136
    %v1498 = vpop.f32.mrb[0].mxu0
    %v1499 = vadd.f32 %v1203, %v1498
    %v1500 = vpop.f32.mrb[0].mxu0
    %v1501 = vadd.f32 %v1207, %v1500
    %v1502 = vpop.f32.mrb[0].mxu0
    %v1503 = vadd.f32 %v1203, %v1502
    %v1504 = vpop.f32.mrb[0].mxu0
    %v1505 = vadd.f32 %v1207, %v1504
    %1506 = vmatprep.mubr.bf16.mxu0 %v1405
    %1507 = vmatmul.mubr.bf16.gmra.mrb[0].mxu0 %v1139
    %v1508 = vpop.f32.mrb[0].mxu0
    %v1509 = vadd.f32 %v1203, %v1508
    %v1510 = vpop.f32.mrb[0].mxu0
    %v1511 = vadd.f32 %v1207, %v1510
    %v1512 = vpop.f32.mrb[0].mxu0
    %v1513 = vadd.f32 %v1203, %v1512
    %v1514 = vpop.f32.mrb[0].mxu0
    %v1515 = vadd.f32 %v1207, %v1514
    %1516 = vmatprep.mubr.bf16.mxu0 %v1407
    %1517 = vmatmul.mubr.bf16.gmra.mrb[0].mxu0 %v1142
    %v1518 = vpop.f32.mrb[0].mxu0
    %v1519 = vadd.f32 %v1203, %v1518
    %v1520 = vpop.f32.mrb[0].mxu0
    %v1521 = vadd.f32 %v1207, %v1520
    %v1522 = vpop.f32.mrb[0].mxu0
    %v1523 = vadd.f32 %v1203, %v1522
    %v1524 = vpop.f32.mrb[0].mxu0
    %v1525 = vadd.f32 %v1207, %v1524
    %1526 = vmatprep.mubr.bf16.mxu0 %v1409
    %1527 = vmatmul.mubr.bf16.gmra.mrb[0].mxu0 %v1145
    %v1528 = vpop.f32.mrb[0].mxu0
    %v1529 = vadd.f32 %v1203, %v1528
    %v1530 = vpop.f32.mrb[0].mxu0
    %v1531 = vadd.f32 %v1207, %v1530
    %v1532 = vpop.f32.mrb[0].mxu0
    %v1533 = vadd.f32 %v1203, %v1532
    %v1534 = vpop.f32.mrb[0].mxu0
    %v1535 = vadd.f32 %v1207, %v1534
    %1536 = vmatprep.mubr.bf16.mxu0 %v1411
    %1537 = vmatmul.mubr.bf16.gmra.mrb[0].mxu0 %v1148
    %v1538 = vpop.f32.mrb[0].mxu0
    %v1539 = vadd.f32 %v1203, %v1538
    %v1540 = vpop.f32.mrb[0].mxu0
    %v1541 = vadd.f32 %v1207, %v1540
    %v1542 = vpop.f32.mrb[0].mxu0
    %v1543 = vadd.f32 %v1203, %v1542
    %v1544 = vpop.f32.mrb[0].mxu0
    %v1545 = vadd.f32 %v1207, %v1544
    %1546 = vmatprep.mubr.bf16.mxu0 %v1413
    %1547 = vmatmul.mubr.bf16.gmra.mrb[0].mxu0 %v1151
    %v1548 = vpop.f32.mrb[0].mxu0
    %v1549 = vadd.f32 %v1203, %v1548
    %v1550 = vpop.f32.mrb[0].mxu0
    %v1551 = vadd.f32 %v1207, %v1550
    %v1552 = vpop.f32.mrb[0].mxu0
    %v1553 = vadd.f32 %v1203, %v1552
    %v1554 = vpop.f32.mrb[0].mxu0
    %v1555 = vadd.f32 %v1207, %v1554
    %1556 = vmatprep.mubr.bf16.mxu0 %v1415
    %1557 = vmatmul.mubr.bf16.gmra.mrb[0].mxu0 %v1154
    %v1558 = vpop.f32.mrb[0].mxu0
    %v1559 = vadd.f32 %v1203, %v1558
    %v1560 = vpop.f32.mrb[0].mxu0
    %v1561 = vadd.f32 %v1207, %v1560
    %v1562 = vpop.f32.mrb[0].mxu0
    %v1563 = vadd.f32 %v1203, %v1562
    %v1564 = vpop.f32.mrb[0].mxu0
    %v1565 = vadd.f32 %v1207, %v1564
    %1566 = vmatprep.mubr.bf16.mxu0 %v1417
    %1567 = vmatmul.mubr.bf16.gmra.mrb[0].mxu0 %v1157
    %v1568 = vpop.f32.mrb[0].mxu0
    %v1569 = vadd.f32 %v1203, %v1568
    %v1570 = vpop.f32.mrb[0].mxu0
    %v1571 = vadd.f32 %v1207, %v1570
    %v1572 = vpop.f32.mrb[0].mxu0
    %v1573 = vadd.f32 %v1203, %v1572
    %v1574 = vpop.f32.mrb[0].mxu0
    %v1575 = vadd.f32 %v1207, %v1574
    %1576 = vmatprep.mubr.bf16.mxu0 %v1419
    %1577 = vmatmul.mubr.bf16.gmra.mrb[0].mxu0 %v1160
    %v1578 = vpop.f32.mrb[0].mxu0
    %v1579 = vadd.f32 %v1203, %v1578
    %v1580 = vpop.f32.mrb[0].mxu0
    %v1581 = vadd.f32 %v1207, %v1580
    %v1582 = vpop.f32.mrb[0].mxu0
    %v1583 = vadd.f32 %v1203, %v1582
    %v1584 = vpop.f32.mrb[0].mxu0
    %v1585 = vadd.f32 %v1207, %v1584
    %1586 = vdwg.mxu0
    %1587 = vmatprep.subr.bf16.mxu0 %v1331
    %1588 = vmatpush1.bf16.msra.mxu0 %v1330
    %1589 = vmatprep.subr.bf16.mxu0 %v1335
    %1590 = vmatpush1.bf16.msra.mxu0 %v1334
    %1591 = vmatprep.subr.bf16.mxu0 %v1339
    %1592 = vmatpush1.bf16.msra.mxu0 %v1338
    %1593 = vmatprep.subr.bf16.mxu0 %v1343
    %1594 = vmatpush1.bf16.msra.mxu0 %v1342
    %1595 = vmatprep.subr.bf16.mxu0 %v1347
    %1596 = vmatpush1.bf16.msra.mxu0 %v1346
    %1597 = vmatprep.subr.bf16.mxu0 %v1351
    %1598 = vmatpush1.bf16.msra.mxu0 %v1350
    %1599 = vmatprep.subr.bf16.mxu0 %v1355
    %1600 = vmatpush1.bf16.msra.mxu0 %v1354
    %1601 = vmatprep.subr.bf16.mxu0 %v1359
    %1602 = vmatpush1.bf16.msra.mxu0 %v1358
    %1603 = vmatprep.subr.bf16.mxu0 %v1432
    %1604 = vmatpush1.bf16.msra.mxu0 %v1429
    %1605 = vmatprep.subr.bf16.mxu0 0
    %1606 = vmatpush1.bf16.msra.mxu0 0
    %1607 = vmatprep.subr.bf16.mxu0 0
    %1608 = vmatpush1.bf16.msra.mxu0 0
    %1609 = vmatprep.subr.bf16.mxu0 0
    %1610 = vmatpush1.bf16.msra.mxu0 0
    %1611 = vmatprep.subr.bf16.mxu0 0
    %1612 = vmatpush1.bf16.msra.mxu0 0
    %1613 = vmatprep.subr.bf16.mxu0 0
    %1614 = vmatpush1.bf16.msra.mxu0 0
    %1615 = vmatprep.subr.bf16.mxu0 0
    %1616 = vmatpush1.bf16.msra.mxu0 0
    %1617 = vmatprep.subr.bf16.mxu0 0
    %1618 = vmatpush1.bf16.msra.mxu0 0
    %1619 = vmatprep.mubr.bf16.mxu0 %v1397
    %1620 = vmatmul.mubr.bf16.gmra.mrb[0].mxu0 %v1127
    %v1621 = vpop.f32.mrb[0].mxu0
    %v1622 = vadd.f32 %v1211, %v1621
    %v1623 = vpop.f32.mrb[0].mxu0
    %v1624 = vadd.f32 %v1215, %v1623
    %v1625 = vpop.f32.mrb[0].mxu0
    %v1626 = vadd.f32 %v1211, %v1625
    %v1627 = vpop.f32.mrb[0].mxu0
    %v1628 = vadd.f32 %v1215, %v1627
    %1629 = vmatprep.mubr.bf16.mxu0 %v1399
    %1630 = vmatmul.mubr.bf16.gmra.mrb[0].mxu0 %v1130
    %v1631 = vpop.f32.mrb[0].mxu0
    %v1632 = vadd.f32 %v1211, %v1631
    %v1633 = vpop.f32.mrb[0].mxu0
    %v1634 = vadd.f32 %v1215, %v1633
    %v1635 = vpop.f32.mrb[0].mxu0
    %v1636 = vadd.f32 %v1211, %v1635
    %v1637 = vpop.f32.mrb[0].mxu0
    %v1638 = vadd.f32 %v1215, %v1637
    %1639 = vmatprep.mubr.bf16.mxu0 %v1401
    %1640 = vmatmul.mubr.bf16.gmra.mrb[0].mxu0 %v1133
    %v1641 = vpop.f32.mrb[0].mxu0
    %v1642 = vadd.f32 %v1211, %v1641
    %v1643 = vpop.f32.mrb[0].mxu0
    %v1644 = vadd.f32 %v1215, %v1643
    %v1645 = vpop.f32.mrb[0].mxu0
    %v1646 = vadd.f32 %v1211, %v1645
    %v1647 = vpop.f32.mrb[0].mxu0
    %v1648 = vadd.f32 %v1215, %v1647
    %1649 = vmatprep.mubr.bf16.mxu0 %v1403
    %1650 = vmatmul.mubr.bf16.gmra.mrb[0].mxu0 %v1136
    %v1651 = vpop.f32.mrb[0].mxu0
    %v1652 = vadd.f32 %v1211, %v1651
    %v1653 = vpop.f32.mrb[0].mxu0
    %v1654 = vadd.f32 %v1215, %v1653
    %v1655 = vpop.f32.mrb[0].mxu0
    %v1656 = vadd.f32 %v1211, %v1655
    %v1657 = vpop.f32.mrb[0].mxu0
    %v1658 = vadd.f32 %v1215, %v1657
    %1659 = vmatprep.mubr.bf16.mxu0 %v1405
    %1660 = vmatmul.mubr.bf16.gmra.mrb[0].mxu0 %v1139
    %v1661 = vpop.f32.mrb[0].mxu0
    %v1662 = vadd.f32 %v1211, %v1661
    %v1663 = vpop.f32.mrb[0].mxu0
    %v1664 = vadd.f32 %v1215, %v1663
    %v1665 = vpop.f32.mrb[0].mxu0
    %v1666 = vadd.f32 %v1211, %v1665
    %v1667 = vpop.f32.mrb[0].mxu0
    %v1668 = vadd.f32 %v1215, %v1667
    %1669 = vmatprep.mubr.bf16.mxu0 %v1407
    %1670 = vmatmul.mubr.bf16.gmra.mrb[0].mxu0 %v1142
    %v1671 = vpop.f32.mrb[0].mxu0
    %v1672 = vadd.f32 %v1211, %v1671
    %v1673 = vpop.f32.mrb[0].mxu0
    %v1674 = vadd.f32 %v1215, %v1673
    %v1675 = vpop.f32.mrb[0].mxu0
    %v1676 = vadd.f32 %v1211, %v1675
    %v1677 = vpop.f32.mrb[0].mxu0
    %v1678 = vadd.f32 %v1215, %v1677
    %1679 = vmatprep.mubr.bf16.mxu0 %v1409
    %1680 = vmatmul.mubr.bf16.gmra.mrb[0].mxu0 %v1145
    %v1681 = vpop.f32.mrb[0].mxu0
    %v1682 = vadd.f32 %v1211, %v1681
    %v1683 = vpop.f32.mrb[0].mxu0
    %v1684 = vadd.f32 %v1215, %v1683
    %v1685 = vpop.f32.mrb[0].mxu0
    %v1686 = vadd.f32 %v1211, %v1685
    %v1687 = vpop.f32.mrb[0].mxu0
    %v1688 = vadd.f32 %v1215, %v1687
    %1689 = vmatprep.mubr.bf16.mxu0 %v1411
    %1690 = vmatmul.mubr.bf16.gmra.mrb[0].mxu0 %v1148
    %v1691 = vpop.f32.mrb[0].mxu0
    %v1692 = vadd.f32 %v1211, %v1691
    %v1693 = vpop.f32.mrb[0].mxu0
    %v1694 = vadd.f32 %v1215, %v1693
    %v1695 = vpop.f32.mrb[0].mxu0
    %v1696 = vadd.f32 %v1211, %v1695
    %v1697 = vpop.f32.mrb[0].mxu0
    %v1698 = vadd.f32 %v1215, %v1697
    %1699 = vmatprep.mubr.bf16.mxu0 %v1413
    %1700 = vmatmul.mubr.bf16.gmra.mrb[0].mxu0 %v1151
    %v1701 = vpop.f32.mrb[0].mxu0
    %v1702 = vadd.f32 %v1211, %v1701
    %v1703 = vpop.f32.mrb[0].mxu0
    %v1704 = vadd.f32 %v1215, %v1703
    %v1705 = vpop.f32.mrb[0].mxu0
    %v1706 = vadd.f32 %v1211, %v1705
    %v1707 = vpop.f32.mrb[0].mxu0
    %v1708 = vadd.f32 %v1215, %v1707
    %1709 = vmatprep.mubr.bf16.mxu0 %v1415
    %1710 = vmatmul.mubr.bf16.gmra.mrb[0].mxu0 %v1154
    %v1711 = vpop.f32.mrb[0].mxu0
    %v1712 = vadd.f32 %v1211, %v1711
    %v1713 = vpop.f32.mrb[0].mxu0
    %v1714 = vadd.f32 %v1215, %v1713
    %v1715 = vpop.f32.mrb[0].mxu0
    %v1716 = vadd.f32 %v1211, %v1715
    %v1717 = vpop.f32.mrb[0].mxu0
    %v1718 = vadd.f32 %v1215, %v1717
    %1719 = vmatprep.mubr.bf16.mxu0 %v1417
    %1720 = vmatmul.mubr.bf16.gmra.mrb[0].mxu0 %v1157
    %v1721 = vpop.f32.mrb[0].mxu0
    %v1722 = vadd.f32 %v1211, %v1721
    %v1723 = vpop.f32.mrb[0].mxu0
    %v1724 = vadd.f32 %v1215, %v1723
    %v1725 = vpop.f32.mrb[0].mxu0
    %v1726 = vadd.f32 %v1211, %v1725
    %v1727 = vpop.f32.mrb[0].mxu0
    %v1728 = vadd.f32 %v1215, %v1727
    %1729 = vmatprep.mubr.bf16.mxu0 %v1419
    %1730 = vmatmul.mubr.bf16.gmra.mrb[0].mxu0 %v1160
    %v1731 = vpop.f32.mrb[0].mxu0
    %v1732 = vadd.f32 %v1211, %v1731
    %v1733 = vpop.f32.mrb[0].mxu0
    %v1734 = vadd.f32 %v1215, %v1733
    %v1735 = vpop.f32.mrb[0].mxu0
    %v1736 = vadd.f32 %v1211, %v1735
    %v1737 = vpop.f32.mrb[0].mxu0
    %v1738 = vadd.f32 %v1215, %v1737
    %1739 = vdwg.mxu0
    %v1740 = vmax.f32 %v1469, 0.0
    %v1741 = vmax.f32 %v1471, 0.0
    %v1742 = vmax.f32 %v1622, 0.0
    %v1743 = vmax.f32 %v1624, 0.0
    %v1744 = vmax.f32 %v1473, 0.0
    %v1745 = vmax.f32 %v1475, 0.0
    %v1746 = vmax.f32 %v1626, 0.0
    %v1747 = vmax.f32 %v1628, 0.0
    %v1748 = vmax.f32 %v1479, 0.0
    %v1749 = vmax.f32 %v1481, 0.0
    %v1750 = vmax.f32 %v1632, 0.0
    %v1751 = vmax.f32 %v1634, 0.0
    %v1752 = vmax.f32 %v1483, 0.0
    %v1753 = vmax.f32 %v1485, 0.0
    %v1754 = vmax.f32 %v1636, 0.0
    %v1755 = vmax.f32 %v1638, 0.0
    %v1756 = vmax.f32 %v1489, 0.0
    %v1757 = vmax.f32 %v1491, 0.0
    %v1758 = vmax.f32 %v1642, 0.0
    %v1759 = vmax.f32 %v1644, 0.0
    %v1760 = vmax.f32 %v1493, 0.0
    %v1761 = vmax.f32 %v1495, 0.0
    %v1762 = vmax.f32 %v1646, 0.0
    %v1763 = vmax.f32 %v1648, 0.0
    %v1764 = vmax.f32 %v1499, 0.0
    %v1765 = vmax.f32 %v1501, 0.0
    %v1766 = vmax.f32 %v1652, 0.0
    %v1767 = vmax.f32 %v1654, 0.0
    %v1768 = vmax.f32 %v1503, 0.0
    %v1769 = vmax.f32 %v1505, 0.0
    %v1770 = vmax.f32 %v1656, 0.0
    %v1771 = vmax.f32 %v1658, 0.0
    %v1772 = vmax.f32 %v1509, 0.0
    %v1773 = vmax.f32 %v1511, 0.0
    %v1774 = vmax.f32 %v1662, 0.0
    %v1775 = vmax.f32 %v1664, 0.0
    %v1776 = vmax.f32 %v1513, 0.0
    %v1777 = vmax.f32 %v1515, 0.0
    %v1778 = vmax.f32 %v1666, 0.0
    %v1779 = vmax.f32 %v1668, 0.0
    %v1780 = vmax.f32 %v1519, 0.0
    %v1781 = vmax.f32 %v1521, 0.0
    %v1782 = vmax.f32 %v1672, 0.0
    %v1783 = vmax.f32 %v1674, 0.0
    %v1784 = vmax.f32 %v1523, 0.0
    %v1785 = vmax.f32 %v1525, 0.0
    %v1786 = vmax.f32 %v1676, 0.0
    %v1787 = vmax.f32 %v1678, 0.0
    %v1788 = vmax.f32 %v1529, 0.0
    %v1789 = vmax.f32 %v1531, 0.0
    %v1790 = vmax.f32 %v1682, 0.0
    %v1791 = vmax.f32 %v1684, 0.0
    %v1792 = vmax.f32 %v1533, 0.0
    %v1793 = vmax.f32 %v1535, 0.0
    %v1794 = vmax.f32 %v1686, 0.0
    %v1795 = vmax.f32 %v1688, 0.0
    %v1796 = vmax.f32 %v1539, 0.0
    %v1797 = vmax.f32 %v1541, 0.0
    %v1798 = vmax.f32 %v1692, 0.0
    %v1799 = vmax.f32 %v1694, 0.0
    %v1800 = vmax.f32 %v1543, 0.0
    %v1801 = vmax.f32 %v1545, 0.0
    %v1802 = vmax.f32 %v1696, 0.0
    %v1803 = vmax.f32 %v1698, 0.0
    %v1804 = vmax.f32 %v1549, 0.0
    %v1805 = vmax.f32 %v1551, 0.0
    %v1806 = vmax.f32 %v1702, 0.0
    %v1807 = vmax.f32 %v1704, 0.0
    %v1808 = vmax.f32 %v1553, 0.0
    %v1809 = vmax.f32 %v1555, 0.0
    %v1810 = vmax.f32 %v1706, 0.0
    %v1811 = vmax.f32 %v1708, 0.0
    %v1812 = vmax.f32 %v1559, 0.0
    %v1813 = vmax.f32 %v1561, 0.0
    %v1814 = vmax.f32 %v1712, 0.0
    %v1815 = vmax.f32 %v1714, 0.0
    %v1816 = vmax.f32 %v1563, 0.0
    %v1817 = vmax.f32 %v1565, 0.0
    %v1818 = vmax.f32 %v1716, 0.0
    %v1819 = vmax.f32 %v1718, 0.0
    %v1820 = vmax.f32 %v1569, 0.0
    %v1821 = vmax.f32 %v1571, 0.0
    %v1822 = vmax.f32 %v1722, 0.0
    %v1823 = vmax.f32 %v1724, 0.0
    %v1824 = vmax.f32 %v1573, 0.0
    %v1825 = vmax.f32 %v1575, 0.0
    %v1826 = vmax.f32 %v1726, 0.0
    %v1827 = vmax.f32 %v1728, 0.0
    %v1828 = vmax.f32 %v1579, 0.0
    %v1829 = vmax.f32 %v1581, 0.0
    %v1830 = vmax.f32 %v1732, 0.0
    %v1831 = vmax.f32 %v1734, 0.0
    %v1832 = vmax.f32 %v1583, 0.0
    %v1833 = vmax.f32 %v1585, 0.0
    %v1834 = vmax.f32 %v1736, 0.0
    %v1835 = vmax.f32 %v1738, 0.0
    %v1836 = vmax.f32 %v1740, %v1742
    %v1837 = vmax.f32 %v1741, %v1743
    %v1838 = vmax.f32 %v1744, %v1746
    %v1839 = vmax.f32 %v1745, %v1747
    %v1840 = vmax.f32 %v1748, %v1750
    %v1841 = vmax.f32 %v1749, %v1751
    %v1842 = vmax.f32 %v1752, %v1754
    %v1843 = vmax.f32 %v1753, %v1755
    %v1844 = vmax.f32 %v1756, %v1758
    %v1845 = vmax.f32 %v1757, %v1759
    %v1846 = vmax.f32 %v1760, %v1762
    %v1847 = vmax.f32 %v1761, %v1763
    %v1848 = vmax.f32 %v1764, %v1766
    %v1849 = vmax.f32 %v1765, %v1767
    %v1850 = vmax.f32 %v1768, %v1770
    %v1851 = vmax.f32 %v1769, %v1771
    %v1852 = vmax.f32 %v1772, %v1774
    %v1853 = vmax.f32 %v1773, %v1775
    %v1854 = vmax.f32 %v1776, %v1778
    %v1855 = vmax.f32 %v1777, %v1779
    %v1856 = vmax.f32 %v1780, %v1782
    %v1857 = vmax.f32 %v1781, %v1783
    %v1858 = vmax.f32 %v1784, %v1786
    %v1859 = vmax.f32 %v1785, %v1787
    %v1860 = vmax.f32 %v1788, %v1790
    %v1861 = vmax.f32 %v1789, %v1791
    %v1862 = vmax.f32 %v1792, %v1794
    %v1863 = vmax.f32 %v1793, %v1795
    %v1864 = vmax.f32 %v1796, %v1798
    %v1865 = vmax.f32 %v1797, %v1799
    %v1866 = vmax.f32 %v1800, %v1802
    %v1867 = vmax.f32 %v1801, %v1803
    %v1868 = vmax.f32 %v1804, %v1806
    %v1869 = vmax.f32 %v1805, %v1807
    %v1870 = vmax.f32 %v1808, %v1810
    %v1871 = vmax.f32 %v1809, %v1811
    %v1872 = vmax.f32 %v1812, %v1814
    %v1873 = vmax.f32 %v1813, %v1815
    %v1874 = vmax.f32 %v1816, %v1818
    %v1875 = vmax.f32 %v1817, %v1819
    %v1876 = vmax.f32 %v1820, %v1822
    %v1877 = vmax.f32 %v1821, %v1823
    %v1878 = vmax.f32 %v1824, %v1826
    %v1879 = vmax.f32 %v1825, %v1827
    %v1880 = vmax.f32 %v1828, %v1830
    %v1881 = vmax.f32 %v1829, %v1831
    %v1882 = vmax.f32 %v1832, %v1834
    %v1883 = vmax.f32 %v1833, %v1835
    %v1932 = vcombine.low %v1836, %v1837
    %v1933 = vcombine.high %v1836, %v1837
    %v1935 = vunpack.c.l.s4 1983009808
    %v1936 = vunpack.c.0.s8 %v1935
    %v1937 = vlaneseq
    %v1938 = vshrl.u32 %v1937, 7
    %v1939 = vsub.s32 %v1936, %v1938
    %v1940 = vrot.slane %v1932, %v1939
    %v1942 = vunpack.c.l.s4 1983009808
    %v1943 = vunpack.c.0.s8 %v1942
    %v1944 = vlaneseq
    %v1945 = vshrl.u32 %v1944, 7
    %v1946 = vsub.s32 %v1943, %v1945
    %v1947 = vrot.slane %v1933, %v1946
    %v1948 = vcombine.high %v1940, %v1940
    %v1949 = vcombine.high %v1947, %v1947
    %v1950 = vcombine.low %v1838, %v1839
    %v1951 = vcombine.high %v1838, %v1839
    %v1953 = vunpack.c.l.s4 1983009808
    %v1954 = vunpack.c.0.s8 %v1953
    %v1955 = vlaneseq
    %v1956 = vshrl.u32 %v1955, 7
    %v1957 = vsub.s32 %v1954, %v1956
    %v1958 = vrot.slane %v1950, %v1957
    %v1960 = vunpack.c.l.s4 1983009808
    %v1961 = vunpack.c.0.s8 %v1960
    %v1962 = vlaneseq
    %v1963 = vshrl.u32 %v1962, 7
    %v1964 = vsub.s32 %v1961, %v1963
    %v1965 = vrot.slane %v1951, %v1964
    %v1966 = vcombine.high %v1958, %v1958
    %v1967 = vcombine.high %v1965, %v1965
    %v1968 = vcombine.low %v1840, %v1841
    %v1969 = vcombine.high %v1840, %v1841
    %v1971 = vunpack.c.l.s4 1983009808
    %v1972 = vunpack.c.0.s8 %v1971
    %v1973 = vlaneseq
    %v1974 = vshrl.u32 %v1973, 7
    %v1975 = vsub.s32 %v1972, %v1974
    %v1976 = vrot.slane %v1968, %v1975
    %v1978 = vunpack.c.l.s4 1983009808
    %v1979 = vunpack.c.0.s8 %v1978
    %v1980 = vlaneseq
    %v1981 = vshrl.u32 %v1980, 7
    %v1982 = vsub.s32 %v1979, %v1981
    %v1983 = vrot.slane %v1969, %v1982
    %v1984 = vcombine.high %v1976, %v1976
    %v1985 = vcombine.high %v1983, %v1983
    %v1986 = vcombine.low %v1842, %v1843
    %v1987 = vcombine.high %v1842, %v1843
    %v1989 = vunpack.c.l.s4 1983009808
    %v1990 = vunpack.c.0.s8 %v1989
    %v1991 = vlaneseq
    %v1992 = vshrl.u32 %v1991, 7
    %v1993 = vsub.s32 %v1990, %v1992
    %v1994 = vrot.slane %v1986, %v1993
    %v1996 = vunpack.c.l.s4 1983009808
    %v1997 = vunpack.c.0.s8 %v1996
    %v1998 = vlaneseq
    %v1999 = vshrl.u32 %v1998, 7
    %v2000 = vsub.s32 %v1997, %v1999
    %v2001 = vrot.slane %v1987, %v2000
    %v2002 = vcombine.high %v1994, %v1994
    %v2003 = vcombine.high %v2001, %v2001
    %v2004 = vcombine.low %v1844, %v1845
    %v2005 = vcombine.high %v1844, %v1845
    %v2007 = vunpack.c.l.s4 1983009808
    %v2008 = vunpack.c.0.s8 %v2007
    %v2009 = vlaneseq
    %v2010 = vshrl.u32 %v2009, 7
    %v2011 = vsub.s32 %v2008, %v2010
    %v2012 = vrot.slane %v2004, %v2011
    %v2014 = vunpack.c.l.s4 1983009808
    %v2015 = vunpack.c.0.s8 %v2014
    %v2016 = vlaneseq
    %v2017 = vshrl.u32 %v2016, 7
    %v2018 = vsub.s32 %v2015, %v2017
    %v2019 = vrot.slane %v2005, %v2018
    %v2020 = vcombine.high %v2012, %v2012
    %v2021 = vcombine.high %v2019, %v2019
    %v2022 = vcombine.low %v1846, %v1847
    %v2023 = vcombine.high %v1846, %v1847
    %v2025 = vunpack.c.l.s4 1983009808
    %v2026 = vunpack.c.0.s8 %v2025
    %v2027 = vlaneseq
    %v2028 = vshrl.u32 %v2027, 7
    %v2029 = vsub.s32 %v2026, %v2028
    %v2030 = vrot.slane %v2022, %v2029
    %v2032 = vunpack.c.l.s4 1983009808
    %v2033 = vunpack.c.0.s8 %v2032
    %v2034 = vlaneseq
    %v2035 = vshrl.u32 %v2034, 7
    %v2036 = vsub.s32 %v2033, %v2035
    %v2037 = vrot.slane %v2023, %v2036
    %v2038 = vcombine.high %v2030, %v2030
    %v2039 = vcombine.high %v2037, %v2037
    %v2040 = vcombine.low %v1848, %v1849
    %v2041 = vcombine.high %v1848, %v1849
    %v2043 = vunpack.c.l.s4 1983009808
    %v2044 = vunpack.c.0.s8 %v2043
    %v2045 = vlaneseq
    %v2046 = vshrl.u32 %v2045, 7
    %v2047 = vsub.s32 %v2044, %v2046
    %v2048 = vrot.slane %v2040, %v2047
    %v2050 = vunpack.c.l.s4 1983009808
    %v2051 = vunpack.c.0.s8 %v2050
    %v2052 = vlaneseq
    %v2053 = vshrl.u32 %v2052, 7
    %v2054 = vsub.s32 %v2051, %v2053
    %v2055 = vrot.slane %v2041, %v2054
    %v2056 = vcombine.high %v2048, %v2048
    %v2057 = vcombine.high %v2055, %v2055
    %v2058 = vcombine.low %v1850, %v1851
    %v2059 = vcombine.high %v1850, %v1851
    %v2061 = vunpack.c.l.s4 1983009808
    %v2062 = vunpack.c.0.s8 %v2061
    %v2063 = vlaneseq
    %v2064 = vshrl.u32 %v2063, 7
    %v2065 = vsub.s32 %v2062, %v2064
    %v2066 = vrot.slane %v2058, %v2065
    %v2068 = vunpack.c.l.s4 1983009808
    %v2069 = vunpack.c.0.s8 %v2068
    %v2070 = vlaneseq
    %v2071 = vshrl.u32 %v2070, 7
    %v2072 = vsub.s32 %v2069, %v2071
    %v2073 = vrot.slane %v2059, %v2072
    %v2074 = vcombine.high %v2066, %v2066
    %v2075 = vcombine.high %v2073, %v2073
    %v2076 = vcombine.low %v1852, %v1853
    %v2077 = vcombine.high %v1852, %v1853
    %v2079 = vunpack.c.l.s4 1983009808
    %v2080 = vunpack.c.0.s8 %v2079
    %v2081 = vlaneseq
    %v2082 = vshrl.u32 %v2081, 7
    %v2083 = vsub.s32 %v2080, %v2082
    %v2084 = vrot.slane %v2076, %v2083
    %v2086 = vunpack.c.l.s4 1983009808
    %v2087 = vunpack.c.0.s8 %v2086
    %v2088 = vlaneseq
    %v2089 = vshrl.u32 %v2088, 7
    %v2090 = vsub.s32 %v2087, %v2089
    %v2091 = vrot.slane %v2077, %v2090
    %v2092 = vcombine.high %v2084, %v2084
    %v2093 = vcombine.high %v2091, %v2091
    %v2094 = vcombine.low %v1854, %v1855
    %v2095 = vcombine.high %v1854, %v1855
    %v2097 = vunpack.c.l.s4 1983009808
    %v2098 = vunpack.c.0.s8 %v2097
    %v2099 = vlaneseq
    %v2100 = vshrl.u32 %v2099, 7
    %v2101 = vsub.s32 %v2098, %v2100
    %v2102 = vrot.slane %v2094, %v2101
    %v2104 = vunpack.c.l.s4 1983009808
    %v2105 = vunpack.c.0.s8 %v2104
    %v2106 = vlaneseq
    %v2107 = vshrl.u32 %v2106, 7
    %v2108 = vsub.s32 %v2105, %v2107
    %v2109 = vrot.slane %v2095, %v2108
    %v2110 = vcombine.high %v2102, %v2102
    %v2111 = vcombine.high %v2109, %v2109
    %v2112 = vcombine.low %v1856, %v1857
    %v2113 = vcombine.high %v1856, %v1857
    %v2115 = vunpack.c.l.s4 1983009808
    %v2116 = vunpack.c.0.s8 %v2115
    %v2117 = vlaneseq
    %v2118 = vshrl.u32 %v2117, 7
    %v2119 = vsub.s32 %v2116, %v2118
    %v2120 = vrot.slane %v2112, %v2119
    %v2122 = vunpack.c.l.s4 1983009808
    %v2123 = vunpack.c.0.s8 %v2122
    %v2124 = vlaneseq
    %v2125 = vshrl.u32 %v2124, 7
    %v2126 = vsub.s32 %v2123, %v2125
    %v2127 = vrot.slane %v2113, %v2126
    %v2128 = vcombine.high %v2120, %v2120
    %v2129 = vcombine.high %v2127, %v2127
    %v2130 = vcombine.low %v1858, %v1859
    %v2131 = vcombine.high %v1858, %v1859
    %v2133 = vunpack.c.l.s4 1983009808
    %v2134 = vunpack.c.0.s8 %v2133
    %v2135 = vlaneseq
    %v2136 = vshrl.u32 %v2135, 7
    %v2137 = vsub.s32 %v2134, %v2136
    %v2138 = vrot.slane %v2130, %v2137
    %v2140 = vunpack.c.l.s4 1983009808
    %v2141 = vunpack.c.0.s8 %v2140
    %v2142 = vlaneseq
    %v2143 = vshrl.u32 %v2142, 7
    %v2144 = vsub.s32 %v2141, %v2143
    %v2145 = vrot.slane %v2131, %v2144
    %v2146 = vcombine.high %v2138, %v2138
    %v2147 = vcombine.high %v2145, %v2145
    %v2148 = vcombine.low %v1860, %v1861
    %v2149 = vcombine.high %v1860, %v1861
    %v2151 = vunpack.c.l.s4 1983009808
    %v2152 = vunpack.c.0.s8 %v2151
    %v2153 = vlaneseq
    %v2154 = vshrl.u32 %v2153, 7
    %v2155 = vsub.s32 %v2152, %v2154
    %v2156 = vrot.slane %v2148, %v2155
    %v2158 = vunpack.c.l.s4 1983009808
    %v2159 = vunpack.c.0.s8 %v2158
    %v2160 = vlaneseq
    %v2161 = vshrl.u32 %v2160, 7
    %v2162 = vsub.s32 %v2159, %v2161
    %v2163 = vrot.slane %v2149, %v2162
    %v2164 = vcombine.high %v2156, %v2156
    %v2165 = vcombine.high %v2163, %v2163
    %v2166 = vcombine.low %v1862, %v1863
    %v2167 = vcombine.high %v1862, %v1863
    %v2169 = vunpack.c.l.s4 1983009808
    %v2170 = vunpack.c.0.s8 %v2169
    %v2171 = vlaneseq
    %v2172 = vshrl.u32 %v2171, 7
    %v2173 = vsub.s32 %v2170, %v2172
    %v2174 = vrot.slane %v2166, %v2173
    %v2176 = vunpack.c.l.s4 1983009808
    %v2177 = vunpack.c.0.s8 %v2176
    %v2178 = vlaneseq
    %v2179 = vshrl.u32 %v2178, 7
    %v2180 = vsub.s32 %v2177, %v2179
    %v2181 = vrot.slane %v2167, %v2180
    %v2182 = vcombine.high %v2174, %v2174
    %v2183 = vcombine.high %v2181, %v2181
    %v2184 = vcombine.low %v1864, %v1865
    %v2185 = vcombine.high %v1864, %v1865
    %v2187 = vunpack.c.l.s4 1983009808
    %v2188 = vunpack.c.0.s8 %v2187
    %v2189 = vlaneseq
    %v2190 = vshrl.u32 %v2189, 7
    %v2191 = vsub.s32 %v2188, %v2190
    %v2192 = vrot.slane %v2184, %v2191
    %v2194 = vunpack.c.l.s4 1983009808
    %v2195 = vunpack.c.0.s8 %v2194
    %v2196 = vlaneseq
    %v2197 = vshrl.u32 %v2196, 7
    %v2198 = vsub.s32 %v2195, %v2197
    %v2199 = vrot.slane %v2185, %v2198
    %v2200 = vcombine.high %v2192, %v2192
    %v2201 = vcombine.high %v2199, %v2199
    %v2202 = vcombine.low %v1866, %v1867
    %v2203 = vcombine.high %v1866, %v1867
    %v2205 = vunpack.c.l.s4 1983009808
    %v2206 = vunpack.c.0.s8 %v2205
    %v2207 = vlaneseq
    %v2208 = vshrl.u32 %v2207, 7
    %v2209 = vsub.s32 %v2206, %v2208
    %v2210 = vrot.slane %v2202, %v2209
    %v2212 = vunpack.c.l.s4 1983009808
    %v2213 = vunpack.c.0.s8 %v2212
    %v2214 = vlaneseq
    %v2215 = vshrl.u32 %v2214, 7
    %v2216 = vsub.s32 %v2213, %v2215
    %v2217 = vrot.slane %v2203, %v2216
    %v2218 = vcombine.high %v2210, %v2210
    %v2219 = vcombine.high %v2217, %v2217
    %v2220 = vcombine.low %v1868, %v1869
    %v2221 = vcombine.high %v1868, %v1869
    %v2223 = vunpack.c.l.s4 1983009808
    %v2224 = vunpack.c.0.s8 %v2223
    %v2225 = vlaneseq
    %v2226 = vshrl.u32 %v2225, 7
    %v2227 = vsub.s32 %v2224, %v2226
    %v2228 = vrot.slane %v2220, %v2227
    %v2230 = vunpack.c.l.s4 1983009808
    %v2231 = vunpack.c.0.s8 %v2230
    %v2232 = vlaneseq
    %v2233 = vshrl.u32 %v2232, 7
    %v2234 = vsub.s32 %v2231, %v2233
    %v2235 = vrot.slane %v2221, %v2234
    %v2236 = vcombine.high %v2228, %v2228
    %v2237 = vcombine.high %v2235, %v2235
    %v2238 = vcombine.low %v1870, %v1871
    %v2239 = vcombine.high %v1870, %v1871
    %v2241 = vunpack.c.l.s4 1983009808
    %v2242 = vunpack.c.0.s8 %v2241
    %v2243 = vlaneseq
    %v2244 = vshrl.u32 %v2243, 7
    %v2245 = vsub.s32 %v2242, %v2244
    %v2246 = vrot.slane %v2238, %v2245
    %v2248 = vunpack.c.l.s4 1983009808
    %v2249 = vunpack.c.0.s8 %v2248
    %v2250 = vlaneseq
    %v2251 = vshrl.u32 %v2250, 7
    %v2252 = vsub.s32 %v2249, %v2251
    %v2253 = vrot.slane %v2239, %v2252
    %v2254 = vcombine.high %v2246, %v2246
    %v2255 = vcombine.high %v2253, %v2253
    %v2256 = vcombine.low %v1872, %v1873
    %v2257 = vcombine.high %v1872, %v1873
    %v2259 = vunpack.c.l.s4 1983009808
    %v2260 = vunpack.c.0.s8 %v2259
    %v2261 = vlaneseq
    %v2262 = vshrl.u32 %v2261, 7
    %v2263 = vsub.s32 %v2260, %v2262
    %v2264 = vrot.slane %v2256, %v2263
    %v2266 = vunpack.c.l.s4 1983009808
    %v2267 = vunpack.c.0.s8 %v2266
    %v2268 = vlaneseq
    %v2269 = vshrl.u32 %v2268, 7
    %v2270 = vsub.s32 %v2267, %v2269
    %v2271 = vrot.slane %v2257, %v2270
    %v2272 = vcombine.high %v2264, %v2264
    %v2273 = vcombine.high %v2271, %v2271
    %v2274 = vcombine.low %v1874, %v1875
    %v2275 = vcombine.high %v1874, %v1875
    %v2277 = vunpack.c.l.s4 1983009808
    %v2278 = vunpack.c.0.s8 %v2277
    %v2279 = vlaneseq
    %v2280 = vshrl.u32 %v2279, 7
    %v2281 = vsub.s32 %v2278, %v2280
    %v2282 = vrot.slane %v2274, %v2281
    %v2284 = vunpack.c.l.s4 1983009808
    %v2285 = vunpack.c.0.s8 %v2284
    %v2286 = vlaneseq
    %v2287 = vshrl.u32 %v2286, 7
    %v2288 = vsub.s32 %v2285, %v2287
    %v2289 = vrot.slane %v2275, %v2288
    %v2290 = vcombine.high %v2282, %v2282
    %v2291 = vcombine.high %v2289, %v2289
    %v2292 = vcombine.low %v1876, %v1877
    %v2293 = vcombine.high %v1876, %v1877
    %v2295 = vunpack.c.l.s4 1983009808
    %v2296 = vunpack.c.0.s8 %v2295
    %v2297 = vlaneseq
    %v2298 = vshrl.u32 %v2297, 7
    %v2299 = vsub.s32 %v2296, %v2298
    %v2300 = vrot.slane %v2292, %v2299
    %v2302 = vunpack.c.l.s4 1983009808
    %v2303 = vunpack.c.0.s8 %v2302
    %v2304 = vlaneseq
    %v2305 = vshrl.u32 %v2304, 7
    %v2306 = vsub.s32 %v2303, %v2305
    %v2307 = vrot.slane %v2293, %v2306
    %v2308 = vcombine.high %v2300, %v2300
    %v2309 = vcombine.high %v2307, %v2307
    %v2310 = vcombine.low %v1878, %v1879
    %v2311 = vcombine.high %v1878, %v1879
    %v2313 = vunpack.c.l.s4 1983009808
    %v2314 = vunpack.c.0.s8 %v2313
    %v2315 = vlaneseq
    %v2316 = vshrl.u32 %v2315, 7
    %v2317 = vsub.s32 %v2314, %v2316
    %v2318 = vrot.slane %v2310, %v2317
    %v2320 = vunpack.c.l.s4 1983009808
    %v2321 = vunpack.c.0.s8 %v2320
    %v2322 = vlaneseq
    %v2323 = vshrl.u32 %v2322, 7
    %v2324 = vsub.s32 %v2321, %v2323
    %v2325 = vrot.slane %v2311, %v2324
    %v2326 = vcombine.high %v2318, %v2318
    %v2327 = vcombine.high %v2325, %v2325
    %v2328 = vcombine.low %v1880, %v1881
    %v2329 = vcombine.high %v1880, %v1881
    %v2331 = vunpack.c.l.s4 1983009808
    %v2332 = vunpack.c.0.s8 %v2331
    %v2333 = vlaneseq
    %v2334 = vshrl.u32 %v2333, 7
    %v2335 = vsub.s32 %v2332, %v2334
    %v2336 = vrot.slane %v2328, %v2335
    %v2338 = vunpack.c.l.s4 1983009808
    %v2339 = vunpack.c.0.s8 %v2338
    %v2340 = vlaneseq
    %v2341 = vshrl.u32 %v2340, 7
    %v2342 = vsub.s32 %v2339, %v2341
    %v2343 = vrot.slane %v2329, %v2342
    %v2344 = vcombine.high %v2336, %v2336
    %v2345 = vcombine.high %v2343, %v2343
    %v2346 = vcombine.low %v1882, %v1883
    %v2347 = vcombine.high %v1882, %v1883
    %v2349 = vunpack.c.l.s4 1983009808
    %v2350 = vunpack.c.0.s8 %v2349
    %v2351 = vlaneseq
    %v2352 = vshrl.u32 %v2351, 7
    %v2353 = vsub.s32 %v2350, %v2352
    %v2354 = vrot.slane %v2346, %v2353
    %v2356 = vunpack.c.l.s4 1983009808
    %v2357 = vunpack.c.0.s8 %v2356
    %v2358 = vlaneseq
    %v2359 = vshrl.u32 %v2358, 7
    %v2360 = vsub.s32 %v2357, %v2359
    %v2361 = vrot.slane %v2347, %v2360
    %v2362 = vcombine.high %v2354, %v2354
    %v2363 = vcombine.high %v2361, %v2361
    %v2460 = vrot.slane %v1940, 7
    %v2461 = vrot.slane %v2460, 2
    %v2462 = vrot.slane %v1948, 7
    %v2463 = vrot.slane %v2462, 2
    %v2464 = vrot.slane %v1947, 7
    %v2465 = vrot.slane %v2464, 2
    %v2466 = vrot.slane %v1949, 7
    %v2467 = vrot.slane %v2466, 2
    %v2468 = vrot.slane %v1958, 7
    %v2469 = vrot.slane %v2468, 2
    %v2470 = vrot.slane %v1966, 7
    %v2471 = vrot.slane %v2470, 2
    %v2472 = vrot.slane %v1965, 7
    %v2473 = vrot.slane %v2472, 2
    %v2474 = vrot.slane %v1967, 7
    %v2475 = vrot.slane %v2474, 2
    %v2476 = vrot.slane %v1976, 7
    %v2477 = vrot.slane %v2476, 2
    %v2478 = vrot.slane %v1984, 7
    %v2479 = vrot.slane %v2478, 2
    %v2480 = vrot.slane %v1983, 7
    %v2481 = vrot.slane %v2480, 2
    %v2482 = vrot.slane %v1985, 7
    %v2483 = vrot.slane %v2482, 2
    %v2484 = vrot.slane %v1994, 7
    %v2485 = vrot.slane %v2484, 2
    %v2486 = vrot.slane %v2002, 7
    %v2487 = vrot.slane %v2486, 2
    %v2488 = vrot.slane %v2001, 7
    %v2489 = vrot.slane %v2488, 2
    %v2490 = vrot.slane %v2003, 7
    %v2491 = vrot.slane %v2490, 2
    %v2492 = vrot.slane %v2012, 7
    %v2493 = vrot.slane %v2492, 2
    %v2494 = vrot.slane %v2020, 7
    %v2495 = vrot.slane %v2494, 2
    %v2496 = vrot.slane %v2019, 7
    %v2497 = vrot.slane %v2496, 2
    %v2498 = vrot.slane %v2021, 7
    %v2499 = vrot.slane %v2498, 2
    %v2500 = vrot.slane %v2030, 7
    %v2501 = vrot.slane %v2500, 2
    %v2502 = vrot.slane %v2038, 7
    %v2503 = vrot.slane %v2502, 2
    %v2504 = vrot.slane %v2037, 7
    %v2505 = vrot.slane %v2504, 2
    %v2506 = vrot.slane %v2039, 7
    %v2507 = vrot.slane %v2506, 2
    %v2508 = vrot.slane %v2048, 7
    %v2509 = vrot.slane %v2508, 2
    %v2510 = vrot.slane %v2056, 7
    %v2511 = vrot.slane %v2510, 2
    %v2512 = vrot.slane %v2055, 7
    %v2513 = vrot.slane %v2512, 2
    %v2514 = vrot.slane %v2057, 7
    %v2515 = vrot.slane %v2514, 2
    %v2516 = vrot.slane %v2066, 7
    %v2517 = vrot.slane %v2516, 2
    %v2518 = vrot.slane %v2074, 7
    %v2519 = vrot.slane %v2518, 2
    %v2520 = vrot.slane %v2073, 7
    %v2521 = vrot.slane %v2520, 2
    %v2522 = vrot.slane %v2075, 7
    %v2523 = vrot.slane %v2522, 2
    %v2524 = vrot.slane %v2084, 7
    %v2525 = vrot.slane %v2524, 2
    %v2526 = vrot.slane %v2092, 7
    %v2527 = vrot.slane %v2526, 2
    %v2528 = vrot.slane %v2091, 7
    %v2529 = vrot.slane %v2528, 2
    %v2530 = vrot.slane %v2093, 7
    %v2531 = vrot.slane %v2530, 2
    %v2532 = vrot.slane %v2102, 7
    %v2533 = vrot.slane %v2532, 2
    %v2534 = vrot.slane %v2110, 7
    %v2535 = vrot.slane %v2534, 2
    %v2536 = vrot.slane %v2109, 7
    %v2537 = vrot.slane %v2536, 2
    %v2538 = vrot.slane %v2111, 7
    %v2539 = vrot.slane %v2538, 2
    %v2540 = vrot.slane %v2120, 7
    %v2541 = vrot.slane %v2540, 2
    %v2542 = vrot.slane %v2128, 7
    %v2543 = vrot.slane %v2542, 2
    %v2544 = vrot.slane %v2127, 7
    %v2545 = vrot.slane %v2544, 2
    %v2546 = vrot.slane %v2129, 7
    %v2547 = vrot.slane %v2546, 2
    %v2548 = vrot.slane %v2138, 7
    %v2549 = vrot.slane %v2548, 2
    %v2550 = vrot.slane %v2146, 7
    %v2551 = vrot.slane %v2550, 2
    %v2552 = vrot.slane %v2145, 7
    %v2553 = vrot.slane %v2552, 2
    %v2554 = vrot.slane %v2147, 7
    %v2555 = vrot.slane %v2554, 2
    %v2556 = vrot.slane %v2156, 7
    %v2557 = vrot.slane %v2556, 2
    %v2558 = vrot.slane %v2164, 7
    %v2559 = vrot.slane %v2558, 2
    %v2560 = vrot.slane %v2163, 7
    %v2561 = vrot.slane %v2560, 2
    %v2562 = vrot.slane %v2165, 7
    %v2563 = vrot.slane %v2562, 2
    %v2564 = vrot.slane %v2174, 7
    %v2565 = vrot.slane %v2564, 2
    %v2566 = vrot.slane %v2182, 7
    %v2567 = vrot.slane %v2566, 2
    %v2568 = vrot.slane %v2181, 7
    %v2569 = vrot.slane %v2568, 2
    %v2570 = vrot.slane %v2183, 7
    %v2571 = vrot.slane %v2570, 2
    %v2572 = vrot.slane %v2192, 7
    %v2573 = vrot.slane %v2572, 2
    %v2574 = vrot.slane %v2200, 7
    %v2575 = vrot.slane %v2574, 2
    %v2576 = vrot.slane %v2199, 7
    %v2577 = vrot.slane %v2576, 2
    %v2578 = vrot.slane %v2201, 7
    %v2579 = vrot.slane %v2578, 2
    %v2580 = vrot.slane %v2210, 7
    %v2581 = vrot.slane %v2580, 2
    %v2582 = vrot.slane %v2218, 7
    %v2583 = vrot.slane %v2582, 2
    %v2584 = vrot.slane %v2217, 7
    %v2585 = vrot.slane %v2584, 2
    %v2586 = vrot.slane %v2219, 7
    %v2587 = vrot.slane %v2586, 2
    %v2588 = vrot.slane %v2228, 7
    %v2589 = vrot.slane %v2588, 2
    %v2590 = vrot.slane %v2236, 7
    %v2591 = vrot.slane %v2590, 2
    %v2592 = vrot.slane %v2235, 7
    %v2593 = vrot.slane %v2592, 2
    %v2594 = vrot.slane %v2237, 7
    %v2595 = vrot.slane %v2594, 2
    %v2596 = vrot.slane %v2246, 7
    %v2597 = vrot.slane %v2596, 2
    %v2598 = vrot.slane %v2254, 7
    %v2599 = vrot.slane %v2598, 2
    %v2600 = vrot.slane %v2253, 7
    %v2601 = vrot.slane %v2600, 2
    %v2602 = vrot.slane %v2255, 7
    %v2603 = vrot.slane %v2602, 2
    %v2604 = vrot.slane %v2264, 7
    %v2605 = vrot.slane %v2604, 2
    %v2606 = vrot.slane %v2272, 7
    %v2607 = vrot.slane %v2606, 2
    %v2608 = vrot.slane %v2271, 7
    %v2609 = vrot.slane %v2608, 2
    %v2610 = vrot.slane %v2273, 7
    %v2611 = vrot.slane %v2610, 2
    %v2612 = vrot.slane %v2282, 7
    %v2613 = vrot.slane %v2612, 2
    %v2614 = vrot.slane %v2290, 7
    %v2615 = vrot.slane %v2614, 2
    %v2616 = vrot.slane %v2289, 7
    %v2617 = vrot.slane %v2616, 2
    %v2618 = vrot.slane %v2291, 7
    %v2619 = vrot.slane %v2618, 2
    %v2620 = vrot.slane %v2300, 7
    %v2621 = vrot.slane %v2620, 2
    %v2622 = vrot.slane %v2308, 7
    %v2623 = vrot.slane %v2622, 2
    %v2624 = vrot.slane %v2307, 7
    %v2625 = vrot.slane %v2624, 2
    %v2626 = vrot.slane %v2309, 7
    %v2627 = vrot.slane %v2626, 2
    %v2628 = vrot.slane %v2318, 7
    %v2629 = vrot.slane %v2628, 2
    %v2630 = vrot.slane %v2326, 7
    %v2631 = vrot.slane %v2630, 2
    %v2632 = vrot.slane %v2325, 7
    %v2633 = vrot.slane %v2632, 2
    %v2634 = vrot.slane %v2327, 7
    %v2635 = vrot.slane %v2634, 2
    %v2636 = vrot.slane %v2336, 7
    %v2637 = vrot.slane %v2636, 2
    %v2638 = vrot.slane %v2344, 7
    %v2639 = vrot.slane %v2638, 2
    %v2640 = vrot.slane %v2343, 7
    %v2641 = vrot.slane %v2640, 2
    %v2642 = vrot.slane %v2345, 7
    %v2643 = vrot.slane %v2642, 2
    %v2644 = vrot.slane %v2354, 7
    %v2645 = vrot.slane %v2644, 2
    %v2646 = vrot.slane %v2362, 7
    %v2647 = vrot.slane %v2646, 2
    %v2648 = vrot.slane %v2361, 7
    %v2649 = vrot.slane %v2648, 2
    %v2650 = vrot.slane %v2363, 7
    %v2651 = vrot.slane %v2650, 2
    %v2748 = vmax.f32 %v1940, %v2461
    %v2749 = vmax.f32 %v1948, %v2463
    %v2750 = vmax.f32 %v1947, %v2465
    %v2751 = vmax.f32 %v1949, %v2467
    %v2752 = vmax.f32 %v1958, %v2469
    %v2753 = vmax.f32 %v1966, %v2471
    %v2754 = vmax.f32 %v1965, %v2473
    %v2755 = vmax.f32 %v1967, %v2475
    %v2756 = vmax.f32 %v1976, %v2477
    %v2757 = vmax.f32 %v1984, %v2479
    %v2758 = vmax.f32 %v1983, %v2481
    %v2759 = vmax.f32 %v1985, %v2483
    %v2760 = vmax.f32 %v1994, %v2485
    %v2761 = vmax.f32 %v2002, %v2487
    %v2762 = vmax.f32 %v2001, %v2489
    %v2763 = vmax.f32 %v2003, %v2491
    %v2764 = vmax.f32 %v2012, %v2493
    %v2765 = vmax.f32 %v2020, %v2495
    %v2766 = vmax.f32 %v2019, %v2497
    %v2767 = vmax.f32 %v2021, %v2499
    %v2768 = vmax.f32 %v2030, %v2501
    %v2769 = vmax.f32 %v2038, %v2503
    %v2770 = vmax.f32 %v2037, %v2505
    %v2771 = vmax.f32 %v2039, %v2507
    %v2772 = vmax.f32 %v2048, %v2509
    %v2773 = vmax.f32 %v2056, %v2511
    %v2774 = vmax.f32 %v2055, %v2513
    %v2775 = vmax.f32 %v2057, %v2515
    %v2776 = vmax.f32 %v2066, %v2517
    %v2777 = vmax.f32 %v2074, %v2519
    %v2778 = vmax.f32 %v2073, %v2521
    %v2779 = vmax.f32 %v2075, %v2523
    %v2780 = vmax.f32 %v2084, %v2525
    %v2781 = vmax.f32 %v2092, %v2527
    %v2782 = vmax.f32 %v2091, %v2529
    %v2783 = vmax.f32 %v2093, %v2531
    %v2784 = vmax.f32 %v2102, %v2533
    %v2785 = vmax.f32 %v2110, %v2535
    %v2786 = vmax.f32 %v2109, %v2537
    %v2787 = vmax.f32 %v2111, %v2539
    %v2788 = vmax.f32 %v2120, %v2541
    %v2789 = vmax.f32 %v2128, %v2543
    %v2790 = vmax.f32 %v2127, %v2545
    %v2791 = vmax.f32 %v2129, %v2547
    %v2792 = vmax.f32 %v2138, %v2549
    %v2793 = vmax.f32 %v2146, %v2551
    %v2794 = vmax.f32 %v2145, %v2553
    %v2795 = vmax.f32 %v2147, %v2555
    %v2796 = vmax.f32 %v2156, %v2557
    %v2797 = vmax.f32 %v2164, %v2559
    %v2798 = vmax.f32 %v2163, %v2561
    %v2799 = vmax.f32 %v2165, %v2563
    %v2800 = vmax.f32 %v2174, %v2565
    %v2801 = vmax.f32 %v2182, %v2567
    %v2802 = vmax.f32 %v2181, %v2569
    %v2803 = vmax.f32 %v2183, %v2571
    %v2804 = vmax.f32 %v2192, %v2573
    %v2805 = vmax.f32 %v2200, %v2575
    %v2806 = vmax.f32 %v2199, %v2577
    %v2807 = vmax.f32 %v2201, %v2579
    %v2808 = vmax.f32 %v2210, %v2581
    %v2809 = vmax.f32 %v2218, %v2583
    %v2810 = vmax.f32 %v2217, %v2585
    %v2811 = vmax.f32 %v2219, %v2587
    %v2812 = vmax.f32 %v2228, %v2589
    %v2813 = vmax.f32 %v2236, %v2591
    %v2814 = vmax.f32 %v2235, %v2593
    %v2815 = vmax.f32 %v2237, %v2595
    %v2816 = vmax.f32 %v2246, %v2597
    %v2817 = vmax.f32 %v2254, %v2599
    %v2818 = vmax.f32 %v2253, %v2601
    %v2819 = vmax.f32 %v2255, %v2603
    %v2820 = vmax.f32 %v2264, %v2605
    %v2821 = vmax.f32 %v2272, %v2607
    %v2822 = vmax.f32 %v2271, %v2609
    %v2823 = vmax.f32 %v2273, %v2611
    %v2824 = vmax.f32 %v2282, %v2613
    %v2825 = vmax.f32 %v2290, %v2615
    %v2826 = vmax.f32 %v2289, %v2617
    %v2827 = vmax.f32 %v2291, %v2619
    %v2828 = vmax.f32 %v2300, %v2621
    %v2829 = vmax.f32 %v2308, %v2623
    %v2830 = vmax.f32 %v2307, %v2625
    %v2831 = vmax.f32 %v2309, %v2627
    %v2832 = vmax.f32 %v2318, %v2629
    %v2833 = vmax.f32 %v2326, %v2631
    %v2834 = vmax.f32 %v2325, %v2633
    %v2835 = vmax.f32 %v2327, %v2635
    %v2836 = vmax.f32 %v2336, %v2637
    %v2837 = vmax.f32 %v2344, %v2639
    %v2838 = vmax.f32 %v2343, %v2641
    %v2839 = vmax.f32 %v2345, %v2643
    %v2840 = vmax.f32 %v2354, %v2645
    %v2841 = vmax.f32 %v2362, %v2647
    %v2842 = vmax.f32 %v2361, %v2649
    %v2843 = vmax.f32 %v2363, %v2651
    %v2940 = vlaneseq
    %v2941 = vshrl.u32 %v2940, 7
    %v2942 = vsub.s32 0, %v2941
    %v2943 = vrot.slane %v2748, %v2942
    %v2944 = vlaneseq
    %v2945 = vshrl.u32 %v2944, 7
    %v2946 = vsub.s32 2, %v2945
    %v2947 = vrot.slane %v2748, %v2946
    %v2948 = vlaneseq
    %v2949 = vshrl.u32 %v2948, 7
    %v2950 = vsub.s32 0, %v2949
    %v2951 = vrot.slane %v2749, %v2950
    %v2952 = vlaneseq
    %v2953 = vshrl.u32 %v2952, 7
    %v2954 = vsub.s32 2, %v2953
    %v2955 = vrot.slane %v2749, %v2954
    %v2956 = vlaneseq
    %v2957 = vshrl.u32 %v2956, 7
    %v2958 = vsub.s32 0, %v2957
    %v2959 = vrot.slane %v2750, %v2958
    %v2960 = vlaneseq
    %v2961 = vshrl.u32 %v2960, 7
    %v2962 = vsub.s32 2, %v2961
    %v2963 = vrot.slane %v2750, %v2962
    %v2964 = vlaneseq
    %v2965 = vshrl.u32 %v2964, 7
    %v2966 = vsub.s32 0, %v2965
    %v2967 = vrot.slane %v2751, %v2966
    %v2968 = vlaneseq
    %v2969 = vshrl.u32 %v2968, 7
    %v2970 = vsub.s32 2, %v2969
    %v2971 = vrot.slane %v2751, %v2970
    %v2972 = vlaneseq
    %v2973 = vshrl.u32 %v2972, 7
    %v2974 = vsub.s32 0, %v2973
    %v2975 = vrot.slane %v2752, %v2974
    %v2976 = vlaneseq
    %v2977 = vshrl.u32 %v2976, 7
    %v2978 = vsub.s32 2, %v2977
    %v2979 = vrot.slane %v2752, %v2978
    %v2980 = vlaneseq
    %v2981 = vshrl.u32 %v2980, 7
    %v2982 = vsub.s32 0, %v2981
    %v2983 = vrot.slane %v2753, %v2982
    %v2984 = vlaneseq
    %v2985 = vshrl.u32 %v2984, 7
    %v2986 = vsub.s32 2, %v2985
    %v2987 = vrot.slane %v2753, %v2986
    %v2988 = vlaneseq
    %v2989 = vshrl.u32 %v2988, 7
    %v2990 = vsub.s32 0, %v2989
    %v2991 = vrot.slane %v2754, %v2990
    %v2992 = vlaneseq
    %v2993 = vshrl.u32 %v2992, 7
    %v2994 = vsub.s32 2, %v2993
    %v2995 = vrot.slane %v2754, %v2994
    %v2996 = vlaneseq
    %v2997 = vshrl.u32 %v2996, 7
    %v2998 = vsub.s32 0, %v2997
    %v2999 = vrot.slane %v2755, %v2998
    %v3000 = vlaneseq
    %v3001 = vshrl.u32 %v3000, 7
    %v3002 = vsub.s32 2, %v3001
    %v3003 = vrot.slane %v2755, %v3002
    %v3004 = vlaneseq
    %v3005 = vshrl.u32 %v3004, 7
    %v3006 = vsub.s32 0, %v3005
    %v3007 = vrot.slane %v2756, %v3006
    %v3008 = vlaneseq
    %v3009 = vshrl.u32 %v3008, 7
    %v3010 = vsub.s32 2, %v3009
    %v3011 = vrot.slane %v2756, %v3010
    %v3012 = vlaneseq
    %v3013 = vshrl.u32 %v3012, 7
    %v3014 = vsub.s32 0, %v3013
    %v3015 = vrot.slane %v2757, %v3014
    %v3016 = vlaneseq
    %v3017 = vshrl.u32 %v3016, 7
    %v3018 = vsub.s32 2, %v3017
    %v3019 = vrot.slane %v2757, %v3018
    %v3020 = vlaneseq
    %v3021 = vshrl.u32 %v3020, 7
    %v3022 = vsub.s32 0, %v3021
    %v3023 = vrot.slane %v2758, %v3022
    %v3024 = vlaneseq
    %v3025 = vshrl.u32 %v3024, 7
    %v3026 = vsub.s32 2, %v3025
    %v3027 = vrot.slane %v2758, %v3026
    %v3028 = vlaneseq
    %v3029 = vshrl.u32 %v3028, 7
    %v3030 = vsub.s32 0, %v3029
    %v3031 = vrot.slane %v2759, %v3030
    %v3032 = vlaneseq
    %v3033 = vshrl.u32 %v3032, 7
    %v3034 = vsub.s32 2, %v3033
    %v3035 = vrot.slane %v2759, %v3034
    %v3036 = vlaneseq
    %v3037 = vshrl.u32 %v3036, 7
    %v3038 = vsub.s32 0, %v3037
    %v3039 = vrot.slane %v2760, %v3038
    %v3040 = vlaneseq
    %v3041 = vshrl.u32 %v3040, 7
    %v3042 = vsub.s32 2, %v3041
    %v3043 = vrot.slane %v2760, %v3042
    %v3044 = vlaneseq
    %v3045 = vshrl.u32 %v3044, 7
    %v3046 = vsub.s32 0, %v3045
    %v3047 = vrot.slane %v2761, %v3046
    %v3048 = vlaneseq
    %v3049 = vshrl.u32 %v3048, 7
    %v3050 = vsub.s32 2, %v3049
    %v3051 = vrot.slane %v2761, %v3050
    %v3052 = vlaneseq
    %v3053 = vshrl.u32 %v3052, 7
    %v3054 = vsub.s32 0, %v3053
    %v3055 = vrot.slane %v2762, %v3054
    %v3056 = vlaneseq
    %v3057 = vshrl.u32 %v3056, 7
    %v3058 = vsub.s32 2, %v3057
    %v3059 = vrot.slane %v2762, %v3058
    %v3060 = vlaneseq
    %v3061 = vshrl.u32 %v3060, 7
    %v3062 = vsub.s32 0, %v3061
    %v3063 = vrot.slane %v2763, %v3062
    %v3064 = vlaneseq
    %v3065 = vshrl.u32 %v3064, 7
    %v3066 = vsub.s32 2, %v3065
    %v3067 = vrot.slane %v2763, %v3066
    %v3068 = vlaneseq
    %v3069 = vshrl.u32 %v3068, 7
    %v3070 = vsub.s32 0, %v3069
    %v3071 = vrot.slane %v2764, %v3070
    %v3072 = vlaneseq
    %v3073 = vshrl.u32 %v3072, 7
    %v3074 = vsub.s32 2, %v3073
    %v3075 = vrot.slane %v2764, %v3074
    %v3076 = vlaneseq
    %v3077 = vshrl.u32 %v3076, 7
    %v3078 = vsub.s32 0, %v3077
    %v3079 = vrot.slane %v2765, %v3078
    %v3080 = vlaneseq
    %v3081 = vshrl.u32 %v3080, 7
    %v3082 = vsub.s32 2, %v3081
    %v3083 = vrot.slane %v2765, %v3082
    %v3084 = vlaneseq
    %v3085 = vshrl.u32 %v3084, 7
    %v3086 = vsub.s32 0, %v3085
    %v3087 = vrot.slane %v2766, %v3086
    %v3088 = vlaneseq
    %v3089 = vshrl.u32 %v3088, 7
    %v3090 = vsub.s32 2, %v3089
    %v3091 = vrot.slane %v2766, %v3090
    %v3092 = vlaneseq
    %v3093 = vshrl.u32 %v3092, 7
    %v3094 = vsub.s32 0, %v3093
    %v3095 = vrot.slane %v2767, %v3094
    %v3096 = vlaneseq
    %v3097 = vshrl.u32 %v3096, 7
    %v3098 = vsub.s32 2, %v3097
    %v3099 = vrot.slane %v2767, %v3098
    %v3100 = vlaneseq
    %v3101 = vshrl.u32 %v3100, 7
    %v3102 = vsub.s32 0, %v3101
    %v3103 = vrot.slane %v2768, %v3102
    %v3104 = vlaneseq
    %v3105 = vshrl.u32 %v3104, 7
    %v3106 = vsub.s32 2, %v3105
    %v3107 = vrot.slane %v2768, %v3106
    %v3108 = vlaneseq
    %v3109 = vshrl.u32 %v3108, 7
    %v3110 = vsub.s32 0, %v3109
    %v3111 = vrot.slane %v2769, %v3110
    %v3112 = vlaneseq
    %v3113 = vshrl.u32 %v3112, 7
    %v3114 = vsub.s32 2, %v3113
    %v3115 = vrot.slane %v2769, %v3114
    %v3116 = vlaneseq
    %v3117 = vshrl.u32 %v3116, 7
    %v3118 = vsub.s32 0, %v3117
    %v3119 = vrot.slane %v2770, %v3118
    %v3120 = vlaneseq
    %v3121 = vshrl.u32 %v3120, 7
    %v3122 = vsub.s32 2, %v3121
    %v3123 = vrot.slane %v2770, %v3122
    %v3124 = vlaneseq
    %v3125 = vshrl.u32 %v3124, 7
    %v3126 = vsub.s32 0, %v3125
    %v3127 = vrot.slane %v2771, %v3126
    %v3128 = vlaneseq
    %v3129 = vshrl.u32 %v3128, 7
    %v3130 = vsub.s32 2, %v3129
    %v3131 = vrot.slane %v2771, %v3130
    %v3132 = vlaneseq
    %v3133 = vshrl.u32 %v3132, 7
    %v3134 = vsub.s32 0, %v3133
    %v3135 = vrot.slane %v2772, %v3134
    %v3136 = vlaneseq
    %v3137 = vshrl.u32 %v3136, 7
    %v3138 = vsub.s32 2, %v3137
    %v3139 = vrot.slane %v2772, %v3138
    %v3140 = vlaneseq
    %v3141 = vshrl.u32 %v3140, 7
    %v3142 = vsub.s32 0, %v3141
    %v3143 = vrot.slane %v2773, %v3142
    %v3144 = vlaneseq
    %v3145 = vshrl.u32 %v3144, 7
    %v3146 = vsub.s32 2, %v3145
    %v3147 = vrot.slane %v2773, %v3146
    %v3148 = vlaneseq
    %v3149 = vshrl.u32 %v3148, 7
    %v3150 = vsub.s32 0, %v3149
    %v3151 = vrot.slane %v2774, %v3150
    %v3152 = vlaneseq
    %v3153 = vshrl.u32 %v3152, 7
    %v3154 = vsub.s32 2, %v3153
    %v3155 = vrot.slane %v2774, %v3154
    %v3156 = vlaneseq
    %v3157 = vshrl.u32 %v3156, 7
    %v3158 = vsub.s32 0, %v3157
    %v3159 = vrot.slane %v2775, %v3158
    %v3160 = vlaneseq
    %v3161 = vshrl.u32 %v3160, 7
    %v3162 = vsub.s32 2, %v3161
    %v3163 = vrot.slane %v2775, %v3162
    %v3164 = vlaneseq
    %v3165 = vshrl.u32 %v3164, 7
    %v3166 = vsub.s32 0, %v3165
    %v3167 = vrot.slane %v2776, %v3166
    %v3168 = vlaneseq
    %v3169 = vshrl.u32 %v3168, 7
    %v3170 = vsub.s32 2, %v3169
    %v3171 = vrot.slane %v2776, %v3170
    %v3172 = vlaneseq
    %v3173 = vshrl.u32 %v3172, 7
    %v3174 = vsub.s32 0, %v3173
    %v3175 = vrot.slane %v2777, %v3174
    %v3176 = vlaneseq
    %v3177 = vshrl.u32 %v3176, 7
    %v3178 = vsub.s32 2, %v3177
    %v3179 = vrot.slane %v2777, %v3178
    %v3180 = vlaneseq
    %v3181 = vshrl.u32 %v3180, 7
    %v3182 = vsub.s32 0, %v3181
    %v3183 = vrot.slane %v2778, %v3182
    %v3184 = vlaneseq
    %v3185 = vshrl.u32 %v3184, 7
    %v3186 = vsub.s32 2, %v3185
    %v3187 = vrot.slane %v2778, %v3186
    %v3188 = vlaneseq
    %v3189 = vshrl.u32 %v3188, 7
    %v3190 = vsub.s32 0, %v3189
    %v3191 = vrot.slane %v2779, %v3190
    %v3192 = vlaneseq
    %v3193 = vshrl.u32 %v3192, 7
    %v3194 = vsub.s32 2, %v3193
    %v3195 = vrot.slane %v2779, %v3194
    %v3196 = vlaneseq
    %v3197 = vshrl.u32 %v3196, 7
    %v3198 = vsub.s32 0, %v3197
    %v3199 = vrot.slane %v2780, %v3198
    %v3200 = vlaneseq
    %v3201 = vshrl.u32 %v3200, 7
    %v3202 = vsub.s32 2, %v3201
    %v3203 = vrot.slane %v2780, %v3202
    %v3204 = vlaneseq
    %v3205 = vshrl.u32 %v3204, 7
    %v3206 = vsub.s32 0, %v3205
    %v3207 = vrot.slane %v2781, %v3206
    %v3208 = vlaneseq
    %v3209 = vshrl.u32 %v3208, 7
    %v3210 = vsub.s32 2, %v3209
    %v3211 = vrot.slane %v2781, %v3210
    %v3212 = vlaneseq
    %v3213 = vshrl.u32 %v3212, 7
    %v3214 = vsub.s32 0, %v3213
    %v3215 = vrot.slane %v2782, %v3214
    %v3216 = vlaneseq
    %v3217 = vshrl.u32 %v3216, 7
    %v3218 = vsub.s32 2, %v3217
    %v3219 = vrot.slane %v2782, %v3218
    %v3220 = vlaneseq
    %v3221 = vshrl.u32 %v3220, 7
    %v3222 = vsub.s32 0, %v3221
    %v3223 = vrot.slane %v2783, %v3222
    %v3224 = vlaneseq
    %v3225 = vshrl.u32 %v3224, 7
    %v3226 = vsub.s32 2, %v3225
    %v3227 = vrot.slane %v2783, %v3226
    %v3228 = vlaneseq
    %v3229 = vshrl.u32 %v3228, 7
    %v3230 = vsub.s32 0, %v3229
    %v3231 = vrot.slane %v2784, %v3230
    %v3232 = vlaneseq
    %v3233 = vshrl.u32 %v3232, 7
    %v3234 = vsub.s32 2, %v3233
    %v3235 = vrot.slane %v2784, %v3234
    %v3236 = vlaneseq
    %v3237 = vshrl.u32 %v3236, 7
    %v3238 = vsub.s32 0, %v3237
    %v3239 = vrot.slane %v2785, %v3238
    %v3240 = vlaneseq
    %v3241 = vshrl.u32 %v3240, 7
    %v3242 = vsub.s32 2, %v3241
    %v3243 = vrot.slane %v2785, %v3242
    %v3244 = vlaneseq
    %v3245 = vshrl.u32 %v3244, 7
    %v3246 = vsub.s32 0, %v3245
    %v3247 = vrot.slane %v2786, %v3246
    %v3248 = vlaneseq
    %v3249 = vshrl.u32 %v3248, 7
    %v3250 = vsub.s32 2, %v3249
    %v3251 = vrot.slane %v2786, %v3250
    %v3252 = vlaneseq
    %v3253 = vshrl.u32 %v3252, 7
    %v3254 = vsub.s32 0, %v3253
    %v3255 = vrot.slane %v2787, %v3254
    %v3256 = vlaneseq
    %v3257 = vshrl.u32 %v3256, 7
    %v3258 = vsub.s32 2, %v3257
    %v3259 = vrot.slane %v2787, %v3258
    %v3260 = vlaneseq
    %v3261 = vshrl.u32 %v3260, 7
    %v3262 = vsub.s32 0, %v3261
    %v3263 = vrot.slane %v2788, %v3262
    %v3264 = vlaneseq
    %v3265 = vshrl.u32 %v3264, 7
    %v3266 = vsub.s32 2, %v3265
    %v3267 = vrot.slane %v2788, %v3266
    %v3268 = vlaneseq
    %v3269 = vshrl.u32 %v3268, 7
    %v3270 = vsub.s32 0, %v3269
    %v3271 = vrot.slane %v2789, %v3270
    %v3272 = vlaneseq
    %v3273 = vshrl.u32 %v3272, 7
    %v3274 = vsub.s32 2, %v3273
    %v3275 = vrot.slane %v2789, %v3274
    %v3276 = vlaneseq
    %v3277 = vshrl.u32 %v3276, 7
    %v3278 = vsub.s32 0, %v3277
    %v3279 = vrot.slane %v2790, %v3278
    %v3280 = vlaneseq
    %v3281 = vshrl.u32 %v3280, 7
    %v3282 = vsub.s32 2, %v3281
    %v3283 = vrot.slane %v2790, %v3282
    %v3284 = vlaneseq
    %v3285 = vshrl.u32 %v3284, 7
    %v3286 = vsub.s32 0, %v3285
    %v3287 = vrot.slane %v2791, %v3286
    %v3288 = vlaneseq
    %v3289 = vshrl.u32 %v3288, 7
    %v3290 = vsub.s32 2, %v3289
    %v3291 = vrot.slane %v2791, %v3290
    %v3292 = vlaneseq
    %v3293 = vshrl.u32 %v3292, 7
    %v3294 = vsub.s32 0, %v3293
    %v3295 = vrot.slane %v2792, %v3294
    %v3296 = vlaneseq
    %v3297 = vshrl.u32 %v3296, 7
    %v3298 = vsub.s32 2, %v3297
    %v3299 = vrot.slane %v2792, %v3298
    %v3300 = vlaneseq
    %v3301 = vshrl.u32 %v3300, 7
    %v3302 = vsub.s32 0, %v3301
    %v3303 = vrot.slane %v2793, %v3302
    %v3304 = vlaneseq
    %v3305 = vshrl.u32 %v3304, 7
    %v3306 = vsub.s32 2, %v3305
    %v3307 = vrot.slane %v2793, %v3306
    %v3308 = vlaneseq
    %v3309 = vshrl.u32 %v3308, 7
    %v3310 = vsub.s32 0, %v3309
    %v3311 = vrot.slane %v2794, %v3310
    %v3312 = vlaneseq
    %v3313 = vshrl.u32 %v3312, 7
    %v3314 = vsub.s32 2, %v3313
    %v3315 = vrot.slane %v2794, %v3314
    %v3316 = vlaneseq
    %v3317 = vshrl.u32 %v3316, 7
    %v3318 = vsub.s32 0, %v3317
    %v3319 = vrot.slane %v2795, %v3318
    %v3320 = vlaneseq
    %v3321 = vshrl.u32 %v3320, 7
    %v3322 = vsub.s32 2, %v3321
    %v3323 = vrot.slane %v2795, %v3322
    %v3324 = vlaneseq
    %v3325 = vshrl.u32 %v3324, 7
    %v3326 = vsub.s32 0, %v3325
    %v3327 = vrot.slane %v2796, %v3326
    %v3328 = vlaneseq
    %v3329 = vshrl.u32 %v3328, 7
    %v3330 = vsub.s32 2, %v3329
    %v3331 = vrot.slane %v2796, %v3330
    %v3332 = vlaneseq
    %v3333 = vshrl.u32 %v3332, 7
    %v3334 = vsub.s32 0, %v3333
    %v3335 = vrot.slane %v2797, %v3334
    %v3336 = vlaneseq
    %v3337 = vshrl.u32 %v3336, 7
    %v3338 = vsub.s32 2, %v3337
    %v3339 = vrot.slane %v2797, %v3338
    %v3340 = vlaneseq
    %v3341 = vshrl.u32 %v3340, 7
    %v3342 = vsub.s32 0, %v3341
    %v3343 = vrot.slane %v2798, %v3342
    %v3344 = vlaneseq
    %v3345 = vshrl.u32 %v3344, 7
    %v3346 = vsub.s32 2, %v3345
    %v3347 = vrot.slane %v2798, %v3346
    %v3348 = vlaneseq
    %v3349 = vshrl.u32 %v3348, 7
    %v3350 = vsub.s32 0, %v3349
    %v3351 = vrot.slane %v2799, %v3350
    %v3352 = vlaneseq
    %v3353 = vshrl.u32 %v3352, 7
    %v3354 = vsub.s32 2, %v3353
    %v3355 = vrot.slane %v2799, %v3354
    %v3356 = vlaneseq
    %v3357 = vshrl.u32 %v3356, 7
    %v3358 = vsub.s32 0, %v3357
    %v3359 = vrot.slane %v2800, %v3358
    %v3360 = vlaneseq
    %v3361 = vshrl.u32 %v3360, 7
    %v3362 = vsub.s32 2, %v3361
    %v3363 = vrot.slane %v2800, %v3362
    %v3364 = vlaneseq
    %v3365 = vshrl.u32 %v3364, 7
    %v3366 = vsub.s32 0, %v3365
    %v3367 = vrot.slane %v2801, %v3366
    %v3368 = vlaneseq
    %v3369 = vshrl.u32 %v3368, 7
    %v3370 = vsub.s32 2, %v3369
    %v3371 = vrot.slane %v2801, %v3370
    %v3372 = vlaneseq
    %v3373 = vshrl.u32 %v3372, 7
    %v3374 = vsub.s32 0, %v3373
    %v3375 = vrot.slane %v2802, %v3374
    %v3376 = vlaneseq
    %v3377 = vshrl.u32 %v3376, 7
    %v3378 = vsub.s32 2, %v3377
    %v3379 = vrot.slane %v2802, %v3378
    %v3380 = vlaneseq
    %v3381 = vshrl.u32 %v3380, 7
    %v3382 = vsub.s32 0, %v3381
    %v3383 = vrot.slane %v2803, %v3382
    %v3384 = vlaneseq
    %v3385 = vshrl.u32 %v3384, 7
    %v3386 = vsub.s32 2, %v3385
    %v3387 = vrot.slane %v2803, %v3386
    %v3388 = vlaneseq
    %v3389 = vshrl.u32 %v3388, 7
    %v3390 = vsub.s32 0, %v3389
    %v3391 = vrot.slane %v2804, %v3390
    %v3392 = vlaneseq
    %v3393 = vshrl.u32 %v3392, 7
    %v3394 = vsub.s32 2, %v3393
    %v3395 = vrot.slane %v2804, %v3394
    %v3396 = vlaneseq
    %v3397 = vshrl.u32 %v3396, 7
    %v3398 = vsub.s32 0, %v3397
    %v3399 = vrot.slane %v2805, %v3398
    %v3400 = vlaneseq
    %v3401 = vshrl.u32 %v3400, 7
    %v3402 = vsub.s32 2, %v3401
    %v3403 = vrot.slane %v2805, %v3402
    %v3404 = vlaneseq
    %v3405 = vshrl.u32 %v3404, 7
    %v3406 = vsub.s32 0, %v3405
    %v3407 = vrot.slane %v2806, %v3406
    %v3408 = vlaneseq
    %v3409 = vshrl.u32 %v3408, 7
    %v3410 = vsub.s32 2, %v3409
    %v3411 = vrot.slane %v2806, %v3410
    %v3412 = vlaneseq
    %v3413 = vshrl.u32 %v3412, 7
    %v3414 = vsub.s32 0, %v3413
    %v3415 = vrot.slane %v2807, %v3414
    %v3416 = vlaneseq
    %v3417 = vshrl.u32 %v3416, 7
    %v3418 = vsub.s32 2, %v3417
    %v3419 = vrot.slane %v2807, %v3418
    %v3420 = vlaneseq
    %v3421 = vshrl.u32 %v3420, 7
    %v3422 = vsub.s32 0, %v3421
    %v3423 = vrot.slane %v2808, %v3422
    %v3424 = vlaneseq
    %v3425 = vshrl.u32 %v3424, 7
    %v3426 = vsub.s32 2, %v3425
    %v3427 = vrot.slane %v2808, %v3426
    %v3428 = vlaneseq
    %v3429 = vshrl.u32 %v3428, 7
    %v3430 = vsub.s32 0, %v3429
    %v3431 = vrot.slane %v2809, %v3430
    %v3432 = vlaneseq
    %v3433 = vshrl.u32 %v3432, 7
    %v3434 = vsub.s32 2, %v3433
    %v3435 = vrot.slane %v2809, %v3434
    %v3436 = vlaneseq
    %v3437 = vshrl.u32 %v3436, 7
    %v3438 = vsub.s32 0, %v3437
    %v3439 = vrot.slane %v2810, %v3438
    %v3440 = vlaneseq
    %v3441 = vshrl.u32 %v3440, 7
    %v3442 = vsub.s32 2, %v3441
    %v3443 = vrot.slane %v2810, %v3442
    %v3444 = vlaneseq
    %v3445 = vshrl.u32 %v3444, 7
    %v3446 = vsub.s32 0, %v3445
    %v3447 = vrot.slane %v2811, %v3446
    %v3448 = vlaneseq
    %v3449 = vshrl.u32 %v3448, 7
    %v3450 = vsub.s32 2, %v3449
    %v3451 = vrot.slane %v2811, %v3450
    %v3452 = vlaneseq
    %v3453 = vshrl.u32 %v3452, 7
    %v3454 = vsub.s32 0, %v3453
    %v3455 = vrot.slane %v2812, %v3454
    %v3456 = vlaneseq
    %v3457 = vshrl.u32 %v3456, 7
    %v3458 = vsub.s32 2, %v3457
    %v3459 = vrot.slane %v2812, %v3458
    %v3460 = vlaneseq
    %v3461 = vshrl.u32 %v3460, 7
    %v3462 = vsub.s32 0, %v3461
    %v3463 = vrot.slane %v2813, %v3462
    %v3464 = vlaneseq
    %v3465 = vshrl.u32 %v3464, 7
    %v3466 = vsub.s32 2, %v3465
    %v3467 = vrot.slane %v2813, %v3466
    %v3468 = vlaneseq
    %v3469 = vshrl.u32 %v3468, 7
    %v3470 = vsub.s32 0, %v3469
    %v3471 = vrot.slane %v2814, %v3470
    %v3472 = vlaneseq
    %v3473 = vshrl.u32 %v3472, 7
    %v3474 = vsub.s32 2, %v3473
    %v3475 = vrot.slane %v2814, %v3474
    %v3476 = vlaneseq
    %v3477 = vshrl.u32 %v3476, 7
    %v3478 = vsub.s32 0, %v3477
    %v3479 = vrot.slane %v2815, %v3478
    %v3480 = vlaneseq
    %v3481 = vshrl.u32 %v3480, 7
    %v3482 = vsub.s32 2, %v3481
    %v3483 = vrot.slane %v2815, %v3482
    %v3484 = vlaneseq
    %v3485 = vshrl.u32 %v3484, 7
    %v3486 = vsub.s32 0, %v3485
    %v3487 = vrot.slane %v2816, %v3486
    %v3488 = vlaneseq
    %v3489 = vshrl.u32 %v3488, 7
    %v3490 = vsub.s32 2, %v3489
    %v3491 = vrot.slane %v2816, %v3490
    %v3492 = vlaneseq
    %v3493 = vshrl.u32 %v3492, 7
    %v3494 = vsub.s32 0, %v3493
    %v3495 = vrot.slane %v2817, %v3494
    %v3496 = vlaneseq
    %v3497 = vshrl.u32 %v3496, 7
    %v3498 = vsub.s32 2, %v3497
    %v3499 = vrot.slane %v2817, %v3498
    %v3500 = vlaneseq
    %v3501 = vshrl.u32 %v3500, 7
    %v3502 = vsub.s32 0, %v3501
    %v3503 = vrot.slane %v2818, %v3502
    %v3504 = vlaneseq
    %v3505 = vshrl.u32 %v3504, 7
    %v3506 = vsub.s32 2, %v3505
    %v3507 = vrot.slane %v2818, %v3506
    %v3508 = vlaneseq
    %v3509 = vshrl.u32 %v3508, 7
    %v3510 = vsub.s32 0, %v3509
    %v3511 = vrot.slane %v2819, %v3510
    %v3512 = vlaneseq
    %v3513 = vshrl.u32 %v3512, 7
    %v3514 = vsub.s32 2, %v3513
    %v3515 = vrot.slane %v2819, %v3514
    %v3516 = vlaneseq
    %v3517 = vshrl.u32 %v3516, 7
    %v3518 = vsub.s32 0, %v3517
    %v3519 = vrot.slane %v2820, %v3518
    %v3520 = vlaneseq
    %v3521 = vshrl.u32 %v3520, 7
    %v3522 = vsub.s32 2, %v3521
    %v3523 = vrot.slane %v2820, %v3522
    %v3524 = vlaneseq
    %v3525 = vshrl.u32 %v3524, 7
    %v3526 = vsub.s32 0, %v3525
    %v3527 = vrot.slane %v2821, %v3526
    %v3528 = vlaneseq
    %v3529 = vshrl.u32 %v3528, 7
    %v3530 = vsub.s32 2, %v3529
    %v3531 = vrot.slane %v2821, %v3530
    %v3532 = vlaneseq
    %v3533 = vshrl.u32 %v3532, 7
    %v3534 = vsub.s32 0, %v3533
    %v3535 = vrot.slane %v2822, %v3534
    %v3536 = vlaneseq
    %v3537 = vshrl.u32 %v3536, 7
    %v3538 = vsub.s32 2, %v3537
    %v3539 = vrot.slane %v2822, %v3538
    %v3540 = vlaneseq
    %v3541 = vshrl.u32 %v3540, 7
    %v3542 = vsub.s32 0, %v3541
    %v3543 = vrot.slane %v2823, %v3542
    %v3544 = vlaneseq
    %v3545 = vshrl.u32 %v3544, 7
    %v3546 = vsub.s32 2, %v3545
    %v3547 = vrot.slane %v2823, %v3546
    %v3548 = vlaneseq
    %v3549 = vshrl.u32 %v3548, 7
    %v3550 = vsub.s32 0, %v3549
    %v3551 = vrot.slane %v2824, %v3550
    %v3552 = vlaneseq
    %v3553 = vshrl.u32 %v3552, 7
    %v3554 = vsub.s32 2, %v3553
    %v3555 = vrot.slane %v2824, %v3554
    %v3556 = vlaneseq
    %v3557 = vshrl.u32 %v3556, 7
    %v3558 = vsub.s32 0, %v3557
    %v3559 = vrot.slane %v2825, %v3558
    %v3560 = vlaneseq
    %v3561 = vshrl.u32 %v3560, 7
    %v3562 = vsub.s32 2, %v3561
    %v3563 = vrot.slane %v2825, %v3562
    %v3564 = vlaneseq
    %v3565 = vshrl.u32 %v3564, 7
    %v3566 = vsub.s32 0, %v3565
    %v3567 = vrot.slane %v2826, %v3566
    %v3568 = vlaneseq
    %v3569 = vshrl.u32 %v3568, 7
    %v3570 = vsub.s32 2, %v3569
    %v3571 = vrot.slane %v2826, %v3570
    %v3572 = vlaneseq
    %v3573 = vshrl.u32 %v3572, 7
    %v3574 = vsub.s32 0, %v3573
    %v3575 = vrot.slane %v2827, %v3574
    %v3576 = vlaneseq
    %v3577 = vshrl.u32 %v3576, 7
    %v3578 = vsub.s32 2, %v3577
    %v3579 = vrot.slane %v2827, %v3578
    %v3580 = vlaneseq
    %v3581 = vshrl.u32 %v3580, 7
    %v3582 = vsub.s32 0, %v3581
    %v3583 = vrot.slane %v2828, %v3582
    %v3584 = vlaneseq
    %v3585 = vshrl.u32 %v3584, 7
    %v3586 = vsub.s32 2, %v3585
    %v3587 = vrot.slane %v2828, %v3586
    %v3588 = vlaneseq
    %v3589 = vshrl.u32 %v3588, 7
    %v3590 = vsub.s32 0, %v3589
    %v3591 = vrot.slane %v2829, %v3590
    %v3592 = vlaneseq
    %v3593 = vshrl.u32 %v3592, 7
    %v3594 = vsub.s32 2, %v3593
    %v3595 = vrot.slane %v2829, %v3594
    %v3596 = vlaneseq
    %v3597 = vshrl.u32 %v3596, 7
    %v3598 = vsub.s32 0, %v3597
    %v3599 = vrot.slane %v2830, %v3598
    %v3600 = vlaneseq
    %v3601 = vshrl.u32 %v3600, 7
    %v3602 = vsub.s32 2, %v3601
    %v3603 = vrot.slane %v2830, %v3602
    %v3604 = vlaneseq
    %v3605 = vshrl.u32 %v3604, 7
    %v3606 = vsub.s32 0, %v3605
    %v3607 = vrot.slane %v2831, %v3606
    %v3608 = vlaneseq
    %v3609 = vshrl.u32 %v3608, 7
    %v3610 = vsub.s32 2, %v3609
    %v3611 = vrot.slane %v2831, %v3610
    %v3612 = vlaneseq
    %v3613 = vshrl.u32 %v3612, 7
    %v3614 = vsub.s32 0, %v3613
    %v3615 = vrot.slane %v2832, %v3614
    %v3616 = vlaneseq
    %v3617 = vshrl.u32 %v3616, 7
    %v3618 = vsub.s32 2, %v3617
    %v3619 = vrot.slane %v2832, %v3618
    %v3620 = vlaneseq
    %v3621 = vshrl.u32 %v3620, 7
    %v3622 = vsub.s32 0, %v3621
    %v3623 = vrot.slane %v2833, %v3622
    %v3624 = vlaneseq
    %v3625 = vshrl.u32 %v3624, 7
    %v3626 = vsub.s32 2, %v3625
    %v3627 = vrot.slane %v2833, %v3626
    %v3628 = vlaneseq
    %v3629 = vshrl.u32 %v3628, 7
    %v3630 = vsub.s32 0, %v3629
    %v3631 = vrot.slane %v2834, %v3630
    %v3632 = vlaneseq
    %v3633 = vshrl.u32 %v3632, 7
    %v3634 = vsub.s32 2, %v3633
    %v3635 = vrot.slane %v2834, %v3634
    %v3636 = vlaneseq
    %v3637 = vshrl.u32 %v3636, 7
    %v3638 = vsub.s32 0, %v3637
    %v3639 = vrot.slane %v2835, %v3638
    %v3640 = vlaneseq
    %v3641 = vshrl.u32 %v3640, 7
    %v3642 = vsub.s32 2, %v3641
    %v3643 = vrot.slane %v2835, %v3642
    %v3644 = vlaneseq
    %v3645 = vshrl.u32 %v3644, 7
    %v3646 = vsub.s32 0, %v3645
    %v3647 = vrot.slane %v2836, %v3646
    %v3648 = vlaneseq
    %v3649 = vshrl.u32 %v3648, 7
    %v3650 = vsub.s32 2, %v3649
    %v3651 = vrot.slane %v2836, %v3650
    %v3652 = vlaneseq
    %v3653 = vshrl.u32 %v3652, 7
    %v3654 = vsub.s32 0, %v3653
    %v3655 = vrot.slane %v2837, %v3654
    %v3656 = vlaneseq
    %v3657 = vshrl.u32 %v3656, 7
    %v3658 = vsub.s32 2, %v3657
    %v3659 = vrot.slane %v2837, %v3658
    %v3660 = vlaneseq
    %v3661 = vshrl.u32 %v3660, 7
    %v3662 = vsub.s32 0, %v3661
    %v3663 = vrot.slane %v2838, %v3662
    %v3664 = vlaneseq
    %v3665 = vshrl.u32 %v3664, 7
    %v3666 = vsub.s32 2, %v3665
    %v3667 = vrot.slane %v2838, %v3666
    %v3668 = vlaneseq
    %v3669 = vshrl.u32 %v3668, 7
    %v3670 = vsub.s32 0, %v3669
    %v3671 = vrot.slane %v2839, %v3670
    %v3672 = vlaneseq
    %v3673 = vshrl.u32 %v3672, 7
    %v3674 = vsub.s32 2, %v3673
    %v3675 = vrot.slane %v2839, %v3674
    %v3676 = vlaneseq
    %v3677 = vshrl.u32 %v3676, 7
    %v3678 = vsub.s32 0, %v3677
    %v3679 = vrot.slane %v2840, %v3678
    %v3680 = vlaneseq
    %v3681 = vshrl.u32 %v3680, 7
    %v3682 = vsub.s32 2, %v3681
    %v3683 = vrot.slane %v2840, %v3682
    %v3684 = vlaneseq
    %v3685 = vshrl.u32 %v3684, 7
    %v3686 = vsub.s32 0, %v3685
    %v3687 = vrot.slane %v2841, %v3686
    %v3688 = vlaneseq
    %v3689 = vshrl.u32 %v3688, 7
    %v3690 = vsub.s32 2, %v3689
    %v3691 = vrot.slane %v2841, %v3690
    %v3692 = vlaneseq
    %v3693 = vshrl.u32 %v3692, 7
    %v3694 = vsub.s32 0, %v3693
    %v3695 = vrot.slane %v2842, %v3694
    %v3696 = vlaneseq
    %v3697 = vshrl.u32 %v3696, 7
    %v3698 = vsub.s32 2, %v3697
    %v3699 = vrot.slane %v2842, %v3698
    %v3700 = vlaneseq
    %v3701 = vshrl.u32 %v3700, 7
    %v3702 = vsub.s32 0, %v3701
    %v3703 = vrot.slane %v2843, %v3702
    %v3704 = vlaneseq
    %v3705 = vshrl.u32 %v3704, 7
    %v3706 = vsub.s32 2, %v3705
    %v3707 = vrot.slane %v2843, %v3706
    %v3900 = vpack.c.bf16 %v2943, %v2943
    %v3901 = vpack.c.bf16 %v2947, %v2947
    %v3902 = vpack.c.bf16 %v2951, %v2951
    %v3903 = vpack.c.bf16 %v2955, %v2955
    %v3904 = vpack.c.bf16 %v2959, %v2959
    %v3905 = vpack.c.bf16 %v2963, %v2963
    %v3906 = vpack.c.bf16 %v2967, %v2967
    %v3907 = vpack.c.bf16 %v2971, %v2971
    %v3908 = vpack.c.bf16 %v2975, %v2975
    %v3909 = vpack.c.bf16 %v2979, %v2979
    %v3910 = vpack.c.bf16 %v2983, %v2983
    %v3911 = vpack.c.bf16 %v2987, %v2987
    %v3912 = vpack.c.bf16 %v2991, %v2991
    %v3913 = vpack.c.bf16 %v2995, %v2995
    %v3914 = vpack.c.bf16 %v2999, %v2999
    %v3915 = vpack.c.bf16 %v3003, %v3003
    %v3916 = vpack.c.bf16 %v3007, %v3007
    %v3917 = vpack.c.bf16 %v3011, %v3011
    %v3918 = vpack.c.bf16 %v3015, %v3015
    %v3919 = vpack.c.bf16 %v3019, %v3019
    %v3920 = vpack.c.bf16 %v3023, %v3023
    %v3921 = vpack.c.bf16 %v3027, %v3027
    %v3922 = vpack.c.bf16 %v3031, %v3031
    %v3923 = vpack.c.bf16 %v3035, %v3035
    %v3924 = vpack.c.bf16 %v3039, %v3039
    %v3925 = vpack.c.bf16 %v3043, %v3043
    %v3926 = vpack.c.bf16 %v3047, %v3047
    %v3927 = vpack.c.bf16 %v3051, %v3051
    %v3928 = vpack.c.bf16 %v3055, %v3055
    %v3929 = vpack.c.bf16 %v3059, %v3059
    %v3930 = vpack.c.bf16 %v3063, %v3063
    %v3931 = vpack.c.bf16 %v3067, %v3067
    %v3932 = vpack.c.bf16 %v3071, %v3071
    %v3933 = vpack.c.bf16 %v3075, %v3075
    %v3934 = vpack.c.bf16 %v3079, %v3079
    %v3935 = vpack.c.bf16 %v3083, %v3083
    %v3936 = vpack.c.bf16 %v3087, %v3087
    %v3937 = vpack.c.bf16 %v3091, %v3091
    %v3938 = vpack.c.bf16 %v3095, %v3095
    %v3939 = vpack.c.bf16 %v3099, %v3099
    %v3940 = vpack.c.bf16 %v3103, %v3103
    %v3941 = vpack.c.bf16 %v3107, %v3107
    %v3942 = vpack.c.bf16 %v3111, %v3111
    %v3943 = vpack.c.bf16 %v3115, %v3115
    %v3944 = vpack.c.bf16 %v3119, %v3119
    %v3945 = vpack.c.bf16 %v3123, %v3123
    %v3946 = vpack.c.bf16 %v3127, %v3127
    %v3947 = vpack.c.bf16 %v3131, %v3131
    %v3948 = vpack.c.bf16 %v3135, %v3135
    %v3949 = vpack.c.bf16 %v3139, %v3139
    %v3950 = vpack.c.bf16 %v3143, %v3143
    %v3951 = vpack.c.bf16 %v3147, %v3147
    %v3952 = vpack.c.bf16 %v3151, %v3151
    %v3953 = vpack.c.bf16 %v3155, %v3155
    %v3954 = vpack.c.bf16 %v3159, %v3159
    %v3955 = vpack.c.bf16 %v3163, %v3163
    %v3956 = vpack.c.bf16 %v3167, %v3167
    %v3957 = vpack.c.bf16 %v3171, %v3171
    %v3958 = vpack.c.bf16 %v3175, %v3175
    %v3959 = vpack.c.bf16 %v3179, %v3179
    %v3960 = vpack.c.bf16 %v3183, %v3183
    %v3961 = vpack.c.bf16 %v3187, %v3187
    %v3962 = vpack.c.bf16 %v3191, %v3191
    %v3963 = vpack.c.bf16 %v3195, %v3195
    %v3964 = vpack.c.bf16 %v3199, %v3199
    %v3965 = vpack.c.bf16 %v3203, %v3203
    %v3966 = vpack.c.bf16 %v3207, %v3207
    %v3967 = vpack.c.bf16 %v3211, %v3211
    %v3968 = vpack.c.bf16 %v3215, %v3215
    %v3969 = vpack.c.bf16 %v3219, %v3219
    %v3970 = vpack.c.bf16 %v3223, %v3223
    %v3971 = vpack.c.bf16 %v3227, %v3227
    %v3972 = vpack.c.bf16 %v3231, %v3231
    %v3973 = vpack.c.bf16 %v3235, %v3235
    %v3974 = vpack.c.bf16 %v3239, %v3239
    %v3975 = vpack.c.bf16 %v3243, %v3243
    %v3976 = vpack.c.bf16 %v3247, %v3247
    %v3977 = vpack.c.bf16 %v3251, %v3251
    %v3978 = vpack.c.bf16 %v3255, %v3255
    %v3979 = vpack.c.bf16 %v3259, %v3259
    %v3980 = vpack.c.bf16 %v3263, %v3263
    %v3981 = vpack.c.bf16 %v3267, %v3267
    %v3982 = vpack.c.bf16 %v3271, %v3271
    %v3983 = vpack.c.bf16 %v3275, %v3275
    %v3984 = vpack.c.bf16 %v3279, %v3279
    %v3985 = vpack.c.bf16 %v3283, %v3283
    %v3986 = vpack.c.bf16 %v3287, %v3287
    %v3987 = vpack.c.bf16 %v3291, %v3291
    %v3988 = vpack.c.bf16 %v3295, %v3295
    %v3989 = vpack.c.bf16 %v3299, %v3299
    %v3990 = vpack.c.bf16 %v3303, %v3303
    %v3991 = vpack.c.bf16 %v3307, %v3307
    %v3992 = vpack.c.bf16 %v3311, %v3311
    %v3993 = vpack.c.bf16 %v3315, %v3315
    %v3994 = vpack.c.bf16 %v3319, %v3319
    %v3995 = vpack.c.bf16 %v3323, %v3323
    %v3996 = vpack.c.bf16 %v3327, %v3327
    %v3997 = vpack.c.bf16 %v3331, %v3331
    %v3998 = vpack.c.bf16 %v3335, %v3335
    %v3999 = vpack.c.bf16 %v3339, %v3339
    %v4000 = vpack.c.bf16 %v3343, %v3343
    %v4001 = vpack.c.bf16 %v3347, %v3347
    %v4002 = vpack.c.bf16 %v3351, %v3351
    %v4003 = vpack.c.bf16 %v3355, %v3355
    %v4004 = vpack.c.bf16 %v3359, %v3359
    %v4005 = vpack.c.bf16 %v3363, %v3363
    %v4006 = vpack.c.bf16 %v3367, %v3367
    %v4007 = vpack.c.bf16 %v3371, %v3371
    %v4008 = vpack.c.bf16 %v3375, %v3375
    %v4009 = vpack.c.bf16 %v3379, %v3379
    %v4010 = vpack.c.bf16 %v3383, %v3383
    %v4011 = vpack.c.bf16 %v3387, %v3387
    %v4012 = vpack.c.bf16 %v3391, %v3391
    %v4013 = vpack.c.bf16 %v3395, %v3395
    %v4014 = vpack.c.bf16 %v3399, %v3399
    %v4015 = vpack.c.bf16 %v3403, %v3403
    %v4016 = vpack.c.bf16 %v3407, %v3407
    %v4017 = vpack.c.bf16 %v3411, %v3411
    %v4018 = vpack.c.bf16 %v3415, %v3415
    %v4019 = vpack.c.bf16 %v3419, %v3419
    %v4020 = vpack.c.bf16 %v3423, %v3423
    %v4021 = vpack.c.bf16 %v3427, %v3427
    %v4022 = vpack.c.bf16 %v3431, %v3431
    %v4023 = vpack.c.bf16 %v3435, %v3435
    %v4024 = vpack.c.bf16 %v3439, %v3439
    %v4025 = vpack.c.bf16 %v3443, %v3443
    %v4026 = vpack.c.bf16 %v3447, %v3447
    %v4027 = vpack.c.bf16 %v3451, %v3451
    %v4028 = vpack.c.bf16 %v3455, %v3455
    %v4029 = vpack.c.bf16 %v3459, %v3459
    %v4030 = vpack.c.bf16 %v3463, %v3463
    %v4031 = vpack.c.bf16 %v3467, %v3467
    %v4032 = vpack.c.bf16 %v3471, %v3471
    %v4033 = vpack.c.bf16 %v3475, %v3475
    %v4034 = vpack.c.bf16 %v3479, %v3479
    %v4035 = vpack.c.bf16 %v3483, %v3483
    %v4036 = vpack.c.bf16 %v3487, %v3487
    %v4037 = vpack.c.bf16 %v3491, %v3491
    %v4038 = vpack.c.bf16 %v3495, %v3495
    %v4039 = vpack.c.bf16 %v3499, %v3499
    %v4040 = vpack.c.bf16 %v3503, %v3503
    %v4041 = vpack.c.bf16 %v3507, %v3507
    %v4042 = vpack.c.bf16 %v3511, %v3511
    %v4043 = vpack.c.bf16 %v3515, %v3515
    %v4044 = vpack.c.bf16 %v3519, %v3519
    %v4045 = vpack.c.bf16 %v3523, %v3523
    %v4046 = vpack.c.bf16 %v3527, %v3527
    %v4047 = vpack.c.bf16 %v3531, %v3531
    %v4048 = vpack.c.bf16 %v3535, %v3535
    %v4049 = vpack.c.bf16 %v3539, %v3539
    %v4050 = vpack.c.bf16 %v3543, %v3543
    %v4051 = vpack.c.bf16 %v3547, %v3547
    %v4052 = vpack.c.bf16 %v3551, %v3551
    %v4053 = vpack.c.bf16 %v3555, %v3555
    %v4054 = vpack.c.bf16 %v3559, %v3559
    %v4055 = vpack.c.bf16 %v3563, %v3563
    %v4056 = vpack.c.bf16 %v3567, %v3567
    %v4057 = vpack.c.bf16 %v3571, %v3571
    %v4058 = vpack.c.bf16 %v3575, %v3575
    %v4059 = vpack.c.bf16 %v3579, %v3579
    %v4060 = vpack.c.bf16 %v3583, %v3583
    %v4061 = vpack.c.bf16 %v3587, %v3587
    %v4062 = vpack.c.bf16 %v3591, %v3591
    %v4063 = vpack.c.bf16 %v3595, %v3595
    %v4064 = vpack.c.bf16 %v3599, %v3599
    %v4065 = vpack.c.bf16 %v3603, %v3603
    %v4066 = vpack.c.bf16 %v3607, %v3607
    %v4067 = vpack.c.bf16 %v3611, %v3611
    %v4068 = vpack.c.bf16 %v3615, %v3615
    %v4069 = vpack.c.bf16 %v3619, %v3619
    %v4070 = vpack.c.bf16 %v3623, %v3623
    %v4071 = vpack.c.bf16 %v3627, %v3627
    %v4072 = vpack.c.bf16 %v3631, %v3631
    %v4073 = vpack.c.bf16 %v3635, %v3635
    %v4074 = vpack.c.bf16 %v3639, %v3639
    %v4075 = vpack.c.bf16 %v3643, %v3643
    %v4076 = vpack.c.bf16 %v3647, %v3647
    %v4077 = vpack.c.bf16 %v3651, %v3651
    %v4078 = vpack.c.bf16 %v3655, %v3655
    %v4079 = vpack.c.bf16 %v3659, %v3659
    %v4080 = vpack.c.bf16 %v3663, %v3663
    %v4081 = vpack.c.bf16 %v3667, %v3667
    %v4082 = vpack.c.bf16 %v3671, %v3671
    %v4083 = vpack.c.bf16 %v3675, %v3675
    %v4084 = vpack.c.bf16 %v3679, %v3679
    %v4085 = vpack.c.bf16 %v3683, %v3683
    %v4086 = vpack.c.bf16 %v3687, %v3687
    %v4087 = vpack.c.bf16 %v3691, %v3691
    %v4088 = vpack.c.bf16 %v3695, %v3695
    %v4089 = vpack.c.bf16 %v3699, %v3699
    %v4090 = vpack.c.bf16 %v3703, %v3703
    %v4091 = vpack.c.bf16 %v3707, %v3707
    %v4220 = vunpack.c.l.b16 %v3900
    %v4221 = vunpack.c.l.b16 %v3901
    %v4222 = vunpack.c.l.b16 %v3902
    %v4223 = vunpack.c.l.b16 %v3903
    %v4224 = vunpack.c.l.b16 %v3904
    %v4225 = vunpack.c.l.b16 %v3905
    %v4226 = vunpack.c.l.b16 %v3906
    %v4227 = vunpack.c.l.b16 %v3907
    %v4228 = vunpack.c.l.b16 %v3908
    %v4229 = vunpack.c.l.b16 %v3909
    %v4230 = vunpack.c.l.b16 %v3910
    %v4231 = vunpack.c.l.b16 %v3911
    %v4232 = vunpack.c.l.b16 %v3912
    %v4233 = vunpack.c.l.b16 %v3913
    %v4234 = vunpack.c.l.b16 %v3914
    %v4235 = vunpack.c.l.b16 %v3915
    %v4236 = vunpack.c.l.b16 %v3924
    %v4237 = vunpack.c.l.b16 %v3925
    %v4238 = vunpack.c.l.b16 %v3926
    %v4239 = vunpack.c.l.b16 %v3927
    %v4240 = vunpack.c.l.b16 %v3928
    %v4241 = vunpack.c.l.b16 %v3929
    %v4242 = vunpack.c.l.b16 %v3930
    %v4243 = vunpack.c.l.b16 %v3931
    %v4244 = vunpack.c.l.b16 %v3932
    %v4245 = vunpack.c.l.b16 %v3933
    %v4246 = vunpack.c.l.b16 %v3934
    %v4247 = vunpack.c.l.b16 %v3935
    %v4248 = vunpack.c.l.b16 %v3936
    %v4249 = vunpack.c.l.b16 %v3937
    %v4250 = vunpack.c.l.b16 %v3938
    %v4251 = vunpack.c.l.b16 %v3939
    %v4252 = vunpack.c.l.b16 %v3948
    %v4253 = vunpack.c.l.b16 %v3949
    %v4254 = vunpack.c.l.b16 %v3950
    %v4255 = vunpack.c.l.b16 %v3951
    %v4256 = vunpack.c.l.b16 %v3952
    %v4257 = vunpack.c.l.b16 %v3953
    %v4258 = vunpack.c.l.b16 %v3954
    %v4259 = vunpack.c.l.b16 %v3955
    %v4260 = vunpack.c.l.b16 %v3956
    %v4261 = vunpack.c.l.b16 %v3957
    %v4262 = vunpack.c.l.b16 %v3958
    %v4263 = vunpack.c.l.b16 %v3959
    %v4264 = vunpack.c.l.b16 %v3960
    %v4265 = vunpack.c.l.b16 %v3961
    %v4266 = vunpack.c.l.b16 %v3962
    %v4267 = vunpack.c.l.b16 %v3963
    %v4268 = vunpack.c.l.b16 %v3972
    %v4269 = vunpack.c.l.b16 %v3973
    %v4270 = vunpack.c.l.b16 %v3974
    %v4271 = vunpack.c.l.b16 %v3975
    %v4272 = vunpack.c.l.b16 %v3976
    %v4273 = vunpack.c.l.b16 %v3977
    %v4274 = vunpack.c.l.b16 %v3978
    %v4275 = vunpack.c.l.b16 %v3979
    %v4276 = vunpack.c.l.b16 %v3980
    %v4277 = vunpack.c.l.b16 %v3981
    %v4278 = vunpack.c.l.b16 %v3982
    %v4279 = vunpack.c.l.b16 %v3983
    %v4280 = vunpack.c.l.b16 %v3984
    %v4281 = vunpack.c.l.b16 %v3985
    %v4282 = vunpack.c.l.b16 %v3986
    %v4283 = vunpack.c.l.b16 %v3987
    %v4284 = vunpack.c.l.b16 %v3996
    %v4285 = vunpack.c.l.b16 %v3997
    %v4286 = vunpack.c.l.b16 %v3998
    %v4287 = vunpack.c.l.b16 %v3999
    %v4288 = vunpack.c.l.b16 %v4000
    %v4289 = vunpack.c.l.b16 %v4001
    %v4290 = vunpack.c.l.b16 %v4002
    %v4291 = vunpack.c.l.b16 %v4003
    %v4292 = vunpack.c.l.b16 %v4004
    %v4293 = vunpack.c.l.b16 %v4005
    %v4294 = vunpack.c.l.b16 %v4006
    %v4295 = vunpack.c.l.b16 %v4007
    %v4296 = vunpack.c.l.b16 %v4008
    %v4297 = vunpack.c.l.b16 %v4009
    %v4298 = vunpack.c.l.b16 %v4010
    %v4299 = vunpack.c.l.b16 %v4011
    %v4300 = vunpack.c.l.b16 %v4020
    %v4301 = vunpack.c.l.b16 %v4021
    %v4302 = vunpack.c.l.b16 %v4022
    %v4303 = vunpack.c.l.b16 %v4023
    %v4304 = vunpack.c.l.b16 %v4024
    %v4305 = vunpack.c.l.b16 %v4025
    %v4306 = vunpack.c.l.b16 %v4026
    %v4307 = vunpack.c.l.b16 %v4027
    %v4308 = vunpack.c.l.b16 %v4028
    %v4309 = vunpack.c.l.b16 %v4029
    %v4310 = vunpack.c.l.b16 %v4030
    %v4311 = vunpack.c.l.b16 %v4031
    %v4312 = vunpack.c.l.b16 %v4032
    %v4313 = vunpack.c.l.b16 %v4033
    %v4314 = vunpack.c.l.b16 %v4034
    %v4315 = vunpack.c.l.b16 %v4035
    %v4316 = vunpack.c.l.b16 %v4044
    %v4317 = vunpack.c.l.b16 %v4045
    %v4318 = vunpack.c.l.b16 %v4046
    %v4319 = vunpack.c.l.b16 %v4047
    %v4320 = vunpack.c.l.b16 %v4048
    %v4321 = vunpack.c.l.b16 %v4049
    %v4322 = vunpack.c.l.b16 %v4050
    %v4323 = vunpack.c.l.b16 %v4051
    %v4324 = vunpack.c.l.b16 %v4052
    %v4325 = vunpack.c.l.b16 %v4053
    %v4326 = vunpack.c.l.b16 %v4054
    %v4327 = vunpack.c.l.b16 %v4055
    %v4328 = vunpack.c.l.b16 %v4056
    %v4329 = vunpack.c.l.b16 %v4057
    %v4330 = vunpack.c.l.b16 %v4058
    %v4331 = vunpack.c.l.b16 %v4059
    %v4332 = vunpack.c.l.b16 %v4068
    %v4333 = vunpack.c.l.b16 %v4069
    %v4334 = vunpack.c.l.b16 %v4070
    %v4335 = vunpack.c.l.b16 %v4071
    %v4336 = vunpack.c.l.b16 %v4072
    %v4337 = vunpack.c.l.b16 %v4073
    %v4338 = vunpack.c.l.b16 %v4074
    %v4339 = vunpack.c.l.b16 %v4075
    %v4340 = vunpack.c.l.b16 %v4076
    %v4341 = vunpack.c.l.b16 %v4077
    %v4342 = vunpack.c.l.b16 %v4078
    %v4343 = vunpack.c.l.b16 %v4079
    %v4344 = vunpack.c.l.b16 %v4080
    %v4345 = vunpack.c.l.b16 %v4081
    %v4346 = vunpack.c.l.b16 %v4082
    %v4347 = vunpack.c.l.b16 %v4083
    %v4348 = vrot.slane %v4222, 7
    %vm4349 = vcmask 1041409
    %v4350 = vsel %vm4349, %v4348, %v4220
    %v4351 = vrot.slane %v4224, 6
    %vm4352 = vcmask 1042434
    %v4353 = vsel %vm4352, %v4351, %v4350
    %v4354 = vrot.slane %v4226, 5
    %vm4355 = vcmask 1043459
    %v4356 = vsel %vm4355, %v4354, %v4353
    %v4357 = vrot.slane %v4228, 4
    %vm4358 = vcmask 1044484
    %v4359 = vsel %vm4358, %v4357, %v4356
    %v4360 = vrot.slane %v4230, 3
    %vm4361 = vcmask 1045509
    %v4362 = vsel %vm4361, %v4360, %v4359
    %v4363 = vrot.slane %v4232, 2
    %vm4364 = vcmask 1046534
    %v4365 = vsel %vm4364, %v4363, %v4362
    %v4366 = vrot.slane %v4234, 1
    %vm4367 = vcmask 1047559
    %v4368 = vsel %vm4367, %v4366, %v4365
    %v4369 = vrot.slane %v4223, 7
    %v4370 = vsel %vm4349, %v4369, %v4221
    %v4371 = vrot.slane %v4225, 6
    %v4372 = vsel %vm4352, %v4371, %v4370
    %v4373 = vrot.slane %v4227, 5
    %v4374 = vsel %vm4355, %v4373, %v4372
    %v4375 = vrot.slane %v4229, 4
    %v4376 = vsel %vm4358, %v4375, %v4374
    %v4377 = vrot.slane %v4231, 3
    %v4378 = vsel %vm4361, %v4377, %v4376
    %v4379 = vrot.slane %v4233, 2
    %v4380 = vsel %vm4364, %v4379, %v4378
    %v4381 = vrot.slane %v4235, 1
    %v4382 = vsel %vm4367, %v4381, %v4380
    %v4383 = vrot.slane %v4238, 7
    %v4384 = vsel %vm4349, %v4383, %v4236
    %v4385 = vrot.slane %v4240, 6
    %v4386 = vsel %vm4352, %v4385, %v4384
    %v4387 = vrot.slane %v4242, 5
    %v4388 = vsel %vm4355, %v4387, %v4386
    %v4389 = vrot.slane %v4244, 4
    %v4390 = vsel %vm4358, %v4389, %v4388
    %v4391 = vrot.slane %v4246, 3
    %v4392 = vsel %vm4361, %v4391, %v4390
    %v4393 = vrot.slane %v4248, 2
    %v4394 = vsel %vm4364, %v4393, %v4392
    %v4395 = vrot.slane %v4250, 1
    %v4396 = vsel %vm4367, %v4395, %v4394
    %v4397 = vrot.slane %v4239, 7
    %v4398 = vsel %vm4349, %v4397, %v4237
    %v4399 = vrot.slane %v4241, 6
    %v4400 = vsel %vm4352, %v4399, %v4398
    %v4401 = vrot.slane %v4243, 5
    %v4402 = vsel %vm4355, %v4401, %v4400
    %v4403 = vrot.slane %v4245, 4
    %v4404 = vsel %vm4358, %v4403, %v4402
    %v4405 = vrot.slane %v4247, 3
    %v4406 = vsel %vm4361, %v4405, %v4404
    %v4407 = vrot.slane %v4249, 2
    %v4408 = vsel %vm4364, %v4407, %v4406
    %v4409 = vrot.slane %v4251, 1
    %v4410 = vsel %vm4367, %v4409, %v4408
    %v4411 = vrot.slane %v4254, 7
    %v4412 = vsel %vm4349, %v4411, %v4252
    %v4413 = vrot.slane %v4256, 6
    %v4414 = vsel %vm4352, %v4413, %v4412
    %v4415 = vrot.slane %v4258, 5
    %v4416 = vsel %vm4355, %v4415, %v4414
    %v4417 = vrot.slane %v4260, 4
    %v4418 = vsel %vm4358, %v4417, %v4416
    %v4419 = vrot.slane %v4262, 3
    %v4420 = vsel %vm4361, %v4419, %v4418
    %v4421 = vrot.slane %v4264, 2
    %v4422 = vsel %vm4364, %v4421, %v4420
    %v4423 = vrot.slane %v4266, 1
    %v4424 = vsel %vm4367, %v4423, %v4422
    %v4425 = vrot.slane %v4255, 7
    %v4426 = vsel %vm4349, %v4425, %v4253
    %v4427 = vrot.slane %v4257, 6
    %v4428 = vsel %vm4352, %v4427, %v4426
    %v4429 = vrot.slane %v4259, 5
    %v4430 = vsel %vm4355, %v4429, %v4428
    %v4431 = vrot.slane %v4261, 4
    %v4432 = vsel %vm4358, %v4431, %v4430
    %v4433 = vrot.slane %v4263, 3
    %v4434 = vsel %vm4361, %v4433, %v4432
    %v4435 = vrot.slane %v4265, 2
    %v4436 = vsel %vm4364, %v4435, %v4434
    %v4437 = vrot.slane %v4267, 1
    %v4438 = vsel %vm4367, %v4437, %v4436
    %v4439 = vrot.slane %v4270, 7
    %v4440 = vsel %vm4349, %v4439, %v4268
    %v4441 = vrot.slane %v4272, 6
    %v4442 = vsel %vm4352, %v4441, %v4440
    %v4443 = vrot.slane %v4274, 5
    %v4444 = vsel %vm4355, %v4443, %v4442
    %v4445 = vrot.slane %v4276, 4
    %v4446 = vsel %vm4358, %v4445, %v4444
    %v4447 = vrot.slane %v4278, 3
    %v4448 = vsel %vm4361, %v4447, %v4446
    %v4449 = vrot.slane %v4280, 2
    %v4450 = vsel %vm4364, %v4449, %v4448
    %v4451 = vrot.slane %v4282, 1
    %v4452 = vsel %vm4367, %v4451, %v4450
    %v4453 = vrot.slane %v4271, 7
    %v4454 = vsel %vm4349, %v4453, %v4269
    %v4455 = vrot.slane %v4273, 6
    %v4456 = vsel %vm4352, %v4455, %v4454
    %v4457 = vrot.slane %v4275, 5
    %v4458 = vsel %vm4355, %v4457, %v4456
    %v4459 = vrot.slane %v4277, 4
    %v4460 = vsel %vm4358, %v4459, %v4458
    %v4461 = vrot.slane %v4279, 3
    %v4462 = vsel %vm4361, %v4461, %v4460
    %v4463 = vrot.slane %v4281, 2
    %v4464 = vsel %vm4364, %v4463, %v4462
    %v4465 = vrot.slane %v4283, 1
    %v4466 = vsel %vm4367, %v4465, %v4464
    %v4467 = vrot.slane %v4286, 7
    %v4468 = vsel %vm4349, %v4467, %v4284
    %v4469 = vrot.slane %v4288, 6
    %v4470 = vsel %vm4352, %v4469, %v4468
    %v4471 = vrot.slane %v4290, 5
    %v4472 = vsel %vm4355, %v4471, %v4470
    %v4473 = vrot.slane %v4292, 4
    %v4474 = vsel %vm4358, %v4473, %v4472
    %v4475 = vrot.slane %v4294, 3
    %v4476 = vsel %vm4361, %v4475, %v4474
    %v4477 = vrot.slane %v4296, 2
    %v4478 = vsel %vm4364, %v4477, %v4476
    %v4479 = vrot.slane %v4298, 1
    %v4480 = vsel %vm4367, %v4479, %v4478
    %v4481 = vrot.slane %v4287, 7
    %v4482 = vsel %vm4349, %v4481, %v4285
    %v4483 = vrot.slane %v4289, 6
    %v4484 = vsel %vm4352, %v4483, %v4482
    %v4485 = vrot.slane %v4291, 5
    %v4486 = vsel %vm4355, %v4485, %v4484
    %v4487 = vrot.slane %v4293, 4
    %v4488 = vsel %vm4358, %v4487, %v4486
    %v4489 = vrot.slane %v4295, 3
    %v4490 = vsel %vm4361, %v4489, %v4488
    %v4491 = vrot.slane %v4297, 2
    %v4492 = vsel %vm4364, %v4491, %v4490
    %v4493 = vrot.slane %v4299, 1
    %v4494 = vsel %vm4367, %v4493, %v4492
    %v4495 = vrot.slane %v4302, 7
    %v4496 = vsel %vm4349, %v4495, %v4300
    %v4497 = vrot.slane %v4304, 6
    %v4498 = vsel %vm4352, %v4497, %v4496
    %v4499 = vrot.slane %v4306, 5
    %v4500 = vsel %vm4355, %v4499, %v4498
    %v4501 = vrot.slane %v4308, 4
    %v4502 = vsel %vm4358, %v4501, %v4500
    %v4503 = vrot.slane %v4310, 3
    %v4504 = vsel %vm4361, %v4503, %v4502
    %v4505 = vrot.slane %v4312, 2
    %v4506 = vsel %vm4364, %v4505, %v4504
    %v4507 = vrot.slane %v4314, 1
    %v4508 = vsel %vm4367, %v4507, %v4506
    %v4509 = vrot.slane %v4303, 7
    %v4510 = vsel %vm4349, %v4509, %v4301
    %v4511 = vrot.slane %v4305, 6
    %v4512 = vsel %vm4352, %v4511, %v4510
    %v4513 = vrot.slane %v4307, 5
    %v4514 = vsel %vm4355, %v4513, %v4512
    %v4515 = vrot.slane %v4309, 4
    %v4516 = vsel %vm4358, %v4515, %v4514
    %v4517 = vrot.slane %v4311, 3
    %v4518 = vsel %vm4361, %v4517, %v4516
    %v4519 = vrot.slane %v4313, 2
    %v4520 = vsel %vm4364, %v4519, %v4518
    %v4521 = vrot.slane %v4315, 1
    %v4522 = vsel %vm4367, %v4521, %v4520
    %v4523 = vrot.slane %v4318, 7
    %v4524 = vsel %vm4349, %v4523, %v4316
    %v4525 = vrot.slane %v4320, 6
    %v4526 = vsel %vm4352, %v4525, %v4524
    %v4527 = vrot.slane %v4322, 5
    %v4528 = vsel %vm4355, %v4527, %v4526
    %v4529 = vrot.slane %v4324, 4
    %v4530 = vsel %vm4358, %v4529, %v4528
    %v4531 = vrot.slane %v4326, 3
    %v4532 = vsel %vm4361, %v4531, %v4530
    %v4533 = vrot.slane %v4328, 2
    %v4534 = vsel %vm4364, %v4533, %v4532
    %v4535 = vrot.slane %v4330, 1
    %v4536 = vsel %vm4367, %v4535, %v4534
    %v4537 = vrot.slane %v4319, 7
    %v4538 = vsel %vm4349, %v4537, %v4317
    %v4539 = vrot.slane %v4321, 6
    %v4540 = vsel %vm4352, %v4539, %v4538
    %v4541 = vrot.slane %v4323, 5
    %v4542 = vsel %vm4355, %v4541, %v4540
    %v4543 = vrot.slane %v4325, 4
    %v4544 = vsel %vm4358, %v4543, %v4542
    %v4545 = vrot.slane %v4327, 3
    %v4546 = vsel %vm4361, %v4545, %v4544
    %v4547 = vrot.slane %v4329, 2
    %v4548 = vsel %vm4364, %v4547, %v4546
    %v4549 = vrot.slane %v4331, 1
    %v4550 = vsel %vm4367, %v4549, %v4548
    %v4551 = vrot.slane %v4334, 7
    %v4552 = vsel %vm4349, %v4551, %v4332
    %v4553 = vrot.slane %v4336, 6
    %v4554 = vsel %vm4352, %v4553, %v4552
    %v4555 = vrot.slane %v4338, 5
    %v4556 = vsel %vm4355, %v4555, %v4554
    %v4557 = vrot.slane %v4340, 4
    %v4558 = vsel %vm4358, %v4557, %v4556
    %v4559 = vrot.slane %v4342, 3
    %v4560 = vsel %vm4361, %v4559, %v4558
    %v4561 = vrot.slane %v4344, 2
    %v4562 = vsel %vm4364, %v4561, %v4560
    %v4563 = vrot.slane %v4346, 1
    %v4564 = vsel %vm4367, %v4563, %v4562
    %v4565 = vrot.slane %v4335, 7
    %v4566 = vsel %vm4349, %v4565, %v4333
    %v4567 = vrot.slane %v4337, 6
    %v4568 = vsel %vm4352, %v4567, %v4566
    %v4569 = vrot.slane %v4339, 5
    %v4570 = vsel %vm4355, %v4569, %v4568
    %v4571 = vrot.slane %v4341, 4
    %v4572 = vsel %vm4358, %v4571, %v4570
    %v4573 = vrot.slane %v4343, 3
    %v4574 = vsel %vm4361, %v4573, %v4572
    %v4575 = vrot.slane %v4345, 2
    %v4576 = vsel %vm4364, %v4575, %v4574
    %v4577 = vrot.slane %v4347, 1
    %v4578 = vsel %vm4367, %v4577, %v4576
    %v4579 = vpack.c.b16 %v4396, %v4368
    %v4580 = vpack.c.b16 %v4410, %v4382
    %v4581 = vpack.c.b16 %v4452, %v4424
    %v4582 = vpack.c.b16 %v4466, %v4438
    %v4583 = vpack.c.b16 %v4508, %v4480
    %v4584 = vpack.c.b16 %v4522, %v4494
    %v4585 = vpack.c.b16 %v4564, %v4536
    %v4586 = vpack.c.b16 %v4578, %v4550
    %v4611 = vunpack.c.l.b16 %v3916
    %v4612 = vunpack.c.l.b16 %v3917
    %v4613 = vunpack.c.l.b16 %v3940
    %v4614 = vunpack.c.l.b16 %v3941
    %v4615 = vunpack.c.l.b16 %v3964
    %v4616 = vunpack.c.l.b16 %v3965
    %v4617 = vunpack.c.l.b16 %v3988
    %v4618 = vunpack.c.l.b16 %v3989
    %v4619 = vunpack.c.l.b16 %v4012
    %v4620 = vunpack.c.l.b16 %v4013
    %v4621 = vunpack.c.l.b16 %v4036
    %v4622 = vunpack.c.l.b16 %v4037
    %v4623 = vunpack.c.l.b16 %v4060
    %v4624 = vunpack.c.l.b16 %v4061
    %v4625 = vunpack.c.l.b16 %v4084
    %v4626 = vunpack.c.l.b16 %v4085
    %v4627 = vrot.slane %v4224, 7
    %v4628 = vsel %vm4349, %v4627, %v4222
    %v4629 = vrot.slane %v4226, 6
    %v4630 = vsel %vm4352, %v4629, %v4628
    %v4631 = vrot.slane %v4228, 5
    %v4632 = vsel %vm4355, %v4631, %v4630
    %v4633 = vrot.slane %v4230, 4
    %v4634 = vsel %vm4358, %v4633, %v4632
    %v4635 = vrot.slane %v4232, 3
    %v4636 = vsel %vm4361, %v4635, %v4634
    %v4637 = vrot.slane %v4234, 2
    %v4638 = vsel %vm4364, %v4637, %v4636
    %v4639 = vrot.slane %v4611, 1
    %v4640 = vsel %vm4367, %v4639, %v4638
    %v4641 = vrot.slane %v4225, 7
    %v4642 = vsel %vm4349, %v4641, %v4223
    %v4643 = vrot.slane %v4227, 6
    %v4644 = vsel %vm4352, %v4643, %v4642
    %v4645 = vrot.slane %v4229, 5
    %v4646 = vsel %vm4355, %v4645, %v4644
    %v4647 = vrot.slane %v4231, 4
    %v4648 = vsel %vm4358, %v4647, %v4646
    %v4649 = vrot.slane %v4233, 3
    %v4650 = vsel %vm4361, %v4649, %v4648
    %v4651 = vrot.slane %v4235, 2
    %v4652 = vsel %vm4364, %v4651, %v4650
    %v4653 = vrot.slane %v4612, 1
    %v4654 = vsel %vm4367, %v4653, %v4652
    %v4655 = vrot.slane %v4240, 7
    %v4656 = vsel %vm4349, %v4655, %v4238
    %v4657 = vrot.slane %v4242, 6
    %v4658 = vsel %vm4352, %v4657, %v4656
    %v4659 = vrot.slane %v4244, 5
    %v4660 = vsel %vm4355, %v4659, %v4658
    %v4661 = vrot.slane %v4246, 4
    %v4662 = vsel %vm4358, %v4661, %v4660
    %v4663 = vrot.slane %v4248, 3
    %v4664 = vsel %vm4361, %v4663, %v4662
    %v4665 = vrot.slane %v4250, 2
    %v4666 = vsel %vm4364, %v4665, %v4664
    %v4667 = vrot.slane %v4613, 1
    %v4668 = vsel %vm4367, %v4667, %v4666
    %v4669 = vrot.slane %v4241, 7
    %v4670 = vsel %vm4349, %v4669, %v4239
    %v4671 = vrot.slane %v4243, 6
    %v4672 = vsel %vm4352, %v4671, %v4670
    %v4673 = vrot.slane %v4245, 5
    %v4674 = vsel %vm4355, %v4673, %v4672
    %v4675 = vrot.slane %v4247, 4
    %v4676 = vsel %vm4358, %v4675, %v4674
    %v4677 = vrot.slane %v4249, 3
    %v4678 = vsel %vm4361, %v4677, %v4676
    %v4679 = vrot.slane %v4251, 2
    %v4680 = vsel %vm4364, %v4679, %v4678
    %v4681 = vrot.slane %v4614, 1
    %v4682 = vsel %vm4367, %v4681, %v4680
    %v4683 = vrot.slane %v4256, 7
    %v4684 = vsel %vm4349, %v4683, %v4254
    %v4685 = vrot.slane %v4258, 6
    %v4686 = vsel %vm4352, %v4685, %v4684
    %v4687 = vrot.slane %v4260, 5
    %v4688 = vsel %vm4355, %v4687, %v4686
    %v4689 = vrot.slane %v4262, 4
    %v4690 = vsel %vm4358, %v4689, %v4688
    %v4691 = vrot.slane %v4264, 3
    %v4692 = vsel %vm4361, %v4691, %v4690
    %v4693 = vrot.slane %v4266, 2
    %v4694 = vsel %vm4364, %v4693, %v4692
    %v4695 = vrot.slane %v4615, 1
    %v4696 = vsel %vm4367, %v4695, %v4694
    %v4697 = vrot.slane %v4257, 7
    %v4698 = vsel %vm4349, %v4697, %v4255
    %v4699 = vrot.slane %v4259, 6
    %v4700 = vsel %vm4352, %v4699, %v4698
    %v4701 = vrot.slane %v4261, 5
    %v4702 = vsel %vm4355, %v4701, %v4700
    %v4703 = vrot.slane %v4263, 4
    %v4704 = vsel %vm4358, %v4703, %v4702
    %v4705 = vrot.slane %v4265, 3
    %v4706 = vsel %vm4361, %v4705, %v4704
    %v4707 = vrot.slane %v4267, 2
    %v4708 = vsel %vm4364, %v4707, %v4706
    %v4709 = vrot.slane %v4616, 1
    %v4710 = vsel %vm4367, %v4709, %v4708
    %v4711 = vrot.slane %v4272, 7
    %v4712 = vsel %vm4349, %v4711, %v4270
    %v4713 = vrot.slane %v4274, 6
    %v4714 = vsel %vm4352, %v4713, %v4712
    %v4715 = vrot.slane %v4276, 5
    %v4716 = vsel %vm4355, %v4715, %v4714
    %v4717 = vrot.slane %v4278, 4
    %v4718 = vsel %vm4358, %v4717, %v4716
    %v4719 = vrot.slane %v4280, 3
    %v4720 = vsel %vm4361, %v4719, %v4718
    %v4721 = vrot.slane %v4282, 2
    %v4722 = vsel %vm4364, %v4721, %v4720
    %v4723 = vrot.slane %v4617, 1
    %v4724 = vsel %vm4367, %v4723, %v4722
    %v4725 = vrot.slane %v4273, 7
    %v4726 = vsel %vm4349, %v4725, %v4271
    %v4727 = vrot.slane %v4275, 6
    %v4728 = vsel %vm4352, %v4727, %v4726
    %v4729 = vrot.slane %v4277, 5
    %v4730 = vsel %vm4355, %v4729, %v4728
    %v4731 = vrot.slane %v4279, 4
    %v4732 = vsel %vm4358, %v4731, %v4730
    %v4733 = vrot.slane %v4281, 3
    %v4734 = vsel %vm4361, %v4733, %v4732
    %v4735 = vrot.slane %v4283, 2
    %v4736 = vsel %vm4364, %v4735, %v4734
    %v4737 = vrot.slane %v4618, 1
    %v4738 = vsel %vm4367, %v4737, %v4736
    %v4739 = vrot.slane %v4288, 7
    %v4740 = vsel %vm4349, %v4739, %v4286
    %v4741 = vrot.slane %v4290, 6
    %v4742 = vsel %vm4352, %v4741, %v4740
    %v4743 = vrot.slane %v4292, 5
    %v4744 = vsel %vm4355, %v4743, %v4742
    %v4745 = vrot.slane %v4294, 4
    %v4746 = vsel %vm4358, %v4745, %v4744
    %v4747 = vrot.slane %v4296, 3
    %v4748 = vsel %vm4361, %v4747, %v4746
    %v4749 = vrot.slane %v4298, 2
    %v4750 = vsel %vm4364, %v4749, %v4748
    %v4751 = vrot.slane %v4619, 1
    %v4752 = vsel %vm4367, %v4751, %v4750
    %v4753 = vrot.slane %v4289, 7
    %v4754 = vsel %vm4349, %v4753, %v4287
    %v4755 = vrot.slane %v4291, 6
    %v4756 = vsel %vm4352, %v4755, %v4754
    %v4757 = vrot.slane %v4293, 5
    %v4758 = vsel %vm4355, %v4757, %v4756
    %v4759 = vrot.slane %v4295, 4
    %v4760 = vsel %vm4358, %v4759, %v4758
    %v4761 = vrot.slane %v4297, 3
    %v4762 = vsel %vm4361, %v4761, %v4760
    %v4763 = vrot.slane %v4299, 2
    %v4764 = vsel %vm4364, %v4763, %v4762
    %v4765 = vrot.slane %v4620, 1
    %v4766 = vsel %vm4367, %v4765, %v4764
    %v4767 = vrot.slane %v4304, 7
    %v4768 = vsel %vm4349, %v4767, %v4302
    %v4769 = vrot.slane %v4306, 6
    %v4770 = vsel %vm4352, %v4769, %v4768
    %v4771 = vrot.slane %v4308, 5
    %v4772 = vsel %vm4355, %v4771, %v4770
    %v4773 = vrot.slane %v4310, 4
    %v4774 = vsel %vm4358, %v4773, %v4772
    %v4775 = vrot.slane %v4312, 3
    %v4776 = vsel %vm4361, %v4775, %v4774
    %v4777 = vrot.slane %v4314, 2
    %v4778 = vsel %vm4364, %v4777, %v4776
    %v4779 = vrot.slane %v4621, 1
    %v4780 = vsel %vm4367, %v4779, %v4778
    %v4781 = vrot.slane %v4305, 7
    %v4782 = vsel %vm4349, %v4781, %v4303
    %v4783 = vrot.slane %v4307, 6
    %v4784 = vsel %vm4352, %v4783, %v4782
    %v4785 = vrot.slane %v4309, 5
    %v4786 = vsel %vm4355, %v4785, %v4784
    %v4787 = vrot.slane %v4311, 4
    %v4788 = vsel %vm4358, %v4787, %v4786
    %v4789 = vrot.slane %v4313, 3
    %v4790 = vsel %vm4361, %v4789, %v4788
    %v4791 = vrot.slane %v4315, 2
    %v4792 = vsel %vm4364, %v4791, %v4790
    %v4793 = vrot.slane %v4622, 1
    %v4794 = vsel %vm4367, %v4793, %v4792
    %v4795 = vrot.slane %v4320, 7
    %v4796 = vsel %vm4349, %v4795, %v4318
    %v4797 = vrot.slane %v4322, 6
    %v4798 = vsel %vm4352, %v4797, %v4796
    %v4799 = vrot.slane %v4324, 5
    %v4800 = vsel %vm4355, %v4799, %v4798
    %v4801 = vrot.slane %v4326, 4
    %v4802 = vsel %vm4358, %v4801, %v4800
    %v4803 = vrot.slane %v4328, 3
    %v4804 = vsel %vm4361, %v4803, %v4802
    %v4805 = vrot.slane %v4330, 2
    %v4806 = vsel %vm4364, %v4805, %v4804
    %v4807 = vrot.slane %v4623, 1
    %v4808 = vsel %vm4367, %v4807, %v4806
    %v4809 = vrot.slane %v4321, 7
    %v4810 = vsel %vm4349, %v4809, %v4319
    %v4811 = vrot.slane %v4323, 6
    %v4812 = vsel %vm4352, %v4811, %v4810
    %v4813 = vrot.slane %v4325, 5
    %v4814 = vsel %vm4355, %v4813, %v4812
    %v4815 = vrot.slane %v4327, 4
    %v4816 = vsel %vm4358, %v4815, %v4814
    %v4817 = vrot.slane %v4329, 3
    %v4818 = vsel %vm4361, %v4817, %v4816
    %v4819 = vrot.slane %v4331, 2
    %v4820 = vsel %vm4364, %v4819, %v4818
    %v4821 = vrot.slane %v4624, 1
    %v4822 = vsel %vm4367, %v4821, %v4820
    %v4823 = vrot.slane %v4336, 7
    %v4824 = vsel %vm4349, %v4823, %v4334
    %v4825 = vrot.slane %v4338, 6
    %v4826 = vsel %vm4352, %v4825, %v4824
    %v4827 = vrot.slane %v4340, 5
    %v4828 = vsel %vm4355, %v4827, %v4826
    %v4829 = vrot.slane %v4342, 4
    %v4830 = vsel %vm4358, %v4829, %v4828
    %v4831 = vrot.slane %v4344, 3
    %v4832 = vsel %vm4361, %v4831, %v4830
    %v4833 = vrot.slane %v4346, 2
    %v4834 = vsel %vm4364, %v4833, %v4832
    %v4835 = vrot.slane %v4625, 1
    %v4836 = vsel %vm4367, %v4835, %v4834
    %v4837 = vrot.slane %v4337, 7
    %v4838 = vsel %vm4349, %v4837, %v4335
    %v4839 = vrot.slane %v4339, 6
    %v4840 = vsel %vm4352, %v4839, %v4838
    %v4841 = vrot.slane %v4341, 5
    %v4842 = vsel %vm4355, %v4841, %v4840
    %v4843 = vrot.slane %v4343, 4
    %v4844 = vsel %vm4358, %v4843, %v4842
    %v4845 = vrot.slane %v4345, 3
    %v4846 = vsel %vm4361, %v4845, %v4844
    %v4847 = vrot.slane %v4347, 2
    %v4848 = vsel %vm4364, %v4847, %v4846
    %v4849 = vrot.slane %v4626, 1
    %v4850 = vsel %vm4367, %v4849, %v4848
    %v4851 = vpack.c.b16 %v4668, %v4640
    %v4852 = vpack.c.b16 %v4682, %v4654
    %v4853 = vpack.c.b16 %v4724, %v4696
    %v4854 = vpack.c.b16 %v4738, %v4710
    %v4855 = vpack.c.b16 %v4780, %v4752
    %v4856 = vpack.c.b16 %v4794, %v4766
    %v4857 = vpack.c.b16 %v4836, %v4808
    %v4858 = vpack.c.b16 %v4850, %v4822
    %v4883 = vunpack.c.l.b16 %v3918
    %v4884 = vunpack.c.l.b16 %v3919
    %v4885 = vunpack.c.l.b16 %v3942
    %v4886 = vunpack.c.l.b16 %v3943
    %v4887 = vunpack.c.l.b16 %v3966
    %v4888 = vunpack.c.l.b16 %v3967
    %v4889 = vunpack.c.l.b16 %v3990
    %v4890 = vunpack.c.l.b16 %v3991
    %v4891 = vunpack.c.l.b16 %v4014
    %v4892 = vunpack.c.l.b16 %v4015
    %v4893 = vunpack.c.l.b16 %v4038
    %v4894 = vunpack.c.l.b16 %v4039
    %v4895 = vunpack.c.l.b16 %v4062
    %v4896 = vunpack.c.l.b16 %v4063
    %v4897 = vunpack.c.l.b16 %v4086
    %v4898 = vunpack.c.l.b16 %v4087
    %v4899 = vrot.slane %v4226, 7
    %v4900 = vsel %vm4349, %v4899, %v4224
    %v4901 = vrot.slane %v4228, 6
    %v4902 = vsel %vm4352, %v4901, %v4900
    %v4903 = vrot.slane %v4230, 5
    %v4904 = vsel %vm4355, %v4903, %v4902
    %v4905 = vrot.slane %v4232, 4
    %v4906 = vsel %vm4358, %v4905, %v4904
    %v4907 = vrot.slane %v4234, 3
    %v4908 = vsel %vm4361, %v4907, %v4906
    %v4909 = vrot.slane %v4611, 2
    %v4910 = vsel %vm4364, %v4909, %v4908
    %v4911 = vrot.slane %v4883, 1
    %v4912 = vsel %vm4367, %v4911, %v4910
    %v4913 = vrot.slane %v4227, 7
    %v4914 = vsel %vm4349, %v4913, %v4225
    %v4915 = vrot.slane %v4229, 6
    %v4916 = vsel %vm4352, %v4915, %v4914
    %v4917 = vrot.slane %v4231, 5
    %v4918 = vsel %vm4355, %v4917, %v4916
    %v4919 = vrot.slane %v4233, 4
    %v4920 = vsel %vm4358, %v4919, %v4918
    %v4921 = vrot.slane %v4235, 3
    %v4922 = vsel %vm4361, %v4921, %v4920
    %v4923 = vrot.slane %v4612, 2
    %v4924 = vsel %vm4364, %v4923, %v4922
    %v4925 = vrot.slane %v4884, 1
    %v4926 = vsel %vm4367, %v4925, %v4924
    %v4927 = vrot.slane %v4242, 7
    %v4928 = vsel %vm4349, %v4927, %v4240
    %v4929 = vrot.slane %v4244, 6
    %v4930 = vsel %vm4352, %v4929, %v4928
    %v4931 = vrot.slane %v4246, 5
    %v4932 = vsel %vm4355, %v4931, %v4930
    %v4933 = vrot.slane %v4248, 4
    %v4934 = vsel %vm4358, %v4933, %v4932
    %v4935 = vrot.slane %v4250, 3
    %v4936 = vsel %vm4361, %v4935, %v4934
    %v4937 = vrot.slane %v4613, 2
    %v4938 = vsel %vm4364, %v4937, %v4936
    %v4939 = vrot.slane %v4885, 1
    %v4940 = vsel %vm4367, %v4939, %v4938
    %v4941 = vrot.slane %v4243, 7
    %v4942 = vsel %vm4349, %v4941, %v4241
    %v4943 = vrot.slane %v4245, 6
    %v4944 = vsel %vm4352, %v4943, %v4942
    %v4945 = vrot.slane %v4247, 5
    %v4946 = vsel %vm4355, %v4945, %v4944
    %v4947 = vrot.slane %v4249, 4
    %v4948 = vsel %vm4358, %v4947, %v4946
    %v4949 = vrot.slane %v4251, 3
    %v4950 = vsel %vm4361, %v4949, %v4948
    %v4951 = vrot.slane %v4614, 2
    %v4952 = vsel %vm4364, %v4951, %v4950
    %v4953 = vrot.slane %v4886, 1
    %v4954 = vsel %vm4367, %v4953, %v4952
    %v4955 = vrot.slane %v4258, 7
    %v4956 = vsel %vm4349, %v4955, %v4256
    %v4957 = vrot.slane %v4260, 6
    %v4958 = vsel %vm4352, %v4957, %v4956
    %v4959 = vrot.slane %v4262, 5
    %v4960 = vsel %vm4355, %v4959, %v4958
    %v4961 = vrot.slane %v4264, 4
    %v4962 = vsel %vm4358, %v4961, %v4960
    %v4963 = vrot.slane %v4266, 3
    %v4964 = vsel %vm4361, %v4963, %v4962
    %v4965 = vrot.slane %v4615, 2
    %v4966 = vsel %vm4364, %v4965, %v4964
    %v4967 = vrot.slane %v4887, 1
    %v4968 = vsel %vm4367, %v4967, %v4966
    %v4969 = vrot.slane %v4259, 7
    %v4970 = vsel %vm4349, %v4969, %v4257
    %v4971 = vrot.slane %v4261, 6
    %v4972 = vsel %vm4352, %v4971, %v4970
    %v4973 = vrot.slane %v4263, 5
    %v4974 = vsel %vm4355, %v4973, %v4972
    %v4975 = vrot.slane %v4265, 4
    %v4976 = vsel %vm4358, %v4975, %v4974
    %v4977 = vrot.slane %v4267, 3
    %v4978 = vsel %vm4361, %v4977, %v4976
    %v4979 = vrot.slane %v4616, 2
    %v4980 = vsel %vm4364, %v4979, %v4978
    %v4981 = vrot.slane %v4888, 1
    %v4982 = vsel %vm4367, %v4981, %v4980
    %v4983 = vrot.slane %v4274, 7
    %v4984 = vsel %vm4349, %v4983, %v4272
    %v4985 = vrot.slane %v4276, 6
    %v4986 = vsel %vm4352, %v4985, %v4984
    %v4987 = vrot.slane %v4278, 5
    %v4988 = vsel %vm4355, %v4987, %v4986
    %v4989 = vrot.slane %v4280, 4
    %v4990 = vsel %vm4358, %v4989, %v4988
    %v4991 = vrot.slane %v4282, 3
    %v4992 = vsel %vm4361, %v4991, %v4990
    %v4993 = vrot.slane %v4617, 2
    %v4994 = vsel %vm4364, %v4993, %v4992
    %v4995 = vrot.slane %v4889, 1
    %v4996 = vsel %vm4367, %v4995, %v4994
    %v4997 = vrot.slane %v4275, 7
    %v4998 = vsel %vm4349, %v4997, %v4273
    %v4999 = vrot.slane %v4277, 6
    %v5000 = vsel %vm4352, %v4999, %v4998
    %v5001 = vrot.slane %v4279, 5
    %v5002 = vsel %vm4355, %v5001, %v5000
    %v5003 = vrot.slane %v4281, 4
    %v5004 = vsel %vm4358, %v5003, %v5002
    %v5005 = vrot.slane %v4283, 3
    %v5006 = vsel %vm4361, %v5005, %v5004
    %v5007 = vrot.slane %v4618, 2
    %v5008 = vsel %vm4364, %v5007, %v5006
    %v5009 = vrot.slane %v4890, 1
    %v5010 = vsel %vm4367, %v5009, %v5008
    %v5011 = vrot.slane %v4290, 7
    %v5012 = vsel %vm4349, %v5011, %v4288
    %v5013 = vrot.slane %v4292, 6
    %v5014 = vsel %vm4352, %v5013, %v5012
    %v5015 = vrot.slane %v4294, 5
    %v5016 = vsel %vm4355, %v5015, %v5014
    %v5017 = vrot.slane %v4296, 4
    %v5018 = vsel %vm4358, %v5017, %v5016
    %v5019 = vrot.slane %v4298, 3
    %v5020 = vsel %vm4361, %v5019, %v5018
    %v5021 = vrot.slane %v4619, 2
    %v5022 = vsel %vm4364, %v5021, %v5020
    %v5023 = vrot.slane %v4891, 1
    %v5024 = vsel %vm4367, %v5023, %v5022
    %v5025 = vrot.slane %v4291, 7
    %v5026 = vsel %vm4349, %v5025, %v4289
    %v5027 = vrot.slane %v4293, 6
    %v5028 = vsel %vm4352, %v5027, %v5026
    %v5029 = vrot.slane %v4295, 5
    %v5030 = vsel %vm4355, %v5029, %v5028
    %v5031 = vrot.slane %v4297, 4
    %v5032 = vsel %vm4358, %v5031, %v5030
    %v5033 = vrot.slane %v4299, 3
    %v5034 = vsel %vm4361, %v5033, %v5032
    %v5035 = vrot.slane %v4620, 2
    %v5036 = vsel %vm4364, %v5035, %v5034
    %v5037 = vrot.slane %v4892, 1
    %v5038 = vsel %vm4367, %v5037, %v5036
    %v5039 = vrot.slane %v4306, 7
    %v5040 = vsel %vm4349, %v5039, %v4304
    %v5041 = vrot.slane %v4308, 6
    %v5042 = vsel %vm4352, %v5041, %v5040
    %v5043 = vrot.slane %v4310, 5
    %v5044 = vsel %vm4355, %v5043, %v5042
    %v5045 = vrot.slane %v4312, 4
    %v5046 = vsel %vm4358, %v5045, %v5044
    %v5047 = vrot.slane %v4314, 3
    %v5048 = vsel %vm4361, %v5047, %v5046
    %v5049 = vrot.slane %v4621, 2
    %v5050 = vsel %vm4364, %v5049, %v5048
    %v5051 = vrot.slane %v4893, 1
    %v5052 = vsel %vm4367, %v5051, %v5050
    %v5053 = vrot.slane %v4307, 7
    %v5054 = vsel %vm4349, %v5053, %v4305
    %v5055 = vrot.slane %v4309, 6
    %v5056 = vsel %vm4352, %v5055, %v5054
    %v5057 = vrot.slane %v4311, 5
    %v5058 = vsel %vm4355, %v5057, %v5056
    %v5059 = vrot.slane %v4313, 4
    %v5060 = vsel %vm4358, %v5059, %v5058
    %v5061 = vrot.slane %v4315, 3
    %v5062 = vsel %vm4361, %v5061, %v5060
    %v5063 = vrot.slane %v4622, 2
    %v5064 = vsel %vm4364, %v5063, %v5062
    %v5065 = vrot.slane %v4894, 1
    %v5066 = vsel %vm4367, %v5065, %v5064
    %v5067 = vrot.slane %v4322, 7
    %v5068 = vsel %vm4349, %v5067, %v4320
    %v5069 = vrot.slane %v4324, 6
    %v5070 = vsel %vm4352, %v5069, %v5068
    %v5071 = vrot.slane %v4326, 5
    %v5072 = vsel %vm4355, %v5071, %v5070
    %v5073 = vrot.slane %v4328, 4
    %v5074 = vsel %vm4358, %v5073, %v5072
    %v5075 = vrot.slane %v4330, 3
    %v5076 = vsel %vm4361, %v5075, %v5074
    %v5077 = vrot.slane %v4623, 2
    %v5078 = vsel %vm4364, %v5077, %v5076
    %v5079 = vrot.slane %v4895, 1
    %v5080 = vsel %vm4367, %v5079, %v5078
    %v5081 = vrot.slane %v4323, 7
    %v5082 = vsel %vm4349, %v5081, %v4321
    %v5083 = vrot.slane %v4325, 6
    %v5084 = vsel %vm4352, %v5083, %v5082
    %v5085 = vrot.slane %v4327, 5
    %v5086 = vsel %vm4355, %v5085, %v5084
    %v5087 = vrot.slane %v4329, 4
    %v5088 = vsel %vm4358, %v5087, %v5086
    %v5089 = vrot.slane %v4331, 3
    %v5090 = vsel %vm4361, %v5089, %v5088
    %v5091 = vrot.slane %v4624, 2
    %v5092 = vsel %vm4364, %v5091, %v5090
    %v5093 = vrot.slane %v4896, 1
    %v5094 = vsel %vm4367, %v5093, %v5092
    %v5095 = vrot.slane %v4338, 7
    %v5096 = vsel %vm4349, %v5095, %v4336
    %v5097 = vrot.slane %v4340, 6
    %v5098 = vsel %vm4352, %v5097, %v5096
    %v5099 = vrot.slane %v4342, 5
    %v5100 = vsel %vm4355, %v5099, %v5098
    %v5101 = vrot.slane %v4344, 4
    %v5102 = vsel %vm4358, %v5101, %v5100
    %v5103 = vrot.slane %v4346, 3
    %v5104 = vsel %vm4361, %v5103, %v5102
    %v5105 = vrot.slane %v4625, 2
    %v5106 = vsel %vm4364, %v5105, %v5104
    %v5107 = vrot.slane %v4897, 1
    %v5108 = vsel %vm4367, %v5107, %v5106
    %v5109 = vrot.slane %v4339, 7
    %v5110 = vsel %vm4349, %v5109, %v4337
    %v5111 = vrot.slane %v4341, 6
    %v5112 = vsel %vm4352, %v5111, %v5110
    %v5113 = vrot.slane %v4343, 5
    %v5114 = vsel %vm4355, %v5113, %v5112
    %v5115 = vrot.slane %v4345, 4
    %v5116 = vsel %vm4358, %v5115, %v5114
    %v5117 = vrot.slane %v4347, 3
    %v5118 = vsel %vm4361, %v5117, %v5116
    %v5119 = vrot.slane %v4626, 2
    %v5120 = vsel %vm4364, %v5119, %v5118
    %v5121 = vrot.slane %v4898, 1
    %v5122 = vsel %vm4367, %v5121, %v5120
    %v5123 = vpack.c.b16 %v4940, %v4912
    %v5124 = vpack.c.b16 %v4954, %v4926
    %v5125 = vpack.c.b16 %v4996, %v4968
    %v5126 = vpack.c.b16 %v5010, %v4982
    %v5127 = vpack.c.b16 %v5052, %v5024
    %v5128 = vpack.c.b16 %v5066, %v5038
    %v5129 = vpack.c.b16 %v5108, %v5080
    %v5130 = vpack.c.b16 %v5122, %v5094
    %v5155 = vunpack.c.l.b16 %v3920
    %v5156 = vunpack.c.l.b16 %v3921
    %v5157 = vunpack.c.l.b16 %v3944
    %v5158 = vunpack.c.l.b16 %v3945
    %v5159 = vunpack.c.l.b16 %v3968
    %v5160 = vunpack.c.l.b16 %v3969
    %v5161 = vunpack.c.l.b16 %v3992
    %v5162 = vunpack.c.l.b16 %v3993
    %v5163 = vunpack.c.l.b16 %v4016
    %v5164 = vunpack.c.l.b16 %v4017
    %v5165 = vunpack.c.l.b16 %v4040
    %v5166 = vunpack.c.l.b16 %v4041
    %v5167 = vunpack.c.l.b16 %v4064
    %v5168 = vunpack.c.l.b16 %v4065
    %v5169 = vunpack.c.l.b16 %v4088
    %v5170 = vunpack.c.l.b16 %v4089
    %v5171 = vrot.slane %v4228, 7
    %v5172 = vsel %vm4349, %v5171, %v4226
    %v5173 = vrot.slane %v4230, 6
    %v5174 = vsel %vm4352, %v5173, %v5172
    %v5175 = vrot.slane %v4232, 5
    %v5176 = vsel %vm4355, %v5175, %v5174
    %v5177 = vrot.slane %v4234, 4
    %v5178 = vsel %vm4358, %v5177, %v5176
    %v5179 = vrot.slane %v4611, 3
    %v5180 = vsel %vm4361, %v5179, %v5178
    %v5181 = vrot.slane %v4883, 2
    %v5182 = vsel %vm4364, %v5181, %v5180
    %v5183 = vrot.slane %v5155, 1
    %v5184 = vsel %vm4367, %v5183, %v5182
    %v5185 = vrot.slane %v4229, 7
    %v5186 = vsel %vm4349, %v5185, %v4227
    %v5187 = vrot.slane %v4231, 6
    %v5188 = vsel %vm4352, %v5187, %v5186
    %v5189 = vrot.slane %v4233, 5
    %v5190 = vsel %vm4355, %v5189, %v5188
    %v5191 = vrot.slane %v4235, 4
    %v5192 = vsel %vm4358, %v5191, %v5190
    %v5193 = vrot.slane %v4612, 3
    %v5194 = vsel %vm4361, %v5193, %v5192
    %v5195 = vrot.slane %v4884, 2
    %v5196 = vsel %vm4364, %v5195, %v5194
    %v5197 = vrot.slane %v5156, 1
    %v5198 = vsel %vm4367, %v5197, %v5196
    %v5199 = vrot.slane %v4244, 7
    %v5200 = vsel %vm4349, %v5199, %v4242
    %v5201 = vrot.slane %v4246, 6
    %v5202 = vsel %vm4352, %v5201, %v5200
    %v5203 = vrot.slane %v4248, 5
    %v5204 = vsel %vm4355, %v5203, %v5202
    %v5205 = vrot.slane %v4250, 4
    %v5206 = vsel %vm4358, %v5205, %v5204
    %v5207 = vrot.slane %v4613, 3
    %v5208 = vsel %vm4361, %v5207, %v5206
    %v5209 = vrot.slane %v4885, 2
    %v5210 = vsel %vm4364, %v5209, %v5208
    %v5211 = vrot.slane %v5157, 1
    %v5212 = vsel %vm4367, %v5211, %v5210
    %v5213 = vrot.slane %v4245, 7
    %v5214 = vsel %vm4349, %v5213, %v4243
    %v5215 = vrot.slane %v4247, 6
    %v5216 = vsel %vm4352, %v5215, %v5214
    %v5217 = vrot.slane %v4249, 5
    %v5218 = vsel %vm4355, %v5217, %v5216
    %v5219 = vrot.slane %v4251, 4
    %v5220 = vsel %vm4358, %v5219, %v5218
    %v5221 = vrot.slane %v4614, 3
    %v5222 = vsel %vm4361, %v5221, %v5220
    %v5223 = vrot.slane %v4886, 2
    %v5224 = vsel %vm4364, %v5223, %v5222
    %v5225 = vrot.slane %v5158, 1
    %v5226 = vsel %vm4367, %v5225, %v5224
    %v5227 = vrot.slane %v4260, 7
    %v5228 = vsel %vm4349, %v5227, %v4258
    %v5229 = vrot.slane %v4262, 6
    %v5230 = vsel %vm4352, %v5229, %v5228
    %v5231 = vrot.slane %v4264, 5
    %v5232 = vsel %vm4355, %v5231, %v5230
    %v5233 = vrot.slane %v4266, 4
    %v5234 = vsel %vm4358, %v5233, %v5232
    %v5235 = vrot.slane %v4615, 3
    %v5236 = vsel %vm4361, %v5235, %v5234
    %v5237 = vrot.slane %v4887, 2
    %v5238 = vsel %vm4364, %v5237, %v5236
    %v5239 = vrot.slane %v5159, 1
    %v5240 = vsel %vm4367, %v5239, %v5238
    %v5241 = vrot.slane %v4261, 7
    %v5242 = vsel %vm4349, %v5241, %v4259
    %v5243 = vrot.slane %v4263, 6
    %v5244 = vsel %vm4352, %v5243, %v5242
    %v5245 = vrot.slane %v4265, 5
    %v5246 = vsel %vm4355, %v5245, %v5244
    %v5247 = vrot.slane %v4267, 4
    %v5248 = vsel %vm4358, %v5247, %v5246
    %v5249 = vrot.slane %v4616, 3
    %v5250 = vsel %vm4361, %v5249, %v5248
    %v5251 = vrot.slane %v4888, 2
    %v5252 = vsel %vm4364, %v5251, %v5250
    %v5253 = vrot.slane %v5160, 1
    %v5254 = vsel %vm4367, %v5253, %v5252
    %v5255 = vrot.slane %v4276, 7
    %v5256 = vsel %vm4349, %v5255, %v4274
    %v5257 = vrot.slane %v4278, 6
    %v5258 = vsel %vm4352, %v5257, %v5256
    %v5259 = vrot.slane %v4280, 5
    %v5260 = vsel %vm4355, %v5259, %v5258
    %v5261 = vrot.slane %v4282, 4
    %v5262 = vsel %vm4358, %v5261, %v5260
    %v5263 = vrot.slane %v4617, 3
    %v5264 = vsel %vm4361, %v5263, %v5262
    %v5265 = vrot.slane %v4889, 2
    %v5266 = vsel %vm4364, %v5265, %v5264
    %v5267 = vrot.slane %v5161, 1
    %v5268 = vsel %vm4367, %v5267, %v5266
    %v5269 = vrot.slane %v4277, 7
    %v5270 = vsel %vm4349, %v5269, %v4275
    %v5271 = vrot.slane %v4279, 6
    %v5272 = vsel %vm4352, %v5271, %v5270
    %v5273 = vrot.slane %v4281, 5
    %v5274 = vsel %vm4355, %v5273, %v5272
    %v5275 = vrot.slane %v4283, 4
    %v5276 = vsel %vm4358, %v5275, %v5274
    %v5277 = vrot.slane %v4618, 3
    %v5278 = vsel %vm4361, %v5277, %v5276
    %v5279 = vrot.slane %v4890, 2
    %v5280 = vsel %vm4364, %v5279, %v5278
    %v5281 = vrot.slane %v5162, 1
    %v5282 = vsel %vm4367, %v5281, %v5280
    %v5283 = vrot.slane %v4292, 7
    %v5284 = vsel %vm4349, %v5283, %v4290
    %v5285 = vrot.slane %v4294, 6
    %v5286 = vsel %vm4352, %v5285, %v5284
    %v5287 = vrot.slane %v4296, 5
    %v5288 = vsel %vm4355, %v5287, %v5286
    %v5289 = vrot.slane %v4298, 4
    %v5290 = vsel %vm4358, %v5289, %v5288
    %v5291 = vrot.slane %v4619, 3
    %v5292 = vsel %vm4361, %v5291, %v5290
    %v5293 = vrot.slane %v4891, 2
    %v5294 = vsel %vm4364, %v5293, %v5292
    %v5295 = vrot.slane %v5163, 1
    %v5296 = vsel %vm4367, %v5295, %v5294
    %v5297 = vrot.slane %v4293, 7
    %v5298 = vsel %vm4349, %v5297, %v4291
    %v5299 = vrot.slane %v4295, 6
    %v5300 = vsel %vm4352, %v5299, %v5298
    %v5301 = vrot.slane %v4297, 5
    %v5302 = vsel %vm4355, %v5301, %v5300
    %v5303 = vrot.slane %v4299, 4
    %v5304 = vsel %vm4358, %v5303, %v5302
    %v5305 = vrot.slane %v4620, 3
    %v5306 = vsel %vm4361, %v5305, %v5304
    %v5307 = vrot.slane %v4892, 2
    %v5308 = vsel %vm4364, %v5307, %v5306
    %v5309 = vrot.slane %v5164, 1
    %v5310 = vsel %vm4367, %v5309, %v5308
    %v5311 = vrot.slane %v4308, 7
    %v5312 = vsel %vm4349, %v5311, %v4306
    %v5313 = vrot.slane %v4310, 6
    %v5314 = vsel %vm4352, %v5313, %v5312
    %v5315 = vrot.slane %v4312, 5
    %v5316 = vsel %vm4355, %v5315, %v5314
    %v5317 = vrot.slane %v4314, 4
    %v5318 = vsel %vm4358, %v5317, %v5316
    %v5319 = vrot.slane %v4621, 3
    %v5320 = vsel %vm4361, %v5319, %v5318
    %v5321 = vrot.slane %v4893, 2
    %v5322 = vsel %vm4364, %v5321, %v5320
    %v5323 = vrot.slane %v5165, 1
    %v5324 = vsel %vm4367, %v5323, %v5322
    %v5325 = vrot.slane %v4309, 7
    %v5326 = vsel %vm4349, %v5325, %v4307
    %v5327 = vrot.slane %v4311, 6
    %v5328 = vsel %vm4352, %v5327, %v5326
    %v5329 = vrot.slane %v4313, 5
    %v5330 = vsel %vm4355, %v5329, %v5328
    %v5331 = vrot.slane %v4315, 4
    %v5332 = vsel %vm4358, %v5331, %v5330
    %v5333 = vrot.slane %v4622, 3
    %v5334 = vsel %vm4361, %v5333, %v5332
    %v5335 = vrot.slane %v4894, 2
    %v5336 = vsel %vm4364, %v5335, %v5334
    %v5337 = vrot.slane %v5166, 1
    %v5338 = vsel %vm4367, %v5337, %v5336
    %v5339 = vrot.slane %v4324, 7
    %v5340 = vsel %vm4349, %v5339, %v4322
    %v5341 = vrot.slane %v4326, 6
    %v5342 = vsel %vm4352, %v5341, %v5340
    %v5343 = vrot.slane %v4328, 5
    %v5344 = vsel %vm4355, %v5343, %v5342
    %v5345 = vrot.slane %v4330, 4
    %v5346 = vsel %vm4358, %v5345, %v5344
    %v5347 = vrot.slane %v4623, 3
    %v5348 = vsel %vm4361, %v5347, %v5346
    %v5349 = vrot.slane %v4895, 2
    %v5350 = vsel %vm4364, %v5349, %v5348
    %v5351 = vrot.slane %v5167, 1
    %v5352 = vsel %vm4367, %v5351, %v5350
    %v5353 = vrot.slane %v4325, 7
    %v5354 = vsel %vm4349, %v5353, %v4323
    %v5355 = vrot.slane %v4327, 6
    %v5356 = vsel %vm4352, %v5355, %v5354
    %v5357 = vrot.slane %v4329, 5
    %v5358 = vsel %vm4355, %v5357, %v5356
    %v5359 = vrot.slane %v4331, 4
    %v5360 = vsel %vm4358, %v5359, %v5358
    %v5361 = vrot.slane %v4624, 3
    %v5362 = vsel %vm4361, %v5361, %v5360
    %v5363 = vrot.slane %v4896, 2
    %v5364 = vsel %vm4364, %v5363, %v5362
    %v5365 = vrot.slane %v5168, 1
    %v5366 = vsel %vm4367, %v5365, %v5364
    %v5367 = vrot.slane %v4340, 7
    %v5368 = vsel %vm4349, %v5367, %v4338
    %v5369 = vrot.slane %v4342, 6
    %v5370 = vsel %vm4352, %v5369, %v5368
    %v5371 = vrot.slane %v4344, 5
    %v5372 = vsel %vm4355, %v5371, %v5370
    %v5373 = vrot.slane %v4346, 4
    %v5374 = vsel %vm4358, %v5373, %v5372
    %v5375 = vrot.slane %v4625, 3
    %v5376 = vsel %vm4361, %v5375, %v5374
    %v5377 = vrot.slane %v4897, 2
    %v5378 = vsel %vm4364, %v5377, %v5376
    %v5379 = vrot.slane %v5169, 1
    %v5380 = vsel %vm4367, %v5379, %v5378
    %v5381 = vrot.slane %v4341, 7
    %v5382 = vsel %vm4349, %v5381, %v4339
    %v5383 = vrot.slane %v4343, 6
    %v5384 = vsel %vm4352, %v5383, %v5382
    %v5385 = vrot.slane %v4345, 5
    %v5386 = vsel %vm4355, %v5385, %v5384
    %v5387 = vrot.slane %v4347, 4
    %v5388 = vsel %vm4358, %v5387, %v5386
    %v5389 = vrot.slane %v4626, 3
    %v5390 = vsel %vm4361, %v5389, %v5388
    %v5391 = vrot.slane %v4898, 2
    %v5392 = vsel %vm4364, %v5391, %v5390
    %v5393 = vrot.slane %v5170, 1
    %v5394 = vsel %vm4367, %v5393, %v5392
    %v5395 = vpack.c.b16 %v5212, %v5184
    %v5396 = vpack.c.b16 %v5226, %v5198
    %v5397 = vpack.c.b16 %v5268, %v5240
    %v5398 = vpack.c.b16 %v5282, %v5254
    %v5399 = vpack.c.b16 %v5324, %v5296
    %v5400 = vpack.c.b16 %v5338, %v5310
    %v5401 = vpack.c.b16 %v5380, %v5352
    %v5402 = vpack.c.b16 %v5394, %v5366
    %v5427 = vunpack.c.l.b16 %v3922
    %v5428 = vunpack.c.l.b16 %v3923
    %v5429 = vunpack.c.l.b16 %v3946
    %v5430 = vunpack.c.l.b16 %v3947
    %v5431 = vunpack.c.l.b16 %v3970
    %v5432 = vunpack.c.l.b16 %v3971
    %v5433 = vunpack.c.l.b16 %v3994
    %v5434 = vunpack.c.l.b16 %v3995
    %v5435 = vunpack.c.l.b16 %v4018
    %v5436 = vunpack.c.l.b16 %v4019
    %v5437 = vunpack.c.l.b16 %v4042
    %v5438 = vunpack.c.l.b16 %v4043
    %v5439 = vunpack.c.l.b16 %v4066
    %v5440 = vunpack.c.l.b16 %v4067
    %v5441 = vunpack.c.l.b16 %v4090
    %v5442 = vunpack.c.l.b16 %v4091
    %v5443 = vrot.slane %v4230, 7
    %v5444 = vsel %vm4349, %v5443, %v4228
    %v5445 = vrot.slane %v4232, 6
    %v5446 = vsel %vm4352, %v5445, %v5444
    %v5447 = vrot.slane %v4234, 5
    %v5448 = vsel %vm4355, %v5447, %v5446
    %v5449 = vrot.slane %v4611, 4
    %v5450 = vsel %vm4358, %v5449, %v5448
    %v5451 = vrot.slane %v4883, 3
    %v5452 = vsel %vm4361, %v5451, %v5450
    %v5453 = vrot.slane %v5155, 2
    %v5454 = vsel %vm4364, %v5453, %v5452
    %v5455 = vrot.slane %v5427, 1
    %v5456 = vsel %vm4367, %v5455, %v5454
    %v5457 = vrot.slane %v4231, 7
    %v5458 = vsel %vm4349, %v5457, %v4229
    %v5459 = vrot.slane %v4233, 6
    %v5460 = vsel %vm4352, %v5459, %v5458
    %v5461 = vrot.slane %v4235, 5
    %v5462 = vsel %vm4355, %v5461, %v5460
    %v5463 = vrot.slane %v4612, 4
    %v5464 = vsel %vm4358, %v5463, %v5462
    %v5465 = vrot.slane %v4884, 3
    %v5466 = vsel %vm4361, %v5465, %v5464
    %v5467 = vrot.slane %v5156, 2
    %v5468 = vsel %vm4364, %v5467, %v5466
    %v5469 = vrot.slane %v5428, 1
    %v5470 = vsel %vm4367, %v5469, %v5468
    %v5471 = vrot.slane %v4246, 7
    %v5472 = vsel %vm4349, %v5471, %v4244
    %v5473 = vrot.slane %v4248, 6
    %v5474 = vsel %vm4352, %v5473, %v5472
    %v5475 = vrot.slane %v4250, 5
    %v5476 = vsel %vm4355, %v5475, %v5474
    %v5477 = vrot.slane %v4613, 4
    %v5478 = vsel %vm4358, %v5477, %v5476
    %v5479 = vrot.slane %v4885, 3
    %v5480 = vsel %vm4361, %v5479, %v5478
    %v5481 = vrot.slane %v5157, 2
    %v5482 = vsel %vm4364, %v5481, %v5480
    %v5483 = vrot.slane %v5429, 1
    %v5484 = vsel %vm4367, %v5483, %v5482
    %v5485 = vrot.slane %v4247, 7
    %v5486 = vsel %vm4349, %v5485, %v4245
    %v5487 = vrot.slane %v4249, 6
    %v5488 = vsel %vm4352, %v5487, %v5486
    %v5489 = vrot.slane %v4251, 5
    %v5490 = vsel %vm4355, %v5489, %v5488
    %v5491 = vrot.slane %v4614, 4
    %v5492 = vsel %vm4358, %v5491, %v5490
    %v5493 = vrot.slane %v4886, 3
    %v5494 = vsel %vm4361, %v5493, %v5492
    %v5495 = vrot.slane %v5158, 2
    %v5496 = vsel %vm4364, %v5495, %v5494
    %v5497 = vrot.slane %v5430, 1
    %v5498 = vsel %vm4367, %v5497, %v5496
    %v5499 = vrot.slane %v4262, 7
    %v5500 = vsel %vm4349, %v5499, %v4260
    %v5501 = vrot.slane %v4264, 6
    %v5502 = vsel %vm4352, %v5501, %v5500
    %v5503 = vrot.slane %v4266, 5
    %v5504 = vsel %vm4355, %v5503, %v5502
    %v5505 = vrot.slane %v4615, 4
    %v5506 = vsel %vm4358, %v5505, %v5504
    %v5507 = vrot.slane %v4887, 3
    %v5508 = vsel %vm4361, %v5507, %v5506
    %v5509 = vrot.slane %v5159, 2
    %v5510 = vsel %vm4364, %v5509, %v5508
    %v5511 = vrot.slane %v5431, 1
    %v5512 = vsel %vm4367, %v5511, %v5510
    %v5513 = vrot.slane %v4263, 7
    %v5514 = vsel %vm4349, %v5513, %v4261
    %v5515 = vrot.slane %v4265, 6
    %v5516 = vsel %vm4352, %v5515, %v5514
    %v5517 = vrot.slane %v4267, 5
    %v5518 = vsel %vm4355, %v5517, %v5516
    %v5519 = vrot.slane %v4616, 4
    %v5520 = vsel %vm4358, %v5519, %v5518
    %v5521 = vrot.slane %v4888, 3
    %v5522 = vsel %vm4361, %v5521, %v5520
    %v5523 = vrot.slane %v5160, 2
    %v5524 = vsel %vm4364, %v5523, %v5522
    %v5525 = vrot.slane %v5432, 1
    %v5526 = vsel %vm4367, %v5525, %v5524
    %v5527 = vrot.slane %v4278, 7
    %v5528 = vsel %vm4349, %v5527, %v4276
    %v5529 = vrot.slane %v4280, 6
    %v5530 = vsel %vm4352, %v5529, %v5528
    %v5531 = vrot.slane %v4282, 5
    %v5532 = vsel %vm4355, %v5531, %v5530
    %v5533 = vrot.slane %v4617, 4
    %v5534 = vsel %vm4358, %v5533, %v5532
    %v5535 = vrot.slane %v4889, 3
    %v5536 = vsel %vm4361, %v5535, %v5534
    %v5537 = vrot.slane %v5161, 2
    %v5538 = vsel %vm4364, %v5537, %v5536
    %v5539 = vrot.slane %v5433, 1
    %v5540 = vsel %vm4367, %v5539, %v5538
    %v5541 = vrot.slane %v4279, 7
    %v5542 = vsel %vm4349, %v5541, %v4277
    %v5543 = vrot.slane %v4281, 6
    %v5544 = vsel %vm4352, %v5543, %v5542
    %v5545 = vrot.slane %v4283, 5
    %v5546 = vsel %vm4355, %v5545, %v5544
    %v5547 = vrot.slane %v4618, 4
    %v5548 = vsel %vm4358, %v5547, %v5546
    %v5549 = vrot.slane %v4890, 3
    %v5550 = vsel %vm4361, %v5549, %v5548
    %v5551 = vrot.slane %v5162, 2
    %v5552 = vsel %vm4364, %v5551, %v5550
    %v5553 = vrot.slane %v5434, 1
    %v5554 = vsel %vm4367, %v5553, %v5552
    %v5555 = vrot.slane %v4294, 7
    %v5556 = vsel %vm4349, %v5555, %v4292
    %v5557 = vrot.slane %v4296, 6
    %v5558 = vsel %vm4352, %v5557, %v5556
    %v5559 = vrot.slane %v4298, 5
    %v5560 = vsel %vm4355, %v5559, %v5558
    %v5561 = vrot.slane %v4619, 4
    %v5562 = vsel %vm4358, %v5561, %v5560
    %v5563 = vrot.slane %v4891, 3
    %v5564 = vsel %vm4361, %v5563, %v5562
    %v5565 = vrot.slane %v5163, 2
    %v5566 = vsel %vm4364, %v5565, %v5564
    %v5567 = vrot.slane %v5435, 1
    %v5568 = vsel %vm4367, %v5567, %v5566
    %v5569 = vrot.slane %v4295, 7
    %v5570 = vsel %vm4349, %v5569, %v4293
    %v5571 = vrot.slane %v4297, 6
    %v5572 = vsel %vm4352, %v5571, %v5570
    %v5573 = vrot.slane %v4299, 5
    %v5574 = vsel %vm4355, %v5573, %v5572
    %v5575 = vrot.slane %v4620, 4
    %v5576 = vsel %vm4358, %v5575, %v5574
    %v5577 = vrot.slane %v4892, 3
    %v5578 = vsel %vm4361, %v5577, %v5576
    %v5579 = vrot.slane %v5164, 2
    %v5580 = vsel %vm4364, %v5579, %v5578
    %v5581 = vrot.slane %v5436, 1
    %v5582 = vsel %vm4367, %v5581, %v5580
    %v5583 = vrot.slane %v4310, 7
    %v5584 = vsel %vm4349, %v5583, %v4308
    %v5585 = vrot.slane %v4312, 6
    %v5586 = vsel %vm4352, %v5585, %v5584
    %v5587 = vrot.slane %v4314, 5
    %v5588 = vsel %vm4355, %v5587, %v5586
    %v5589 = vrot.slane %v4621, 4
    %v5590 = vsel %vm4358, %v5589, %v5588
    %v5591 = vrot.slane %v4893, 3
    %v5592 = vsel %vm4361, %v5591, %v5590
    %v5593 = vrot.slane %v5165, 2
    %v5594 = vsel %vm4364, %v5593, %v5592
    %v5595 = vrot.slane %v5437, 1
    %v5596 = vsel %vm4367, %v5595, %v5594
    %v5597 = vrot.slane %v4311, 7
    %v5598 = vsel %vm4349, %v5597, %v4309
    %v5599 = vrot.slane %v4313, 6
    %v5600 = vsel %vm4352, %v5599, %v5598
    %v5601 = vrot.slane %v4315, 5
    %v5602 = vsel %vm4355, %v5601, %v5600
    %v5603 = vrot.slane %v4622, 4
    %v5604 = vsel %vm4358, %v5603, %v5602
    %v5605 = vrot.slane %v4894, 3
    %v5606 = vsel %vm4361, %v5605, %v5604
    %v5607 = vrot.slane %v5166, 2
    %v5608 = vsel %vm4364, %v5607, %v5606
    %v5609 = vrot.slane %v5438, 1
    %v5610 = vsel %vm4367, %v5609, %v5608
    %v5611 = vrot.slane %v4326, 7
    %v5612 = vsel %vm4349, %v5611, %v4324
    %v5613 = vrot.slane %v4328, 6
    %v5614 = vsel %vm4352, %v5613, %v5612
    %v5615 = vrot.slane %v4330, 5
    %v5616 = vsel %vm4355, %v5615, %v5614
    %v5617 = vrot.slane %v4623, 4
    %v5618 = vsel %vm4358, %v5617, %v5616
    %v5619 = vrot.slane %v4895, 3
    %v5620 = vsel %vm4361, %v5619, %v5618
    %v5621 = vrot.slane %v5167, 2
    %v5622 = vsel %vm4364, %v5621, %v5620
    %v5623 = vrot.slane %v5439, 1
    %v5624 = vsel %vm4367, %v5623, %v5622
    %v5625 = vrot.slane %v4327, 7
    %v5626 = vsel %vm4349, %v5625, %v4325
    %v5627 = vrot.slane %v4329, 6
    %v5628 = vsel %vm4352, %v5627, %v5626
    %v5629 = vrot.slane %v4331, 5
    %v5630 = vsel %vm4355, %v5629, %v5628
    %v5631 = vrot.slane %v4624, 4
    %v5632 = vsel %vm4358, %v5631, %v5630
    %v5633 = vrot.slane %v4896, 3
    %v5634 = vsel %vm4361, %v5633, %v5632
    %v5635 = vrot.slane %v5168, 2
    %v5636 = vsel %vm4364, %v5635, %v5634
    %v5637 = vrot.slane %v5440, 1
    %v5638 = vsel %vm4367, %v5637, %v5636
    %v5639 = vrot.slane %v4342, 7
    %v5640 = vsel %vm4349, %v5639, %v4340
    %v5641 = vrot.slane %v4344, 6
    %v5642 = vsel %vm4352, %v5641, %v5640
    %v5643 = vrot.slane %v4346, 5
    %v5644 = vsel %vm4355, %v5643, %v5642
    %v5645 = vrot.slane %v4625, 4
    %v5646 = vsel %vm4358, %v5645, %v5644
    %v5647 = vrot.slane %v4897, 3
    %v5648 = vsel %vm4361, %v5647, %v5646
    %v5649 = vrot.slane %v5169, 2
    %v5650 = vsel %vm4364, %v5649, %v5648
    %v5651 = vrot.slane %v5441, 1
    %v5652 = vsel %vm4367, %v5651, %v5650
    %v5653 = vrot.slane %v4343, 7
    %v5654 = vsel %vm4349, %v5653, %v4341
    %v5655 = vrot.slane %v4345, 6
    %v5656 = vsel %vm4352, %v5655, %v5654
    %v5657 = vrot.slane %v4347, 5
    %v5658 = vsel %vm4355, %v5657, %v5656
    %v5659 = vrot.slane %v4626, 4
    %v5660 = vsel %vm4358, %v5659, %v5658
    %v5661 = vrot.slane %v4898, 3
    %v5662 = vsel %vm4361, %v5661, %v5660
    %v5663 = vrot.slane %v5170, 2
    %v5664 = vsel %vm4364, %v5663, %v5662
    %v5665 = vrot.slane %v5442, 1
    %v5666 = vsel %vm4367, %v5665, %v5664
    %v5667 = vpack.c.b16 %v5484, %v5456
    %v5668 = vpack.c.b16 %v5498, %v5470
    %v5669 = vpack.c.b16 %v5540, %v5512
    %v5670 = vpack.c.b16 %v5554, %v5526
    %v5671 = vpack.c.b16 %v5596, %v5568
    %v5672 = vpack.c.b16 %v5610, %v5582
    %v5673 = vpack.c.b16 %v5652, %v5624
    %v5674 = vpack.c.b16 %v5666, %v5638
    %v5683 = vld [vmem:[#allocation4] sm:$0xff]
    %v5684 = vld [vmem:[#allocation4 + $0x8] sm:$0xff]
    %v5685 = vld [vmem:[#allocation4 + $0x10] sm:$0xff]
    %v5686 = vld [vmem:[#allocation4 + $0x18] sm:$0xff]
    %v5687 = vld [vmem:[#allocation4 + $0x20] sm:$0xff]
    %v5688 = vld [vmem:[#allocation4 + $0x28] sm:$0xff]
    %v5689 = vld [vmem:[#allocation4 + $0x30] sm:$0xff]
    %v5690 = vld [vmem:[#allocation4 + $0x38] sm:$0xff]
    %v5691 = vld [vmem:[#allocation4 + $0x40] sm:$0xff]
    %v5692 = vld [vmem:[#allocation4 + $0x48] sm:$0xff]
    %v5693 = vld [vmem:[#allocation4 + $0x50] sm:$0xff]
    %v5694 = vld [vmem:[#allocation4 + $0x58] sm:$0xff]
    %v5695 = vld [vmem:[#allocation4 + $0x60] sm:$0xff]
    %v5696 = vld [vmem:[#allocation4 + $0x68] sm:$0xff]
    %v5697 = vld [vmem:[#allocation4 + $0x70] sm:$0xff]
    %v5698 = vld [vmem:[#allocation4 + $0x78] sm:$0xff]
    %v5699 = vld [vmem:[#allocation4 + $0x80] sm:$0xff]
    %v5700 = vld [vmem:[#allocation4 + $0x88] sm:$0xff]
    %v5701 = vld [vmem:[#allocation4 + $0x90] sm:$0xff]
    %v5702 = vld [vmem:[#allocation4 + $0x98] sm:$0xff]
    %v5703 = vld [vmem:[#allocation4 + $0xa0] sm:$0xff]
    %v5704 = vld [vmem:[#allocation4 + $0xa8] sm:$0xff]
    %v5705 = vld [vmem:[#allocation4 + $0xb0] sm:$0xff]
    %v5706 = vld [vmem:[#allocation4 + $0xb8] sm:$0xff]
    %v5707 = vld [vmem:[#allocation4 + $0xc0] sm:$0xff]
    %v5708 = vld [vmem:[#allocation4 + $0xc8] sm:$0xff]
    %v5709 = vld [vmem:[#allocation4 + $0xd0] sm:$0xff]
    %v5710 = vld [vmem:[#allocation4 + $0xd8] sm:$0xff]
    %v5711 = vld [vmem:[#allocation4 + $0xe0] sm:$0xff]
    %v5712 = vld [vmem:[#allocation4 + $0xe8] sm:$0xff]
    %v5713 = vld [vmem:[#allocation4 + $0xf0] sm:$0xff]
    %v5714 = vld [vmem:[#allocation4 + $0xf8] sm:$0xff]
    %v5715 = vld [vmem:[#allocation4 + $0x100] sm:$0xff]
    %v5716 = vld [vmem:[#allocation4 + $0x108] sm:$0xff]
    %v5717 = vld [vmem:[#allocation4 + $0x110] sm:$0xff]
    %v5718 = vld [vmem:[#allocation4 + $0x118] sm:$0xff]
    %v5719 = vld [vmem:[#allocation4 + $0x120] sm:$0xff]
    %v5720 = vld [vmem:[#allocation4 + $0x128] sm:$0xff]
    %v5721 = vld [vmem:[#allocation4 + $0x130] sm:$0xff]
    %v5722 = vld [vmem:[#allocation4 + $0x138] sm:$0xff]
    %v5723 = vld [vmem:[#allocation4 + $0x140] sm:$0xff]
    %v5724 = vld [vmem:[#allocation4 + $0x148] sm:$0xff]
    %v5725 = vld [vmem:[#allocation4 + $0x150] sm:$0xff]
    %v5726 = vld [vmem:[#allocation4 + $0x158] sm:$0xff]
    %v5727 = vld [vmem:[#allocation4 + $0x160] sm:$0xff]
    %v5728 = vld [vmem:[#allocation4 + $0x168] sm:$0xff]
    %v5729 = vld [vmem:[#allocation4 + $0x170] sm:$0xff]
    %v5730 = vld [vmem:[#allocation4 + $0x178] sm:$0xff]
    %v5731 = vld [vmem:[#allocation4 + $0x180] sm:$0xff]
    %v5732 = vld [vmem:[#allocation4 + $0x188] sm:$0xff]
    %v5733 = vld [vmem:[#allocation4 + $0x190] sm:$0xff]
    %v5734 = vld [vmem:[#allocation4 + $0x198] sm:$0xff]
    %v5735 = vld [vmem:[#allocation4 + $0x1a0] sm:$0xff]
    %v5736 = vld [vmem:[#allocation4 + $0x1a8] sm:$0xff]
    %v5737 = vld [vmem:[#allocation4 + $0x1b0] sm:$0xff]
    %v5738 = vld [vmem:[#allocation4 + $0x1b8] sm:$0xff]
    %v5739 = vld [vmem:[#allocation4 + $0x1c0] sm:$0xff]
    %v5740 = vld [vmem:[#allocation4 + $0x1c8] sm:$0xff]
    %v5741 = vld [vmem:[#allocation4 + $0x1d0] sm:$0xff]
    %v5742 = vld [vmem:[#allocation4 + $0x1d8] sm:$0xff]
    %v5743 = vld [vmem:[#allocation4 + $0x1e0] sm:$0xff]
    %v5744 = vld [vmem:[#allocation4 + $0x1e8] sm:$0xff]
    %v5745 = vld [vmem:[#allocation4 + $0x1f0] sm:$0xff]
    %v5746 = vld [vmem:[#allocation4 + $0x1f8] sm:$0xff]
    %v5747 = vld [vmem:[#allocation4 + $0x200] sm:$0xff]
    %v5748 = vld [vmem:[#allocation4 + $0x208] sm:$0xff]
    %v5749 = vld [vmem:[#allocation4 + $0x210] sm:$0xff]
    %v5750 = vld [vmem:[#allocation4 + $0x218] sm:$0xff]
    %v5751 = vld [vmem:[#allocation4 + $0x220] sm:$0xff]
    %v5752 = vld [vmem:[#allocation4 + $0x228] sm:$0xff]
    %v5753 = vld [vmem:[#allocation4 + $0x230] sm:$0xff]
    %v5754 = vld [vmem:[#allocation4 + $0x238] sm:$0xff]
    %v5755 = vld [vmem:[#allocation4 + $0x240] sm:$0xff]
    %v5756 = vld [vmem:[#allocation4 + $0x248] sm:$0xff]
    %v5757 = vld [vmem:[#allocation4 + $0x250] sm:$0xff]
    %v5758 = vld [vmem:[#allocation4 + $0x258] sm:$0xff]
    %v5759 = vld [vmem:[#allocation4 + $0x260] sm:$0xff]
    %v5760 = vld [vmem:[#allocation4 + $0x268] sm:$0xff]
    %v5761 = vld [vmem:[#allocation4 + $0x270] sm:$0xff]
    %v5762 = vld [vmem:[#allocation4 + $0x278] sm:$0xff]
    %v5763 = vld [vmem:[#allocation4 + $0x280] sm:$0xff]
    %v5764 = vld [vmem:[#allocation4 + $0x288] sm:$0xff]
    %v5765 = vld [vmem:[#allocation4 + $0x290] sm:$0xff]
    %v5766 = vld [vmem:[#allocation4 + $0x298] sm:$0xff]
    %v5767 = vld [vmem:[#allocation4 + $0x2a0] sm:$0xff]
    %v5768 = vld [vmem:[#allocation4 + $0x2a8] sm:$0xff]
    %v5769 = vld [vmem:[#allocation4 + $0x2b0] sm:$0xff]
    %v5770 = vld [vmem:[#allocation4 + $0x2b8] sm:$0xff]
    %v5771 = vld [vmem:[#allocation4 + $0x2c0] sm:$0xff]
    %v5772 = vld [vmem:[#allocation4 + $0x2c8] sm:$0xff]
    %v5773 = vld [vmem:[#allocation4 + $0x2d0] sm:$0xff]
    %v5774 = vld [vmem:[#allocation4 + $0x2d8] sm:$0xff]
    %v5775 = vld [vmem:[#allocation4 + $0x2e0] sm:$0xff]
    %v5776 = vld [vmem:[#allocation4 + $0x2e8] sm:$0xff]
    %v5777 = vld [vmem:[#allocation4 + $0x2f0] sm:$0xff]
    %v5778 = vld [vmem:[#allocation4 + $0x2f8] sm:$0xff]
    %v5779 = vld [vmem:[#allocation4 + $0x300] sm:$0xff]
    %v5780 = vld [vmem:[#allocation4 + $0x308] sm:$0xff]
    %v5781 = vld [vmem:[#allocation4 + $0x310] sm:$0xff]
    %v5782 = vld [vmem:[#allocation4 + $0x318] sm:$0xff]
    %v5783 = vld [vmem:[#allocation4 + $0x320] sm:$0xff]
    %v5784 = vld [vmem:[#allocation4 + $0x328] sm:$0xff]
    %v5785 = vld [vmem:[#allocation4 + $0x330] sm:$0xff]
    %v5786 = vld [vmem:[#allocation4 + $0x338] sm:$0xff]
    %v5787 = vld [vmem:[#allocation4 + $0x340] sm:$0xff]
    %v5788 = vld [vmem:[#allocation4 + $0x348] sm:$0xff]
    %v5789 = vld [vmem:[#allocation4 + $0x350] sm:$0xff]
    %v5790 = vld [vmem:[#allocation4 + $0x358] sm:$0xff]
    %v5791 = vld [vmem:[#allocation4 + $0x360] sm:$0xff]
    %v5792 = vld [vmem:[#allocation4 + $0x368] sm:$0xff]
    %v5793 = vld [vmem:[#allocation4 + $0x370] sm:$0xff]
    %v5794 = vld [vmem:[#allocation4 + $0x378] sm:$0xff]
    %v5795 = vld [vmem:[#allocation4 + $0x380] sm:$0xff]
    %v5796 = vld [vmem:[#allocation4 + $0x388] sm:$0xff]
    %v5797 = vld [vmem:[#allocation4 + $0x390] sm:$0xff]
    %v5798 = vld [vmem:[#allocation4 + $0x398] sm:$0xff]
    %v5799 = vld [vmem:[#allocation4 + $0x3a0] sm:$0xff]
    %v5800 = vld [vmem:[#allocation4 + $0x3a8] sm:$0xff]
    %v5801 = vld [vmem:[#allocation4 + $0x3b0] sm:$0xff]
    %v5802 = vld [vmem:[#allocation4 + $0x3b8] sm:$0xff]
    %v5803 = vld [vmem:[#allocation4 + $0x3c0] sm:$0xff]
    %v5804 = vld [vmem:[#allocation4 + $0x3c8] sm:$0xff]
    %v5805 = vld [vmem:[#allocation4 + $0x3d0] sm:$0xff]
    %v5806 = vld [vmem:[#allocation4 + $0x3d8] sm:$0xff]
    %v5807 = vld [vmem:[#allocation4 + $0x3e0] sm:$0xff]
    %v5808 = vld [vmem:[#allocation4 + $0x3e8] sm:$0xff]
    %v5809 = vld [vmem:[#allocation4 + $0x3f0] sm:$0xff]
    %v5810 = vld [vmem:[#allocation4 + $0x3f8] sm:$0xff]
    %v5811 = vld [vmem:[#allocation4 + $0x400] sm:$0xff]
    %v5812 = vld [vmem:[#allocation4 + $0x408] sm:$0xff]
    %v5813 = vld [vmem:[#allocation4 + $0x410] sm:$0xff]
    %v5814 = vld [vmem:[#allocation4 + $0x418] sm:$0xff]
    %v5815 = vld [vmem:[#allocation4 + $0x420] sm:$0xff]
    %v5816 = vld [vmem:[#allocation4 + $0x428] sm:$0xff]
    %v5817 = vld [vmem:[#allocation4 + $0x430] sm:$0xff]
    %v5818 = vld [vmem:[#allocation4 + $0x438] sm:$0xff]
    %v5819 = vld [vmem:[#allocation4 + $0x440] sm:$0xff]
    %v5820 = vld [vmem:[#allocation4 + $0x448] sm:$0xff]
    %v5821 = vld [vmem:[#allocation4 + $0x450] sm:$0xff]
    %v5822 = vld [vmem:[#allocation4 + $0x458] sm:$0xff]
    %v5823 = vld [vmem:[#allocation4 + $0x460] sm:$0xff]
    %v5824 = vld [vmem:[#allocation4 + $0x468] sm:$0xff]
    %v5825 = vld [vmem:[#allocation4 + $0x470] sm:$0xff]
    %v5826 = vld [vmem:[#allocation4 + $0x478] sm:$0xff]
    %v5827 = vld [vmem:[#allocation4 + $0x480] sm:$0xff]
    %v5828 = vld [vmem:[#allocation4 + $0x488] sm:$0xff]
    %v5829 = vld [vmem:[#allocation4 + $0x490] sm:$0xff]
    %v5830 = vld [vmem:[#allocation4 + $0x498] sm:$0xff]
    %v5831 = vld [vmem:[#allocation4 + $0x4a0] sm:$0xff]
    %v5832 = vld [vmem:[#allocation4 + $0x4a8] sm:$0xff]
    %v5833 = vld [vmem:[#allocation4 + $0x4b0] sm:$0xff]
    %v5834 = vld [vmem:[#allocation4 + $0x4b8] sm:$0xff]
    %v5835 = vld [vmem:[#allocation4 + $0x4c0] sm:$0xff]
    %v5836 = vld [vmem:[#allocation4 + $0x4c8] sm:$0xff]
    %v5837 = vld [vmem:[#allocation4 + $0x4d0] sm:$0xff]
    %v5838 = vld [vmem:[#allocation4 + $0x4d8] sm:$0xff]
    %v5839 = vld [vmem:[#allocation4 + $0x4e0] sm:$0xff]
    %v5840 = vld [vmem:[#allocation4 + $0x4e8] sm:$0xff]
    %v5841 = vld [vmem:[#allocation4 + $0x4f0] sm:$0xff]
    %v5842 = vld [vmem:[#allocation4 + $0x4f8] sm:$0xff]
    %v5843 = vld [vmem:[%s4] sm:$0x3]
    %v5845 = vlaneseq
    %v5846 = vshrl.u32 %v5845, 7
    %v5847 = vsub.s32 0, %v5846
    %v5848 = vrot.slane %v5843, %v5847
    %v5849 = vlaneseq
    %v5850 = vshrl.u32 %v5849, 7
    %v5851 = vsub.s32 1, %v5850
    %v5852 = vrot.slane %v5843, %v5851
    %v6015 = vunpack.c.l.b16 %v5683
    %v6016 = vunpack.c.h.b16 %v5683
    %v6017 = vunpack.c.l.b16 %v5684
    %v6018 = vunpack.c.h.b16 %v5684
    %v6019 = vunpack.c.l.b16 %v5685
    %v6020 = vunpack.c.h.b16 %v5685
    %v6021 = vunpack.c.l.b16 %v5686
    %v6022 = vunpack.c.h.b16 %v5686
    %v6023 = vunpack.c.l.b16 %v5687
    %v6024 = vunpack.c.h.b16 %v5687
    %v6025 = vunpack.c.l.b16 %v5688
    %v6026 = vunpack.c.h.b16 %v5688
    %v6027 = vunpack.c.l.b16 %v5689
    %v6028 = vunpack.c.h.b16 %v5689
    %v6029 = vunpack.c.l.b16 %v5690
    %v6030 = vunpack.c.h.b16 %v5690
    %v6031 = vunpack.c.l.b16 %v5691
    %v6032 = vunpack.c.h.b16 %v5691
    %v6033 = vunpack.c.l.b16 %v5692
    %v6034 = vunpack.c.h.b16 %v5692
    %v6035 = vunpack.c.l.b16 %v5693
    %v6036 = vunpack.c.h.b16 %v5693
    %v6037 = vunpack.c.l.b16 %v5694
    %v6038 = vunpack.c.h.b16 %v5694
    %v6039 = vunpack.c.l.b16 %v5695
    %v6040 = vunpack.c.h.b16 %v5695
    %v6041 = vunpack.c.l.b16 %v5696
    %v6042 = vunpack.c.h.b16 %v5696
    %v6043 = vunpack.c.l.b16 %v5697
    %v6044 = vunpack.c.h.b16 %v5697
    %v6045 = vunpack.c.l.b16 %v5698
    %v6046 = vunpack.c.h.b16 %v5698
    %v6047 = vunpack.c.l.b16 %v5699
    %v6048 = vunpack.c.h.b16 %v5699
    %v6049 = vunpack.c.l.b16 %v5700
    %v6050 = vunpack.c.h.b16 %v5700
    %v6051 = vunpack.c.l.b16 %v5701
    %v6052 = vunpack.c.h.b16 %v5701
    %v6053 = vunpack.c.l.b16 %v5702
    %v6054 = vunpack.c.h.b16 %v5702
    %v6055 = vunpack.c.l.b16 %v5703
    %v6056 = vunpack.c.h.b16 %v5703
    %v6057 = vunpack.c.l.b16 %v5704
    %v6058 = vunpack.c.h.b16 %v5704
    %v6059 = vunpack.c.l.b16 %v5705
    %v6060 = vunpack.c.h.b16 %v5705
    %v6061 = vunpack.c.l.b16 %v5706
    %v6062 = vunpack.c.h.b16 %v5706
    %v6063 = vunpack.c.l.b16 %v5707
    %v6064 = vunpack.c.h.b16 %v5707
    %v6065 = vunpack.c.l.b16 %v5708
    %v6066 = vunpack.c.h.b16 %v5708
    %v6067 = vunpack.c.l.b16 %v5709
    %v6068 = vunpack.c.h.b16 %v5709
    %v6069 = vunpack.c.l.b16 %v5710
    %v6070 = vunpack.c.h.b16 %v5710
    %v6071 = vunpack.c.l.b16 %v5711
    %v6072 = vunpack.c.h.b16 %v5711
    %v6073 = vunpack.c.l.b16 %v5712
    %v6074 = vunpack.c.h.b16 %v5712
    %v6075 = vunpack.c.l.b16 %v5713
    %v6076 = vunpack.c.h.b16 %v5713
    %v6077 = vunpack.c.l.b16 %v5714
    %v6078 = vunpack.c.h.b16 %v5714
    %v6079 = vunpack.c.l.b16 %v5715
    %v6080 = vunpack.c.h.b16 %v5715
    %v6081 = vunpack.c.l.b16 %v5716
    %v6082 = vunpack.c.h.b16 %v5716
    %v6083 = vunpack.c.l.b16 %v5717
    %v6084 = vunpack.c.h.b16 %v5717
    %v6085 = vunpack.c.l.b16 %v5718
    %v6086 = vunpack.c.h.b16 %v5718
    %v6087 = vunpack.c.l.b16 %v5719
    %v6088 = vunpack.c.h.b16 %v5719
    %v6089 = vunpack.c.l.b16 %v5720
    %v6090 = vunpack.c.h.b16 %v5720
    %v6091 = vunpack.c.l.b16 %v5721
    %v6092 = vunpack.c.h.b16 %v5721
    %v6093 = vunpack.c.l.b16 %v5722
    %v6094 = vunpack.c.h.b16 %v5722
    %v6095 = vunpack.c.l.b16 %v5723
    %v6096 = vunpack.c.h.b16 %v5723
    %v6097 = vunpack.c.l.b16 %v5724
    %v6098 = vunpack.c.h.b16 %v5724
    %v6099 = vunpack.c.l.b16 %v5725
    %v6100 = vunpack.c.h.b16 %v5725
    %v6101 = vunpack.c.l.b16 %v5726
    %v6102 = vunpack.c.h.b16 %v5726
    %v6103 = vunpack.c.l.b16 %v5727
    %v6104 = vunpack.c.h.b16 %v5727
    %v6105 = vunpack.c.l.b16 %v5728
    %v6106 = vunpack.c.h.b16 %v5728
    %v6107 = vunpack.c.l.b16 %v5729
    %v6108 = vunpack.c.h.b16 %v5729
    %v6109 = vunpack.c.l.b16 %v5730
    %v6110 = vunpack.c.h.b16 %v5730
    %v6111 = vunpack.c.l.b16 %v5731
    %v6112 = vunpack.c.h.b16 %v5731
    %v6113 = vunpack.c.l.b16 %v5732
    %v6114 = vunpack.c.h.b16 %v5732
    %v6115 = vunpack.c.l.b16 %v5733
    %v6116 = vunpack.c.h.b16 %v5733
    %v6117 = vunpack.c.l.b16 %v5734
    %v6118 = vunpack.c.h.b16 %v5734
    %v6119 = vunpack.c.l.b16 %v5735
    %v6120 = vunpack.c.h.b16 %v5735
    %v6121 = vunpack.c.l.b16 %v5736
    %v6122 = vunpack.c.h.b16 %v5736
    %v6123 = vunpack.c.l.b16 %v5737
    %v6124 = vunpack.c.h.b16 %v5737
    %v6125 = vunpack.c.l.b16 %v5738
    %v6126 = vunpack.c.h.b16 %v5738
    %v6127 = vunpack.c.l.b16 %v5739
    %v6128 = vunpack.c.h.b16 %v5739
    %v6129 = vunpack.c.l.b16 %v5740
    %v6130 = vunpack.c.h.b16 %v5740
    %v6131 = vunpack.c.l.b16 %v5741
    %v6132 = vunpack.c.h.b16 %v5741
    %v6133 = vunpack.c.l.b16 %v5742
    %v6134 = vunpack.c.h.b16 %v5742
    %v6135 = vunpack.c.l.b16 %v5743
    %v6136 = vunpack.c.h.b16 %v5743
    %v6137 = vunpack.c.l.b16 %v5744
    %v6138 = vunpack.c.h.b16 %v5744
    %v6139 = vunpack.c.l.b16 %v5745
    %v6140 = vunpack.c.h.b16 %v5745
    %v6141 = vunpack.c.l.b16 %v5746
    %v6142 = vunpack.c.h.b16 %v5746
    %v6143 = vunpack.c.l.b16 %v5747
    %v6144 = vunpack.c.h.b16 %v5747
    %v6145 = vunpack.c.l.b16 %v5748
    %v6146 = vunpack.c.h.b16 %v5748
    %v6147 = vunpack.c.l.b16 %v5749
    %v6148 = vunpack.c.h.b16 %v5749
    %v6149 = vunpack.c.l.b16 %v5750
    %v6150 = vunpack.c.h.b16 %v5750
    %v6151 = vunpack.c.l.b16 %v5751
    %v6152 = vunpack.c.h.b16 %v5751
    %v6153 = vunpack.c.l.b16 %v5752
    %v6154 = vunpack.c.h.b16 %v5752
    %v6155 = vunpack.c.l.b16 %v5753
    %v6156 = vunpack.c.h.b16 %v5753
    %v6157 = vunpack.c.l.b16 %v5754
    %v6158 = vunpack.c.h.b16 %v5754
    %v6159 = vunpack.c.l.b16 %v5755
    %v6160 = vunpack.c.h.b16 %v5755
    %v6161 = vunpack.c.l.b16 %v5756
    %v6162 = vunpack.c.h.b16 %v5756
    %v6163 = vunpack.c.l.b16 %v5757
    %v6164 = vunpack.c.h.b16 %v5757
    %v6165 = vunpack.c.l.b16 %v5758
    %v6166 = vunpack.c.h.b16 %v5758
    %v6167 = vunpack.c.l.b16 %v5759
    %v6168 = vunpack.c.h.b16 %v5759
    %v6169 = vunpack.c.l.b16 %v5760
    %v6170 = vunpack.c.h.b16 %v5760
    %v6171 = vunpack.c.l.b16 %v5761
    %v6172 = vunpack.c.h.b16 %v5761
    %v6173 = vunpack.c.l.b16 %v5762
    %v6174 = vunpack.c.h.b16 %v5762
    %v6175 = vunpack.c.l.b16 %v5763
    %v6176 = vunpack.c.h.b16 %v5763
    %v6177 = vunpack.c.l.b16 %v5764
    %v6178 = vunpack.c.h.b16 %v5764
    %v6179 = vunpack.c.l.b16 %v5765
    %v6180 = vunpack.c.h.b16 %v5765
    %v6181 = vunpack.c.l.b16 %v5766
    %v6182 = vunpack.c.h.b16 %v5766
    %v6183 = vunpack.c.l.b16 %v5767
    %v6184 = vunpack.c.h.b16 %v5767
    %v6185 = vunpack.c.l.b16 %v5768
    %v6186 = vunpack.c.h.b16 %v5768
    %v6187 = vunpack.c.l.b16 %v5769
    %v6188 = vunpack.c.h.b16 %v5769
    %v6189 = vunpack.c.l.b16 %v5770
    %v6190 = vunpack.c.h.b16 %v5770
    %v6191 = vunpack.c.l.b16 %v5771
    %v6192 = vunpack.c.h.b16 %v5771
    %v6193 = vunpack.c.l.b16 %v5772
    %v6194 = vunpack.c.h.b16 %v5772
    %v6195 = vunpack.c.l.b16 %v5773
    %v6196 = vunpack.c.h.b16 %v5773
    %v6197 = vunpack.c.l.b16 %v5774
    %v6198 = vunpack.c.h.b16 %v5774
    %v6199 = vunpack.c.l.b16 %v5775
    %v6200 = vunpack.c.h.b16 %v5775
    %v6201 = vunpack.c.l.b16 %v5776
    %v6202 = vunpack.c.h.b16 %v5776
    %v6203 = vunpack.c.l.b16 %v5777
    %v6204 = vunpack.c.h.b16 %v5777
    %v6205 = vunpack.c.l.b16 %v5778
    %v6206 = vunpack.c.h.b16 %v5778
    %v6207 = vunpack.c.l.b16 %v5779
    %v6208 = vunpack.c.h.b16 %v5779
    %v6209 = vunpack.c.l.b16 %v5780
    %v6210 = vunpack.c.h.b16 %v5780
    %v6211 = vunpack.c.l.b16 %v5781
    %v6212 = vunpack.c.h.b16 %v5781
    %v6213 = vunpack.c.l.b16 %v5782
    %v6214 = vunpack.c.h.b16 %v5782
    %v6215 = vunpack.c.l.b16 %v5783
    %v6216 = vunpack.c.h.b16 %v5783
    %v6217 = vunpack.c.l.b16 %v5784
    %v6218 = vunpack.c.h.b16 %v5784
    %v6219 = vunpack.c.l.b16 %v5785
    %v6220 = vunpack.c.h.b16 %v5785
    %v6221 = vunpack.c.l.b16 %v5786
    %v6222 = vunpack.c.h.b16 %v5786
    %v6223 = vunpack.c.l.b16 %v5787
    %v6224 = vunpack.c.h.b16 %v5787
    %v6225 = vunpack.c.l.b16 %v5788
    %v6226 = vunpack.c.h.b16 %v5788
    %v6227 = vunpack.c.l.b16 %v5789
    %v6228 = vunpack.c.h.b16 %v5789
    %v6229 = vunpack.c.l.b16 %v5790
    %v6230 = vunpack.c.h.b16 %v5790
    %v6231 = vunpack.c.l.b16 %v5791
    %v6232 = vunpack.c.h.b16 %v5791
    %v6233 = vunpack.c.l.b16 %v5792
    %v6234 = vunpack.c.h.b16 %v5792
    %v6235 = vunpack.c.l.b16 %v5793
    %v6236 = vunpack.c.h.b16 %v5793
    %v6237 = vunpack.c.l.b16 %v5794
    %v6238 = vunpack.c.h.b16 %v5794
    %v6239 = vunpack.c.l.b16 %v5795
    %v6240 = vunpack.c.h.b16 %v5795
    %v6241 = vunpack.c.l.b16 %v5796
    %v6242 = vunpack.c.h.b16 %v5796
    %v6243 = vunpack.c.l.b16 %v5797
    %v6244 = vunpack.c.h.b16 %v5797
    %v6245 = vunpack.c.l.b16 %v5798
    %v6246 = vunpack.c.h.b16 %v5798
    %v6247 = vunpack.c.l.b16 %v5799
    %v6248 = vunpack.c.h.b16 %v5799
    %v6249 = vunpack.c.l.b16 %v5800
    %v6250 = vunpack.c.h.b16 %v5800
    %v6251 = vunpack.c.l.b16 %v5801
    %v6252 = vunpack.c.h.b16 %v5801
    %v6253 = vunpack.c.l.b16 %v5802
    %v6254 = vunpack.c.h.b16 %v5802
    %v6255 = vunpack.c.l.b16 %v5803
    %v6256 = vunpack.c.h.b16 %v5803
    %v6257 = vunpack.c.l.b16 %v5804
    %v6258 = vunpack.c.h.b16 %v5804
    %v6259 = vunpack.c.l.b16 %v5805
    %v6260 = vunpack.c.h.b16 %v5805
    %v6261 = vunpack.c.l.b16 %v5806
    %v6262 = vunpack.c.h.b16 %v5806
    %v6263 = vunpack.c.l.b16 %v5807
    %v6264 = vunpack.c.h.b16 %v5807
    %v6265 = vunpack.c.l.b16 %v5808
    %v6266 = vunpack.c.h.b16 %v5808
    %v6267 = vunpack.c.l.b16 %v5809
    %v6268 = vunpack.c.h.b16 %v5809
    %v6269 = vunpack.c.l.b16 %v5810
    %v6270 = vunpack.c.h.b16 %v5810
    %v6271 = vunpack.c.l.b16 %v5811
    %v6272 = vunpack.c.h.b16 %v5811
    %v6273 = vunpack.c.l.b16 %v5812
    %v6274 = vunpack.c.h.b16 %v5812
    %v6275 = vunpack.c.l.b16 %v5813
    %v6276 = vunpack.c.h.b16 %v5813
    %v6277 = vunpack.c.l.b16 %v5814
    %v6278 = vunpack.c.h.b16 %v5814
    %v6279 = vunpack.c.l.b16 %v5815
    %v6280 = vunpack.c.h.b16 %v5815
    %v6281 = vunpack.c.l.b16 %v5816
    %v6282 = vunpack.c.h.b16 %v5816
    %v6283 = vunpack.c.l.b16 %v5817
    %v6284 = vunpack.c.h.b16 %v5817
    %v6285 = vunpack.c.l.b16 %v5818
    %v6286 = vunpack.c.h.b16 %v5818
    %v6287 = vunpack.c.l.b16 %v5819
    %v6288 = vunpack.c.h.b16 %v5819
    %v6289 = vunpack.c.l.b16 %v5820
    %v6290 = vunpack.c.h.b16 %v5820
    %v6291 = vunpack.c.l.b16 %v5821
    %v6292 = vunpack.c.h.b16 %v5821
    %v6293 = vunpack.c.l.b16 %v5822
    %v6294 = vunpack.c.h.b16 %v5822
    %v6295 = vunpack.c.l.b16 %v5823
    %v6296 = vunpack.c.h.b16 %v5823
    %v6297 = vunpack.c.l.b16 %v5824
    %v6298 = vunpack.c.h.b16 %v5824
    %v6299 = vunpack.c.l.b16 %v5825
    %v6300 = vunpack.c.h.b16 %v5825
    %v6301 = vunpack.c.l.b16 %v5826
    %v6302 = vunpack.c.h.b16 %v5826
    %v6303 = vunpack.c.l.b16 %v5827
    %v6304 = vunpack.c.h.b16 %v5827
    %v6305 = vunpack.c.l.b16 %v5828
    %v6306 = vunpack.c.h.b16 %v5828
    %v6307 = vunpack.c.l.b16 %v5829
    %v6308 = vunpack.c.h.b16 %v5829
    %v6309 = vunpack.c.l.b16 %v5830
    %v6310 = vunpack.c.h.b16 %v5830
    %v6311 = vunpack.c.l.b16 %v5831
    %v6312 = vunpack.c.h.b16 %v5831
    %v6313 = vunpack.c.l.b16 %v5832
    %v6314 = vunpack.c.h.b16 %v5832
    %v6315 = vunpack.c.l.b16 %v5833
    %v6316 = vunpack.c.h.b16 %v5833
    %v6317 = vunpack.c.l.b16 %v5834
    %v6318 = vunpack.c.h.b16 %v5834
    %v6319 = vunpack.c.l.b16 %v5835
    %v6320 = vunpack.c.h.b16 %v5835
    %v6321 = vunpack.c.l.b16 %v5836
    %v6322 = vunpack.c.h.b16 %v5836
    %v6323 = vunpack.c.l.b16 %v5837
    %v6324 = vunpack.c.h.b16 %v5837
    %v6325 = vunpack.c.l.b16 %v5838
    %v6326 = vunpack.c.h.b16 %v5838
    %v6327 = vunpack.c.l.b16 %v5839
    %v6328 = vunpack.c.h.b16 %v5839
    %v6329 = vunpack.c.l.b16 %v5840
    %v6330 = vunpack.c.h.b16 %v5840
    %v6331 = vunpack.c.l.b16 %v5841
    %v6332 = vunpack.c.h.b16 %v5841
    %v6333 = vunpack.c.l.b16 %v5842
    %v6334 = vunpack.c.h.b16 %v5842
    %v6335 = vpack.c.b16 %v6017, %v6015
    %v6336 = vpack.c.b16 %v6018, %v6016
    %v6337 = vpack.c.b16 %v6021, %v6019
    %v6338 = vpack.c.b16 %v6022, %v6020
    %v6339 = vpack.c.b16 %v6025, %v6023
    %v6340 = vpack.c.b16 %v6026, %v6024
    %v6341 = vpack.c.b16 %v6029, %v6027
    %v6342 = vpack.c.b16 %v6030, %v6028
    %v6343 = vpack.c.b16 %v6033, %v6031
    %v6344 = vpack.c.b16 %v6034, %v6032
    %v6345 = vpack.c.b16 %v6037, %v6035
    %v6346 = vpack.c.b16 %v6038, %v6036
    %v6347 = vpack.c.b16 %v6041, %v6039
    %v6348 = vpack.c.b16 %v6042, %v6040
    %v6349 = vpack.c.b16 %v6045, %v6043
    %v6350 = vpack.c.b16 %v6046, %v6044
    %v6351 = vpack.c.b16 %v6049, %v6047
    %v6352 = vpack.c.b16 %v6050, %v6048
    %v6353 = vpack.c.b16 %v6053, %v6051
    %v6354 = vpack.c.b16 %v6054, %v6052
    %v6355 = vpack.c.b16 %v6057, %v6055
    %v6356 = vpack.c.b16 %v6058, %v6056
    %v6357 = vpack.c.b16 %v6061, %v6059
    %v6358 = vpack.c.b16 %v6062, %v6060
    %v6359 = vpack.c.b16 %v6065, %v6063
    %v6360 = vpack.c.b16 %v6066, %v6064
    %v6361 = vpack.c.b16 %v6069, %v6067
    %v6362 = vpack.c.b16 %v6070, %v6068
    %v6363 = vpack.c.b16 %v6073, %v6071
    %v6364 = vpack.c.b16 %v6074, %v6072
    %v6365 = vpack.c.b16 %v6077, %v6075
    %v6366 = vpack.c.b16 %v6078, %v6076
    %v6367 = vpack.c.b16 %v6081, %v6079
    %v6368 = vpack.c.b16 %v6082, %v6080
    %v6369 = vpack.c.b16 %v6085, %v6083
    %v6370 = vpack.c.b16 %v6086, %v6084
    %v6371 = vpack.c.b16 %v6089, %v6087
    %v6372 = vpack.c.b16 %v6090, %v6088
    %v6373 = vpack.c.b16 %v6093, %v6091
    %v6374 = vpack.c.b16 %v6094, %v6092
    %v6375 = vpack.c.b16 %v6097, %v6095
    %v6376 = vpack.c.b16 %v6098, %v6096
    %v6377 = vpack.c.b16 %v6101, %v6099
    %v6378 = vpack.c.b16 %v6102, %v6100
    %v6379 = vpack.c.b16 %v6105, %v6103
    %v6380 = vpack.c.b16 %v6106, %v6104
    %v6381 = vpack.c.b16 %v6109, %v6107
    %v6382 = vpack.c.b16 %v6110, %v6108
    %v6383 = vpack.c.b16 %v6113, %v6111
    %v6384 = vpack.c.b16 %v6114, %v6112
    %v6385 = vpack.c.b16 %v6117, %v6115
    %v6386 = vpack.c.b16 %v6118, %v6116
    %v6387 = vpack.c.b16 %v6121, %v6119
    %v6388 = vpack.c.b16 %v6122, %v6120
    %v6389 = vpack.c.b16 %v6125, %v6123
    %v6390 = vpack.c.b16 %v6126, %v6124
    %v6391 = vpack.c.b16 %v6129, %v6127
    %v6392 = vpack.c.b16 %v6130, %v6128
    %v6393 = vpack.c.b16 %v6133, %v6131
    %v6394 = vpack.c.b16 %v6134, %v6132
    %v6395 = vpack.c.b16 %v6137, %v6135
    %v6396 = vpack.c.b16 %v6138, %v6136
    %v6397 = vpack.c.b16 %v6141, %v6139
    %v6398 = vpack.c.b16 %v6142, %v6140
    %v6399 = vpack.c.b16 %v6145, %v6143
    %v6400 = vpack.c.b16 %v6146, %v6144
    %v6401 = vpack.c.b16 %v6149, %v6147
    %v6402 = vpack.c.b16 %v6150, %v6148
    %v6403 = vpack.c.b16 %v6153, %v6151
    %v6404 = vpack.c.b16 %v6154, %v6152
    %v6405 = vpack.c.b16 %v6157, %v6155
    %v6406 = vpack.c.b16 %v6158, %v6156
    %v6407 = vpack.c.b16 %v6161, %v6159
    %v6408 = vpack.c.b16 %v6162, %v6160
    %v6409 = vpack.c.b16 %v6165, %v6163
    %v6410 = vpack.c.b16 %v6166, %v6164
    %v6411 = vpack.c.b16 %v6169, %v6167
    %v6412 = vpack.c.b16 %v6170, %v6168
    %v6413 = vpack.c.b16 %v6173, %v6171
    %v6414 = vpack.c.b16 %v6174, %v6172
    %v6415 = vpack.c.b16 %v6177, %v6175
    %v6416 = vpack.c.b16 %v6178, %v6176
    %v6417 = vpack.c.b16 %v6181, %v6179
    %v6418 = vpack.c.b16 %v6182, %v6180
    %v6419 = vpack.c.b16 %v6185, %v6183
    %v6420 = vpack.c.b16 %v6186, %v6184
    %v6421 = vpack.c.b16 %v6189, %v6187
    %v6422 = vpack.c.b16 %v6190, %v6188
    %v6423 = vpack.c.b16 %v6193, %v6191
    %v6424 = vpack.c.b16 %v6194, %v6192
    %v6425 = vpack.c.b16 %v6197, %v6195
    %v6426 = vpack.c.b16 %v6198, %v6196
    %v6427 = vpack.c.b16 %v6201, %v6199
    %v6428 = vpack.c.b16 %v6202, %v6200
    %v6429 = vpack.c.b16 %v6205, %v6203
    %v6430 = vpack.c.b16 %v6206, %v6204
    %v6431 = vpack.c.b16 %v6209, %v6207
    %v6432 = vpack.c.b16 %v6210, %v6208
    %v6433 = vpack.c.b16 %v6213, %v6211
    %v6434 = vpack.c.b16 %v6214, %v6212
    %v6435 = vpack.c.b16 %v6217, %v6215
    %v6436 = vpack.c.b16 %v6218, %v6216
    %v6437 = vpack.c.b16 %v6221, %v6219
    %v6438 = vpack.c.b16 %v6222, %v6220
    %v6439 = vpack.c.b16 %v6225, %v6223
    %v6440 = vpack.c.b16 %v6226, %v6224
    %v6441 = vpack.c.b16 %v6229, %v6227
    %v6442 = vpack.c.b16 %v6230, %v6228
    %v6443 = vpack.c.b16 %v6233, %v6231
    %v6444 = vpack.c.b16 %v6234, %v6232
    %v6445 = vpack.c.b16 %v6237, %v6235
    %v6446 = vpack.c.b16 %v6238, %v6236
    %v6447 = vpack.c.b16 %v6241, %v6239
    %v6448 = vpack.c.b16 %v6242, %v6240
    %v6449 = vpack.c.b16 %v6245, %v6243
    %v6450 = vpack.c.b16 %v6246, %v6244
    %v6451 = vpack.c.b16 %v6249, %v6247
    %v6452 = vpack.c.b16 %v6250, %v6248
    %v6453 = vpack.c.b16 %v6253, %v6251
    %v6454 = vpack.c.b16 %v6254, %v6252
    %v6455 = vpack.c.b16 %v6257, %v6255
    %v6456 = vpack.c.b16 %v6258, %v6256
    %v6457 = vpack.c.b16 %v6261, %v6259
    %v6458 = vpack.c.b16 %v6262, %v6260
    %v6459 = vpack.c.b16 %v6265, %v6263
    %v6460 = vpack.c.b16 %v6266, %v6264
    %v6461 = vpack.c.b16 %v6269, %v6267
    %v6462 = vpack.c.b16 %v6270, %v6268
    %v6463 = vpack.c.b16 %v6273, %v6271
    %v6464 = vpack.c.b16 %v6274, %v6272
    %v6465 = vpack.c.b16 %v6277, %v6275
    %v6466 = vpack.c.b16 %v6278, %v6276
    %v6467 = vpack.c.b16 %v6281, %v6279
    %v6468 = vpack.c.b16 %v6282, %v6280
    %v6469 = vpack.c.b16 %v6285, %v6283
    %v6470 = vpack.c.b16 %v6286, %v6284
    %v6471 = vpack.c.b16 %v6289, %v6287
    %v6472 = vpack.c.b16 %v6290, %v6288
    %v6473 = vpack.c.b16 %v6293, %v6291
    %v6474 = vpack.c.b16 %v6294, %v6292
    %v6475 = vpack.c.b16 %v6297, %v6295
    %v6476 = vpack.c.b16 %v6298, %v6296
    %v6477 = vpack.c.b16 %v6301, %v6299
    %v6478 = vpack.c.b16 %v6302, %v6300
    %v6479 = vpack.c.b16 %v6305, %v6303
    %v6480 = vpack.c.b16 %v6306, %v6304
    %v6481 = vpack.c.b16 %v6309, %v6307
    %v6482 = vpack.c.b16 %v6310, %v6308
    %v6483 = vpack.c.b16 %v6313, %v6311
    %v6484 = vpack.c.b16 %v6314, %v6312
    %v6485 = vpack.c.b16 %v6317, %v6315
    %v6486 = vpack.c.b16 %v6318, %v6316
    %v6487 = vpack.c.b16 %v6321, %v6319
    %v6488 = vpack.c.b16 %v6322, %v6320
    %v6489 = vpack.c.b16 %v6325, %v6323
    %v6490 = vpack.c.b16 %v6326, %v6324
    %v6491 = vpack.c.b16 %v6329, %v6327
    %v6492 = vpack.c.b16 %v6330, %v6328
    %v6493 = vpack.c.b16 %v6333, %v6331
    %v6494 = vpack.c.b16 %v6334, %v6332
    %6655 = vmatprep.subr.bf16.mxu0 %v6336
    %6656 = vmatpush1.bf16.msra.mxu0 %v6335
    %6657 = vmatprep.subr.bf16.mxu0 %v6338
    %6658 = vmatpush1.bf16.msra.mxu0 %v6337
    %6659 = vmatprep.subr.bf16.mxu0 %v6340
    %6660 = vmatpush1.bf16.msra.mxu0 %v6339
    %6661 = vmatprep.subr.bf16.mxu0 %v6342
    %6662 = vmatpush1.bf16.msra.mxu0 %v6341
    %6663 = vmatprep.subr.bf16.mxu0 %v6344
    %6664 = vmatpush1.bf16.msra.mxu0 %v6343
    %6665 = vmatprep.subr.bf16.mxu0 %v6346
    %6666 = vmatpush1.bf16.msra.mxu0 %v6345
    %6667 = vmatprep.subr.bf16.mxu0 %v6348
    %6668 = vmatpush1.bf16.msra.mxu0 %v6347
    %6669 = vmatprep.subr.bf16.mxu0 %v6350
    %6670 = vmatpush1.bf16.msra.mxu0 %v6349
    %6671 = vmatprep.subr.bf16.mxu0 %v6352
    %6672 = vmatpush1.bf16.msra.mxu0 %v6351
    %6673 = vmatprep.subr.bf16.mxu0 %v6354
    %6674 = vmatpush1.bf16.msra.mxu0 %v6353
    %6675 = vmatprep.subr.bf16.mxu0 %v6356
    %6676 = vmatpush1.bf16.msra.mxu0 %v6355
    %6677 = vmatprep.subr.bf16.mxu0 %v6358
    %6678 = vmatpush1.bf16.msra.mxu0 %v6357
    %6679 = vmatprep.subr.bf16.mxu0 %v6360
    %6680 = vmatpush1.bf16.msra.mxu0 %v6359
    %6681 = vmatprep.subr.bf16.mxu0 %v6362
    %6682 = vmatpush1.bf16.msra.mxu0 %v6361
    %6683 = vmatprep.subr.bf16.mxu0 %v6364
    %6684 = vmatpush1.bf16.msra.mxu0 %v6363
    %6685 = vmatprep.subr.bf16.mxu0 %v6366
    %6686 = vmatpush1.bf16.msra.mxu0 %v6365
    %6687 = vmatprep.mubr.bf16.mxu0 %v4580
    %6688 = vmatmul.mubr.bf16.gmra.mrb[0].mxu0 %v4579
    %v6689 = vpop.f32.mrb[0].mxu0
    %v6690 = vadd.f32 %v5848, %v6689
    %v6691 = vpop.f32.mrb[0].mxu0
    %v6692 = vadd.f32 %v5852, %v6691
    %v6693 = vpop.f32.mrb[0].mxu0
    %v6694 = vadd.f32 %v5848, %v6693
    %v6695 = vpop.f32.mrb[0].mxu0
    %v6696 = vadd.f32 %v5852, %v6695
    %6697 = vmatprep.mubr.bf16.mxu0 %v4582
    %6698 = vmatmul.mubr.bf16.gmra.mrb[0].mxu0 %v4581
    %v6699 = vpop.f32.mrb[0].mxu0
    %v6700 = vadd.f32 %v5848, %v6699
    %v6701 = vpop.f32.mrb[0].mxu0
    %v6702 = vadd.f32 %v5852, %v6701
    %v6703 = vpop.f32.mrb[0].mxu0
    %v6704 = vadd.f32 %v5848, %v6703
    %v6705 = vpop.f32.mrb[0].mxu0
    %v6706 = vadd.f32 %v5852, %v6705
    %6707 = vmatprep.mubr.bf16.mxu0 %v4584
    %6708 = vmatmul.mubr.bf16.gmra.mrb[0].mxu0 %v4583
    %v6709 = vpop.f32.mrb[0].mxu0
    %v6710 = vadd.f32 %v5848, %v6709
    %v6711 = vpop.f32.mrb[0].mxu0
    %v6712 = vadd.f32 %v5852, %v6711
    %v6713 = vpop.f32.mrb[0].mxu0
    %v6714 = vadd.f32 %v5848, %v6713
    %v6715 = vpop.f32.mrb[0].mxu0
    %v6716 = vadd.f32 %v5852, %v6715
    %6717 = vmatprep.mubr.bf16.mxu0 %v4586
    %6718 = vmatmul.mubr.bf16.gmra.mrb[0].mxu0 %v4585
    %v6719 = vpop.f32.mrb[0].mxu0
    %v6720 = vadd.f32 %v5848, %v6719
    %v6721 = vpop.f32.mrb[0].mxu0
    %v6722 = vadd.f32 %v5852, %v6721
    %v6723 = vpop.f32.mrb[0].mxu0
    %v6724 = vadd.f32 %v5848, %v6723
    %v6725 = vpop.f32.mrb[0].mxu0
    %v6726 = vadd.f32 %v5852, %v6725
    %6727 = vdwg.mxu0
    %6728 = vmatprep.subr.bf16.mxu0 %v6368
    %6729 = vmatpush1.bf16.msra.mxu0 %v6367
    %6730 = vmatprep.subr.bf16.mxu0 %v6370
    %6731 = vmatpush1.bf16.msra.mxu0 %v6369
    %6732 = vmatprep.subr.bf16.mxu0 %v6372
    %6733 = vmatpush1.bf16.msra.mxu0 %v6371
    %6734 = vmatprep.subr.bf16.mxu0 %v6374
    %6735 = vmatpush1.bf16.msra.mxu0 %v6373
    %6736 = vmatprep.subr.bf16.mxu0 %v6376
    %6737 = vmatpush1.bf16.msra.mxu0 %v6375
    %6738 = vmatprep.subr.bf16.mxu0 %v6378
    %6739 = vmatpush1.bf16.msra.mxu0 %v6377
    %6740 = vmatprep.subr.bf16.mxu0 %v6380
    %6741 = vmatpush1.bf16.msra.mxu0 %v6379
    %6742 = vmatprep.subr.bf16.mxu0 %v6382
    %6743 = vmatpush1.bf16.msra.mxu0 %v6381
    %6744 = vmatprep.subr.bf16.mxu0 %v6384
    %6745 = vmatpush1.bf16.msra.mxu0 %v6383
    %6746 = vmatprep.subr.bf16.mxu0 %v6386
    %6747 = vmatpush1.bf16.msra.mxu0 %v6385
    %6748 = vmatprep.subr.bf16.mxu0 %v6388
    %6749 = vmatpush1.bf16.msra.mxu0 %v6387
    %6750 = vmatprep.subr.bf16.mxu0 %v6390
    %6751 = vmatpush1.bf16.msra.mxu0 %v6389
    %6752 = vmatprep.subr.bf16.mxu0 %v6392
    %6753 = vmatpush1.bf16.msra.mxu0 %v6391
    %6754 = vmatprep.subr.bf16.mxu0 %v6394
    %6755 = vmatpush1.bf16.msra.mxu0 %v6393
    %6756 = vmatprep.subr.bf16.mxu0 %v6396
    %6757 = vmatpush1.bf16.msra.mxu0 %v6395
    %6758 = vmatprep.subr.bf16.mxu0 %v6398
    %6759 = vmatpush1.bf16.msra.mxu0 %v6397
    %6760 = vmatprep.mubr.bf16.mxu0 %v4852
    %6761 = vmatmul.mubr.bf16.gmra.mrb[0].mxu0 %v4851
    %v6762 = vpop.f32.mrb[0].mxu0
    %v6763 = vadd.f32 %v6690, %v6762
    %v6764 = vpop.f32.mrb[0].mxu0
    %v6765 = vadd.f32 %v6692, %v6764
    %v6766 = vpop.f32.mrb[0].mxu0
    %v6767 = vadd.f32 %v6694, %v6766
    %v6768 = vpop.f32.mrb[0].mxu0
    %v6769 = vadd.f32 %v6696, %v6768
    %6770 = vmatprep.mubr.bf16.mxu0 %v4854
    %6771 = vmatmul.mubr.bf16.gmra.mrb[0].mxu0 %v4853
    %v6772 = vpop.f32.mrb[0].mxu0
    %v6773 = vadd.f32 %v6700, %v6772
    %v6774 = vpop.f32.mrb[0].mxu0
    %v6775 = vadd.f32 %v6702, %v6774
    %v6776 = vpop.f32.mrb[0].mxu0
    %v6777 = vadd.f32 %v6704, %v6776
    %v6778 = vpop.f32.mrb[0].mxu0
    %v6779 = vadd.f32 %v6706, %v6778
    %6780 = vmatprep.mubr.bf16.mxu0 %v4856
    %6781 = vmatmul.mubr.bf16.gmra.mrb[0].mxu0 %v4855
    %v6782 = vpop.f32.mrb[0].mxu0
    %v6783 = vadd.f32 %v6710, %v6782
    %v6784 = vpop.f32.mrb[0].mxu0
    %v6785 = vadd.f32 %v6712, %v6784
    %v6786 = vpop.f32.mrb[0].mxu0
    %v6787 = vadd.f32 %v6714, %v6786
    %v6788 = vpop.f32.mrb[0].mxu0
    %v6789 = vadd.f32 %v6716, %v6788
    %6790 = vmatprep.mubr.bf16.mxu0 %v4858
    %6791 = vmatmul.mubr.bf16.gmra.mrb[0].mxu0 %v4857
    %v6792 = vpop.f32.mrb[0].mxu0
    %v6793 = vadd.f32 %v6720, %v6792
    %v6794 = vpop.f32.mrb[0].mxu0
    %v6795 = vadd.f32 %v6722, %v6794
    %v6796 = vpop.f32.mrb[0].mxu0
    %v6797 = vadd.f32 %v6724, %v6796
    %v6798 = vpop.f32.mrb[0].mxu0
    %v6799 = vadd.f32 %v6726, %v6798
    %6800 = vdwg.mxu0
    %6801 = vmatprep.subr.bf16.mxu0 %v6400
    %6802 = vmatpush1.bf16.msra.mxu0 %v6399
    %6803 = vmatprep.subr.bf16.mxu0 %v6402
    %6804 = vmatpush1.bf16.msra.mxu0 %v6401
    %6805 = vmatprep.subr.bf16.mxu0 %v6404
    %6806 = vmatpush1.bf16.msra.mxu0 %v6403
    %6807 = vmatprep.subr.bf16.mxu0 %v6406
    %6808 = vmatpush1.bf16.msra.mxu0 %v6405
    %6809 = vmatprep.subr.bf16.mxu0 %v6408
    %6810 = vmatpush1.bf16.msra.mxu0 %v6407
    %6811 = vmatprep.subr.bf16.mxu0 %v6410
    %6812 = vmatpush1.bf16.msra.mxu0 %v6409
    %6813 = vmatprep.subr.bf16.mxu0 %v6412
    %6814 = vmatpush1.bf16.msra.mxu0 %v6411
    %6815 = vmatprep.subr.bf16.mxu0 %v6414
    %6816 = vmatpush1.bf16.msra.mxu0 %v6413
    %6817 = vmatprep.subr.bf16.mxu0 %v6416
    %6818 = vmatpush1.bf16.msra.mxu0 %v6415
    %6819 = vmatprep.subr.bf16.mxu0 %v6418
    %6820 = vmatpush1.bf16.msra.mxu0 %v6417
    %6821 = vmatprep.subr.bf16.mxu0 %v6420
    %6822 = vmatpush1.bf16.msra.mxu0 %v6419
    %6823 = vmatprep.subr.bf16.mxu0 %v6422
    %6824 = vmatpush1.bf16.msra.mxu0 %v6421
    %6825 = vmatprep.subr.bf16.mxu0 %v6424
    %6826 = vmatpush1.bf16.msra.mxu0 %v6423
    %6827 = vmatprep.subr.bf16.mxu0 %v6426
    %6828 = vmatpush1.bf16.msra.mxu0 %v6425
    %6829 = vmatprep.subr.bf16.mxu0 %v6428
    %6830 = vmatpush1.bf16.msra.mxu0 %v6427
    %6831 = vmatprep.subr.bf16.mxu0 %v6430
    %6832 = vmatpush1.bf16.msra.mxu0 %v6429
    %6833 = vmatprep.mubr.bf16.mxu0 %v5124
    %6834 = vmatmul.mubr.bf16.gmra.mrb[0].mxu0 %v5123
    %v6835 = vpop.f32.mrb[0].mxu0
    %v6836 = vadd.f32 %v6763, %v6835
    %v6837 = vpop.f32.mrb[0].mxu0
    %v6838 = vadd.f32 %v6765, %v6837
    %v6839 = vpop.f32.mrb[0].mxu0
    %v6840 = vadd.f32 %v6767, %v6839
    %v6841 = vpop.f32.mrb[0].mxu0
    %v6842 = vadd.f32 %v6769, %v6841
    %6843 = vmatprep.mubr.bf16.mxu0 %v5126
    %6844 = vmatmul.mubr.bf16.gmra.mrb[0].mxu0 %v5125
    %v6845 = vpop.f32.mrb[0].mxu0
    %v6846 = vadd.f32 %v6773, %v6845
    %v6847 = vpop.f32.mrb[0].mxu0
    %v6848 = vadd.f32 %v6775, %v6847
    %v6849 = vpop.f32.mrb[0].mxu0
    %v6850 = vadd.f32 %v6777, %v6849
    %v6851 = vpop.f32.mrb[0].mxu0
    %v6852 = vadd.f32 %v6779, %v6851
    %6853 = vmatprep.mubr.bf16.mxu0 %v5128
    %6854 = vmatmul.mubr.bf16.gmra.mrb[0].mxu0 %v5127
    %v6855 = vpop.f32.mrb[0].mxu0
    %v6856 = vadd.f32 %v6783, %v6855
    %v6857 = vpop.f32.mrb[0].mxu0
    %v6858 = vadd.f32 %v6785, %v6857
    %v6859 = vpop.f32.mrb[0].mxu0
    %v6860 = vadd.f32 %v6787, %v6859
    %v6861 = vpop.f32.mrb[0].mxu0
    %v6862 = vadd.f32 %v6789, %v6861
    %6863 = vmatprep.mubr.bf16.mxu0 %v5130
    %6864 = vmatmul.mubr.bf16.gmra.mrb[0].mxu0 %v5129
    %v6865 = vpop.f32.mrb[0].mxu0
    %v6866 = vadd.f32 %v6793, %v6865
    %v6867 = vpop.f32.mrb[0].mxu0
    %v6868 = vadd.f32 %v6795, %v6867
    %v6869 = vpop.f32.mrb[0].mxu0
    %v6870 = vadd.f32 %v6797, %v6869
    %v6871 = vpop.f32.mrb[0].mxu0
    %v6872 = vadd.f32 %v6799, %v6871
    %6873 = vdwg.mxu0
    %6874 = vmatprep.subr.bf16.mxu0 %v6432
    %6875 = vmatpush1.bf16.msra.mxu0 %v6431
    %6876 = vmatprep.subr.bf16.mxu0 %v6434
    %6877 = vmatpush1.bf16.msra.mxu0 %v6433
    %6878 = vmatprep.subr.bf16.mxu0 %v6436
    %6879 = vmatpush1.bf16.msra.mxu0 %v6435
    %6880 = vmatprep.subr.bf16.mxu0 %v6438
    %6881 = vmatpush1.bf16.msra.mxu0 %v6437
    %6882 = vmatprep.subr.bf16.mxu0 %v6440
    %6883 = vmatpush1.bf16.msra.mxu0 %v6439
    %6884 = vmatprep.subr.bf16.mxu0 %v6442
    %6885 = vmatpush1.bf16.msra.mxu0 %v6441
    %6886 = vmatprep.subr.bf16.mxu0 %v6444
    %6887 = vmatpush1.bf16.msra.mxu0 %v6443
    %6888 = vmatprep.subr.bf16.mxu0 %v6446
    %6889 = vmatpush1.bf16.msra.mxu0 %v6445
    %6890 = vmatprep.subr.bf16.mxu0 %v6448
    %6891 = vmatpush1.bf16.msra.mxu0 %v6447
    %6892 = vmatprep.subr.bf16.mxu0 %v6450
    %6893 = vmatpush1.bf16.msra.mxu0 %v6449
    %6894 = vmatprep.subr.bf16.mxu0 %v6452
    %6895 = vmatpush1.bf16.msra.mxu0 %v6451
    %6896 = vmatprep.subr.bf16.mxu0 %v6454
    %6897 = vmatpush1.bf16.msra.mxu0 %v6453
    %6898 = vmatprep.subr.bf16.mxu0 %v6456
    %6899 = vmatpush1.bf16.msra.mxu0 %v6455
    %6900 = vmatprep.subr.bf16.mxu0 %v6458
    %6901 = vmatpush1.bf16.msra.mxu0 %v6457
    %6902 = vmatprep.subr.bf16.mxu0 %v6460
    %6903 = vmatpush1.bf16.msra.mxu0 %v6459
    %6904 = vmatprep.subr.bf16.mxu0 %v6462
    %6905 = vmatpush1.bf16.msra.mxu0 %v6461
    %6906 = vmatprep.mubr.bf16.mxu0 %v5396
    %6907 = vmatmul.mubr.bf16.gmra.mrb[0].mxu0 %v5395
    %v6908 = vpop.f32.mrb[0].mxu0
    %v6909 = vadd.f32 %v6836, %v6908
    %v6910 = vpop.f32.mrb[0].mxu0
    %v6911 = vadd.f32 %v6838, %v6910
    %v6912 = vpop.f32.mrb[0].mxu0
    %v6913 = vadd.f32 %v6840, %v6912
    %v6914 = vpop.f32.mrb[0].mxu0
    %v6915 = vadd.f32 %v6842, %v6914
    %6916 = vmatprep.mubr.bf16.mxu0 %v5398
    %6917 = vmatmul.mubr.bf16.gmra.mrb[0].mxu0 %v5397
    %v6918 = vpop.f32.mrb[0].mxu0
    %v6919 = vadd.f32 %v6846, %v6918
    %v6920 = vpop.f32.mrb[0].mxu0
    %v6921 = vadd.f32 %v6848, %v6920
    %v6922 = vpop.f32.mrb[0].mxu0
    %v6923 = vadd.f32 %v6850, %v6922
    %v6924 = vpop.f32.mrb[0].mxu0
    %v6925 = vadd.f32 %v6852, %v6924
    %6926 = vmatprep.mubr.bf16.mxu0 %v5400
    %6927 = vmatmul.mubr.bf16.gmra.mrb[0].mxu0 %v5399
    %v6928 = vpop.f32.mrb[0].mxu0
    %v6929 = vadd.f32 %v6856, %v6928
    %v6930 = vpop.f32.mrb[0].mxu0
    %v6931 = vadd.f32 %v6858, %v6930
    %v6932 = vpop.f32.mrb[0].mxu0
    %v6933 = vadd.f32 %v6860, %v6932
    %v6934 = vpop.f32.mrb[0].mxu0
    %v6935 = vadd.f32 %v6862, %v6934
    %6936 = vmatprep.mubr.bf16.mxu0 %v5402
    %6937 = vmatmul.mubr.bf16.gmra.mrb[0].mxu0 %v5401
    %v6938 = vpop.f32.mrb[0].mxu0
    %v6939 = vadd.f32 %v6866, %v6938
    %v6940 = vpop.f32.mrb[0].mxu0
    %v6941 = vadd.f32 %v6868, %v6940
    %v6942 = vpop.f32.mrb[0].mxu0
    %v6943 = vadd.f32 %v6870, %v6942
    %v6944 = vpop.f32.mrb[0].mxu0
    %v6945 = vadd.f32 %v6872, %v6944
    %6946 = vdwg.mxu0
    %6947 = vmatprep.subr.bf16.mxu0 %v6464
    %6948 = vmatpush1.bf16.msra.mxu0 %v6463
    %6949 = vmatprep.subr.bf16.mxu0 %v6466
    %6950 = vmatpush1.bf16.msra.mxu0 %v6465
    %6951 = vmatprep.subr.bf16.mxu0 %v6468
    %6952 = vmatpush1.bf16.msra.mxu0 %v6467
    %6953 = vmatprep.subr.bf16.mxu0 %v6470
    %6954 = vmatpush1.bf16.msra.mxu0 %v6469
    %6955 = vmatprep.subr.bf16.mxu0 %v6472
    %6956 = vmatpush1.bf16.msra.mxu0 %v6471
    %6957 = vmatprep.subr.bf16.mxu0 %v6474
    %6958 = vmatpush1.bf16.msra.mxu0 %v6473
    %6959 = vmatprep.subr.bf16.mxu0 %v6476
    %6960 = vmatpush1.bf16.msra.mxu0 %v6475
    %6961 = vmatprep.subr.bf16.mxu0 %v6478
    %6962 = vmatpush1.bf16.msra.mxu0 %v6477
    %6963 = vmatprep.subr.bf16.mxu0 %v6480
    %6964 = vmatpush1.bf16.msra.mxu0 %v6479
    %6965 = vmatprep.subr.bf16.mxu0 %v6482
    %6966 = vmatpush1.bf16.msra.mxu0 %v6481
    %6967 = vmatprep.subr.bf16.mxu0 %v6484
    %6968 = vmatpush1.bf16.msra.mxu0 %v6483
    %6969 = vmatprep.subr.bf16.mxu0 %v6486
    %6970 = vmatpush1.bf16.msra.mxu0 %v6485
    %6971 = vmatprep.subr.bf16.mxu0 %v6488
    %6972 = vmatpush1.bf16.msra.mxu0 %v6487
    %6973 = vmatprep.subr.bf16.mxu0 %v6490
    %6974 = vmatpush1.bf16.msra.mxu0 %v6489
    %6975 = vmatprep.subr.bf16.mxu0 %v6492
    %6976 = vmatpush1.bf16.msra.mxu0 %v6491
    %6977 = vmatprep.subr.bf16.mxu0 %v6494
    %6978 = vmatpush1.bf16.msra.mxu0 %v6493
    %6979 = vmatprep.mubr.bf16.mxu0 %v5668
    %6980 = vmatmul.mubr.bf16.gmra.mrb[0].mxu0 %v5667
    %v6981 = vpop.f32.mrb[0].mxu0
    %v6982 = vadd.f32 %v6909, %v6981
    %v6983 = vpop.f32.mrb[0].mxu0
    %v6984 = vadd.f32 %v6911, %v6983
    %v6985 = vpop.f32.mrb[0].mxu0
    %v6986 = vadd.f32 %v6913, %v6985
    %v6987 = vpop.f32.mrb[0].mxu0
    %v6988 = vadd.f32 %v6915, %v6987
    %6989 = vmatprep.mubr.bf16.mxu0 %v5670
    %6990 = vmatmul.mubr.bf16.gmra.mrb[0].mxu0 %v5669
    %v6991 = vpop.f32.mrb[0].mxu0
    %v6992 = vadd.f32 %v6919, %v6991
    %v6993 = vpop.f32.mrb[0].mxu0
    %v6994 = vadd.f32 %v6921, %v6993
    %v6995 = vpop.f32.mrb[0].mxu0
    %v6996 = vadd.f32 %v6923, %v6995
    %v6997 = vpop.f32.mrb[0].mxu0
    %v6998 = vadd.f32 %v6925, %v6997
    %6999 = vmatprep.mubr.bf16.mxu0 %v5672
    %7000 = vmatmul.mubr.bf16.gmra.mrb[0].mxu0 %v5671
    %v7001 = vpop.f32.mrb[0].mxu0
    %v7002 = vadd.f32 %v6929, %v7001
    %v7003 = vpop.f32.mrb[0].mxu0
    %v7004 = vadd.f32 %v6931, %v7003
    %v7005 = vpop.f32.mrb[0].mxu0
    %v7006 = vadd.f32 %v6933, %v7005
    %v7007 = vpop.f32.mrb[0].mxu0
    %v7008 = vadd.f32 %v6935, %v7007
    %7009 = vmatprep.mubr.bf16.mxu0 %v5674
    %7010 = vmatmul.mubr.bf16.gmra.mrb[0].mxu0 %v5673
    %v7011 = vpop.f32.mrb[0].mxu0
    %v7012 = vadd.f32 %v6939, %v7011
    %v7013 = vpop.f32.mrb[0].mxu0
    %v7014 = vadd.f32 %v6941, %v7013
    %v7015 = vpop.f32.mrb[0].mxu0
    %v7016 = vadd.f32 %v6943, %v7015
    %v7017 = vpop.f32.mrb[0].mxu0
    %v7018 = vadd.f32 %v6945, %v7017
    %7019 = vdwg.mxu0
    %v7020 = vmax.f32 %v6982, 0.0
    %v7021 = vmax.f32 %v6984, 0.0
    %v7022 = vmax.f32 %v6986, 0.0
    %v7023 = vmax.f32 %v6988, 0.0
    %v7024 = vmax.f32 %v6992, 0.0
    %v7025 = vmax.f32 %v6994, 0.0
    %v7026 = vmax.f32 %v6996, 0.0
    %v7027 = vmax.f32 %v6998, 0.0
    %v7028 = vmax.f32 %v7002, 0.0
    %v7029 = vmax.f32 %v7004, 0.0
    %v7030 = vmax.f32 %v7006, 0.0
    %v7031 = vmax.f32 %v7008, 0.0
    %v7032 = vmax.f32 %v7012, 0.0
    %v7033 = vmax.f32 %v7014, 0.0
    %v7034 = vmax.f32 %v7016, 0.0
    %v7035 = vmax.f32 %v7018, 0.0
    %v7036 = vmax.f32 %v7020, %v7021
    %v7037 = vmax.f32 %v7022, %v7023
    %v7038 = vmax.f32 %v7024, %v7025
    %v7039 = vmax.f32 %v7026, %v7027
    %v7040 = vmax.f32 %v7028, %v7029
    %v7041 = vmax.f32 %v7030, %v7031
    %v7042 = vmax.f32 %v7032, %v7033
    %v7043 = vmax.f32 %v7034, %v7035
    %v7052 = vcombine.high %v7036, %v7036
    %v7054 = vunpack.c.l.s4 1983009808
    %v7055 = vunpack.c.0.s8 %v7054
    %v7056 = vlaneseq
    %v7057 = vshrl.u32 %v7056, 7
    %v7058 = vsub.s32 %v7055, %v7057
    %v7059 = vrot.slane %v7036, %v7058
    %v7061 = vunpack.c.l.s4 1983009808
    %v7062 = vunpack.c.0.s8 %v7061
    %v7063 = vlaneseq
    %v7064 = vshrl.u32 %v7063, 7
    %v7065 = vsub.s32 %v7062, %v7064
    %v7066 = vrot.slane %v7052, %v7065
    %v7067 = vcombine.high %v7059, %v7059
    %v7068 = vcombine.high %v7066, %v7066
    %v7069 = vcombine.high %v7037, %v7037
    %v7071 = vunpack.c.l.s4 1983009808
    %v7072 = vunpack.c.0.s8 %v7071
    %v7073 = vlaneseq
    %v7074 = vshrl.u32 %v7073, 7
    %v7075 = vsub.s32 %v7072, %v7074
    %v7076 = vrot.slane %v7037, %v7075
    %v7078 = vunpack.c.l.s4 1983009808
    %v7079 = vunpack.c.0.s8 %v7078
    %v7080 = vlaneseq
    %v7081 = vshrl.u32 %v7080, 7
    %v7082 = vsub.s32 %v7079, %v7081
    %v7083 = vrot.slane %v7069, %v7082
    %v7084 = vcombine.high %v7076, %v7076
    %v7085 = vcombine.high %v7083, %v7083
    %v7086 = vcombine.high %v7038, %v7038
    %v7088 = vunpack.c.l.s4 1983009808
    %v7089 = vunpack.c.0.s8 %v7088
    %v7090 = vlaneseq
    %v7091 = vshrl.u32 %v7090, 7
    %v7092 = vsub.s32 %v7089, %v7091
    %v7093 = vrot.slane %v7038, %v7092
    %v7095 = vunpack.c.l.s4 1983009808
    %v7096 = vunpack.c.0.s8 %v7095
    %v7097 = vlaneseq
    %v7098 = vshrl.u32 %v7097, 7
    %v7099 = vsub.s32 %v7096, %v7098
    %v7100 = vrot.slane %v7086, %v7099
    %v7101 = vcombine.high %v7093, %v7093
    %v7102 = vcombine.high %v7100, %v7100
    %v7103 = vcombine.high %v7039, %v7039
    %v7105 = vunpack.c.l.s4 1983009808
    %v7106 = vunpack.c.0.s8 %v7105
    %v7107 = vlaneseq
    %v7108 = vshrl.u32 %v7107, 7
    %v7109 = vsub.s32 %v7106, %v7108
    %v7110 = vrot.slane %v7039, %v7109
    %v7112 = vunpack.c.l.s4 1983009808
    %v7113 = vunpack.c.0.s8 %v7112
    %v7114 = vlaneseq
    %v7115 = vshrl.u32 %v7114, 7
    %v7116 = vsub.s32 %v7113, %v7115
    %v7117 = vrot.slane %v7103, %v7116
    %v7118 = vcombine.high %v7110, %v7110
    %v7119 = vcombine.high %v7117, %v7117
    %v7120 = vcombine.high %v7040, %v7040
    %v7122 = vunpack.c.l.s4 1983009808
    %v7123 = vunpack.c.0.s8 %v7122
    %v7124 = vlaneseq
    %v7125 = vshrl.u32 %v7124, 7
    %v7126 = vsub.s32 %v7123, %v7125
    %v7127 = vrot.slane %v7040, %v7126
    %v7129 = vunpack.c.l.s4 1983009808
    %v7130 = vunpack.c.0.s8 %v7129
    %v7131 = vlaneseq
    %v7132 = vshrl.u32 %v7131, 7
    %v7133 = vsub.s32 %v7130, %v7132
    %v7134 = vrot.slane %v7120, %v7133
    %v7135 = vcombine.high %v7127, %v7127
    %v7136 = vcombine.high %v7134, %v7134
    %v7137 = vcombine.high %v7041, %v7041
    %v7139 = vunpack.c.l.s4 1983009808
    %v7140 = vunpack.c.0.s8 %v7139
    %v7141 = vlaneseq
    %v7142 = vshrl.u32 %v7141, 7
    %v7143 = vsub.s32 %v7140, %v7142
    %v7144 = vrot.slane %v7041, %v7143
    %v7146 = vunpack.c.l.s4 1983009808
    %v7147 = vunpack.c.0.s8 %v7146
    %v7148 = vlaneseq
    %v7149 = vshrl.u32 %v7148, 7
    %v7150 = vsub.s32 %v7147, %v7149
    %v7151 = vrot.slane %v7137, %v7150
    %v7152 = vcombine.high %v7144, %v7144
    %v7153 = vcombine.high %v7151, %v7151
    %v7154 = vcombine.high %v7042, %v7042
    %v7156 = vunpack.c.l.s4 1983009808
    %v7157 = vunpack.c.0.s8 %v7156
    %v7158 = vlaneseq
    %v7159 = vshrl.u32 %v7158, 7
    %v7160 = vsub.s32 %v7157, %v7159
    %v7161 = vrot.slane %v7042, %v7160
    %v7163 = vunpack.c.l.s4 1983009808
    %v7164 = vunpack.c.0.s8 %v7163
    %v7165 = vlaneseq
    %v7166 = vshrl.u32 %v7165, 7
    %v7167 = vsub.s32 %v7164, %v7166
    %v7168 = vrot.slane %v7154, %v7167
    %v7169 = vcombine.high %v7161, %v7161
    %v7170 = vcombine.high %v7168, %v7168
    %v7171 = vcombine.high %v7043, %v7043
    %v7173 = vunpack.c.l.s4 1983009808
    %v7174 = vunpack.c.0.s8 %v7173
    %v7175 = vlaneseq
    %v7176 = vshrl.u32 %v7175, 7
    %v7177 = vsub.s32 %v7174, %v7176
    %v7178 = vrot.slane %v7043, %v7177
    %v7180 = vunpack.c.l.s4 1983009808
    %v7181 = vunpack.c.0.s8 %v7180
    %v7182 = vlaneseq
    %v7183 = vshrl.u32 %v7182, 7
    %v7184 = vsub.s32 %v7181, %v7183
    %v7185 = vrot.slane %v7171, %v7184
    %v7186 = vcombine.high %v7178, %v7178
    %v7187 = vcombine.high %v7185, %v7185
    %v7220 = vrot.slane %v7059, 7
    %v7221 = vrot.slane %v7220, 2
    %v7222 = vrot.slane %v7067, 7
    %v7223 = vrot.slane %v7222, 2
    %v7224 = vrot.slane %v7066, 7
    %v7225 = vrot.slane %v7224, 2
    %v7226 = vrot.slane %v7068, 7
    %v7227 = vrot.slane %v7226, 2
    %v7228 = vrot.slane %v7076, 7
    %v7229 = vrot.slane %v7228, 2
    %v7230 = vrot.slane %v7084, 7
    %v7231 = vrot.slane %v7230, 2
    %v7232 = vrot.slane %v7083, 7
    %v7233 = vrot.slane %v7232, 2
    %v7234 = vrot.slane %v7085, 7
    %v7235 = vrot.slane %v7234, 2
    %v7236 = vrot.slane %v7093, 7
    %v7237 = vrot.slane %v7236, 2
    %v7238 = vrot.slane %v7101, 7
    %v7239 = vrot.slane %v7238, 2
    %v7240 = vrot.slane %v7100, 7
    %v7241 = vrot.slane %v7240, 2
    %v7242 = vrot.slane %v7102, 7
    %v7243 = vrot.slane %v7242, 2
    %v7244 = vrot.slane %v7110, 7
    %v7245 = vrot.slane %v7244, 2
    %v7246 = vrot.slane %v7118, 7
    %v7247 = vrot.slane %v7246, 2
    %v7248 = vrot.slane %v7117, 7
    %v7249 = vrot.slane %v7248, 2
    %v7250 = vrot.slane %v7119, 7
    %v7251 = vrot.slane %v7250, 2
    %v7252 = vrot.slane %v7127, 7
    %v7253 = vrot.slane %v7252, 2
    %v7254 = vrot.slane %v7135, 7
    %v7255 = vrot.slane %v7254, 2
    %v7256 = vrot.slane %v7134, 7
    %v7257 = vrot.slane %v7256, 2
    %v7258 = vrot.slane %v7136, 7
    %v7259 = vrot.slane %v7258, 2
    %v7260 = vrot.slane %v7144, 7
    %v7261 = vrot.slane %v7260, 2
    %v7262 = vrot.slane %v7152, 7
    %v7263 = vrot.slane %v7262, 2
    %v7264 = vrot.slane %v7151, 7
    %v7265 = vrot.slane %v7264, 2
    %v7266 = vrot.slane %v7153, 7
    %v7267 = vrot.slane %v7266, 2
    %v7268 = vrot.slane %v7161, 7
    %v7269 = vrot.slane %v7268, 2
    %v7270 = vrot.slane %v7169, 7
    %v7271 = vrot.slane %v7270, 2
    %v7272 = vrot.slane %v7168, 7
    %v7273 = vrot.slane %v7272, 2
    %v7274 = vrot.slane %v7170, 7
    %v7275 = vrot.slane %v7274, 2
    %v7276 = vrot.slane %v7178, 7
    %v7277 = vrot.slane %v7276, 2
    %v7278 = vrot.slane %v7186, 7
    %v7279 = vrot.slane %v7278, 2
    %v7280 = vrot.slane %v7185, 7
    %v7281 = vrot.slane %v7280, 2
    %v7282 = vrot.slane %v7187, 7
    %v7283 = vrot.slane %v7282, 2
    %v7316 = vmax.f32 %v7059, %v7221
    %v7317 = vmax.f32 %v7067, %v7223
    %v7318 = vmax.f32 %v7066, %v7225
    %v7319 = vmax.f32 %v7068, %v7227
    %v7320 = vmax.f32 %v7076, %v7229
    %v7321 = vmax.f32 %v7084, %v7231
    %v7322 = vmax.f32 %v7083, %v7233
    %v7323 = vmax.f32 %v7085, %v7235
    %v7324 = vmax.f32 %v7093, %v7237
    %v7325 = vmax.f32 %v7101, %v7239
    %v7326 = vmax.f32 %v7100, %v7241
    %v7327 = vmax.f32 %v7102, %v7243
    %v7328 = vmax.f32 %v7110, %v7245
    %v7329 = vmax.f32 %v7118, %v7247
    %v7330 = vmax.f32 %v7117, %v7249
    %v7331 = vmax.f32 %v7119, %v7251
    %v7332 = vmax.f32 %v7127, %v7253
    %v7333 = vmax.f32 %v7135, %v7255
    %v7334 = vmax.f32 %v7134, %v7257
    %v7335 = vmax.f32 %v7136, %v7259
    %v7336 = vmax.f32 %v7144, %v7261
    %v7337 = vmax.f32 %v7152, %v7263
    %v7338 = vmax.f32 %v7151, %v7265
    %v7339 = vmax.f32 %v7153, %v7267
    %v7340 = vmax.f32 %v7161, %v7269
    %v7341 = vmax.f32 %v7169, %v7271
    %v7342 = vmax.f32 %v7168, %v7273
    %v7343 = vmax.f32 %v7170, %v7275
    %v7344 = vmax.f32 %v7178, %v7277
    %v7345 = vmax.f32 %v7186, %v7279
    %v7346 = vmax.f32 %v7185, %v7281
    %v7347 = vmax.f32 %v7187, %v7283
    %v7348 = vpack.c.bf16 %v7316, %v7316
    %v7349 = vpack.c.bf16 %v7317, %v7317
    %v7350 = vpack.c.bf16 %v7318, %v7318
    %v7351 = vpack.c.bf16 %v7319, %v7319
    %v7352 = vpack.c.bf16 %v7320, %v7320
    %v7353 = vpack.c.bf16 %v7321, %v7321
    %v7354 = vpack.c.bf16 %v7322, %v7322
    %v7355 = vpack.c.bf16 %v7323, %v7323
    %v7356 = vpack.c.bf16 %v7324, %v7324
    %v7357 = vpack.c.bf16 %v7325, %v7325
    %v7358 = vpack.c.bf16 %v7326, %v7326
    %v7359 = vpack.c.bf16 %v7327, %v7327
    %v7360 = vpack.c.bf16 %v7328, %v7328
    %v7361 = vpack.c.bf16 %v7329, %v7329
    %v7362 = vpack.c.bf16 %v7330, %v7330
    %v7363 = vpack.c.bf16 %v7331, %v7331
    %v7364 = vpack.c.bf16 %v7332, %v7332
    %v7365 = vpack.c.bf16 %v7333, %v7333
    %v7366 = vpack.c.bf16 %v7334, %v7334
    %v7367 = vpack.c.bf16 %v7335, %v7335
    %v7368 = vpack.c.bf16 %v7336, %v7336
    %v7369 = vpack.c.bf16 %v7337, %v7337
    %v7370 = vpack.c.bf16 %v7338, %v7338
    %v7371 = vpack.c.bf16 %v7339, %v7339
    %v7372 = vpack.c.bf16 %v7340, %v7340
    %v7373 = vpack.c.bf16 %v7341, %v7341
    %v7374 = vpack.c.bf16 %v7342, %v7342
    %v7375 = vpack.c.bf16 %v7343, %v7343
    %v7376 = vpack.c.bf16 %v7344, %v7344
    %v7377 = vpack.c.bf16 %v7345, %v7345
    %v7378 = vpack.c.bf16 %v7346, %v7346
    %v7379 = vpack.c.bf16 %v7347, %v7347
    %v7388 = vunpack.c.l.b16 %v7348
    %v7389 = vunpack.c.l.b16 %v7352
    %v7390 = vunpack.c.l.b16 %v7356
    %v7391 = vunpack.c.l.b16 %v7360
    %v7392 = vunpack.c.l.b16 %v7364
    %v7393 = vunpack.c.l.b16 %v7368
    %v7394 = vunpack.c.l.b16 %v7372
    %v7395 = vunpack.c.l.b16 %v7376
    %v7396 = vrot.slane %v7389, 7
    %v7397 = vsel %vm4349, %v7396, %v7388
    %v7398 = vrot.slane %v7390, 6
    %v7399 = vsel %vm4352, %v7398, %v7397
    %v7400 = vrot.slane %v7391, 5
    %v7401 = vsel %vm4355, %v7400, %v7399
    %v7402 = vrot.slane %v7392, 4
    %v7403 = vsel %vm4358, %v7402, %v7401
    %v7404 = vrot.slane %v7393, 3
    %v7405 = vsel %vm4361, %v7404, %v7403
    %v7406 = vrot.slane %v7394, 2
    %v7407 = vsel %vm4364, %v7406, %v7405
    %v7408 = vrot.slane %v7395, 1
    %v7409 = vsel %vm4367, %v7408, %v7407
    %v7410 = vpack.c.b16 %v7409, %v7409
    %v7420 = vunpack.c.l.b16 %v7349
    %v7421 = vunpack.c.l.b16 %v7353
    %v7422 = vunpack.c.l.b16 %v7357
    %v7423 = vunpack.c.l.b16 %v7361
    %v7424 = vunpack.c.l.b16 %v7365
    %v7425 = vunpack.c.l.b16 %v7369
    %v7426 = vunpack.c.l.b16 %v7373
    %v7427 = vunpack.c.l.b16 %v7377
    %v7428 = vrot.slane %v7421, 7
    %v7429 = vsel %vm4349, %v7428, %v7420
    %v7430 = vrot.slane %v7422, 6
    %v7431 = vsel %vm4352, %v7430, %v7429
    %v7432 = vrot.slane %v7423, 5
    %v7433 = vsel %vm4355, %v7432, %v7431
    %v7434 = vrot.slane %v7424, 4
    %v7435 = vsel %vm4358, %v7434, %v7433
    %v7436 = vrot.slane %v7425, 3
    %v7437 = vsel %vm4361, %v7436, %v7435
    %v7438 = vrot.slane %v7426, 2
    %v7439 = vsel %vm4364, %v7438, %v7437
    %v7440 = vrot.slane %v7427, 1
    %v7441 = vsel %vm4367, %v7440, %v7439
    %v7442 = vpack.c.b16 %v7441, %v7441
    %v7452 = vunpack.c.l.b16 %v7350
    %v7453 = vunpack.c.l.b16 %v7354
    %v7454 = vunpack.c.l.b16 %v7358
    %v7455 = vunpack.c.l.b16 %v7362
    %v7456 = vunpack.c.l.b16 %v7366
    %v7457 = vunpack.c.l.b16 %v7370
    %v7458 = vunpack.c.l.b16 %v7374
    %v7459 = vunpack.c.l.b16 %v7378
    %v7460 = vrot.slane %v7453, 7
    %v7461 = vsel %vm4349, %v7460, %v7452
    %v7462 = vrot.slane %v7454, 6
    %v7463 = vsel %vm4352, %v7462, %v7461
    %v7464 = vrot.slane %v7455, 5
    %v7465 = vsel %vm4355, %v7464, %v7463
    %v7466 = vrot.slane %v7456, 4
    %v7467 = vsel %vm4358, %v7466, %v7465
    %v7468 = vrot.slane %v7457, 3
    %v7469 = vsel %vm4361, %v7468, %v7467
    %v7470 = vrot.slane %v7458, 2
    %v7471 = vsel %vm4364, %v7470, %v7469
    %v7472 = vrot.slane %v7459, 1
    %v7473 = vsel %vm4367, %v7472, %v7471
    %v7474 = vpack.c.b16 %v7473, %v7473
    %v7484 = vunpack.c.l.b16 %v7351
    %v7485 = vunpack.c.l.b16 %v7355
    %v7486 = vunpack.c.l.b16 %v7359
    %v7487 = vunpack.c.l.b16 %v7363
    %v7488 = vunpack.c.l.b16 %v7367
    %v7489 = vunpack.c.l.b16 %v7371
    %v7490 = vunpack.c.l.b16 %v7375
    %v7491 = vunpack.c.l.b16 %v7379
    %v7492 = vrot.slane %v7485, 7
    %v7493 = vsel %vm4349, %v7492, %v7484
    %v7494 = vrot.slane %v7486, 6
    %v7495 = vsel %vm4352, %v7494, %v7493
    %v7496 = vrot.slane %v7487, 5
    %v7497 = vsel %vm4355, %v7496, %v7495
    %v7498 = vrot.slane %v7488, 4
    %v7499 = vsel %vm4358, %v7498, %v7497
    %v7500 = vrot.slane %v7489, 3
    %v7501 = vsel %vm4361, %v7500, %v7499
    %v7502 = vrot.slane %v7490, 2
    %v7503 = vsel %vm4364, %v7502, %v7501
    %v7504 = vrot.slane %v7491, 1
    %v7505 = vsel %vm4367, %v7504, %v7503
    %v7506 = vpack.c.b16 %v7505, %v7505
    %v7508 = vld [vmem:[#allocation6] sm:$0xff]
    %v7509 = vld [vmem:[#allocation6 + $0x8] sm:$0xff]
    %v7510 = vld [vmem:[#allocation6 + $0x10] sm:$0xff]
    %v7511 = vld [vmem:[#allocation6 + $0x18] sm:$0xff]
    %v7512 = vld [vmem:[#allocation6 + $0x20] sm:$0xff]
    %v7513 = vld [vmem:[#allocation6 + $0x28] sm:$0xff]
    %v7514 = vld [vmem:[#allocation6 + $0x30] sm:$0xff]
    %v7515 = vld [vmem:[#allocation6 + $0x38] sm:$0xff]
    %v7516 = vld [vmem:[#allocation6 + $0x40] sm:$0xff]
    %v7517 = vld [vmem:[#allocation6 + $0x48] sm:$0xff]
    %v7518 = vld [vmem:[#allocation6 + $0x50] sm:$0xff]
    %v7519 = vld [vmem:[#allocation6 + $0x58] sm:$0xff]
    %v7520 = vld [vmem:[#allocation6 + $0x60] sm:$0xff]
    %v7521 = vld [vmem:[#allocation6 + $0x68] sm:$0xff]
    %v7522 = vld [vmem:[#allocation6 + $0x70] sm:$0xff]
    %v7523 = vld [vmem:[#allocation6 + $0x78] sm:$0xff]
    %v7524 = vld [vmem:[#allocation6 + $0x80] sm:$0xff]
    %v7525 = vld [vmem:[#allocation6 + $0x88] sm:$0xff]
    %v7526 = vld [vmem:[#allocation6 + $0x90] sm:$0xff]
    %v7527 = vld [vmem:[#allocation6 + $0x98] sm:$0xff]
    %v7528 = vld [vmem:[#allocation6 + $0xa0] sm:$0xff]
    %v7529 = vld [vmem:[#allocation6 + $0xa8] sm:$0xff]
    %v7530 = vld [vmem:[#allocation6 + $0xb0] sm:$0xff]
    %v7531 = vld [vmem:[#allocation6 + $0xb8] sm:$0xff]
    %v7532 = vld [vmem:[#allocation6 + $0xc0] sm:$0xff]
    %v7533 = vld [vmem:[#allocation6 + $0xc8] sm:$0xff]
    %v7534 = vld [vmem:[#allocation6 + $0xd0] sm:$0xff]
    %v7535 = vld [vmem:[#allocation6 + $0xd8] sm:$0xff]
    %v7536 = vld [vmem:[#allocation6 + $0xe0] sm:$0xff]
    %v7537 = vld [vmem:[#allocation6 + $0xe8] sm:$0xff]
    %v7538 = vld [vmem:[#allocation6 + $0xf0] sm:$0xff]
    %v7539 = vld [vmem:[#allocation6 + $0xf8] sm:$0xff]
    %v7540 = vld [vmem:[#allocation6 + $0x100] sm:$0xff]
    %v7541 = vld [vmem:[#allocation6 + $0x108] sm:$0xff]
    %v7542 = vld [vmem:[#allocation6 + $0x110] sm:$0xff]
    %v7543 = vld [vmem:[#allocation6 + $0x118] sm:$0xff]
    %v7544 = vld [vmem:[#allocation6 + $0x120] sm:$0xff]
    %v7545 = vld [vmem:[#allocation6 + $0x128] sm:$0xff]
    %v7546 = vld [vmem:[#allocation6 + $0x130] sm:$0xff]
    %v7547 = vld [vmem:[#allocation6 + $0x138] sm:$0xff]
    %v7548 = vld [vmem:[#allocation6 + $0x140] sm:$0xff]
    %v7549 = vld [vmem:[#allocation6 + $0x148] sm:$0xff]
    %v7550 = vld [vmem:[#allocation6 + $0x150] sm:$0xff]
    %v7551 = vld [vmem:[#allocation6 + $0x158] sm:$0xff]
    %v7552 = vld [vmem:[#allocation6 + $0x160] sm:$0xff]
    %v7553 = vld [vmem:[#allocation6 + $0x168] sm:$0xff]
    %v7554 = vld [vmem:[#allocation6 + $0x170] sm:$0xff]
    %v7555 = vld [vmem:[#allocation6 + $0x178] sm:$0xff]
    %v7556 = vld [vmem:[#allocation6 + $0x180] sm:$0xff]
    %v7557 = vld [vmem:[#allocation6 + $0x188] sm:$0xff]
    %v7558 = vld [vmem:[#allocation6 + $0x190] sm:$0xff]
    %v7559 = vld [vmem:[#allocation6 + $0x198] sm:$0xff]
    %v7560 = vld [vmem:[#allocation6 + $0x1a0] sm:$0xff]
    %v7561 = vld [vmem:[#allocation6 + $0x1a8] sm:$0xff]
    %v7562 = vld [vmem:[#allocation6 + $0x1b0] sm:$0xff]
    %v7563 = vld [vmem:[#allocation6 + $0x1b8] sm:$0xff]
    %v7564 = vld [vmem:[#allocation6 + $0x1c0] sm:$0xff]
    %v7565 = vld [vmem:[#allocation6 + $0x1c8] sm:$0xff]
    %v7566 = vld [vmem:[#allocation6 + $0x1d0] sm:$0xff]
    %v7567 = vld [vmem:[#allocation6 + $0x1d8] sm:$0xff]
    %v7568 = vld [vmem:[#allocation6 + $0x1e0] sm:$0xff]
    %v7569 = vld [vmem:[#allocation6 + $0x1e8] sm:$0xff]
    %v7570 = vld [vmem:[#allocation6 + $0x1f0] sm:$0xff]
    %v7571 = vld [vmem:[#allocation6 + $0x1f8] sm:$0xff]
    %v7572 = vld [vmem:[%s6] sm:$0x3]
    %v7574 = vlaneseq
    %v7575 = vshrl.u32 %v7574, 7
    %v7576 = vsub.s32 0, %v7575
    %v7577 = vrot.slane %v7572, %v7576
    %v7578 = vlaneseq
    %v7579 = vshrl.u32 %v7578, 7
    %v7580 = vsub.s32 1, %v7579
    %v7581 = vrot.slane %v7572, %v7580
    %v7648 = vunpack.c.l.b16 %v7508
    %v7649 = vunpack.c.h.b16 %v7508
    %v7650 = vunpack.c.l.b16 %v7509
    %v7651 = vunpack.c.h.b16 %v7509
    %v7652 = vunpack.c.l.b16 %v7510
    %v7653 = vunpack.c.h.b16 %v7510
    %v7654 = vunpack.c.l.b16 %v7511
    %v7655 = vunpack.c.h.b16 %v7511
    %v7656 = vunpack.c.l.b16 %v7512
    %v7657 = vunpack.c.h.b16 %v7512
    %v7658 = vunpack.c.l.b16 %v7513
    %v7659 = vunpack.c.h.b16 %v7513
    %v7660 = vunpack.c.l.b16 %v7514
    %v7661 = vunpack.c.h.b16 %v7514
    %v7662 = vunpack.c.l.b16 %v7515
    %v7663 = vunpack.c.h.b16 %v7515
    %v7664 = vunpack.c.l.b16 %v7516
    %v7665 = vunpack.c.h.b16 %v7516
    %v7666 = vunpack.c.l.b16 %v7517
    %v7667 = vunpack.c.h.b16 %v7517
    %v7668 = vunpack.c.l.b16 %v7518
    %v7669 = vunpack.c.h.b16 %v7518
    %v7670 = vunpack.c.l.b16 %v7519
    %v7671 = vunpack.c.h.b16 %v7519
    %v7672 = vunpack.c.l.b16 %v7520
    %v7673 = vunpack.c.h.b16 %v7520
    %v7674 = vunpack.c.l.b16 %v7521
    %v7675 = vunpack.c.h.b16 %v7521
    %v7676 = vunpack.c.l.b16 %v7522
    %v7677 = vunpack.c.h.b16 %v7522
    %v7678 = vunpack.c.l.b16 %v7523
    %v7679 = vunpack.c.h.b16 %v7523
    %v7680 = vunpack.c.l.b16 %v7524
    %v7681 = vunpack.c.h.b16 %v7524
    %v7682 = vunpack.c.l.b16 %v7525
    %v7683 = vunpack.c.h.b16 %v7525
    %v7684 = vunpack.c.l.b16 %v7526
    %v7685 = vunpack.c.h.b16 %v7526
    %v7686 = vunpack.c.l.b16 %v7527
    %v7687 = vunpack.c.h.b16 %v7527
    %v7688 = vunpack.c.l.b16 %v7528
    %v7689 = vunpack.c.h.b16 %v7528
    %v7690 = vunpack.c.l.b16 %v7529
    %v7691 = vunpack.c.h.b16 %v7529
    %v7692 = vunpack.c.l.b16 %v7530
    %v7693 = vunpack.c.h.b16 %v7530
    %v7694 = vunpack.c.l.b16 %v7531
    %v7695 = vunpack.c.h.b16 %v7531
    %v7696 = vunpack.c.l.b16 %v7532
    %v7697 = vunpack.c.h.b16 %v7532
    %v7698 = vunpack.c.l.b16 %v7533
    %v7699 = vunpack.c.h.b16 %v7533
    %v7700 = vunpack.c.l.b16 %v7534
    %v7701 = vunpack.c.h.b16 %v7534
    %v7702 = vunpack.c.l.b16 %v7535
    %v7703 = vunpack.c.h.b16 %v7535
    %v7704 = vunpack.c.l.b16 %v7536
    %v7705 = vunpack.c.h.b16 %v7536
    %v7706 = vunpack.c.l.b16 %v7537
    %v7707 = vunpack.c.h.b16 %v7537
    %v7708 = vunpack.c.l.b16 %v7538
    %v7709 = vunpack.c.h.b16 %v7538
    %v7710 = vunpack.c.l.b16 %v7539
    %v7711 = vunpack.c.h.b16 %v7539
    %v7712 = vunpack.c.l.b16 %v7540
    %v7713 = vunpack.c.h.b16 %v7540
    %v7714 = vunpack.c.l.b16 %v7541
    %v7715 = vunpack.c.h.b16 %v7541
    %v7716 = vunpack.c.l.b16 %v7542
    %v7717 = vunpack.c.h.b16 %v7542
    %v7718 = vunpack.c.l.b16 %v7543
    %v7719 = vunpack.c.h.b16 %v7543
    %v7720 = vunpack.c.l.b16 %v7544
    %v7721 = vunpack.c.h.b16 %v7544
    %v7722 = vunpack.c.l.b16 %v7545
    %v7723 = vunpack.c.h.b16 %v7545
    %v7724 = vunpack.c.l.b16 %v7546
    %v7725 = vunpack.c.h.b16 %v7546
    %v7726 = vunpack.c.l.b16 %v7547
    %v7727 = vunpack.c.h.b16 %v7547
    %v7728 = vunpack.c.l.b16 %v7548
    %v7729 = vunpack.c.h.b16 %v7548
    %v7730 = vunpack.c.l.b16 %v7549
    %v7731 = vunpack.c.h.b16 %v7549
    %v7732 = vunpack.c.l.b16 %v7550
    %v7733 = vunpack.c.h.b16 %v7550
    %v7734 = vunpack.c.l.b16 %v7551
    %v7735 = vunpack.c.h.b16 %v7551
    %v7736 = vunpack.c.l.b16 %v7552
    %v7737 = vunpack.c.h.b16 %v7552
    %v7738 = vunpack.c.l.b16 %v7553
    %v7739 = vunpack.c.h.b16 %v7553
    %v7740 = vunpack.c.l.b16 %v7554
    %v7741 = vunpack.c.h.b16 %v7554
    %v7742 = vunpack.c.l.b16 %v7555
    %v7743 = vunpack.c.h.b16 %v7555
    %v7744 = vunpack.c.l.b16 %v7556
    %v7745 = vunpack.c.h.b16 %v7556
    %v7746 = vunpack.c.l.b16 %v7557
    %v7747 = vunpack.c.h.b16 %v7557
    %v7748 = vunpack.c.l.b16 %v7558
    %v7749 = vunpack.c.h.b16 %v7558
    %v7750 = vunpack.c.l.b16 %v7559
    %v7751 = vunpack.c.h.b16 %v7559
    %v7752 = vunpack.c.l.b16 %v7560
    %v7753 = vunpack.c.h.b16 %v7560
    %v7754 = vunpack.c.l.b16 %v7561
    %v7755 = vunpack.c.h.b16 %v7561
    %v7756 = vunpack.c.l.b16 %v7562
    %v7757 = vunpack.c.h.b16 %v7562
    %v7758 = vunpack.c.l.b16 %v7563
    %v7759 = vunpack.c.h.b16 %v7563
    %v7760 = vunpack.c.l.b16 %v7564
    %v7761 = vunpack.c.h.b16 %v7564
    %v7762 = vunpack.c.l.b16 %v7565
    %v7763 = vunpack.c.h.b16 %v7565
    %v7764 = vunpack.c.l.b16 %v7566
    %v7765 = vunpack.c.h.b16 %v7566
    %v7766 = vunpack.c.l.b16 %v7567
    %v7767 = vunpack.c.h.b16 %v7567
    %v7768 = vunpack.c.l.b16 %v7568
    %v7769 = vunpack.c.h.b16 %v7568
    %v7770 = vunpack.c.l.b16 %v7569
    %v7771 = vunpack.c.h.b16 %v7569
    %v7772 = vunpack.c.l.b16 %v7570
    %v7773 = vunpack.c.h.b16 %v7570
    %v7774 = vunpack.c.l.b16 %v7571
    %v7775 = vunpack.c.h.b16 %v7571
    %v7776 = vpack.c.b16 %v7650, %v7648
    %v7777 = vpack.c.b16 %v7651, %v7649
    %v7778 = vpack.c.b16 %v7654, %v7652
    %v7779 = vpack.c.b16 %v7655, %v7653
    %v7780 = vpack.c.b16 %v7658, %v7656
    %v7781 = vpack.c.b16 %v7659, %v7657
    %v7782 = vpack.c.b16 %v7662, %v7660
    %v7783 = vpack.c.b16 %v7663, %v7661
    %v7784 = vpack.c.b16 %v7666, %v7664
    %v7785 = vpack.c.b16 %v7667, %v7665
    %v7786 = vpack.c.b16 %v7670, %v7668
    %v7787 = vpack.c.b16 %v7671, %v7669
    %v7788 = vpack.c.b16 %v7674, %v7672
    %v7789 = vpack.c.b16 %v7675, %v7673
    %v7790 = vpack.c.b16 %v7678, %v7676
    %v7791 = vpack.c.b16 %v7679, %v7677
    %v7792 = vpack.c.b16 %v7682, %v7680
    %v7793 = vpack.c.b16 %v7683, %v7681
    %v7794 = vpack.c.b16 %v7686, %v7684
    %v7795 = vpack.c.b16 %v7687, %v7685
    %v7796 = vpack.c.b16 %v7690, %v7688
    %v7797 = vpack.c.b16 %v7691, %v7689
    %v7798 = vpack.c.b16 %v7694, %v7692
    %v7799 = vpack.c.b16 %v7695, %v7693
    %v7800 = vpack.c.b16 %v7698, %v7696
    %v7801 = vpack.c.b16 %v7699, %v7697
    %v7802 = vpack.c.b16 %v7702, %v7700
    %v7803 = vpack.c.b16 %v7703, %v7701
    %v7804 = vpack.c.b16 %v7706, %v7704
    %v7805 = vpack.c.b16 %v7707, %v7705
    %v7806 = vpack.c.b16 %v7710, %v7708
    %v7807 = vpack.c.b16 %v7711, %v7709
    %v7808 = vpack.c.b16 %v7714, %v7712
    %v7809 = vpack.c.b16 %v7715, %v7713
    %v7810 = vpack.c.b16 %v7718, %v7716
    %v7811 = vpack.c.b16 %v7719, %v7717
    %v7812 = vpack.c.b16 %v7722, %v7720
    %v7813 = vpack.c.b16 %v7723, %v7721
    %v7814 = vpack.c.b16 %v7726, %v7724
    %v7815 = vpack.c.b16 %v7727, %v7725
    %v7816 = vpack.c.b16 %v7730, %v7728
    %v7817 = vpack.c.b16 %v7731, %v7729
    %v7818 = vpack.c.b16 %v7734, %v7732
    %v7819 = vpack.c.b16 %v7735, %v7733
    %v7820 = vpack.c.b16 %v7738, %v7736
    %v7821 = vpack.c.b16 %v7739, %v7737
    %v7822 = vpack.c.b16 %v7742, %v7740
    %v7823 = vpack.c.b16 %v7743, %v7741
    %v7824 = vpack.c.b16 %v7746, %v7744
    %v7825 = vpack.c.b16 %v7747, %v7745
    %v7826 = vpack.c.b16 %v7750, %v7748
    %v7827 = vpack.c.b16 %v7751, %v7749
    %v7828 = vpack.c.b16 %v7754, %v7752
    %v7829 = vpack.c.b16 %v7755, %v7753
    %v7830 = vpack.c.b16 %v7758, %v7756
    %v7831 = vpack.c.b16 %v7759, %v7757
    %v7832 = vpack.c.b16 %v7762, %v7760
    %v7833 = vpack.c.b16 %v7763, %v7761
    %v7834 = vpack.c.b16 %v7766, %v7764
    %v7835 = vpack.c.b16 %v7767, %v7765
    %v7836 = vpack.c.b16 %v7770, %v7768
    %v7837 = vpack.c.b16 %v7771, %v7769
    %v7838 = vpack.c.b16 %v7774, %v7772
    %v7839 = vpack.c.b16 %v7775, %v7773
    %7904 = vmatprep.subr.bf16.mxu0 %v7777
    %7905 = vmatpush1.bf16.msra.mxu0 %v7776
    %7906 = vmatprep.subr.bf16.mxu0 %v7779
    %7907 = vmatpush1.bf16.msra.mxu0 %v7778
    %7908 = vmatprep.subr.bf16.mxu0 %v7781
    %7909 = vmatpush1.bf16.msra.mxu0 %v7780
    %7910 = vmatprep.subr.bf16.mxu0 %v7783
    %7911 = vmatpush1.bf16.msra.mxu0 %v7782
    %7912 = vmatprep.subr.bf16.mxu0 %v7785
    %7913 = vmatpush1.bf16.msra.mxu0 %v7784
    %7914 = vmatprep.subr.bf16.mxu0 %v7787
    %7915 = vmatpush1.bf16.msra.mxu0 %v7786
    %7916 = vmatprep.subr.bf16.mxu0 %v7789
    %7917 = vmatpush1.bf16.msra.mxu0 %v7788
    %7918 = vmatprep.subr.bf16.mxu0 %v7791
    %7919 = vmatpush1.bf16.msra.mxu0 %v7790
    %7920 = vmatprep.subr.bf16.mxu0 %v7793
    %7921 = vmatpush1.bf16.msra.mxu0 %v7792
    %7922 = vmatprep.subr.bf16.mxu0 %v7795
    %7923 = vmatpush1.bf16.msra.mxu0 %v7794
    %7924 = vmatprep.subr.bf16.mxu0 %v7797
    %7925 = vmatpush1.bf16.msra.mxu0 %v7796
    %7926 = vmatprep.subr.bf16.mxu0 %v7799
    %7927 = vmatpush1.bf16.msra.mxu0 %v7798
    %7928 = vmatprep.subr.bf16.mxu0 %v7801
    %7929 = vmatpush1.bf16.msra.mxu0 %v7800
    %7930 = vmatprep.subr.bf16.mxu0 %v7803
    %7931 = vmatpush1.bf16.msra.mxu0 %v7802
    %7932 = vmatprep.subr.bf16.mxu0 %v7805
    %7933 = vmatpush1.bf16.msra.mxu0 %v7804
    %7934 = vmatprep.subr.bf16.mxu0 %v7807
    %7935 = vmatpush1.bf16.msra.mxu0 %v7806
    %7936 = vmatprep.mubr.bf16.mxu0 %v7442
    %7937 = vmatmul.mubr.bf16.gmra.mrb[0].mxu0 %v7410
    %v7938 = vpop.f32.mrb[0].mxu0
    %v7939 = vadd.f32 %v7577, %v7938
    %v7940 = vpop.f32.mrb[0].mxu0
    %v7941 = vadd.f32 %v7581, %v7940
    %v7942 = vpop.f32.mrb[0].mxu0
    %v7943 = vpop.f32.mrb[0].mxu0
    %7944 = vdwg.mxu0
    %7945 = vmatprep.subr.bf16.mxu0 %v7809
    %7946 = vmatpush1.bf16.msra.mxu0 %v7808
    %7947 = vmatprep.subr.bf16.mxu0 %v7811
    %7948 = vmatpush1.bf16.msra.mxu0 %v7810
    %7949 = vmatprep.subr.bf16.mxu0 %v7813
    %7950 = vmatpush1.bf16.msra.mxu0 %v7812
    %7951 = vmatprep.subr.bf16.mxu0 %v7815
    %7952 = vmatpush1.bf16.msra.mxu0 %v7814
    %7953 = vmatprep.subr.bf16.mxu0 %v7817
    %7954 = vmatpush1.bf16.msra.mxu0 %v7816
    %7955 = vmatprep.subr.bf16.mxu0 %v7819
    %7956 = vmatpush1.bf16.msra.mxu0 %v7818
    %7957 = vmatprep.subr.bf16.mxu0 %v7821
    %7958 = vmatpush1.bf16.msra.mxu0 %v7820
    %7959 = vmatprep.subr.bf16.mxu0 %v7823
    %7960 = vmatpush1.bf16.msra.mxu0 %v7822
    %7961 = vmatprep.subr.bf16.mxu0 %v7825
    %7962 = vmatpush1.bf16.msra.mxu0 %v7824
    %7963 = vmatprep.subr.bf16.mxu0 %v7827
    %7964 = vmatpush1.bf16.msra.mxu0 %v7826
    %7965 = vmatprep.subr.bf16.mxu0 %v7829
    %7966 = vmatpush1.bf16.msra.mxu0 %v7828
    %7967 = vmatprep.subr.bf16.mxu0 %v7831
    %7968 = vmatpush1.bf16.msra.mxu0 %v7830
    %7969 = vmatprep.subr.bf16.mxu0 %v7833
    %7970 = vmatpush1.bf16.msra.mxu0 %v7832
    %7971 = vmatprep.subr.bf16.mxu0 %v7835
    %7972 = vmatpush1.bf16.msra.mxu0 %v7834
    %7973 = vmatprep.subr.bf16.mxu0 %v7837
    %7974 = vmatpush1.bf16.msra.mxu0 %v7836
    %7975 = vmatprep.subr.bf16.mxu0 %v7839
    %7976 = vmatpush1.bf16.msra.mxu0 %v7838
    %7977 = vmatprep.mubr.bf16.mxu0 %v7506
    %7978 = vmatmul.mubr.bf16.gmra.mrb[0].mxu0 %v7474
    %v7979 = vpop.f32.mrb[0].mxu0
    %v7980 = vadd.f32 %v7939, %v7979
    %v7981 = vpop.f32.mrb[0].mxu0
    %v7982 = vadd.f32 %v7941, %v7981
    %v7983 = vpop.f32.mrb[0].mxu0
    %v7984 = vpop.f32.mrb[0].mxu0
    %7985 = vdwg.mxu0
    %v7986 = vmax.f32 %v7980, 0.0
    %v7987 = vmax.f32 %v7982, 0.0
    %v7988 = vpack.c.bf16 %v7986, %v7986
    %v7989 = vpack.c.bf16 %v7987, %v7987
    %v7990 = vld [vmem:[%s7] sm:$0xff]
    %v7991 = vld [vmem:[%s7 + $0x8] sm:$0xff]
    %v7992 = vld [vmem:[%s7 + $0x10] sm:$0xff]
    %v7993 = vld [vmem:[%s7 + $0x18] sm:$0xff]
    %v7994 = vld [vmem:[%s7 + $0x20] sm:$0xff]
    %v7995 = vld [vmem:[%s7 + $0x28] sm:$0xff]
    %v7996 = vld [vmem:[%s7 + $0x30] sm:$0xff]
    %v7997 = vld [vmem:[%s7 + $0x38] sm:$0xff]
    %v7998 = vld [vmem:[%s7 + $0x40] sm:$0xff]
    %v7999 = vld [vmem:[%s7 + $0x48] sm:$0xff]
    %v8000 = vld [vmem:[%s7 + $0x50] sm:$0xff]
    %v8001 = vld [vmem:[%s7 + $0x58] sm:$0xff]
    %v8002 = vld [vmem:[%s7 + $0x60] sm:$0xff]
    %v8003 = vld [vmem:[%s7 + $0x68] sm:$0xff]
    %v8004 = vld [vmem:[%s7 + $0x70] sm:$0xff]
    %v8005 = vld [vmem:[%s7 + $0x78] sm:$0xff]
    %v8006 = vld [vmem:[%s7 + $0x80] sm:$0xff]
    %v8007 = vld [vmem:[%s7 + $0x88] sm:$0xff]
    %v8008 = vld [vmem:[%s7 + $0x90] sm:$0xff]
    %v8009 = vld [vmem:[%s7 + $0x98] sm:$0xff]
    %v8010 = vld [vmem:[%s7 + $0xa0] sm:$0xff]
    %v8011 = vld [vmem:[%s7 + $0xa8] sm:$0xff]
    %v8012 = vld [vmem:[%s7 + $0xb0] sm:$0xff]
    %v8013 = vld [vmem:[%s7 + $0xb8] sm:$0xff]
    %v8014 = vld [vmem:[%s7 + $0xc0] sm:$0xff]
    %v8015 = vld [vmem:[%s7 + $0xc8] sm:$0xff]
    %v8016 = vld [vmem:[%s7 + $0xd0] sm:$0xff]
    %v8017 = vld [vmem:[%s7 + $0xd8] sm:$0xff]
    %v8018 = vld [vmem:[%s7 + $0xe0] sm:$0xff]
    %v8019 = vld [vmem:[%s7 + $0xe8] sm:$0xff]
    %v8020 = vld [vmem:[%s7 + $0xf0] sm:$0xff]
    %v8021 = vld [vmem:[%s7 + $0xf8] sm:$0xff]
    %v8022 = vld [vmem:[%s8] sm:$0x3]
    %v8024 = vlaneseq
    %v8025 = vshrl.u32 %v8024, 7
    %v8026 = vsub.s32 0, %v8025
    %v8027 = vrot.slane %v8022, %v8026
    %v8028 = vlaneseq
    %v8029 = vshrl.u32 %v8028, 7
    %v8030 = vsub.s32 1, %v8029
    %v8031 = vrot.slane %v8022, %v8030
    %v8066 = vunpack.c.l.b16 %v7990
    %v8067 = vunpack.c.h.b16 %v7990
    %v8068 = vunpack.c.l.b16 %v7991
    %v8069 = vunpack.c.h.b16 %v7991
    %v8070 = vunpack.c.l.b16 %v7992
    %v8071 = vunpack.c.h.b16 %v7992
    %v8072 = vunpack.c.l.b16 %v7993
    %v8073 = vunpack.c.h.b16 %v7993
    %v8074 = vunpack.c.l.b16 %v7994
    %v8075 = vunpack.c.h.b16 %v7994
    %v8076 = vunpack.c.l.b16 %v7995
    %v8077 = vunpack.c.h.b16 %v7995
    %v8078 = vunpack.c.l.b16 %v7996
    %v8079 = vunpack.c.h.b16 %v7996
    %v8080 = vunpack.c.l.b16 %v7997
    %v8081 = vunpack.c.h.b16 %v7997
    %v8082 = vunpack.c.l.b16 %v7998
    %v8083 = vunpack.c.h.b16 %v7998
    %v8084 = vunpack.c.l.b16 %v7999
    %v8085 = vunpack.c.h.b16 %v7999
    %v8086 = vunpack.c.l.b16 %v8000
    %v8087 = vunpack.c.h.b16 %v8000
    %v8088 = vunpack.c.l.b16 %v8001
    %v8089 = vunpack.c.h.b16 %v8001
    %v8090 = vunpack.c.l.b16 %v8002
    %v8091 = vunpack.c.h.b16 %v8002
    %v8092 = vunpack.c.l.b16 %v8003
    %v8093 = vunpack.c.h.b16 %v8003
    %v8094 = vunpack.c.l.b16 %v8004
    %v8095 = vunpack.c.h.b16 %v8004
    %v8096 = vunpack.c.l.b16 %v8005
    %v8097 = vunpack.c.h.b16 %v8005
    %v8098 = vunpack.c.l.b16 %v8006
    %v8099 = vunpack.c.h.b16 %v8006
    %v8100 = vunpack.c.l.b16 %v8007
    %v8101 = vunpack.c.h.b16 %v8007
    %v8102 = vunpack.c.l.b16 %v8008
    %v8103 = vunpack.c.h.b16 %v8008
    %v8104 = vunpack.c.l.b16 %v8009
    %v8105 = vunpack.c.h.b16 %v8009
    %v8106 = vunpack.c.l.b16 %v8010
    %v8107 = vunpack.c.h.b16 %v8010
    %v8108 = vunpack.c.l.b16 %v8011
    %v8109 = vunpack.c.h.b16 %v8011
    %v8110 = vunpack.c.l.b16 %v8012
    %v8111 = vunpack.c.h.b16 %v8012
    %v8112 = vunpack.c.l.b16 %v8013
    %v8113 = vunpack.c.h.b16 %v8013
    %v8114 = vunpack.c.l.b16 %v8014
    %v8115 = vunpack.c.h.b16 %v8014
    %v8116 = vunpack.c.l.b16 %v8015
    %v8117 = vunpack.c.h.b16 %v8015
    %v8118 = vunpack.c.l.b16 %v8016
    %v8119 = vunpack.c.h.b16 %v8016
    %v8120 = vunpack.c.l.b16 %v8017
    %v8121 = vunpack.c.h.b16 %v8017
    %v8122 = vunpack.c.l.b16 %v8018
    %v8123 = vunpack.c.h.b16 %v8018
    %v8124 = vunpack.c.l.b16 %v8019
    %v8125 = vunpack.c.h.b16 %v8019
    %v8126 = vunpack.c.l.b16 %v8020
    %v8127 = vunpack.c.h.b16 %v8020
    %v8128 = vunpack.c.l.b16 %v8021
    %v8129 = vunpack.c.h.b16 %v8021
    %v8130 = vpack.c.b16 %v8068, %v8066
    %v8131 = vpack.c.b16 %v8069, %v8067
    %v8132 = vpack.c.b16 %v8072, %v8070
    %v8133 = vpack.c.b16 %v8073, %v8071
    %v8134 = vpack.c.b16 %v8076, %v8074
    %v8135 = vpack.c.b16 %v8077, %v8075
    %v8136 = vpack.c.b16 %v8080, %v8078
    %v8137 = vpack.c.b16 %v8081, %v8079
    %v8138 = vpack.c.b16 %v8084, %v8082
    %v8139 = vpack.c.b16 %v8085, %v8083
    %v8140 = vpack.c.b16 %v8088, %v8086
    %v8141 = vpack.c.b16 %v8089, %v8087
    %v8142 = vpack.c.b16 %v8092, %v8090
    %v8143 = vpack.c.b16 %v8093, %v8091
    %v8144 = vpack.c.b16 %v8096, %v8094
    %v8145 = vpack.c.b16 %v8097, %v8095
    %v8146 = vpack.c.b16 %v8100, %v8098
    %v8147 = vpack.c.b16 %v8101, %v8099
    %v8148 = vpack.c.b16 %v8104, %v8102
    %v8149 = vpack.c.b16 %v8105, %v8103
    %v8150 = vpack.c.b16 %v8108, %v8106
    %v8151 = vpack.c.b16 %v8109, %v8107
    %v8152 = vpack.c.b16 %v8112, %v8110
    %v8153 = vpack.c.b16 %v8113, %v8111
    %v8154 = vpack.c.b16 %v8116, %v8114
    %v8155 = vpack.c.b16 %v8117, %v8115
    %v8156 = vpack.c.b16 %v8120, %v8118
    %v8157 = vpack.c.b16 %v8121, %v8119
    %v8158 = vpack.c.b16 %v8124, %v8122
    %v8159 = vpack.c.b16 %v8125, %v8123
    %v8160 = vpack.c.b16 %v8128, %v8126
    %v8161 = vpack.c.b16 %v8129, %v8127
    %8194 = vmatprep.subr.bf16.mxu0 %v8131
    %8195 = vmatpush1.bf16.msra.mxu0 %v8130
    %8196 = vmatprep.subr.bf16.mxu0 %v8133
    %8197 = vmatpush1.bf16.msra.mxu0 %v8132
    %8198 = vmatprep.subr.bf16.mxu0 %v8135
    %8199 = vmatpush1.bf16.msra.mxu0 %v8134
    %8200 = vmatprep.subr.bf16.mxu0 %v8137
    %8201 = vmatpush1.bf16.msra.mxu0 %v8136
    %8202 = vmatprep.subr.bf16.mxu0 %v8139
    %8203 = vmatpush1.bf16.msra.mxu0 %v8138
    %8204 = vmatprep.subr.bf16.mxu0 %v8141
    %8205 = vmatpush1.bf16.msra.mxu0 %v8140
    %8206 = vmatprep.subr.bf16.mxu0 %v8143
    %8207 = vmatpush1.bf16.msra.mxu0 %v8142
    %8208 = vmatprep.subr.bf16.mxu0 %v8145
    %8209 = vmatpush1.bf16.msra.mxu0 %v8144
    %8210 = vmatprep.subr.bf16.mxu0 %v8147
    %8211 = vmatpush1.bf16.msra.mxu0 %v8146
    %8212 = vmatprep.subr.bf16.mxu0 %v8149
    %8213 = vmatpush1.bf16.msra.mxu0 %v8148
    %8214 = vmatprep.subr.bf16.mxu0 %v8151
    %8215 = vmatpush1.bf16.msra.mxu0 %v8150
    %8216 = vmatprep.subr.bf16.mxu0 %v8153
    %8217 = vmatpush1.bf16.msra.mxu0 %v8152
    %8218 = vmatprep.subr.bf16.mxu0 %v8155
    %8219 = vmatpush1.bf16.msra.mxu0 %v8154
    %8220 = vmatprep.subr.bf16.mxu0 %v8157
    %8221 = vmatpush1.bf16.msra.mxu0 %v8156
    %8222 = vmatprep.subr.bf16.mxu0 %v8159
    %8223 = vmatpush1.bf16.msra.mxu0 %v8158
    %8224 = vmatprep.subr.bf16.mxu0 %v8161
    %8225 = vmatpush1.bf16.msra.mxu0 %v8160
    %8226 = vmatprep.mubr.bf16.mxu0 %v7989
    %8227 = vmatmul.mubr.bf16.gmra.mrb[0].mxu0 %v7988
    %v8228 = vpop.f32.mrb[0].mxu0
    %v8229 = vadd.f32 %v8027, %v8228
    %v8230 = vpop.f32.mrb[0].mxu0
    %v8231 = vadd.f32 %v8031, %v8230
    %v8232 = vpop.f32.mrb[0].mxu0
    %v8233 = vpop.f32.mrb[0].mxu0
    %8234 = vdwg.mxu0
    %v8235 = vmax.f32 %v8229, 0.0
    %v8236 = vmax.f32 %v8231, 0.0
    %v8237 = vpack.c.bf16 %v8235, %v8235
    %v8238 = vpack.c.bf16 %v8236, %v8236
    %v8239 = vld [vmem:[#allocation7] sm:$0xf]
    %v8240 = vld [vmem:[#allocation7 + $0x4] sm:$0xf]
    %v8241 = vld [vmem:[#allocation7 + $0x8] sm:$0xf]
    %v8242 = vld [vmem:[#allocation7 + $0xc] sm:$0xf]
    %v8243 = vld [vmem:[#allocation7 + $0x10] sm:$0xf]
    %v8244 = vld [vmem:[#allocation7 + $0x14] sm:$0xf]
    %v8245 = vld [vmem:[#allocation7 + $0x18] sm:$0xf]
    %v8246 = vld [vmem:[#allocation7 + $0x1c] sm:$0xf]
    %v8247 = vld [vmem:[#allocation7 + $0x20] sm:$0xf]
    %v8248 = vld [vmem:[#allocation7 + $0x24] sm:$0xf]
    %v8249 = vld [vmem:[#allocation7 + $0x28] sm:$0xf]
    %v8250 = vld [vmem:[#allocation7 + $0x2c] sm:$0xf]
    %v8251 = vld [vmem:[#allocation7 + $0x30] sm:$0xf]
    %v8252 = vld [vmem:[#allocation7 + $0x34] sm:$0xf]
    %v8253 = vld [vmem:[#allocation7 + $0x38] sm:$0xf]
    %v8254 = vld [vmem:[#allocation7 + $0x3c] sm:$0xf]
    %v8255 = vld [vmem:[#allocation7 + $0x40] sm:$0xf]
    %v8256 = vld [vmem:[#allocation7 + $0x44] sm:$0xf]
    %v8257 = vld [vmem:[#allocation7 + $0x48] sm:$0xf]
    %v8258 = vld [vmem:[#allocation7 + $0x4c] sm:$0xf]
    %v8259 = vld [vmem:[#allocation7 + $0x50] sm:$0xf]
    %v8260 = vld [vmem:[#allocation7 + $0x54] sm:$0xf]
    %v8261 = vld [vmem:[#allocation7 + $0x58] sm:$0xf]
    %v8262 = vld [vmem:[#allocation7 + $0x5c] sm:$0xf]
    %v8263 = vld [vmem:[#allocation7 + $0x60] sm:$0xf]
    %v8264 = vld [vmem:[#allocation7 + $0x64] sm:$0xf]
    %v8265 = vld [vmem:[#allocation7 + $0x68] sm:$0xf]
    %v8266 = vld [vmem:[#allocation7 + $0x6c] sm:$0xf]
    %v8267 = vld [vmem:[#allocation7 + $0x70] sm:$0xf]
    %v8268 = vld [vmem:[#allocation7 + $0x74] sm:$0xf]
    %v8269 = vld [vmem:[#allocation7 + $0x78] sm:$0xf]
    %v8270 = vld [vmem:[#allocation7 + $0x7c] sm:$0xf]
    %v8271 = vld [vmem:[%s10] sm:$0x1]
    %v8273 = vlaneseq
    %v8274 = vshrl.u32 %v8273, 7
    %v8275 = vsub.s32 0, %v8274
    %v8276 = vrot.slane %v8271, %v8275
    %v8310 = vunpack.c.l.b16 %v8239
    %v8311 = vunpack.c.l.b16 %v8240
    %v8312 = vunpack.c.l.b16 %v8241
    %v8313 = vunpack.c.l.b16 %v8242
    %v8314 = vunpack.c.l.b16 %v8243
    %v8315 = vunpack.c.l.b16 %v8244
    %v8316 = vunpack.c.l.b16 %v8245
    %v8317 = vunpack.c.l.b16 %v8246
    %v8318 = vunpack.c.l.b16 %v8247
    %v8319 = vunpack.c.l.b16 %v8248
    %v8320 = vunpack.c.l.b16 %v8249
    %v8321 = vunpack.c.l.b16 %v8250
    %v8322 = vunpack.c.l.b16 %v8251
    %v8323 = vunpack.c.l.b16 %v8252
    %v8324 = vunpack.c.l.b16 %v8253
    %v8325 = vunpack.c.l.b16 %v8254
    %v8326 = vunpack.c.l.b16 %v8255
    %v8327 = vunpack.c.l.b16 %v8256
    %v8328 = vunpack.c.l.b16 %v8257
    %v8329 = vunpack.c.l.b16 %v8258
    %v8330 = vunpack.c.l.b16 %v8259
    %v8331 = vunpack.c.l.b16 %v8260
    %v8332 = vunpack.c.l.b16 %v8261
    %v8333 = vunpack.c.l.b16 %v8262
    %v8334 = vunpack.c.l.b16 %v8263
    %v8335 = vunpack.c.l.b16 %v8264
    %v8336 = vunpack.c.l.b16 %v8265
    %v8337 = vunpack.c.l.b16 %v8266
    %v8338 = vunpack.c.l.b16 %v8267
    %v8339 = vunpack.c.l.b16 %v8268
    %v8340 = vunpack.c.l.b16 %v8269
    %v8341 = vunpack.c.l.b16 %v8270
    %v8342 = vpack.c.b16 %v8311, %v8310
    %v8343 = vpack.c.b16 %v8313, %v8312
    %v8344 = vpack.c.b16 %v8315, %v8314
    %v8345 = vpack.c.b16 %v8317, %v8316
    %v8346 = vpack.c.b16 %v8319, %v8318
    %v8347 = vpack.c.b16 %v8321, %v8320
    %v8348 = vpack.c.b16 %v8323, %v8322
    %v8349 = vpack.c.b16 %v8325, %v8324
    %v8350 = vpack.c.b16 %v8327, %v8326
    %v8351 = vpack.c.b16 %v8329, %v8328
    %v8352 = vpack.c.b16 %v8331, %v8330
    %v8353 = vpack.c.b16 %v8333, %v8332
    %v8354 = vpack.c.b16 %v8335, %v8334
    %v8355 = vpack.c.b16 %v8337, %v8336
    %v8356 = vpack.c.b16 %v8339, %v8338
    %v8357 = vpack.c.b16 %v8341, %v8340
    %8374 = vmatprep.subr.bf16.mxu0 0
    %8375 = vmatpush1.bf16.msra.mxu0 %v8342
    %8376 = vmatprep.subr.bf16.mxu0 0
    %8377 = vmatpush1.bf16.msra.mxu0 %v8343
    %8378 = vmatprep.subr.bf16.mxu0 0
    %8379 = vmatpush1.bf16.msra.mxu0 %v8344
    %8380 = vmatprep.subr.bf16.mxu0 0
    %8381 = vmatpush1.bf16.msra.mxu0 %v8345
    %8382 = vmatprep.subr.bf16.mxu0 0
    %8383 = vmatpush1.bf16.msra.mxu0 %v8346
    %8384 = vmatprep.subr.bf16.mxu0 0
    %8385 = vmatpush1.bf16.msra.mxu0 %v8347
    %8386 = vmatprep.subr.bf16.mxu0 0
    %8387 = vmatpush1.bf16.msra.mxu0 %v8348
    %8388 = vmatprep.subr.bf16.mxu0 0
    %8389 = vmatpush1.bf16.msra.mxu0 %v8349
    %8390 = vmatprep.subr.bf16.mxu0 0
    %8391 = vmatpush1.bf16.msra.mxu0 %v8350
    %8392 = vmatprep.subr.bf16.mxu0 0
    %8393 = vmatpush1.bf16.msra.mxu0 %v8351
    %8394 = vmatprep.subr.bf16.mxu0 0
    %8395 = vmatpush1.bf16.msra.mxu0 %v8352
    %8396 = vmatprep.subr.bf16.mxu0 0
    %8397 = vmatpush1.bf16.msra.mxu0 %v8353
    %8398 = vmatprep.subr.bf16.mxu0 0
    %8399 = vmatpush1.bf16.msra.mxu0 %v8354
    %8400 = vmatprep.subr.bf16.mxu0 0
    %8401 = vmatpush1.bf16.msra.mxu0 %v8355
    %8402 = vmatprep.subr.bf16.mxu0 0
    %8403 = vmatpush1.bf16.msra.mxu0 %v8356
    %8404 = vmatprep.subr.bf16.mxu0 0
    %8405 = vmatpush1.bf16.msra.mxu0 %v8357
    %8406 = vmatprep.mubr.bf16.mxu0 %v8238
    %8407 = vmatmul.mubr.bf16.gmra.mrb[0].mxu0 %v8237
    %v8408 = vpop.f32.mrb[0].mxu0
    %v8409 = vadd.f32 %v8276, %v8408
    %v8410 = vpop.f32.mrb[0].mxu0
    %v8411 = vpop.f32.mrb[0].mxu0
    %v8412 = vpop.f32.mrb[0].mxu0
    %8413 = vdwg.mxu0
    %8414 = vst [vmem:[%s11] sm:$0xff] %v8409
    // Predicated region
    $region62: #{packed_lenet_forward.1} parent=1 // pred_check
      _
    $region63: #{packed_lenet_forward.1} parent=1 // pred_check_branch
      %8416 = sbr.rel (0) target = $region65
    $region64: #{packed_lenet_forward.1} parent=1 // pred_region
      _
    $region65: #{packed_lenet_forward.1} parent=1 // pred_fallthru
      _
    // Predicated region
    $region66: #{packed_lenet_forward.1} parent=1 // pred_check
      _
    $region67: #{packed_lenet_forward.1} parent=1 // pred_check_branch
      %8418 = sbr.rel (0) target = $region69
    $region68: #{packed_lenet_forward.1} parent=1 // pred_region
      _
    $region69: #{packed_lenet_forward.1} parent=1 // pred_fallthru
      _
    %8419 = vsyncpa [#allocation3], 1
    %8420 = vsyncpa [#allocation5], 1
    %8421 = vsyncpa [#allocation8], 1

</llo_original>
